<compile_context>
chip_gen: v7x
topology: tpu7x:2x2x1
jax: 0.10.0
libtpu: 0.0.40
codegen_flags: <defaults>
</compile_context>

<pallas_src>
import numpy as np
import jax
import jax.numpy as jnp
from jax import lax
from jax.experimental import pallas as pl
from jax.experimental.pallas import tpu as pltpu

SQRT2_INV = float(1.0 / np.sqrt(2.0))


# ----------------------------------------------------------------------------
# Wavelet filter construction (db1 / Haar, coefficients hardcoded; pywt-free).
# Mirrors create_wavelet_filter() of the PyTorch module.
# ----------------------------------------------------------------------------
def create_db1_wavelet_filters():
    dec_lo = jnp.array([SQRT2_INV, SQRT2_INV], jnp.float32)    # dec_lo[::-1]
    dec_hi = jnp.array([SQRT2_INV, -SQRT2_INV], jnp.float32)   # dec_hi[::-1]
    rec_lo = jnp.array([SQRT2_INV, SQRT2_INV], jnp.float32)    # rec_lo[::-1].flip
    rec_hi = jnp.array([SQRT2_INV, -SQRT2_INV], jnp.float32)   # rec_hi[::-1].flip
    dec_filters = jnp.stack([
        dec_lo[:, None] * dec_lo[None, :],
        dec_hi[:, None] * dec_lo[None, :],
        dec_lo[:, None] * dec_hi[None, :],
        dec_hi[:, None] * dec_hi[None, :]], axis=0)            # (4, 2, 2)
    rec_filters = jnp.stack([
        rec_lo[:, None] * rec_lo[None, :],
        rec_hi[:, None] * rec_lo[None, :],
        rec_lo[:, None] * rec_hi[None, :],
        rec_hi[:, None] * rec_hi[None, :]], axis=0)            # (4, 2, 2)
    return dec_filters, rec_filters


# ----------------------------------------------------------------------------
# Fused kernel: operates on one (batch, channel-tile) block in the polyphase,
# channels-last layout (1, Hh, 2, 2, Wh, Cblk).
# ----------------------------------------------------------------------------
def _make_fused_kernel(Hh, Wh, Cblk, K):
    pad = K // 2                 # 'same' halo at full resolution
    php = (pad + 1) // 2         # halo needed on a half-resolution phase plane

    def kernel(x_ref, bw_ref, bb_ref, bs_ref, ww_ref, ws_ref, o_ref,
               ph_ref, wpad_ref, sb_ref):
        f32 = jnp.float32

        # ---- Stage 1: de-interleave x into 4 zero-padded phase planes (in VMEM) ----
        ph_ref[...] = jnp.zeros(ph_ref.shape, f32)
        phase = []
        for di in range(2):
            for dj in range(2):
                v = x_ref[0, :, di, dj, :, :].astype(f32)          # (Hh, Wh, Cblk)
                ph_ref[di * 2 + dj, php:php + Hh, php:php + Wh, :] = v
                phase.append(v)
        a, b, c, d = phase   # a=(0,0) b=(0,1) c=(1,0) d=(1,1) phases of x

        # ---- Stage 2: Haar DWT (db1), coefficients baked in (+-0.5) ----
        subbands = (
            0.5 * (a + b + c + d),     # k=0: LL
            0.5 * (a + b - c - d),     # k=1: hi along H
            0.5 * (a - b + c - d),     # k=2: hi along W
            0.5 * (a - b - c + d),     # k=3: HH
        )

        # ---- Stage 3: wavelet-path depthwise KxK conv + per-channel scale ----
        ww = ww_ref[...]               # (4, K*K, Cblk)
        ws = ws_ref[...]               # (4, Cblk)
        wpad_ref[...] = jnp.zeros(wpad_ref.shape, f32)
        for k in range(4):
            wpad_ref[pad:pad + Hh, pad:pad + Wh, :] = subbands[k]
            acc = jnp.zeros((Hh, Wh, Cblk), f32)
            for ta in range(K):
                for tb in range(K):
                    t = ta * K + tb
                    w_tap = ww[k, t:t + 1, :]                      # (1, Cblk)
                    acc = acc + wpad_ref[ta:ta + Hh, tb:tb + Wh, :] * w_tap
            sb_ref[k, :, :, :] = ws[k:k + 1, :] * acc              # bias=False

        # ---- Stage 4+5: inverse Haar + polyphase base conv + bias/scale + add ----
        bw = bw_ref[...]               # (K*K, Cblk)
        bb = bb_ref[...]               # (1, Cblk)
        bs = bs_ref[...]               # (1, Cblk)
        s0 = sb_ref[0, :, :, :]
        s1 = sb_ref[1, :, :, :]
        s2 = sb_ref[2, :, :, :]
        s3 = sb_ref[3, :, :, :]
        for di in range(2):
            sh = 1.0 if di == 0 else -1.0          # rec_hi = [+, -] along H phase
            for dj in range(2):
                sw = 1.0 if dj == 0 else -1.0      # rec_hi = [+, -] along W phase
                x_tag = 0.5 * (s0 + sh * s1 + sw * s2 + (sh * sw) * s3)

                # depthwise 'same' KxK conv of full-res x, evaluated directly in
                # polyphase form: tap (ta, tb) of output phase (di, dj) reads input
                # phase (rh, rw) at half-res offset (qh, qw).
                acc = jnp.zeros((Hh, Wh, Cblk), f32)
                for ta in range(K):
                    qh, rh = divmod(di + ta - pad, 2)
                    for tb in range(K):
                        qw, rw = divmod(dj + tb - pad, 2)
                        p = rh * 2 + rw
                        t = ta * K + tb
                        w_tap = bw[t:t + 1, :]                     # (1, Cblk)
                        acc = acc + ph_ref[p,
                                           php + qh:php + qh + Hh,
                                           php + qw:php + qw + Wh, :] * w_tap
                base = bs * (acc + bb)
                o_ref[0, :, di, dj, :, :] = (base + x_tag).astype(o_ref.dtype)

    return kernel, php


def _pick_channel_tile(C, max_tile=512):
    """Channel tile: either full C (if < 128 or already modest) or a 128-multiple divisor."""
    if C % 128 != 0 or C <= max_tile:
        return C
    for t in range(max_tile, 127, -128):
        if C % t == 0:
            return t
    return C


# ----------------------------------------------------------------------------
# Parameter init (deterministic, synthetic) — shapes follow WTConv2d.__init__.
# ----------------------------------------------------------------------------
def init_wtconv2d_params(in_channels, kernel_size=5, wt_levels=1, seed=0):
    C, K = in_channels, kernel_size
    key = jax.random.PRNGKey(seed)
    keys = jax.random.split(key, 2 + wt_levels)
    dec_f, rec_f = create_db1_wavelet_filters()
    return {
        "in_channels": C,
        "kernel_size": K,
        "wt_levels": wt_levels,
        "dec_filters": dec_f,
        "rec_filters": rec_f,
        # base_conv: Conv2d(C, C, K, groups=C, bias=True) -> weight (C,1,K,K)
        "base_conv_w": 0.1 * jax.random.normal(keys[0], (C, 1, K, K), jnp.float32),
        "base_conv_b": 0.05 * jax.random.normal(keys[1], (C,), jnp.float32),
        # base_scale: _ScaleModule([1,C,1,1], init_scale=1.0)
        "base_scale": jnp.ones((C,), jnp.float32),
        # wavelet_convs[i]: Conv2d(4C, 4C, K, groups=4C, bias=False) -> (4C,1,K,K)
        "wavelet_conv_w": [
            0.1 * jax.random.normal(keys[2 + i], (4 * C, 1, K, K), jnp.float32)
            for i in range(wt_levels)
        ],
        # wavelet_scale[i]: _ScaleModule([1,4C,1,1], init_scale=0.1)
        "wavelet_scale": [jnp.full((4 * C,), 0.1, jnp.float32) for _ in range(wt_levels)],
    }


# ----------------------------------------------------------------------------
# Forward pass — one fused pallas_call (wt_levels=1), plus one layout transpose
# in and one out (NCHW <-> polyphase channels-last).
# ----------------------------------------------------------------------------
def wtconv2d_forward(x, params, stride=1):
    B, C, H, W = x.shape
    K = params["kernel_size"]
    pad = K // 2

    assert params["wt_levels"] == 1, "fused kernel supports wt_levels=1"
    # TODO(synk): wt_levels > 1 (recursive LL decomposition) not implemented in the fused kernel.
    assert H % 2 == 0 and W % 2 == 0, "even spatial dims required"
    # TODO(synk): odd spatial dims (the F.pad-to-even branch) not implemented.

    Hh, Wh = H // 2, W // 2
    Cblk = _pick_channel_tile(C)
    n_ct = C // Cblk

    kernel, php = _make_fused_kernel(Hh, Wh, Cblk, K)

    # Single layout transform in: NCHW -> (B, Hh, 2, 2, Wh, C)  [di, dj = H/W phases]
    xp = x.reshape(B, C, Hh, 2, Wh, 2).transpose(0, 2, 3, 5, 4, 1)

    # Parameter repacking: channels on the lane axis, one (C,)-vector per tap.
    bw = params["base_conv_w"].reshape(C, K * K).T.astype(jnp.float32)            # (K*K, C)
    bb = params["base_conv_b"].reshape(1, C).astype(jnp.float32)                  # (1, C)
    bs = params["base_scale"].reshape(1, C).astype(jnp.float32)                   # (1, C)
    # torch wavelet conv channel index = c*4 + k  ->  (4, K*K, C)
    ww = params["wavelet_conv_w"][0].reshape(C, 4, K * K).transpose(1, 2, 0).astype(jnp.float32)
    ws = params["wavelet_scale"][0].reshape(C, 4).T.astype(jnp.float32)           # (4, C)

    out_p = pl.pallas_call(
        kernel,
        out_shape=jax.ShapeDtypeStruct((B, Hh, 2, 2, Wh, C), x.dtype),
        grid=(B, n_ct),
        in_specs=[
            pl.BlockSpec((1, Hh, 2, 2, Wh, Cblk), lambda b, c: (b, 0, 0, 0, 0, c)),
            pl.BlockSpec((K * K, Cblk), lambda b, c: (0, c)),
            pl.BlockSpec((1, Cblk), lambda b, c: (0, c)),
            pl.BlockSpec((1, Cblk), lambda b, c: (0, c)),
            pl.BlockSpec((4, K * K, Cblk), lambda b, c: (0, 0, c)),
            pl.BlockSpec((4, Cblk), lambda b, c: (0, c)),
        ],
        out_specs=pl.BlockSpec((1, Hh, 2, 2, Wh, Cblk), lambda b, c: (b, 0, 0, 0, 0, c)),
        scratch_shapes=[
            pltpu.VMEM((4, Hh + 2 * php, Wh + 2 * php, Cblk), jnp.float32),  # padded phases
            pltpu.VMEM((Hh + 2 * pad, Wh + 2 * pad, Cblk), jnp.float32),     # padded subband
            pltpu.VMEM((4, Hh, Wh, Cblk), jnp.float32),                      # post-conv subbands
        ],
        compiler_params=pltpu.CompilerParams(
            dimension_semantics=("parallel", "parallel"),
            vmem_limit_bytes=48 * 1024 * 1024),
    )(xp, bw, bb, bs, ww, ws)

    # Single layout transform out: (B, Hh, 2, 2, Wh, C) -> NCHW
    out = out_p.transpose(0, 5, 1, 2, 4, 3).reshape(B, C, H, W)

    if stride > 1:
        # do_stride: conv with ones(1,1) filter, stride s, groups=C == subsampling
        out = out[:, :, ::stride, ::stride]
    return out


# ----------------------------------------------------------------------------
# Pure-XLA reference (independent path) for numerical verification.
# ----------------------------------------------------------------------------
def _ref_forward(x, params):
    B, C, H, W = x.shape
    dec_f, rec_f = params["dec_filters"], params["rec_filters"]
    hi = lax.Precision.HIGHEST

    dec_full = jnp.tile(dec_f, (C, 1, 1))[:, None]             # (4C,1,2,2), chan = c*4+k
    sub = lax.conv_general_dilated(
        x, dec_full, (2, 2), "VALID",
        dimension_numbers=("NCHW", "OIHW", "NCHW"),
        feature_group_count=C, precision=hi)
    sub = sub.reshape(B, C, 4, H // 2, W // 2)

    tag = sub.reshape(B, C * 4, H // 2, W // 2)
    tag = lax.conv_general_dilated(
        tag, params["wavelet_conv_w"][0], (1, 1), "SAME",
        dimension_numbers=("NCHW", "OIHW", "NCHW"),
        feature_group_count=C * 4, precision=hi)
    tag = tag * params["wavelet_scale"][0].reshape(1, C * 4, 1, 1)
    tag = tag.reshape(B, C, 4, H // 2, W // 2)

    # conv_transpose2d(stride=2, 2x2, pad 0) has no overlaps -> direct scatter formula
    x_tag = jnp.einsum("bckhw,kij->bchiwj", tag, rec_f,
                       precision=hi).reshape(B, C, H, W)

    base = lax.conv_general_dilated(
        x, params["base_conv_w"], (1, 1), "SAME",
        dimension_numbers=("NCHW", "OIHW", "NCHW"),
        feature_group_count=C, precision=hi)
    base = (base + params["base_conv_b"].reshape(1, C, 1, 1)) \
        * params["base_scale"].reshape(1, C, 1, 1)
    return base + x_tag


if __name__ == "__main__":
    B, C, H, W = 2, 4, 16, 16
    params = init_wtconv2d_params(in_channels=C, kernel_size=5, wt_levels=1, seed=0)
    x = jax.random.normal(jax.random.PRNGKey(0), (B, C, H, W), jnp.float32)

    fwd = jax.jit(lambda xi: wtconv2d_forward(xi, params, stride=1))
    out = jax.block_until_ready(fwd(x))

    assert out.shape == (B, C, H, W), out.shape
    assert bool(jnp.all(jnp.isfinite(out)))

    ref = jax.block_until_ready(_ref_forward(x, params))
    err = float(jnp.max(jnp.abs(out - ref)))
    assert err < 2e-4, f"max abs err vs XLA reference: {err}"

    print("KERNEL_OK")
</pallas_src>

<mosaic_0001>
module attributes {stable_mosaic.version = 11 : i64} {
  func.func @kernel(%arg0: i32, %arg1: i32, %arg2: memref<1x8x2x2x8x4xf32, #tpu.memory_space<vmem>>, %arg3: memref<25x4xf32, #tpu.memory_space<vmem>>, %arg4: memref<1x4xf32, #tpu.memory_space<vmem>>, %arg5: memref<1x4xf32, #tpu.memory_space<vmem>>, %arg6: memref<4x25x4xf32, #tpu.memory_space<vmem>>, %arg7: memref<4x4xf32, #tpu.memory_space<vmem>>, %arg8: memref<1x8x2x2x8x4xf32, #tpu.memory_space<vmem>>, %arg9: memref<4x10x10x4xf32, #tpu.memory_space<vmem>>, %arg10: memref<12x12x4xf32, #tpu.memory_space<vmem>>, %arg11: memref<4x8x8x4xf32, #tpu.memory_space<vmem>>) attributes {dimension_semantics = [#tpu.dimension_semantics<parallel>, #tpu.dimension_semantics<parallel>], iteration_bounds = array<i64: 2, 1>, scalar_prefetch = 0 : i64, scratch_operands = 3 : i64, tpu.core_type = #tpu.core_type<tc>, window_params = [{transform_indices = @transform_0, window_bounds = array<i64: 1, 8, 2, 2, 8, 4>}, {transform_indices = @transform_1, window_bounds = array<i64: 25, 4>}, {transform_indices = @transform_2, window_bounds = array<i64: 1, 4>}, {transform_indices = @transform_3, window_bounds = array<i64: 1, 4>}, {transform_indices = @transform_4, window_bounds = array<i64: 4, 25, 4>}, {transform_indices = @transform_5, window_bounds = array<i64: 4, 4>}, {transform_indices = @transform_6, window_bounds = array<i64: 1, 8, 2, 2, 8, 4>}]} {
    %cst = arith.constant 0.000000e+00 : f32
    %0 = vector.broadcast %cst : f32 to vector<4x10x10x4xf32>
    %c0 = arith.constant 0 : index
    %c0_0 = arith.constant 0 : index
    %c0_1 = arith.constant 0 : index
    %c0_2 = arith.constant 0 : index
    %1 = vector.load %arg9[%c0, %c0_0, %c0_1, %c0_2] : memref<4x10x10x4xf32, #tpu.memory_space<vmem>>, vector<4x10x10x4xf32>
    tpu.vector_store %arg9[%c0, %c0_0, %c0_1, %c0_2], %0 {strides = array<i32>} : memref<4x10x10x4xf32, #tpu.memory_space<vmem>>, vector<4x10x10x4xf32>,
    %c0_3 = arith.constant 0 : index
    %c0_4 = arith.constant 0 : index
    %c0_5 = arith.constant 0 : index
    %c0_6 = arith.constant 0 : index
    %c0_7 = arith.constant 0 : index
    %c0_8 = arith.constant 0 : index
    %2 = vector.load %arg2[%c0_3, %c0_4, %c0_5, %c0_6, %c0_7, %c0_8] : memref<1x8x2x2x8x4xf32, #tpu.memory_space<vmem>>, vector<1x8x1x1x8x4xf32>
    %3 = vector.shape_cast %2 : vector<1x8x1x1x8x4xf32> to vector<8x8x4xf32>
    %c0_9 = arith.constant 0 : index
    %c1 = arith.constant 1 : index
    %c1_10 = arith.constant 1 : index
    %c0_11 = arith.constant 0 : index
    %4 = vector.load %arg9[%c0_9, %c1, %c1_10, %c0_11] : memref<4x10x10x4xf32, #tpu.memory_space<vmem>>, vector<1x8x8x4xf32>
    %5 = vector.shape_cast %4 : vector<1x8x8x4xf32> to vector<8x8x4xf32>
    %6 = vector.shape_cast %3 : vector<8x8x4xf32> to vector<1x8x8x4xf32>
    tpu.vector_store %arg9[%c0_9, %c1, %c1_10, %c0_11], %6 {strides = array<i32>} : memref<4x10x10x4xf32, #tpu.memory_space<vmem>>, vector<1x8x8x4xf32>,
    %c0_12 = arith.constant 0 : index
    %c0_13 = arith.constant 0 : index
    %c0_14 = arith.constant 0 : index
    %c1_15 = arith.constant 1 : index
    %c0_16 = arith.constant 0 : index
    %c0_17 = arith.constant 0 : index
    %7 = vector.load %arg2[%c0_12, %c0_13, %c0_14, %c1_15, %c0_16, %c0_17] : memref<1x8x2x2x8x4xf32, #tpu.memory_space<vmem>>, vector<1x8x1x1x8x4xf32>
    %8 = vector.shape_cast %7 : vector<1x8x1x1x8x4xf32> to vector<8x8x4xf32>
    %c1_18 = arith.constant 1 : index
    %c1_19 = arith.constant 1 : index
    %c1_20 = arith.constant 1 : index
    %c0_21 = arith.constant 0 : index
    %9 = vector.load %arg9[%c1_18, %c1_19, %c1_20, %c0_21] : memref<4x10x10x4xf32, #tpu.memory_space<vmem>>, vector<1x8x8x4xf32>
    %10 = vector.shape_cast %9 : vector<1x8x8x4xf32> to vector<8x8x4xf32>
    %11 = vector.shape_cast %8 : vector<8x8x4xf32> to vector<1x8x8x4xf32>
    tpu.vector_store %arg9[%c1_18, %c1_19, %c1_20, %c0_21], %11 {strides = array<i32>} : memref<4x10x10x4xf32, #tpu.memory_space<vmem>>, vector<1x8x8x4xf32>,
    %c0_22 = arith.constant 0 : index
    %c0_23 = arith.constant 0 : index
    %c1_24 = arith.constant 1 : index
    %c0_25 = arith.constant 0 : index
    %c0_26 = arith.constant 0 : index
    %c0_27 = arith.constant 0 : index
    %12 = vector.load %arg2[%c0_22, %c0_23, %c1_24, %c0_25, %c0_26, %c0_27] : memref<1x8x2x2x8x4xf32, #tpu.memory_space<vmem>>, vector<1x8x1x1x8x4xf32>
    %13 = vector.shape_cast %12 : vector<1x8x1x1x8x4xf32> to vector<8x8x4xf32>
    %c2 = arith.constant 2 : index
    %c1_28 = arith.constant 1 : index
    %c1_29 = arith.constant 1 : index
    %c0_30 = arith.constant 0 : index
    %14 = vector.load %arg9[%c2, %c1_28, %c1_29, %c0_30] : memref<4x10x10x4xf32, #tpu.memory_space<vmem>>, vector<1x8x8x4xf32>
    %15 = vector.shape_cast %14 : vector<1x8x8x4xf32> to vector<8x8x4xf32>
    %16 = vector.shape_cast %13 : vector<8x8x4xf32> to vector<1x8x8x4xf32>
    tpu.vector_store %arg9[%c2, %c1_28, %c1_29, %c0_30], %16 {strides = array<i32>} : memref<4x10x10x4xf32, #tpu.memory_space<vmem>>, vector<1x8x8x4xf32>,
    %c0_31 = arith.constant 0 : index
    %c0_32 = arith.constant 0 : index
    %c1_33 = arith.constant 1 : index
    %c1_34 = arith.constant 1 : index
    %c0_35 = arith.constant 0 : index
    %c0_36 = arith.constant 0 : index
    %17 = vector.load %arg2[%c0_31, %c0_32, %c1_33, %c1_34, %c0_35, %c0_36] : memref<1x8x2x2x8x4xf32, #tpu.memory_space<vmem>>, vector<1x8x1x1x8x4xf32>
    %18 = vector.shape_cast %17 : vector<1x8x1x1x8x4xf32> to vector<8x8x4xf32>
    %c3 = arith.constant 3 : index
    %c1_37 = arith.constant 1 : index
    %c1_38 = arith.constant 1 : index
    %c0_39 = arith.constant 0 : index
    %19 = vector.load %arg9[%c3, %c1_37, %c1_38, %c0_39] : memref<4x10x10x4xf32, #tpu.memory_space<vmem>>, vector<1x8x8x4xf32>
    %20 = vector.shape_cast %19 : vector<1x8x8x4xf32> to vector<8x8x4xf32>
    %21 = vector.shape_cast %18 : vector<8x8x4xf32> to vector<1x8x8x4xf32>
    tpu.vector_store %arg9[%c3, %c1_37, %c1_38, %c0_39], %21 {strides = array<i32>} : memref<4x10x10x4xf32, #tpu.memory_space<vmem>>, vector<1x8x8x4xf32>,
    %22 = arith.addf %3, %8 : vector<8x8x4xf32>
    %23 = arith.addf %22, %13 : vector<8x8x4xf32>
    %24 = arith.addf %23, %18 : vector<8x8x4xf32>
    %cst_40 = arith.constant 5.000000e-01 : f32
    %25 = vector.broadcast %cst_40 : f32 to vector<8x8x4xf32>
    %26 = arith.mulf %25, %24 : vector<8x8x4xf32>
    %27 = arith.addf %3, %8 : vector<8x8x4xf32>
    %28 = arith.subf %27, %13 : vector<8x8x4xf32>
    %29 = arith.subf %28, %18 : vector<8x8x4xf32>
    %cst_41 = arith.constant 5.000000e-01 : f32
    %30 = vector.broadcast %cst_41 : f32 to vector<8x8x4xf32>
    %31 = arith.mulf %30, %29 : vector<8x8x4xf32>
    %32 = arith.subf %3, %8 : vector<8x8x4xf32>
    %33 = arith.addf %32, %13 : vector<8x8x4xf32>
    %34 = arith.subf %33, %18 : vector<8x8x4xf32>
    %cst_42 = arith.constant 5.000000e-01 : f32
    %35 = vector.broadcast %cst_42 : f32 to vector<8x8x4xf32>
    %36 = arith.mulf %35, %34 : vector<8x8x4xf32>
    %37 = arith.subf %3, %8 : vector<8x8x4xf32>
    %38 = arith.subf %37, %13 : vector<8x8x4xf32>
    %39 = arith.addf %38, %18 : vector<8x8x4xf32>
    %cst_43 = arith.constant 5.000000e-01 : f32
    %40 = vector.broadcast %cst_43 : f32 to vector<8x8x4xf32>
    %41 = arith.mulf %40, %39 : vector<8x8x4xf32>
    %c0_44 = arith.constant 0 : index
    %c0_45 = arith.constant 0 : index
    %c0_46 = arith.constant 0 : index
    %42 = vector.load %arg6[%c0_44, %c0_45, %c0_46] : memref<4x25x4xf32, #tpu.memory_space<vmem>>, vector<4x25x4xf32>
    %c0_47 = arith.constant 0 : index
    %c0_48 = arith.constant 0 : index
    %43 = vector.load %arg7[%c0_47, %c0_48] : memref<4x4xf32, #tpu.memory_space<vmem>>, vector<4x4xf32>
    %cst_49 = arith.constant 0.000000e+00 : f32
    %44 = vector.broadcast %cst_49 : f32 to vector<12x12x4xf32>
    %c0_50 = arith.constant 0 : index
    %c0_51 = arith.constant 0 : index
    %c0_52 = arith.constant 0 : index
    %45 = vector.load %arg10[%c0_50, %c0_51, %c0_52] : memref<12x12x4xf32, #tpu.memory_space<vmem>>, vector<12x12x4xf32>
    tpu.vector_store %arg10[%c0_50, %c0_51, %c0_52], %44 {strides = array<i32>} : memref<12x12x4xf32, #tpu.memory_space<vmem>>, vector<12x12x4xf32>,
    %c2_53 = arith.constant 2 : index
    %c2_54 = arith.constant 2 : index
    %c0_55 = arith.constant 0 : index
    %46 = vector.load %arg10[%c2_53, %c2_54, %c0_55] : memref<12x12x4xf32, #tpu.memory_space<vmem>>, vector<8x8x4xf32>
    tpu.vector_store %arg10[%c2_53, %c2_54, %c0_55], %26 {strides = array<i32>} : memref<12x12x4xf32, #tpu.memory_space<vmem>>, vector<8x8x4xf32>,
    %cst_56 = arith.constant 0.000000e+00 : f32
    %47 = vector.broadcast %cst_56 : f32 to vector<8x8x4xf32>
    %48 = vector.extract_strided_slice %42 {offsets = [0, 0, 0], sizes = [1, 1, 4], strides = [1, 1, 1]} : vector<4x25x4xf32> to vector<1x1x4xf32>
    %49 = vector.shape_cast %48 : vector<1x1x4xf32> to vector<1x4xf32>
    %c0_57 = arith.constant 0 : index
    %c0_58 = arith.constant 0 : index
    %c0_59 = arith.constant 0 : index
    %50 = vector.load %arg10[%c0_57, %c0_58, %c0_59] : memref<12x12x4xf32, #tpu.memory_space<vmem>>, vector<8x8x4xf32>
    %51 = vector.shape_cast %49 : vector<1x4xf32> to vector<1x1x4xf32>
    %52 = vector.broadcast %51 : vector<1x1x4xf32> to vector<8x8x4xf32>
    %53 = arith.mulf %50, %52 : vector<8x8x4xf32>
    %54 = arith.addf %47, %53 : vector<8x8x4xf32>
    %55 = vector.extract_strided_slice %42 {offsets = [0, 1, 0], sizes = [1, 1, 4], strides = [1, 1, 1]} : vector<4x25x4xf32> to vector<1x1x4xf32>
    %56 = vector.shape_cast %55 : vector<1x1x4xf32> to vector<1x4xf32>
    %c0_60 = arith.constant 0 : index
    %c1_61 = arith.constant 1 : index
    %c0_62 = arith.constant 0 : index
    %57 = vector.load %arg10[%c0_60, %c1_61, %c0_62] : memref<12x12x4xf32, #tpu.memory_space<vmem>>, vector<8x8x4xf32>
    %58 = vector.shape_cast %56 : vector<1x4xf32> to vector<1x1x4xf32>
    %59 = vector.broadcast %58 : vector<1x1x4xf32> to vector<8x8x4xf32>
    %60 = arith.mulf %57, %59 : vector<8x8x4xf32>
    %61 = arith.addf %54, %60 : vector<8x8x4xf32>
    %62 = vector.extract_strided_slice %42 {offsets = [0, 2, 0], sizes = [1, 1, 4], strides = [1, 1, 1]} : vector<4x25x4xf32> to vector<1x1x4xf32>
    %63 = vector.shape_cast %62 : vector<1x1x4xf32> to vector<1x4xf32>
    %c0_63 = arith.constant 0 : index
    %c2_64 = arith.constant 2 : index
    %c0_65 = arith.constant 0 : index
    %64 = vector.load %arg10[%c0_63, %c2_64, %c0_65] : memref<12x12x4xf32, #tpu.memory_space<vmem>>, vector<8x8x4xf32>
    %65 = vector.shape_cast %63 : vector<1x4xf32> to vector<1x1x4xf32>
    %66 = vector.broadcast %65 : vector<1x1x4xf32> to vector<8x8x4xf32>
    %67 = arith.mulf %64, %66 : vector<8x8x4xf32>
    %68 = arith.addf %61, %67 : vector<8x8x4xf32>
    %69 = vector.extract_strided_slice %42 {offsets = [0, 3, 0], sizes = [1, 1, 4], strides = [1, 1, 1]} : vector<4x25x4xf32> to vector<1x1x4xf32>
    %70 = vector.shape_cast %69 : vector<1x1x4xf32> to vector<1x4xf32>
    %c0_66 = arith.constant 0 : index
    %c3_67 = arith.constant 3 : index
    %c0_68 = arith.constant 0 : index
    %71 = vector.load %arg10[%c0_66, %c3_67, %c0_68] : memref<12x12x4xf32, #tpu.memory_space<vmem>>, vector<8x8x4xf32>
    %72 = vector.shape_cast %70 : vector<1x4xf32> to vector<1x1x4xf32>
    %73 = vector.broadcast %72 : vector<1x1x4xf32> to vector<8x8x4xf32>
    %74 = arith.mulf %71, %73 : vector<8x8x4xf32>
    %75 = arith.addf %68, %74 : vector<8x8x4xf32>
    %76 = vector.extract_strided_slice %42 {offsets = [0, 4, 0], sizes = [1, 1, 4], strides = [1, 1, 1]} : vector<4x25x4xf32> to vector<1x1x4xf32>
    %77 = vector.shape_cast %76 : vector<1x1x4xf32> to vector<1x4xf32>
    %c0_69 = arith.constant 0 : index
    %c4 = arith.constant 4 : index
    %c0_70 = arith.constant 0 : index
    %78 = vector.load %arg10[%c0_69, %c4, %c0_70] : memref<12x12x4xf32, #tpu.memory_space<vmem>>, vector<8x8x4xf32>
    %79 = vector.shape_cast %77 : vector<1x4xf32> to vector<1x1x4xf32>
    %80 = vector.broadcast %79 : vector<1x1x4xf32> to vector<8x8x4xf32>
    %81 = arith.mulf %78, %80 : vector<8x8x4xf32>
    %82 = arith.addf %75, %81 : vector<8x8x4xf32>
    %83 = vector.extract_strided_slice %42 {offsets = [0, 5, 0], sizes = [1, 1, 4], strides = [1, 1, 1]} : vector<4x25x4xf32> to vector<1x1x4xf32>
    %84 = vector.shape_cast %83 : vector<1x1x4xf32> to vector<1x4xf32>
    %c1_71 = arith.constant 1 : index
    %c0_72 = arith.constant 0 : index
    %c0_73 = arith.constant 0 : index
    %85 = vector.load %arg10[%c1_71, %c0_72, %c0_73] : memref<12x12x4xf32, #tpu.memory_space<vmem>>, vector<8x8x4xf32>
    %86 = vector.shape_cast %84 : vector<1x4xf32> to vector<1x1x4xf32>
    %87 = vector.broadcast %86 : vector<1x1x4xf32> to vector<8x8x4xf32>
    %88 = arith.mulf %85, %87 : vector<8x8x4xf32>
    %89 = arith.addf %82, %88 : vector<8x8x4xf32>
    %90 = vector.extract_strided_slice %42 {offsets = [0, 6, 0], sizes = [1, 1, 4], strides = [1, 1, 1]} : vector<4x25x4xf32> to vector<1x1x4xf32>
    %91 = vector.shape_cast %90 : vector<1x1x4xf32> to vector<1x4xf32>
    %c1_74 = arith.constant 1 : index
    %c1_75 = arith.constant 1 : index
    %c0_76 = arith.constant 0 : index
    %92 = vector.load %arg10[%c1_74, %c1_75, %c0_76] : memref<12x12x4xf32, #tpu.memory_space<vmem>>, vector<8x8x4xf32>
    %93 = vector.shape_cast %91 : vector<1x4xf32> to vector<1x1x4xf32>
    %94 = vector.broadcast %93 : vector<1x1x4xf32> to vector<8x8x4xf32>
    %95 = arith.mulf %92, %94 : vector<8x8x4xf32>
    %96 = arith.addf %89, %95 : vector<8x8x4xf32>
    %97 = vector.extract_strided_slice %42 {offsets = [0, 7, 0], sizes = [1, 1, 4], strides = [1, 1, 1]} : vector<4x25x4xf32> to vector<1x1x4xf32>
    %98 = vector.shape_cast %97 : vector<1x1x4xf32> to vector<1x4xf32>
    %c1_77 = arith.constant 1 : index
    %c2_78 = arith.constant 2 : index
    %c0_79 = arith.constant 0 : index
    %99 = vector.load %arg10[%c1_77, %c2_78, %c0_79] : memref<12x12x4xf32, #tpu.memory_space<vmem>>, vector<8x8x4xf32>
    %100 = vector.shape_cast %98 : vector<1x4xf32> to vector<1x1x4xf32>
    %101 = vector.broadcast %100 : vector<1x1x4xf32> to vector<8x8x4xf32>
    %102 = arith.mulf %99, %101 : vector<8x8x4xf32>
    %103 = arith.addf %96, %102 : vector<8x8x4xf32>
    %104 = vector.extract_strided_slice %42 {offsets = [0, 8, 0], sizes = [1, 1, 4], strides = [1, 1, 1]} : vector<4x25x4xf32> to vector<1x1x4xf32>
    %105 = vector.shape_cast %104 : vector<1x1x4xf32> to vector<1x4xf32>
    %c1_80 = arith.constant 1 : index
    %c3_81 = arith.constant 3 : index
    %c0_82 = arith.constant 0 : index
    %106 = vector.load %arg10[%c1_80, %c3_81, %c0_82] : memref<12x12x4xf32, #tpu.memory_space<vmem>>, vector<8x8x4xf32>
    %107 = vector.shape_cast %105 : vector<1x4xf32> to vector<1x1x4xf32>
    %108 = vector.broadcast %107 : vector<1x1x4xf32> to vector<8x8x4xf32>
    %109 = arith.mulf %106, %108 : vector<8x8x4xf32>
    %110 = arith.addf %103, %109 : vector<8x8x4xf32>
    %111 = vector.extract_strided_slice %42 {offsets = [0, 9, 0], sizes = [1, 1, 4], strides = [1, 1, 1]} : vector<4x25x4xf32> to vector<1x1x4xf32>
    %112 = vector.shape_cast %111 : vector<1x1x4xf32> to vector<1x4xf32>
    %c1_83 = arith.constant 1 : index
    %c4_84 = arith.constant 4 : index
    %c0_85 = arith.constant 0 : index
    %113 = vector.load %arg10[%c1_83, %c4_84, %c0_85] : memref<12x12x4xf32, #tpu.memory_space<vmem>>, vector<8x8x4xf32>
    %114 = vector.shape_cast %112 : vector<1x4xf32> to vector<1x1x4xf32>
    %115 = vector.broadcast %114 : vector<1x1x4xf32> to vector<8x8x4xf32>
    %116 = arith.mulf %113, %115 : vector<8x8x4xf32>
    %117 = arith.addf %110, %116 : vector<8x8x4xf32>
    %118 = vector.extract_strided_slice %42 {offsets = [0, 10, 0], sizes = [1, 1, 4], strides = [1, 1, 1]} : vector<4x25x4xf32> to vector<1x1x4xf32>
    %119 = vector.shape_cast %118 : vector<1x1x4xf32> to vector<1x4xf32>
    %c2_86 = arith.constant 2 : index
    %c0_87 = arith.constant 0 : index
    %c0_88 = arith.constant 0 : index
    %120 = vector.load %arg10[%c2_86, %c0_87, %c0_88] : memref<12x12x4xf32, #tpu.memory_space<vmem>>, vector<8x8x4xf32>
    %121 = vector.shape_cast %119 : vector<1x4xf32> to vector<1x1x4xf32>
    %122 = vector.broadcast %121 : vector<1x1x4xf32> to vector<8x8x4xf32>
    %123 = arith.mulf %120, %122 : vector<8x8x4xf32>
    %124 = arith.addf %117, %123 : vector<8x8x4xf32>
    %125 = vector.extract_strided_slice %42 {offsets = [0, 11, 0], sizes = [1, 1, 4], strides = [1, 1, 1]} : vector<4x25x4xf32> to vector<1x1x4xf32>
    %126 = vector.shape_cast %125 : vector<1x1x4xf32> to vector<1x4xf32>
    %c2_89 = arith.constant 2 : index
    %c1_90 = arith.constant 1 : index
    %c0_91 = arith.constant 0 : index
    %127 = vector.load %arg10[%c2_89, %c1_90, %c0_91] : memref<12x12x4xf32, #tpu.memory_space<vmem>>, vector<8x8x4xf32>
    %128 = vector.shape_cast %126 : vector<1x4xf32> to vector<1x1x4xf32>
    %129 = vector.broadcast %128 : vector<1x1x4xf32> to vector<8x8x4xf32>
    %130 = arith.mulf %127, %129 : vector<8x8x4xf32>
    %131 = arith.addf %124, %130 : vector<8x8x4xf32>
    %132 = vector.extract_strided_slice %42 {offsets = [0, 12, 0], sizes = [1, 1, 4], strides = [1, 1, 1]} : vector<4x25x4xf32> to vector<1x1x4xf32>
    %133 = vector.shape_cast %132 : vector<1x1x4xf32> to vector<1x4xf32>
    %c2_92 = arith.constant 2 : index
    %c2_93 = arith.constant 2 : index
    %c0_94 = arith.constant 0 : index
    %134 = vector.load %arg10[%c2_92, %c2_93, %c0_94] : memref<12x12x4xf32, #tpu.memory_space<vmem>>, vector<8x8x4xf32>
    %135 = vector.shape_cast %133 : vector<1x4xf32> to vector<1x1x4xf32>
    %136 = vector.broadcast %135 : vector<1x1x4xf32> to vector<8x8x4xf32>
    %137 = arith.mulf %134, %136 : vector<8x8x4xf32>
    %138 = arith.addf %131, %137 : vector<8x8x4xf32>
    %139 = vector.extract_strided_slice %42 {offsets = [0, 13, 0], sizes = [1, 1, 4], strides = [1, 1, 1]} : vector<4x25x4xf32> to vector<1x1x4xf32>
    %140 = vector.shape_cast %139 : vector<1x1x4xf32> to vector<1x4xf32>
    %c2_95 = arith.constant 2 : index
    %c3_96 = arith.constant 3 : index
    %c0_97 = arith.constant 0 : index
    %141 = vector.load %arg10[%c2_95, %c3_96, %c0_97] : memref<12x12x4xf32, #tpu.memory_space<vmem>>, vector<8x8x4xf32>
    %142 = vector.shape_cast %140 : vector<1x4xf32> to vector<1x1x4xf32>
    %143 = vector.broadcast %142 : vector<1x1x4xf32> to vector<8x8x4xf32>
    %144 = arith.mulf %141, %143 : vector<8x8x4xf32>
    %145 = arith.addf %138, %144 : vector<8x8x4xf32>
    %146 = vector.extract_strided_slice %42 {offsets = [0, 14, 0], sizes = [1, 1, 4], strides = [1, 1, 1]} : vector<4x25x4xf32> to vector<1x1x4xf32>
    %147 = vector.shape_cast %146 : vector<1x1x4xf32> to vector<1x4xf32>
    %c2_98 = arith.constant 2 : index
    %c4_99 = arith.constant 4 : index
    %c0_100 = arith.constant 0 : index
    %148 = vector.load %arg10[%c2_98, %c4_99, %c0_100] : memref<12x12x4xf32, #tpu.memory_space<vmem>>, vector<8x8x4xf32>
    %149 = vector.shape_cast %147 : vector<1x4xf32> to vector<1x1x4xf32>
    %150 = vector.broadcast %149 : vector<1x1x4xf32> to vector<8x8x4xf32>
    %151 = arith.mulf %148, %150 : vector<8x8x4xf32>
    %152 = arith.addf %145, %151 : vector<8x8x4xf32>
    %153 = vector.extract_strided_slice %42 {offsets = [0, 15, 0], sizes = [1, 1, 4], strides = [1, 1, 1]} : vector<4x25x4xf32> to vector<1x1x4xf32>
    %154 = vector.shape_cast %153 : vector<1x1x4xf32> to vector<1x4xf32>
    %c3_101 = arith.constant 3 : index
    %c0_102 = arith.constant 0 : index
    %c0_103 = arith.constant 0 : index
    %155 = vector.load %arg10[%c3_101, %c0_102, %c0_103] : memref<12x12x4xf32, #tpu.memory_space<vmem>>, vector<8x8x4xf32>
    %156 = vector.shape_cast %154 : vector<1x4xf32> to vector<1x1x4xf32>
    %157 = vector.broadcast %156 : vector<1x1x4xf32> to vector<8x8x4xf32>
    %158 = arith.mulf %155, %157 : vector<8x8x4xf32>
    %159 = arith.addf %152, %158 : vector<8x8x4xf32>
    %160 = vector.extract_strided_slice %42 {offsets = [0, 16, 0], sizes = [1, 1, 4], strides = [1, 1, 1]} : vector<4x25x4xf32> to vector<1x1x4xf32>
    %161 = vector.shape_cast %160 : vector<1x1x4xf32> to vector<1x4xf32>
    %c3_104 = arith.constant 3 : index
    %c1_105 = arith.constant 1 : index
    %c0_106 = arith.constant 0 : index
    %162 = vector.load %arg10[%c3_104, %c1_105, %c0_106] : memref<12x12x4xf32, #tpu.memory_space<vmem>>, vector<8x8x4xf32>
    %163 = vector.shape_cast %161 : vector<1x4xf32> to vector<1x1x4xf32>
    %164 = vector.broadcast %163 : vector<1x1x4xf32> to vector<8x8x4xf32>
    %165 = arith.mulf %162, %164 : vector<8x8x4xf32>
    %166 = arith.addf %159, %165 : vector<8x8x4xf32>
    %167 = vector.extract_strided_slice %42 {offsets = [0, 17, 0], sizes = [1, 1, 4], strides = [1, 1, 1]} : vector<4x25x4xf32> to vector<1x1x4xf32>
    %168 = vector.shape_cast %167 : vector<1x1x4xf32> to vector<1x4xf32>
    %c3_107 = arith.constant 3 : index
    %c2_108 = arith.constant 2 : index
    %c0_109 = arith.constant 0 : index
    %169 = vector.load %arg10[%c3_107, %c2_108, %c0_109] : memref<12x12x4xf32, #tpu.memory_space<vmem>>, vector<8x8x4xf32>
    %170 = vector.shape_cast %168 : vector<1x4xf32> to vector<1x1x4xf32>
    %171 = vector.broadcast %170 : vector<1x1x4xf32> to vector<8x8x4xf32>
    %172 = arith.mulf %169, %171 : vector<8x8x4xf32>
    %173 = arith.addf %166, %172 : vector<8x8x4xf32>
    %174 = vector.extract_strided_slice %42 {offsets = [0, 18, 0], sizes = [1, 1, 4], strides = [1, 1, 1]} : vector<4x25x4xf32> to vector<1x1x4xf32>
    %175 = vector.shape_cast %174 : vector<1x1x4xf32> to vector<1x4xf32>
    %c3_110 = arith.constant 3 : index
    %c3_111 = arith.constant 3 : index
    %c0_112 = arith.constant 0 : index
    %176 = vector.load %arg10[%c3_110, %c3_111, %c0_112] : memref<12x12x4xf32, #tpu.memory_space<vmem>>, vector<8x8x4xf32>
    %177 = vector.shape_cast %175 : vector<1x4xf32> to vector<1x1x4xf32>
    %178 = vector.broadcast %177 : vector<1x1x4xf32> to vector<8x8x4xf32>
    %179 = arith.mulf %176, %178 : vector<8x8x4xf32>
    %180 = arith.addf %173, %179 : vector<8x8x4xf32>
    %181 = vector.extract_strided_slice %42 {offsets = [0, 19, 0], sizes = [1, 1, 4], strides = [1, 1, 1]} : vector<4x25x4xf32> to vector<1x1x4xf32>
    %182 = vector.shape_cast %181 : vector<1x1x4xf32> to vector<1x4xf32>
    %c3_113 = arith.constant 3 : index
    %c4_114 = arith.constant 4 : index
    %c0_115 = arith.constant 0 : index
    %183 = vector.load %arg10[%c3_113, %c4_114, %c0_115] : memref<12x12x4xf32, #tpu.memory_space<vmem>>, vector<8x8x4xf32>
    %184 = vector.shape_cast %182 : vector<1x4xf32> to vector<1x1x4xf32>
    %185 = vector.broadcast %184 : vector<1x1x4xf32> to vector<8x8x4xf32>
    %186 = arith.mulf %183, %185 : vector<8x8x4xf32>
    %187 = arith.addf %180, %186 : vector<8x8x4xf32>
    %188 = vector.extract_strided_slice %42 {offsets = [0, 20, 0], sizes = [1, 1, 4], strides = [1, 1, 1]} : vector<4x25x4xf32> to vector<1x1x4xf32>
    %189 = vector.shape_cast %188 : vector<1x1x4xf32> to vector<1x4xf32>
    %c4_116 = arith.constant 4 : index
    %c0_117 = arith.constant 0 : index
    %c0_118 = arith.constant 0 : index
    %190 = vector.load %arg10[%c4_116, %c0_117, %c0_118] : memref<12x12x4xf32, #tpu.memory_space<vmem>>, vector<8x8x4xf32>
    %191 = vector.shape_cast %189 : vector<1x4xf32> to vector<1x1x4xf32>
    %192 = vector.broadcast %191 : vector<1x1x4xf32> to vector<8x8x4xf32>
    %193 = arith.mulf %190, %192 : vector<8x8x4xf32>
    %194 = arith.addf %187, %193 : vector<8x8x4xf32>
    %195 = vector.extract_strided_slice %42 {offsets = [0, 21, 0], sizes = [1, 1, 4], strides = [1, 1, 1]} : vector<4x25x4xf32> to vector<1x1x4xf32>
    %196 = vector.shape_cast %195 : vector<1x1x4xf32> to vector<1x4xf32>
    %c4_119 = arith.constant 4 : index
    %c1_120 = arith.constant 1 : index
    %c0_121 = arith.constant 0 : index
    %197 = vector.load %arg10[%c4_119, %c1_120, %c0_121] : memref<12x12x4xf32, #tpu.memory_space<vmem>>, vector<8x8x4xf32>
    %198 = vector.shape_cast %196 : vector<1x4xf32> to vector<1x1x4xf32>
    %199 = vector.broadcast %198 : vector<1x1x4xf32> to vector<8x8x4xf32>
    %200 = arith.mulf %197, %199 : vector<8x8x4xf32>
    %201 = arith.addf %194, %200 : vector<8x8x4xf32>
    %202 = vector.extract_strided_slice %42 {offsets = [0, 22, 0], sizes = [1, 1, 4], strides = [1, 1, 1]} : vector<4x25x4xf32> to vector<1x1x4xf32>
    %203 = vector.shape_cast %202 : vector<1x1x4xf32> to vector<1x4xf32>
    %c4_122 = arith.constant 4 : index
    %c2_123 = arith.constant 2 : index
    %c0_124 = arith.constant 0 : index
    %204 = vector.load %arg10[%c4_122, %c2_123, %c0_124] : memref<12x12x4xf32, #tpu.memory_space<vmem>>, vector<8x8x4xf32>
    %205 = vector.shape_cast %203 : vector<1x4xf32> to vector<1x1x4xf32>
    %206 = vector.broadcast %205 : vector<1x1x4xf32> to vector<8x8x4xf32>
    %207 = arith.mulf %204, %206 : vector<8x8x4xf32>
    %208 = arith.addf %201, %207 : vector<8x8x4xf32>
    %209 = vector.extract_strided_slice %42 {offsets = [0, 23, 0], sizes = [1, 1, 4], strides = [1, 1, 1]} : vector<4x25x4xf32> to vector<1x1x4xf32>
    %210 = vector.shape_cast %209 : vector<1x1x4xf32> to vector<1x4xf32>
    %c4_125 = arith.constant 4 : index
    %c3_126 = arith.constant 3 : index
    %c0_127 = arith.constant 0 : index
    %211 = vector.load %arg10[%c4_125, %c3_126, %c0_127] : memref<12x12x4xf32, #tpu.memory_space<vmem>>, vector<8x8x4xf32>
    %212 = vector.shape_cast %210 : vector<1x4xf32> to vector<1x1x4xf32>
    %213 = vector.broadcast %212 : vector<1x1x4xf32> to vector<8x8x4xf32>
    %214 = arith.mulf %211, %213 : vector<8x8x4xf32>
    %215 = arith.addf %208, %214 : vector<8x8x4xf32>
    %216 = vector.extract_strided_slice %42 {offsets = [0, 24, 0], sizes = [1, 1, 4], strides = [1, 1, 1]} : vector<4x25x4xf32> to vector<1x1x4xf32>
    %217 = vector.shape_cast %216 : vector<1x1x4xf32> to vector<1x4xf32>
    %c4_128 = arith.constant 4 : index
    %c4_129 = arith.constant 4 : index
    %c0_130 = arith.constant 0 : index
    %218 = vector.load %arg10[%c4_128, %c4_129, %c0_130] : memref<12x12x4xf32, #tpu.memory_space<vmem>>, vector<8x8x4xf32>
    %219 = vector.shape_cast %217 : vector<1x4xf32> to vector<1x1x4xf32>
    %220 = vector.broadcast %219 : vector<1x1x4xf32> to vector<8x8x4xf32>
    %221 = arith.mulf %218, %220 : vector<8x8x4xf32>
    %222 = arith.addf %215, %221 : vector<8x8x4xf32>
    %223 = vector.extract_strided_slice %43 {offsets = [0, 0], sizes = [1, 4], strides = [1, 1]} : vector<4x4xf32> to vector<1x4xf32>
    %224 = vector.shape_cast %223 : vector<1x4xf32> to vector<1x1x4xf32>
    %225 = vector.broadcast %224 : vector<1x1x4xf32> to vector<8x8x4xf32>
    %226 = arith.mulf %225, %222 : vector<8x8x4xf32>
    %c0_131 = arith.constant 0 : index
    %c0_132 = arith.constant 0 : index
    %c0_133 = arith.constant 0 : index
    %c0_134 = arith.constant 0 : index
    %227 = vector.load %arg11[%c0_131, %c0_132, %c0_133, %c0_134] : memref<4x8x8x4xf32, #tpu.memory_space<vmem>>, vector<1x8x8x4xf32>
    %228 = vector.shape_cast %227 : vector<1x8x8x4xf32> to vector<8x8x4xf32>
    %229 = vector.shape_cast %226 : vector<8x8x4xf32> to vector<1x8x8x4xf32>
    tpu.vector_store %arg11[%c0_131, %c0_132, %c0_133, %c0_134], %229 {strides = array<i32>} : memref<4x8x8x4xf32, #tpu.memory_space<vmem>>, vector<1x8x8x4xf32>,
    %c2_135 = arith.constant 2 : index
    %c2_136 = arith.constant 2 : index
    %c0_137 = arith.constant 0 : index
    %230 = vector.load %arg10[%c2_135, %c2_136, %c0_137] : memref<12x12x4xf32, #tpu.memory_space<vmem>>, vector<8x8x4xf32>
    tpu.vector_store %arg10[%c2_135, %c2_136, %c0_137], %31 {strides = array<i32>} : memref<12x12x4xf32, #tpu.memory_space<vmem>>, vector<8x8x4xf32>,
    %cst_138 = arith.constant 0.000000e+00 : f32
    %231 = vector.broadcast %cst_138 : f32 to vector<8x8x4xf32>
    %232 = vector.extract_strided_slice %42 {offsets = [1, 0, 0], sizes = [1, 1, 4], strides = [1, 1, 1]} : vector<4x25x4xf32> to vector<1x1x4xf32>
    %233 = vector.shape_cast %232 : vector<1x1x4xf32> to vector<1x4xf32>
    %c0_139 = arith.constant 0 : index
    %c0_140 = arith.constant 0 : index
    %c0_141 = arith.constant 0 : index
    %234 = vector.load %arg10[%c0_139, %c0_140, %c0_141] : memref<12x12x4xf32, #tpu.memory_space<vmem>>, vector<8x8x4xf32>
    %235 = vector.shape_cast %233 : vector<1x4xf32> to vector<1x1x4xf32>
    %236 = vector.broadcast %235 : vector<1x1x4xf32> to vector<8x8x4xf32>
    %237 = arith.mulf %234, %236 : vector<8x8x4xf32>
    %238 = arith.addf %231, %237 : vector<8x8x4xf32>
    %239 = vector.extract_strided_slice %42 {offsets = [1, 1, 0], sizes = [1, 1, 4], strides = [1, 1, 1]} : vector<4x25x4xf32> to vector<1x1x4xf32>
    %240 = vector.shape_cast %239 : vector<1x1x4xf32> to vector<1x4xf32>
    %c0_142 = arith.constant 0 : index
    %c1_143 = arith.constant 1 : index
    %c0_144 = arith.constant 0 : index
    %241 = vector.load %arg10[%c0_142, %c1_143, %c0_144] : memref<12x12x4xf32, #tpu.memory_space<vmem>>, vector<8x8x4xf32>
    %242 = vector.shape_cast %240 : vector<1x4xf32> to vector<1x1x4xf32>
    %243 = vector.broadcast %242 : vector<1x1x4xf32> to vector<8x8x4xf32>
    %244 = arith.mulf %241, %243 : vector<8x8x4xf32>
    %245 = arith.addf %238, %244 : vector<8x8x4xf32>
    %246 = vector.extract_strided_slice %42 {offsets = [1, 2, 0], sizes = [1, 1, 4], strides = [1, 1, 1]} : vector<4x25x4xf32> to vector<1x1x4xf32>
    %247 = vector.shape_cast %246 : vector<1x1x4xf32> to vector<1x4xf32>
    %c0_145 = arith.constant 0 : index
    %c2_146 = arith.constant 2 : index
    %c0_147 = arith.constant 0 : index
    %248 = vector.load %arg10[%c0_145, %c2_146, %c0_147] : memref<12x12x4xf32, #tpu.memory_space<vmem>>, vector<8x8x4xf32>
    %249 = vector.shape_cast %247 : vector<1x4xf32> to vector<1x1x4xf32>
    %250 = vector.broadcast %249 : vector<1x1x4xf32> to vector<8x8x4xf32>
    %251 = arith.mulf %248, %250 : vector<8x8x4xf32>
    %252 = arith.addf %245, %251 : vector<8x8x4xf32>
    %253 = vector.extract_strided_slice %42 {offsets = [1, 3, 0], sizes = [1, 1, 4], strides = [1, 1, 1]} : vector<4x25x4xf32> to vector<1x1x4xf32>
    %254 = vector.shape_cast %253 : vector<1x1x4xf32> to vector<1x4xf32>
    %c0_148 = arith.constant 0 : index
    %c3_149 = arith.constant 3 : index
    %c0_150 = arith.constant 0 : index
    %255 = vector.load %arg10[%c0_148, %c3_149, %c0_150] : memref<12x12x4xf32, #tpu.memory_space<vmem>>, vector<8x8x4xf32>
    %256 = vector.shape_cast %254 : vector<1x4xf32> to vector<1x1x4xf32>
    %257 = vector.broadcast %256 : vector<1x1x4xf32> to vector<8x8x4xf32>
    %258 = arith.mulf %255, %257 : vector<8x8x4xf32>
    %259 = arith.addf %252, %258 : vector<8x8x4xf32>
    %260 = vector.extract_strided_slice %42 {offsets = [1, 4, 0], sizes = [1, 1, 4], strides = [1, 1, 1]} : vector<4x25x4xf32> to vector<1x1x4xf32>
    %261 = vector.shape_cast %260 : vector<1x1x4xf32> to vector<1x4xf32>
    %c0_151 = arith.constant 0 : index
    %c4_152 = arith.constant 4 : index
    %c0_153 = arith.constant 0 : index
    %262 = vector.load %arg10[%c0_151, %c4_152, %c0_153] : memref<12x12x4xf32, #tpu.memory_space<vmem>>, vector<8x8x4xf32>
    %263 = vector.shape_cast %261 : vector<1x4xf32> to vector<1x1x4xf32>
    %264 = vector.broadcast %263 : vector<1x1x4xf32> to vector<8x8x4xf32>
    %265 = arith.mulf %262, %264 : vector<8x8x4xf32>
    %266 = arith.addf %259, %265 : vector<8x8x4xf32>
    %267 = vector.extract_strided_slice %42 {offsets = [1, 5, 0], sizes = [1, 1, 4], strides = [1, 1, 1]} : vector<4x25x4xf32> to vector<1x1x4xf32>
    %268 = vector.shape_cast %267 : vector<1x1x4xf32> to vector<1x4xf32>
    %c1_154 = arith.constant 1 : index
    %c0_155 = arith.constant 0 : index
    %c0_156 = arith.constant 0 : index
    %269 = vector.load %arg10[%c1_154, %c0_155, %c0_156] : memref<12x12x4xf32, #tpu.memory_space<vmem>>, vector<8x8x4xf32>
    %270 = vector.shape_cast %268 : vector<1x4xf32> to vector<1x1x4xf32>
    %271 = vector.broadcast %270 : vector<1x1x4xf32> to vector<8x8x4xf32>
    %272 = arith.mulf %269, %271 : vector<8x8x4xf32>
    %273 = arith.addf %266, %272 : vector<8x8x4xf32>
    %274 = vector.extract_strided_slice %42 {offsets = [1, 6, 0], sizes = [1, 1, 4], strides = [1, 1, 1]} : vector<4x25x4xf32> to vector<1x1x4xf32>
    %275 = vector.shape_cast %274 : vector<1x1x4xf32> to vector<1x4xf32>
    %c1_157 = arith.constant 1 : index
    %c1_158 = arith.constant 1 : index
    %c0_159 = arith.constant 0 : index
    %276 = vector.load %arg10[%c1_157, %c1_158, %c0_159] : memref<12x12x4xf32, #tpu.memory_space<vmem>>, vector<8x8x4xf32>
    %277 = vector.shape_cast %275 : vector<1x4xf32> to vector<1x1x4xf32>
    %278 = vector.broadcast %277 : vector<1x1x4xf32> to vector<8x8x4xf32>
    %279 = arith.mulf %276, %278 : vector<8x8x4xf32>
    %280 = arith.addf %273, %279 : vector<8x8x4xf32>
    %281 = vector.extract_strided_slice %42 {offsets = [1, 7, 0], sizes = [1, 1, 4], strides = [1, 1, 1]} : vector<4x25x4xf32> to vector<1x1x4xf32>
    %282 = vector.shape_cast %281 : vector<1x1x4xf32> to vector<1x4xf32>
    %c1_160 = arith.constant 1 : index
    %c2_161 = arith.constant 2 : index
    %c0_162 = arith.constant 0 : index
    %283 = vector.load %arg10[%c1_160, %c2_161, %c0_162] : memref<12x12x4xf32, #tpu.memory_space<vmem>>, vector<8x8x4xf32>
    %284 = vector.shape_cast %282 : vector<1x4xf32> to vector<1x1x4xf32>
    %285 = vector.broadcast %284 : vector<1x1x4xf32> to vector<8x8x4xf32>
    %286 = arith.mulf %283, %285 : vector<8x8x4xf32>
    %287 = arith.addf %280, %286 : vector<8x8x4xf32>
    %288 = vector.extract_strided_slice %42 {offsets = [1, 8, 0], sizes = [1, 1, 4], strides = [1, 1, 1]} : vector<4x25x4xf32> to vector<1x1x4xf32>
    %289 = vector.shape_cast %288 : vector<1x1x4xf32> to vector<1x4xf32>
    %c1_163 = arith.constant 1 : index
    %c3_164 = arith.constant 3 : index
    %c0_165 = arith.constant 0 : index
    %290 = vector.load %arg10[%c1_163, %c3_164, %c0_165] : memref<12x12x4xf32, #tpu.memory_space<vmem>>, vector<8x8x4xf32>
    %291 = vector.shape_cast %289 : vector<1x4xf32> to vector<1x1x4xf32>
    %292 = vector.broadcast %291 : vector<1x1x4xf32> to vector<8x8x4xf32>
    %293 = arith.mulf %290, %292 : vector<8x8x4xf32>
    %294 = arith.addf %287, %293 : vector<8x8x4xf32>
    %295 = vector.extract_strided_slice %42 {offsets = [1, 9, 0], sizes = [1, 1, 4], strides = [1, 1, 1]} : vector<4x25x4xf32> to vector<1x1x4xf32>
    %296 = vector.shape_cast %295 : vector<1x1x4xf32> to vector<1x4xf32>
    %c1_166 = arith.constant 1 : index
    %c4_167 = arith.constant 4 : index
    %c0_168 = arith.constant 0 : index
    %297 = vector.load %arg10[%c1_166, %c4_167, %c0_168] : memref<12x12x4xf32, #tpu.memory_space<vmem>>, vector<8x8x4xf32>
    %298 = vector.shape_cast %296 : vector<1x4xf32> to vector<1x1x4xf32>
    %299 = vector.broadcast %298 : vector<1x1x4xf32> to vector<8x8x4xf32>
    %300 = arith.mulf %297, %299 : vector<8x8x4xf32>
    %301 = arith.addf %294, %300 : vector<8x8x4xf32>
    %302 = vector.extract_strided_slice %42 {offsets = [1, 10, 0], sizes = [1, 1, 4], strides = [1, 1, 1]} : vector<4x25x4xf32> to vector<1x1x4xf32>
    %303 = vector.shape_cast %302 : vector<1x1x4xf32> to vector<1x4xf32>
    %c2_169 = arith.constant 2 : index
    %c0_170 = arith.constant 0 : index
    %c0_171 = arith.constant 0 : index
    %304 = vector.load %arg10[%c2_169, %c0_170, %c0_171] : memref<12x12x4xf32, #tpu.memory_space<vmem>>, vector<8x8x4xf32>
    %305 = vector.shape_cast %303 : vector<1x4xf32> to vector<1x1x4xf32>
    %306 = vector.broadcast %305 : vector<1x1x4xf32> to vector<8x8x4xf32>
    %307 = arith.mulf %304, %306 : vector<8x8x4xf32>
    %308 = arith.addf %301, %307 : vector<8x8x4xf32>
    %309 = vector.extract_strided_slice %42 {offsets = [1, 11, 0], sizes = [1, 1, 4], strides = [1, 1, 1]} : vector<4x25x4xf32> to vector<1x1x4xf32>
    %310 = vector.shape_cast %309 : vector<1x1x4xf32> to vector<1x4xf32>
    %c2_172 = arith.constant 2 : index
    %c1_173 = arith.constant 1 : index
    %c0_174 = arith.constant 0 : index
    %311 = vector.load %arg10[%c2_172, %c1_173, %c0_174] : memref<12x12x4xf32, #tpu.memory_space<vmem>>, vector<8x8x4xf32>
    %312 = vector.shape_cast %310 : vector<1x4xf32> to vector<1x1x4xf32>
    %313 = vector.broadcast %312 : vector<1x1x4xf32> to vector<8x8x4xf32>
    %314 = arith.mulf %311, %313 : vector<8x8x4xf32>
    %315 = arith.addf %308, %314 : vector<8x8x4xf32>
    %316 = vector.extract_strided_slice %42 {offsets = [1, 12, 0], sizes = [1, 1, 4], strides = [1, 1, 1]} : vector<4x25x4xf32> to vector<1x1x4xf32>
    %317 = vector.shape_cast %316 : vector<1x1x4xf32> to vector<1x4xf32>
    %c2_175 = arith.constant 2 : index
    %c2_176 = arith.constant 2 : index
    %c0_177 = arith.constant 0 : index
    %318 = vector.load %arg10[%c2_175, %c2_176, %c0_177] : memref<12x12x4xf32, #tpu.memory_space<vmem>>, vector<8x8x4xf32>
    %319 = vector.shape_cast %317 : vector<1x4xf32> to vector<1x1x4xf32>
    %320 = vector.broadcast %319 : vector<1x1x4xf32> to vector<8x8x4xf32>
    %321 = arith.mulf %318, %320 : vector<8x8x4xf32>
    %322 = arith.addf %315, %321 : vector<8x8x4xf32>
    %323 = vector.extract_strided_slice %42 {offsets = [1, 13, 0], sizes = [1, 1, 4], strides = [1, 1, 1]} : vector<4x25x4xf32> to vector<1x1x4xf32>
    %324 = vector.shape_cast %323 : vector<1x1x4xf32> to vector<1x4xf32>
    %c2_178 = arith.constant 2 : index
    %c3_179 = arith.constant 3 : index
    %c0_180 = arith.constant 0 : index
    %325 = vector.load %arg10[%c2_178, %c3_179, %c0_180] : memref<12x12x4xf32, #tpu.memory_space<vmem>>, vector<8x8x4xf32>
    %326 = vector.shape_cast %324 : vector<1x4xf32> to vector<1x1x4xf32>
    %327 = vector.broadcast %326 : vector<1x1x4xf32> to vector<8x8x4xf32>
    %328 = arith.mulf %325, %327 : vector<8x8x4xf32>
    %329 = arith.addf %322, %328 : vector<8x8x4xf32>
    %330 = vector.extract_strided_slice %42 {offsets = [1, 14, 0], sizes = [1, 1, 4], strides = [1, 1, 1]} : vector<4x25x4xf32> to vector<1x1x4xf32>
    %331 = vector.shape_cast %330 : vector<1x1x4xf32> to vector<1x4xf32>
    %c2_181 = arith.constant 2 : index
    %c4_182 = arith.constant 4 : index
    %c0_183 = arith.constant 0 : index
    %332 = vector.load %arg10[%c2_181, %c4_182, %c0_183] : memref<12x12x4xf32, #tpu.memory_space<vmem>>, vector<8x8x4xf32>
    %333 = vector.shape_cast %331 : vector<1x4xf32> to vector<1x1x4xf32>
    %334 = vector.broadcast %333 : vector<1x1x4xf32> to vector<8x8x4xf32>
    %335 = arith.mulf %332, %334 : vector<8x8x4xf32>
    %336 = arith.addf %329, %335 : vector<8x8x4xf32>
    %337 = vector.extract_strided_slice %42 {offsets = [1, 15, 0], sizes = [1, 1, 4], strides = [1, 1, 1]} : vector<4x25x4xf32> to vector<1x1x4xf32>
    %338 = vector.shape_cast %337 : vector<1x1x4xf32> to vector<1x4xf32>
    %c3_184 = arith.constant 3 : index
    %c0_185 = arith.constant 0 : index
    %c0_186 = arith.constant 0 : index
    %339 = vector.load %arg10[%c3_184, %c0_185, %c0_186] : memref<12x12x4xf32, #tpu.memory_space<vmem>>, vector<8x8x4xf32>
    %340 = vector.shape_cast %338 : vector<1x4xf32> to vector<1x1x4xf32>
    %341 = vector.broadcast %340 : vector<1x1x4xf32> to vector<8x8x4xf32>
    %342 = arith.mulf %339, %341 : vector<8x8x4xf32>
    %343 = arith.addf %336, %342 : vector<8x8x4xf32>
    %344 = vector.extract_strided_slice %42 {offsets = [1, 16, 0], sizes = [1, 1, 4], strides = [1, 1, 1]} : vector<4x25x4xf32> to vector<1x1x4xf32>
    %345 = vector.shape_cast %344 : vector<1x1x4xf32> to vector<1x4xf32>
    %c3_187 = arith.constant 3 : index
    %c1_188 = arith.constant 1 : index
    %c0_189 = arith.constant 0 : index
    %346 = vector.load %arg10[%c3_187, %c1_188, %c0_189] : memref<12x12x4xf32, #tpu.memory_space<vmem>>, vector<8x8x4xf32>
    %347 = vector.shape_cast %345 : vector<1x4xf32> to vector<1x1x4xf32>
    %348 = vector.broadcast %347 : vector<1x1x4xf32> to vector<8x8x4xf32>
    %349 = arith.mulf %346, %348 : vector<8x8x4xf32>
    %350 = arith.addf %343, %349 : vector<8x8x4xf32>
    %351 = vector.extract_strided_slice %42 {offsets = [1, 17, 0], sizes = [1, 1, 4], strides = [1, 1, 1]} : vector<4x25x4xf32> to vector<1x1x4xf32>
    %352 = vector.shape_cast %351 : vector<1x1x4xf32> to vector<1x4xf32>
    %c3_190 = arith.constant 3 : index
    %c2_191 = arith.constant 2 : index
    %c0_192 = arith.constant 0 : index
    %353 = vector.load %arg10[%c3_190, %c2_191, %c0_192] : memref<12x12x4xf32, #tpu.memory_space<vmem>>, vector<8x8x4xf32>
    %354 = vector.shape_cast %352 : vector<1x4xf32> to vector<1x1x4xf32>
    %355 = vector.broadcast %354 : vector<1x1x4xf32> to vector<8x8x4xf32>
    %356 = arith.mulf %353, %355 : vector<8x8x4xf32>
    %357 = arith.addf %350, %356 : vector<8x8x4xf32>
    %358 = vector.extract_strided_slice %42 {offsets = [1, 18, 0], sizes = [1, 1, 4], strides = [1, 1, 1]} : vector<4x25x4xf32> to vector<1x1x4xf32>
    %359 = vector.shape_cast %358 : vector<1x1x4xf32> to vector<1x4xf32>
    %c3_193 = arith.constant 3 : index
    %c3_194 = arith.constant 3 : index
    %c0_195 = arith.constant 0 : index
    %360 = vector.load %arg10[%c3_193, %c3_194, %c0_195] : memref<12x12x4xf32, #tpu.memory_space<vmem>>, vector<8x8x4xf32>
    %361 = vector.shape_cast %359 : vector<1x4xf32> to vector<1x1x4xf32>
    %362 = vector.broadcast %361 : vector<1x1x4xf32> to vector<8x8x4xf32>
    %363 = arith.mulf %360, %362 : vector<8x8x4xf32>
    %364 = arith.addf %357, %363 : vector<8x8x4xf32>
    %365 = vector.extract_strided_slice %42 {offsets = [1, 19, 0], sizes = [1, 1, 4], strides = [1, 1, 1]} : vector<4x25x4xf32> to vector<1x1x4xf32>
    %366 = vector.shape_cast %365 : vector<1x1x4xf32> to vector<1x4xf32>
    %c3_196 = arith.constant 3 : index
    %c4_197 = arith.constant 4 : index
    %c0_198 = arith.constant 0 : index
    %367 = vector.load %arg10[%c3_196, %c4_197, %c0_198] : memref<12x12x4xf32, #tpu.memory_space<vmem>>, vector<8x8x4xf32>
    %368 = vector.shape_cast %366 : vector<1x4xf32> to vector<1x1x4xf32>
    %369 = vector.broadcast %368 : vector<1x1x4xf32> to vector<8x8x4xf32>
    %370 = arith.mulf %367, %369 : vector<8x8x4xf32>
    %371 = arith.addf %364, %370 : vector<8x8x4xf32>
    %372 = vector.extract_strided_slice %42 {offsets = [1, 20, 0], sizes = [1, 1, 4], strides = [1, 1, 1]} : vector<4x25x4xf32> to vector<1x1x4xf32>
    %373 = vector.shape_cast %372 : vector<1x1x4xf32> to vector<1x4xf32>
    %c4_199 = arith.constant 4 : index
    %c0_200 = arith.constant 0 : index
    %c0_201 = arith.constant 0 : index
    %374 = vector.load %arg10[%c4_199, %c0_200, %c0_201] : memref<12x12x4xf32, #tpu.memory_space<vmem>>, vector<8x8x4xf32>
    %375 = vector.shape_cast %373 : vector<1x4xf32> to vector<1x1x4xf32>
    %376 = vector.broadcast %375 : vector<1x1x4xf32> to vector<8x8x4xf32>
    %377 = arith.mulf %374, %376 : vector<8x8x4xf32>
    %378 = arith.addf %371, %377 : vector<8x8x4xf32>
    %379 = vector.extract_strided_slice %42 {offsets = [1, 21, 0], sizes = [1, 1, 4], strides = [1, 1, 1]} : vector<4x25x4xf32> to vector<1x1x4xf32>
    %380 = vector.shape_cast %379 : vector<1x1x4xf32> to vector<1x4xf32>
    %c4_202 = arith.constant 4 : index
    %c1_203 = arith.constant 1 : index
    %c0_204 = arith.constant 0 : index
    %381 = vector.load %arg10[%c4_202, %c1_203, %c0_204] : memref<12x12x4xf32, #tpu.memory_space<vmem>>, vector<8x8x4xf32>
    %382 = vector.shape_cast %380 : vector<1x4xf32> to vector<1x1x4xf32>
    %383 = vector.broadcast %382 : vector<1x1x4xf32> to vector<8x8x4xf32>
    %384 = arith.mulf %381, %383 : vector<8x8x4xf32>
    %385 = arith.addf %378, %384 : vector<8x8x4xf32>
    %386 = vector.extract_strided_slice %42 {offsets = [1, 22, 0], sizes = [1, 1, 4], strides = [1, 1, 1]} : vector<4x25x4xf32> to vector<1x1x4xf32>
    %387 = vector.shape_cast %386 : vector<1x1x4xf32> to vector<1x4xf32>
    %c4_205 = arith.constant 4 : index
    %c2_206 = arith.constant 2 : index
    %c0_207 = arith.constant 0 : index
    %388 = vector.load %arg10[%c4_205, %c2_206, %c0_207] : memref<12x12x4xf32, #tpu.memory_space<vmem>>, vector<8x8x4xf32>
    %389 = vector.shape_cast %387 : vector<1x4xf32> to vector<1x1x4xf32>
    %390 = vector.broadcast %389 : vector<1x1x4xf32> to vector<8x8x4xf32>
    %391 = arith.mulf %388, %390 : vector<8x8x4xf32>
    %392 = arith.addf %385, %391 : vector<8x8x4xf32>
    %393 = vector.extract_strided_slice %42 {offsets = [1, 23, 0], sizes = [1, 1, 4], strides = [1, 1, 1]} : vector<4x25x4xf32> to vector<1x1x4xf32>
    %394 = vector.shape_cast %393 : vector<1x1x4xf32> to vector<1x4xf32>
    %c4_208 = arith.constant 4 : index
    %c3_209 = arith.constant 3 : index
    %c0_210 = arith.constant 0 : index
    %395 = vector.load %arg10[%c4_208, %c3_209, %c0_210] : memref<12x12x4xf32, #tpu.memory_space<vmem>>, vector<8x8x4xf32>
    %396 = vector.shape_cast %394 : vector<1x4xf32> to vector<1x1x4xf32>
    %397 = vector.broadcast %396 : vector<1x1x4xf32> to vector<8x8x4xf32>
    %398 = arith.mulf %395, %397 : vector<8x8x4xf32>
    %399 = arith.addf %392, %398 : vector<8x8x4xf32>
    %400 = vector.extract_strided_slice %42 {offsets = [1, 24, 0], sizes = [1, 1, 4], strides = [1, 1, 1]} : vector<4x25x4xf32> to vector<1x1x4xf32>
    %401 = vector.shape_cast %400 : vector<1x1x4xf32> to vector<1x4xf32>
    %c4_211 = arith.constant 4 : index
    %c4_212 = arith.constant 4 : index
    %c0_213 = arith.constant 0 : index
    %402 = vector.load %arg10[%c4_211, %c4_212, %c0_213] : memref<12x12x4xf32, #tpu.memory_space<vmem>>, vector<8x8x4xf32>
    %403 = vector.shape_cast %401 : vector<1x4xf32> to vector<1x1x4xf32>
    %404 = vector.broadcast %403 : vector<1x1x4xf32> to vector<8x8x4xf32>
    %405 = arith.mulf %402, %404 : vector<8x8x4xf32>
    %406 = arith.addf %399, %405 : vector<8x8x4xf32>
    %407 = vector.extract_strided_slice %43 {offsets = [1, 0], sizes = [1, 4], strides = [1, 1]} : vector<4x4xf32> to vector<1x4xf32>
    %408 = vector.shape_cast %407 : vector<1x4xf32> to vector<1x1x4xf32>
    %409 = vector.broadcast %408 : vector<1x1x4xf32> to vector<8x8x4xf32>
    %410 = arith.mulf %409, %406 : vector<8x8x4xf32>
    %c1_214 = arith.constant 1 : index
    %c0_215 = arith.constant 0 : index
    %c0_216 = arith.constant 0 : index
    %c0_217 = arith.constant 0 : index
    %411 = vector.load %arg11[%c1_214, %c0_215, %c0_216, %c0_217] : memref<4x8x8x4xf32, #tpu.memory_space<vmem>>, vector<1x8x8x4xf32>
    %412 = vector.shape_cast %411 : vector<1x8x8x4xf32> to vector<8x8x4xf32>
    %413 = vector.shape_cast %410 : vector<8x8x4xf32> to vector<1x8x8x4xf32>
    tpu.vector_store %arg11[%c1_214, %c0_215, %c0_216, %c0_217], %413 {strides = array<i32>} : memref<4x8x8x4xf32, #tpu.memory_space<vmem>>, vector<1x8x8x4xf32>,
    %c2_218 = arith.constant 2 : index
    %c2_219 = arith.constant 2 : index
    %c0_220 = arith.constant 0 : index
    %414 = vector.load %arg10[%c2_218, %c2_219, %c0_220] : memref<12x12x4xf32, #tpu.memory_space<vmem>>, vector<8x8x4xf32>
    tpu.vector_store %arg10[%c2_218, %c2_219, %c0_220], %36 {strides = array<i32>} : memref<12x12x4xf32, #tpu.memory_space<vmem>>, vector<8x8x4xf32>,
    %cst_221 = arith.constant 0.000000e+00 : f32
    %415 = vector.broadcast %cst_221 : f32 to vector<8x8x4xf32>
    %416 = vector.extract_strided_slice %42 {offsets = [2, 0, 0], sizes = [1, 1, 4], strides = [1, 1, 1]} : vector<4x25x4xf32> to vector<1x1x4xf32>
    %417 = vector.shape_cast %416 : vector<1x1x4xf32> to vector<1x4xf32>
    %c0_222 = arith.constant 0 : index
    %c0_223 = arith.constant 0 : index
    %c0_224 = arith.constant 0 : index
    %418 = vector.load %arg10[%c0_222, %c0_223, %c0_224] : memref<12x12x4xf32, #tpu.memory_space<vmem>>, vector<8x8x4xf32>
    %419 = vector.shape_cast %417 : vector<1x4xf32> to vector<1x1x4xf32>
    %420 = vector.broadcast %419 : vector<1x1x4xf32> to vector<8x8x4xf32>
    %421 = arith.mulf %418, %420 : vector<8x8x4xf32>
    %422 = arith.addf %415, %421 : vector<8x8x4xf32>
    %423 = vector.extract_strided_slice %42 {offsets = [2, 1, 0], sizes = [1, 1, 4], strides = [1, 1, 1]} : vector<4x25x4xf32> to vector<1x1x4xf32>
    %424 = vector.shape_cast %423 : vector<1x1x4xf32> to vector<1x4xf32>
    %c0_225 = arith.constant 0 : index
    %c1_226 = arith.constant 1 : index
    %c0_227 = arith.constant 0 : index
    %425 = vector.load %arg10[%c0_225, %c1_226, %c0_227] : memref<12x12x4xf32, #tpu.memory_space<vmem>>, vector<8x8x4xf32>
    %426 = vector.shape_cast %424 : vector<1x4xf32> to vector<1x1x4xf32>
    %427 = vector.broadcast %426 : vector<1x1x4xf32> to vector<8x8x4xf32>
    %428 = arith.mulf %425, %427 : vector<8x8x4xf32>
    %429 = arith.addf %422, %428 : vector<8x8x4xf32>
    %430 = vector.extract_strided_slice %42 {offsets = [2, 2, 0], sizes = [1, 1, 4], strides = [1, 1, 1]} : vector<4x25x4xf32> to vector<1x1x4xf32>
    %431 = vector.shape_cast %430 : vector<1x1x4xf32> to vector<1x4xf32>
    %c0_228 = arith.constant 0 : index
    %c2_229 = arith.constant 2 : index
    %c0_230 = arith.constant 0 : index
    %432 = vector.load %arg10[%c0_228, %c2_229, %c0_230] : memref<12x12x4xf32, #tpu.memory_space<vmem>>, vector<8x8x4xf32>
    %433 = vector.shape_cast %431 : vector<1x4xf32> to vector<1x1x4xf32>
    %434 = vector.broadcast %433 : vector<1x1x4xf32> to vector<8x8x4xf32>
    %435 = arith.mulf %432, %434 : vector<8x8x4xf32>
    %436 = arith.addf %429, %435 : vector<8x8x4xf32>
    %437 = vector.extract_strided_slice %42 {offsets = [2, 3, 0], sizes = [1, 1, 4], strides = [1, 1, 1]} : vector<4x25x4xf32> to vector<1x1x4xf32>
    %438 = vector.shape_cast %437 : vector<1x1x4xf32> to vector<1x4xf32>
    %c0_231 = arith.constant 0 : index
    %c3_232 = arith.constant 3 : index
    %c0_233 = arith.constant 0 : index
    %439 = vector.load %arg10[%c0_231, %c3_232, %c0_233] : memref<12x12x4xf32, #tpu.memory_space<vmem>>, vector<8x8x4xf32>
    %440 = vector.shape_cast %438 : vector<1x4xf32> to vector<1x1x4xf32>
    %441 = vector.broadcast %440 : vector<1x1x4xf32> to vector<8x8x4xf32>
    %442 = arith.mulf %439, %441 : vector<8x8x4xf32>
    %443 = arith.addf %436, %442 : vector<8x8x4xf32>
    %444 = vector.extract_strided_slice %42 {offsets = [2, 4, 0], sizes = [1, 1, 4], strides = [1, 1, 1]} : vector<4x25x4xf32> to vector<1x1x4xf32>
    %445 = vector.shape_cast %444 : vector<1x1x4xf32> to vector<1x4xf32>
    %c0_234 = arith.constant 0 : index
    %c4_235 = arith.constant 4 : index
    %c0_236 = arith.constant 0 : index
    %446 = vector.load %arg10[%c0_234, %c4_235, %c0_236] : memref<12x12x4xf32, #tpu.memory_space<vmem>>, vector<8x8x4xf32>
    %447 = vector.shape_cast %445 : vector<1x4xf32> to vector<1x1x4xf32>
    %448 = vector.broadcast %447 : vector<1x1x4xf32> to vector<8x8x4xf32>
    %449 = arith.mulf %446, %448 : vector<8x8x4xf32>
    %450 = arith.addf %443, %449 : vector<8x8x4xf32>
    %451 = vector.extract_strided_slice %42 {offsets = [2, 5, 0], sizes = [1, 1, 4], strides = [1, 1, 1]} : vector<4x25x4xf32> to vector<1x1x4xf32>
    %452 = vector.shape_cast %451 : vector<1x1x4xf32> to vector<1x4xf32>
    %c1_237 = arith.constant 1 : index
    %c0_238 = arith.constant 0 : index
    %c0_239 = arith.constant 0 : index
    %453 = vector.load %arg10[%c1_237, %c0_238, %c0_239] : memref<12x12x4xf32, #tpu.memory_space<vmem>>, vector<8x8x4xf32>
    %454 = vector.shape_cast %452 : vector<1x4xf32> to vector<1x1x4xf32>
    %455 = vector.broadcast %454 : vector<1x1x4xf32> to vector<8x8x4xf32>
    %456 = arith.mulf %453, %455 : vector<8x8x4xf32>
    %457 = arith.addf %450, %456 : vector<8x8x4xf32>
    %458 = vector.extract_strided_slice %42 {offsets = [2, 6, 0], sizes = [1, 1, 4], strides = [1, 1, 1]} : vector<4x25x4xf32> to vector<1x1x4xf32>
    %459 = vector.shape_cast %458 : vector<1x1x4xf32> to vector<1x4xf32>
    %c1_240 = arith.constant 1 : index
    %c1_241 = arith.constant 1 : index
    %c0_242 = arith.constant 0 : index
    %460 = vector.load %arg10[%c1_240, %c1_241, %c0_242] : memref<12x12x4xf32, #tpu.memory_space<vmem>>, vector<8x8x4xf32>
    %461 = vector.shape_cast %459 : vector<1x4xf32> to vector<1x1x4xf32>
    %462 = vector.broadcast %461 : vector<1x1x4xf32> to vector<8x8x4xf32>
    %463 = arith.mulf %460, %462 : vector<8x8x4xf32>
    %464 = arith.addf %457, %463 : vector<8x8x4xf32>
    %465 = vector.extract_strided_slice %42 {offsets = [2, 7, 0], sizes = [1, 1, 4], strides = [1, 1, 1]} : vector<4x25x4xf32> to vector<1x1x4xf32>
    %466 = vector.shape_cast %465 : vector<1x1x4xf32> to vector<1x4xf32>
    %c1_243 = arith.constant 1 : index
    %c2_244 = arith.constant 2 : index
    %c0_245 = arith.constant 0 : index
    %467 = vector.load %arg10[%c1_243, %c2_244, %c0_245] : memref<12x12x4xf32, #tpu.memory_space<vmem>>, vector<8x8x4xf32>
    %468 = vector.shape_cast %466 : vector<1x4xf32> to vector<1x1x4xf32>
    %469 = vector.broadcast %468 : vector<1x1x4xf32> to vector<8x8x4xf32>
    %470 = arith.mulf %467, %469 : vector<8x8x4xf32>
    %471 = arith.addf %464, %470 : vector<8x8x4xf32>
    %472 = vector.extract_strided_slice %42 {offsets = [2, 8, 0], sizes = [1, 1, 4], strides = [1, 1, 1]} : vector<4x25x4xf32> to vector<1x1x4xf32>
    %473 = vector.shape_cast %472 : vector<1x1x4xf32> to vector<1x4xf32>
    %c1_246 = arith.constant 1 : index
    %c3_247 = arith.constant 3 : index
    %c0_248 = arith.constant 0 : index
    %474 = vector.load %arg10[%c1_246, %c3_247, %c0_248] : memref<12x12x4xf32, #tpu.memory_space<vmem>>, vector<8x8x4xf32>
    %475 = vector.shape_cast %473 : vector<1x4xf32> to vector<1x1x4xf32>
    %476 = vector.broadcast %475 : vector<1x1x4xf32> to vector<8x8x4xf32>
    %477 = arith.mulf %474, %476 : vector<8x8x4xf32>
    %478 = arith.addf %471, %477 : vector<8x8x4xf32>
    %479 = vector.extract_strided_slice %42 {offsets = [2, 9, 0], sizes = [1, 1, 4], strides = [1, 1, 1]} : vector<4x25x4xf32> to vector<1x1x4xf32>
    %480 = vector.shape_cast %479 : vector<1x1x4xf32> to vector<1x4xf32>
    %c1_249 = arith.constant 1 : index
    %c4_250 = arith.constant 4 : index
    %c0_251 = arith.constant 0 : index
    %481 = vector.load %arg10[%c1_249, %c4_250, %c0_251] : memref<12x12x4xf32, #tpu.memory_space<vmem>>, vector<8x8x4xf32>
    %482 = vector.shape_cast %480 : vector<1x4xf32> to vector<1x1x4xf32>
    %483 = vector.broadcast %482 : vector<1x1x4xf32> to vector<8x8x4xf32>
    %484 = arith.mulf %481, %483 : vector<8x8x4xf32>
    %485 = arith.addf %478, %484 : vector<8x8x4xf32>
    %486 = vector.extract_strided_slice %42 {offsets = [2, 10, 0], sizes = [1, 1, 4], strides = [1, 1, 1]} : vector<4x25x4xf32> to vector<1x1x4xf32>
    %487 = vector.shape_cast %486 : vector<1x1x4xf32> to vector<1x4xf32>
    %c2_252 = arith.constant 2 : index
    %c0_253 = arith.constant 0 : index
    %c0_254 = arith.constant 0 : index
    %488 = vector.load %arg10[%c2_252, %c0_253, %c0_254] : memref<12x12x4xf32, #tpu.memory_space<vmem>>, vector<8x8x4xf32>
    %489 = vector.shape_cast %487 : vector<1x4xf32> to vector<1x1x4xf32>
    %490 = vector.broadcast %489 : vector<1x1x4xf32> to vector<8x8x4xf32>
    %491 = arith.mulf %488, %490 : vector<8x8x4xf32>
    %492 = arith.addf %485, %491 : vector<8x8x4xf32>
    %493 = vector.extract_strided_slice %42 {offsets = [2, 11, 0], sizes = [1, 1, 4], strides = [1, 1, 1]} : vector<4x25x4xf32> to vector<1x1x4xf32>
    %494 = vector.shape_cast %493 : vector<1x1x4xf32> to vector<1x4xf32>
    %c2_255 = arith.constant 2 : index
    %c1_256 = arith.constant 1 : index
    %c0_257 = arith.constant 0 : index
    %495 = vector.load %arg10[%c2_255, %c1_256, %c0_257] : memref<12x12x4xf32, #tpu.memory_space<vmem>>, vector<8x8x4xf32>
    %496 = vector.shape_cast %494 : vector<1x4xf32> to vector<1x1x4xf32>
    %497 = vector.broadcast %496 : vector<1x1x4xf32> to vector<8x8x4xf32>
    %498 = arith.mulf %495, %497 : vector<8x8x4xf32>
    %499 = arith.addf %492, %498 : vector<8x8x4xf32>
    %500 = vector.extract_strided_slice %42 {offsets = [2, 12, 0], sizes = [1, 1, 4], strides = [1, 1, 1]} : vector<4x25x4xf32> to vector<1x1x4xf32>
    %501 = vector.shape_cast %500 : vector<1x1x4xf32> to vector<1x4xf32>
    %c2_258 = arith.constant 2 : index
    %c2_259 = arith.constant 2 : index
    %c0_260 = arith.constant 0 : index
    %502 = vector.load %arg10[%c2_258, %c2_259, %c0_260] : memref<12x12x4xf32, #tpu.memory_space<vmem>>, vector<8x8x4xf32>
    %503 = vector.shape_cast %501 : vector<1x4xf32> to vector<1x1x4xf32>
    %504 = vector.broadcast %503 : vector<1x1x4xf32> to vector<8x8x4xf32>
    %505 = arith.mulf %502, %504 : vector<8x8x4xf32>
    %506 = arith.addf %499, %505 : vector<8x8x4xf32>
    %507 = vector.extract_strided_slice %42 {offsets = [2, 13, 0], sizes = [1, 1, 4], strides = [1, 1, 1]} : vector<4x25x4xf32> to vector<1x1x4xf32>
    %508 = vector.shape_cast %507 : vector<1x1x4xf32> to vector<1x4xf32>
    %c2_261 = arith.constant 2 : index
    %c3_262 = arith.constant 3 : index
    %c0_263 = arith.constant 0 : index
    %509 = vector.load %arg10[%c2_261, %c3_262, %c0_263] : memref<12x12x4xf32, #tpu.memory_space<vmem>>, vector<8x8x4xf32>
    %510 = vector.shape_cast %508 : vector<1x4xf32> to vector<1x1x4xf32>
    %511 = vector.broadcast %510 : vector<1x1x4xf32> to vector<8x8x4xf32>
    %512 = arith.mulf %509, %511 : vector<8x8x4xf32>
    %513 = arith.addf %506, %512 : vector<8x8x4xf32>
    %514 = vector.extract_strided_slice %42 {offsets = [2, 14, 0], sizes = [1, 1, 4], strides = [1, 1, 1]} : vector<4x25x4xf32> to vector<1x1x4xf32>
    %515 = vector.shape_cast %514 : vector<1x1x4xf32> to vector<1x4xf32>
    %c2_264 = arith.constant 2 : index
    %c4_265 = arith.constant 4 : index
    %c0_266 = arith.constant 0 : index
    %516 = vector.load %arg10[%c2_264, %c4_265, %c0_266] : memref<12x12x4xf32, #tpu.memory_space<vmem>>, vector<8x8x4xf32>
    %517 = vector.shape_cast %515 : vector<1x4xf32> to vector<1x1x4xf32>
    %518 = vector.broadcast %517 : vector<1x1x4xf32> to vector<8x8x4xf32>
    %519 = arith.mulf %516, %518 : vector<8x8x4xf32>
    %520 = arith.addf %513, %519 : vector<8x8x4xf32>
    %521 = vector.extract_strided_slice %42 {offsets = [2, 15, 0], sizes = [1, 1, 4], strides = [1, 1, 1]} : vector<4x25x4xf32> to vector<1x1x4xf32>
    %522 = vector.shape_cast %521 : vector<1x1x4xf32> to vector<1x4xf32>
    %c3_267 = arith.constant 3 : index
    %c0_268 = arith.constant 0 : index
    %c0_269 = arith.constant 0 : index
    %523 = vector.load %arg10[%c3_267, %c0_268, %c0_269] : memref<12x12x4xf32, #tpu.memory_space<vmem>>, vector<8x8x4xf32>
    %524 = vector.shape_cast %522 : vector<1x4xf32> to vector<1x1x4xf32>
    %525 = vector.broadcast %524 : vector<1x1x4xf32> to vector<8x8x4xf32>
    %526 = arith.mulf %523, %525 : vector<8x8x4xf32>
    %527 = arith.addf %520, %526 : vector<8x8x4xf32>
    %528 = vector.extract_strided_slice %42 {offsets = [2, 16, 0], sizes = [1, 1, 4], strides = [1, 1, 1]} : vector<4x25x4xf32> to vector<1x1x4xf32>
    %529 = vector.shape_cast %528 : vector<1x1x4xf32> to vector<1x4xf32>
    %c3_270 = arith.constant 3 : index
    %c1_271 = arith.constant 1 : index
    %c0_272 = arith.constant 0 : index
    %530 = vector.load %arg10[%c3_270, %c1_271, %c0_272] : memref<12x12x4xf32, #tpu.memory_space<vmem>>, vector<8x8x4xf32>
    %531 = vector.shape_cast %529 : vector<1x4xf32> to vector<1x1x4xf32>
    %532 = vector.broadcast %531 : vector<1x1x4xf32> to vector<8x8x4xf32>
    %533 = arith.mulf %530, %532 : vector<8x8x4xf32>
    %534 = arith.addf %527, %533 : vector<8x8x4xf32>
    %535 = vector.extract_strided_slice %42 {offsets = [2, 17, 0], sizes = [1, 1, 4], strides = [1, 1, 1]} : vector<4x25x4xf32> to vector<1x1x4xf32>
    %536 = vector.shape_cast %535 : vector<1x1x4xf32> to vector<1x4xf32>
    %c3_273 = arith.constant 3 : index
    %c2_274 = arith.constant 2 : index
    %c0_275 = arith.constant 0 : index
    %537 = vector.load %arg10[%c3_273, %c2_274, %c0_275] : memref<12x12x4xf32, #tpu.memory_space<vmem>>, vector<8x8x4xf32>
    %538 = vector.shape_cast %536 : vector<1x4xf32> to vector<1x1x4xf32>
    %539 = vector.broadcast %538 : vector<1x1x4xf32> to vector<8x8x4xf32>
    %540 = arith.mulf %537, %539 : vector<8x8x4xf32>
    %541 = arith.addf %534, %540 : vector<8x8x4xf32>
    %542 = vector.extract_strided_slice %42 {offsets = [2, 18, 0], sizes = [1, 1, 4], strides = [1, 1, 1]} : vector<4x25x4xf32> to vector<1x1x4xf32>
    %543 = vector.shape_cast %542 : vector<1x1x4xf32> to vector<1x4xf32>
    %c3_276 = arith.constant 3 : index
    %c3_277 = arith.constant 3 : index
    %c0_278 = arith.constant 0 : index
    %544 = vector.load %arg10[%c3_276, %c3_277, %c0_278] : memref<12x12x4xf32, #tpu.memory_space<vmem>>, vector<8x8x4xf32>
    %545 = vector.shape_cast %543 : vector<1x4xf32> to vector<1x1x4xf32>
    %546 = vector.broadcast %545 : vector<1x1x4xf32> to vector<8x8x4xf32>
    %547 = arith.mulf %544, %546 : vector<8x8x4xf32>
    %548 = arith.addf %541, %547 : vector<8x8x4xf32>
    %549 = vector.extract_strided_slice %42 {offsets = [2, 19, 0], sizes = [1, 1, 4], strides = [1, 1, 1]} : vector<4x25x4xf32> to vector<1x1x4xf32>
    %550 = vector.shape_cast %549 : vector<1x1x4xf32> to vector<1x4xf32>
    %c3_279 = arith.constant 3 : index
    %c4_280 = arith.constant 4 : index
    %c0_281 = arith.constant 0 : index
    %551 = vector.load %arg10[%c3_279, %c4_280, %c0_281] : memref<12x12x4xf32, #tpu.memory_space<vmem>>, vector<8x8x4xf32>
    %552 = vector.shape_cast %550 : vector<1x4xf32> to vector<1x1x4xf32>
    %553 = vector.broadcast %552 : vector<1x1x4xf32> to vector<8x8x4xf32>
    %554 = arith.mulf %551, %553 : vector<8x8x4xf32>
    %555 = arith.addf %548, %554 : vector<8x8x4xf32>
    %556 = vector.extract_strided_slice %42 {offsets = [2, 20, 0], sizes = [1, 1, 4], strides = [1, 1, 1]} : vector<4x25x4xf32> to vector<1x1x4xf32>
    %557 = vector.shape_cast %556 : vector<1x1x4xf32> to vector<1x4xf32>
    %c4_282 = arith.constant 4 : index
    %c0_283 = arith.constant 0 : index
    %c0_284 = arith.constant 0 : index
    %558 = vector.load %arg10[%c4_282, %c0_283, %c0_284] : memref<12x12x4xf32, #tpu.memory_space<vmem>>, vector<8x8x4xf32>
    %559 = vector.shape_cast %557 : vector<1x4xf32> to vector<1x1x4xf32>
    %560 = vector.broadcast %559 : vector<1x1x4xf32> to vector<8x8x4xf32>
    %561 = arith.mulf %558, %560 : vector<8x8x4xf32>
    %562 = arith.addf %555, %561 : vector<8x8x4xf32>
    %563 = vector.extract_strided_slice %42 {offsets = [2, 21, 0], sizes = [1, 1, 4], strides = [1, 1, 1]} : vector<4x25x4xf32> to vector<1x1x4xf32>
    %564 = vector.shape_cast %563 : vector<1x1x4xf32> to vector<1x4xf32>
    %c4_285 = arith.constant 4 : index
    %c1_286 = arith.constant 1 : index
    %c0_287 = arith.constant 0 : index
    %565 = vector.load %arg10[%c4_285, %c1_286, %c0_287] : memref<12x12x4xf32, #tpu.memory_space<vmem>>, vector<8x8x4xf32>
    %566 = vector.shape_cast %564 : vector<1x4xf32> to vector<1x1x4xf32>
    %567 = vector.broadcast %566 : vector<1x1x4xf32> to vector<8x8x4xf32>
    %568 = arith.mulf %565, %567 : vector<8x8x4xf32>
    %569 = arith.addf %562, %568 : vector<8x8x4xf32>
    %570 = vector.extract_strided_slice %42 {offsets = [2, 22, 0], sizes = [1, 1, 4], strides = [1, 1, 1]} : vector<4x25x4xf32> to vector<1x1x4xf32>
    %571 = vector.shape_cast %570 : vector<1x1x4xf32> to vector<1x4xf32>
    %c4_288 = arith.constant 4 : index
    %c2_289 = arith.constant 2 : index
    %c0_290 = arith.constant 0 : index
    %572 = vector.load %arg10[%c4_288, %c2_289, %c0_290] : memref<12x12x4xf32, #tpu.memory_space<vmem>>, vector<8x8x4xf32>
    %573 = vector.shape_cast %571 : vector<1x4xf32> to vector<1x1x4xf32>
    %574 = vector.broadcast %573 : vector<1x1x4xf32> to vector<8x8x4xf32>
    %575 = arith.mulf %572, %574 : vector<8x8x4xf32>
    %576 = arith.addf %569, %575 : vector<8x8x4xf32>
    %577 = vector.extract_strided_slice %42 {offsets = [2, 23, 0], sizes = [1, 1, 4], strides = [1, 1, 1]} : vector<4x25x4xf32> to vector<1x1x4xf32>
    %578 = vector.shape_cast %577 : vector<1x1x4xf32> to vector<1x4xf32>
    %c4_291 = arith.constant 4 : index
    %c3_292 = arith.constant 3 : index
    %c0_293 = arith.constant 0 : index
    %579 = vector.load %arg10[%c4_291, %c3_292, %c0_293] : memref<12x12x4xf32, #tpu.memory_space<vmem>>, vector<8x8x4xf32>
    %580 = vector.shape_cast %578 : vector<1x4xf32> to vector<1x1x4xf32>
    %581 = vector.broadcast %580 : vector<1x1x4xf32> to vector<8x8x4xf32>
    %582 = arith.mulf %579, %581 : vector<8x8x4xf32>
    %583 = arith.addf %576, %582 : vector<8x8x4xf32>
    %584 = vector.extract_strided_slice %42 {offsets = [2, 24, 0], sizes = [1, 1, 4], strides = [1, 1, 1]} : vector<4x25x4xf32> to vector<1x1x4xf32>
    %585 = vector.shape_cast %584 : vector<1x1x4xf32> to vector<1x4xf32>
    %c4_294 = arith.constant 4 : index
    %c4_295 = arith.constant 4 : index
    %c0_296 = arith.constant 0 : index
    %586 = vector.load %arg10[%c4_294, %c4_295, %c0_296] : memref<12x12x4xf32, #tpu.memory_space<vmem>>, vector<8x8x4xf32>
    %587 = vector.shape_cast %585 : vector<1x4xf32> to vector<1x1x4xf32>
    %588 = vector.broadcast %587 : vector<1x1x4xf32> to vector<8x8x4xf32>
    %589 = arith.mulf %586, %588 : vector<8x8x4xf32>
    %590 = arith.addf %583, %589 : vector<8x8x4xf32>
    %591 = vector.extract_strided_slice %43 {offsets = [2, 0], sizes = [1, 4], strides = [1, 1]} : vector<4x4xf32> to vector<1x4xf32>
    %592 = vector.shape_cast %591 : vector<1x4xf32> to vector<1x1x4xf32>
    %593 = vector.broadcast %592 : vector<1x1x4xf32> to vector<8x8x4xf32>
    %594 = arith.mulf %593, %590 : vector<8x8x4xf32>
    %c2_297 = arith.constant 2 : index
    %c0_298 = arith.constant 0 : index
    %c0_299 = arith.constant 0 : index
    %c0_300 = arith.constant 0 : index
    %595 = vector.load %arg11[%c2_297, %c0_298, %c0_299, %c0_300] : memref<4x8x8x4xf32, #tpu.memory_space<vmem>>, vector<1x8x8x4xf32>
    %596 = vector.shape_cast %595 : vector<1x8x8x4xf32> to vector<8x8x4xf32>
    %597 = vector.shape_cast %594 : vector<8x8x4xf32> to vector<1x8x8x4xf32>
    tpu.vector_store %arg11[%c2_297, %c0_298, %c0_299, %c0_300], %597 {strides = array<i32>} : memref<4x8x8x4xf32, #tpu.memory_space<vmem>>, vector<1x8x8x4xf32>,
    %c2_301 = arith.constant 2 : index
    %c2_302 = arith.constant 2 : index
    %c0_303 = arith.constant 0 : index
    %598 = vector.load %arg10[%c2_301, %c2_302, %c0_303] : memref<12x12x4xf32, #tpu.memory_space<vmem>>, vector<8x8x4xf32>
    tpu.vector_store %arg10[%c2_301, %c2_302, %c0_303], %41 {strides = array<i32>} : memref<12x12x4xf32, #tpu.memory_space<vmem>>, vector<8x8x4xf32>,
    %cst_304 = arith.constant 0.000000e+00 : f32
    %599 = vector.broadcast %cst_304 : f32 to vector<8x8x4xf32>
    %600 = vector.extract_strided_slice %42 {offsets = [3, 0, 0], sizes = [1, 1, 4], strides = [1, 1, 1]} : vector<4x25x4xf32> to vector<1x1x4xf32>
    %601 = vector.shape_cast %600 : vector<1x1x4xf32> to vector<1x4xf32>
    %c0_305 = arith.constant 0 : index
    %c0_306 = arith.constant 0 : index
    %c0_307 = arith.constant 0 : index
    %602 = vector.load %arg10[%c0_305, %c0_306, %c0_307] : memref<12x12x4xf32, #tpu.memory_space<vmem>>, vector<8x8x4xf32>
    %603 = vector.shape_cast %601 : vector<1x4xf32> to vector<1x1x4xf32>
    %604 = vector.broadcast %603 : vector<1x1x4xf32> to vector<8x8x4xf32>
    %605 = arith.mulf %602, %604 : vector<8x8x4xf32>
    %606 = arith.addf %599, %605 : vector<8x8x4xf32>
    %607 = vector.extract_strided_slice %42 {offsets = [3, 1, 0], sizes = [1, 1, 4], strides = [1, 1, 1]} : vector<4x25x4xf32> to vector<1x1x4xf32>
    %608 = vector.shape_cast %607 : vector<1x1x4xf32> to vector<1x4xf32>
    %c0_308 = arith.constant 0 : index
    %c1_309 = arith.constant 1 : index
    %c0_310 = arith.constant 0 : index
    %609 = vector.load %arg10[%c0_308, %c1_309, %c0_310] : memref<12x12x4xf32, #tpu.memory_space<vmem>>, vector<8x8x4xf32>
    %610 = vector.shape_cast %608 : vector<1x4xf32> to vector<1x1x4xf32>
    %611 = vector.broadcast %610 : vector<1x1x4xf32> to vector<8x8x4xf32>
    %612 = arith.mulf %609, %611 : vector<8x8x4xf32>
    %613 = arith.addf %606, %612 : vector<8x8x4xf32>
    %614 = vector.extract_strided_slice %42 {offsets = [3, 2, 0], sizes = [1, 1, 4], strides = [1, 1, 1]} : vector<4x25x4xf32> to vector<1x1x4xf32>
    %615 = vector.shape_cast %614 : vector<1x1x4xf32> to vector<1x4xf32>
    %c0_311 = arith.constant 0 : index
    %c2_312 = arith.constant 2 : index
    %c0_313 = arith.constant 0 : index
    %616 = vector.load %arg10[%c0_311, %c2_312, %c0_313] : memref<12x12x4xf32, #tpu.memory_space<vmem>>, vector<8x8x4xf32>
    %617 = vector.shape_cast %615 : vector<1x4xf32> to vector<1x1x4xf32>
    %618 = vector.broadcast %617 : vector<1x1x4xf32> to vector<8x8x4xf32>
    %619 = arith.mulf %616, %618 : vector<8x8x4xf32>
    %620 = arith.addf %613, %619 : vector<8x8x4xf32>
    %621 = vector.extract_strided_slice %42 {offsets = [3, 3, 0], sizes = [1, 1, 4], strides = [1, 1, 1]} : vector<4x25x4xf32> to vector<1x1x4xf32>
    %622 = vector.shape_cast %621 : vector<1x1x4xf32> to vector<1x4xf32>
    %c0_314 = arith.constant 0 : index
    %c3_315 = arith.constant 3 : index
    %c0_316 = arith.constant 0 : index
    %623 = vector.load %arg10[%c0_314, %c3_315, %c0_316] : memref<12x12x4xf32, #tpu.memory_space<vmem>>, vector<8x8x4xf32>
    %624 = vector.shape_cast %622 : vector<1x4xf32> to vector<1x1x4xf32>
    %625 = vector.broadcast %624 : vector<1x1x4xf32> to vector<8x8x4xf32>
    %626 = arith.mulf %623, %625 : vector<8x8x4xf32>
    %627 = arith.addf %620, %626 : vector<8x8x4xf32>
    %628 = vector.extract_strided_slice %42 {offsets = [3, 4, 0], sizes = [1, 1, 4], strides = [1, 1, 1]} : vector<4x25x4xf32> to vector<1x1x4xf32>
    %629 = vector.shape_cast %628 : vector<1x1x4xf32> to vector<1x4xf32>
    %c0_317 = arith.constant 0 : index
    %c4_318 = arith.constant 4 : index
    %c0_319 = arith.constant 0 : index
    %630 = vector.load %arg10[%c0_317, %c4_318, %c0_319] : memref<12x12x4xf32, #tpu.memory_space<vmem>>, vector<8x8x4xf32>
    %631 = vector.shape_cast %629 : vector<1x4xf32> to vector<1x1x4xf32>
    %632 = vector.broadcast %631 : vector<1x1x4xf32> to vector<8x8x4xf32>
    %633 = arith.mulf %630, %632 : vector<8x8x4xf32>
    %634 = arith.addf %627, %633 : vector<8x8x4xf32>
    %635 = vector.extract_strided_slice %42 {offsets = [3, 5, 0], sizes = [1, 1, 4], strides = [1, 1, 1]} : vector<4x25x4xf32> to vector<1x1x4xf32>
    %636 = vector.shape_cast %635 : vector<1x1x4xf32> to vector<1x4xf32>
    %c1_320 = arith.constant 1 : index
    %c0_321 = arith.constant 0 : index
    %c0_322 = arith.constant 0 : index
    %637 = vector.load %arg10[%c1_320, %c0_321, %c0_322] : memref<12x12x4xf32, #tpu.memory_space<vmem>>, vector<8x8x4xf32>
    %638 = vector.shape_cast %636 : vector<1x4xf32> to vector<1x1x4xf32>
    %639 = vector.broadcast %638 : vector<1x1x4xf32> to vector<8x8x4xf32>
    %640 = arith.mulf %637, %639 : vector<8x8x4xf32>
    %641 = arith.addf %634, %640 : vector<8x8x4xf32>
    %642 = vector.extract_strided_slice %42 {offsets = [3, 6, 0], sizes = [1, 1, 4], strides = [1, 1, 1]} : vector<4x25x4xf32> to vector<1x1x4xf32>
    %643 = vector.shape_cast %642 : vector<1x1x4xf32> to vector<1x4xf32>
    %c1_323 = arith.constant 1 : index
    %c1_324 = arith.constant 1 : index
    %c0_325 = arith.constant 0 : index
    %644 = vector.load %arg10[%c1_323, %c1_324, %c0_325] : memref<12x12x4xf32, #tpu.memory_space<vmem>>, vector<8x8x4xf32>
    %645 = vector.shape_cast %643 : vector<1x4xf32> to vector<1x1x4xf32>
    %646 = vector.broadcast %645 : vector<1x1x4xf32> to vector<8x8x4xf32>
    %647 = arith.mulf %644, %646 : vector<8x8x4xf32>
    %648 = arith.addf %641, %647 : vector<8x8x4xf32>
    %649 = vector.extract_strided_slice %42 {offsets = [3, 7, 0], sizes = [1, 1, 4], strides = [1, 1, 1]} : vector<4x25x4xf32> to vector<1x1x4xf32>
    %650 = vector.shape_cast %649 : vector<1x1x4xf32> to vector<1x4xf32>
    %c1_326 = arith.constant 1 : index
    %c2_327 = arith.constant 2 : index
    %c0_328 = arith.constant 0 : index
    %651 = vector.load %arg10[%c1_326, %c2_327, %c0_328] : memref<12x12x4xf32, #tpu.memory_space<vmem>>, vector<8x8x4xf32>
    %652 = vector.shape_cast %650 : vector<1x4xf32> to vector<1x1x4xf32>
    %653 = vector.broadcast %652 : vector<1x1x4xf32> to vector<8x8x4xf32>
    %654 = arith.mulf %651, %653 : vector<8x8x4xf32>
    %655 = arith.addf %648, %654 : vector<8x8x4xf32>
    %656 = vector.extract_strided_slice %42 {offsets = [3, 8, 0], sizes = [1, 1, 4], strides = [1, 1, 1]} : vector<4x25x4xf32> to vector<1x1x4xf32>
    %657 = vector.shape_cast %656 : vector<1x1x4xf32> to vector<1x4xf32>
    %c1_329 = arith.constant 1 : index
    %c3_330 = arith.constant 3 : index
    %c0_331 = arith.constant 0 : index
    %658 = vector.load %arg10[%c1_329, %c3_330, %c0_331] : memref<12x12x4xf32, #tpu.memory_space<vmem>>, vector<8x8x4xf32>
    %659 = vector.shape_cast %657 : vector<1x4xf32> to vector<1x1x4xf32>
    %660 = vector.broadcast %659 : vector<1x1x4xf32> to vector<8x8x4xf32>
    %661 = arith.mulf %658, %660 : vector<8x8x4xf32>
    %662 = arith.addf %655, %661 : vector<8x8x4xf32>
    %663 = vector.extract_strided_slice %42 {offsets = [3, 9, 0], sizes = [1, 1, 4], strides = [1, 1, 1]} : vector<4x25x4xf32> to vector<1x1x4xf32>
    %664 = vector.shape_cast %663 : vector<1x1x4xf32> to vector<1x4xf32>
    %c1_332 = arith.constant 1 : index
    %c4_333 = arith.constant 4 : index
    %c0_334 = arith.constant 0 : index
    %665 = vector.load %arg10[%c1_332, %c4_333, %c0_334] : memref<12x12x4xf32, #tpu.memory_space<vmem>>, vector<8x8x4xf32>
    %666 = vector.shape_cast %664 : vector<1x4xf32> to vector<1x1x4xf32>
    %667 = vector.broadcast %666 : vector<1x1x4xf32> to vector<8x8x4xf32>
    %668 = arith.mulf %665, %667 : vector<8x8x4xf32>
    %669 = arith.addf %662, %668 : vector<8x8x4xf32>
    %670 = vector.extract_strided_slice %42 {offsets = [3, 10, 0], sizes = [1, 1, 4], strides = [1, 1, 1]} : vector<4x25x4xf32> to vector<1x1x4xf32>
    %671 = vector.shape_cast %670 : vector<1x1x4xf32> to vector<1x4xf32>
    %c2_335 = arith.constant 2 : index
    %c0_336 = arith.constant 0 : index
    %c0_337 = arith.constant 0 : index
    %672 = vector.load %arg10[%c2_335, %c0_336, %c0_337] : memref<12x12x4xf32, #tpu.memory_space<vmem>>, vector<8x8x4xf32>
    %673 = vector.shape_cast %671 : vector<1x4xf32> to vector<1x1x4xf32>
    %674 = vector.broadcast %673 : vector<1x1x4xf32> to vector<8x8x4xf32>
    %675 = arith.mulf %672, %674 : vector<8x8x4xf32>
    %676 = arith.addf %669, %675 : vector<8x8x4xf32>
    %677 = vector.extract_strided_slice %42 {offsets = [3, 11, 0], sizes = [1, 1, 4], strides = [1, 1, 1]} : vector<4x25x4xf32> to vector<1x1x4xf32>
    %678 = vector.shape_cast %677 : vector<1x1x4xf32> to vector<1x4xf32>
    %c2_338 = arith.constant 2 : index
    %c1_339 = arith.constant 1 : index
    %c0_340 = arith.constant 0 : index
    %679 = vector.load %arg10[%c2_338, %c1_339, %c0_340] : memref<12x12x4xf32, #tpu.memory_space<vmem>>, vector<8x8x4xf32>
    %680 = vector.shape_cast %678 : vector<1x4xf32> to vector<1x1x4xf32>
    %681 = vector.broadcast %680 : vector<1x1x4xf32> to vector<8x8x4xf32>
    %682 = arith.mulf %679, %681 : vector<8x8x4xf32>
    %683 = arith.addf %676, %682 : vector<8x8x4xf32>
    %684 = vector.extract_strided_slice %42 {offsets = [3, 12, 0], sizes = [1, 1, 4], strides = [1, 1, 1]} : vector<4x25x4xf32> to vector<1x1x4xf32>
    %685 = vector.shape_cast %684 : vector<1x1x4xf32> to vector<1x4xf32>
    %c2_341 = arith.constant 2 : index
    %c2_342 = arith.constant 2 : index
    %c0_343 = arith.constant 0 : index
    %686 = vector.load %arg10[%c2_341, %c2_342, %c0_343] : memref<12x12x4xf32, #tpu.memory_space<vmem>>, vector<8x8x4xf32>
    %687 = vector.shape_cast %685 : vector<1x4xf32> to vector<1x1x4xf32>
    %688 = vector.broadcast %687 : vector<1x1x4xf32> to vector<8x8x4xf32>
    %689 = arith.mulf %686, %688 : vector<8x8x4xf32>
    %690 = arith.addf %683, %689 : vector<8x8x4xf32>
    %691 = vector.extract_strided_slice %42 {offsets = [3, 13, 0], sizes = [1, 1, 4], strides = [1, 1, 1]} : vector<4x25x4xf32> to vector<1x1x4xf32>
    %692 = vector.shape_cast %691 : vector<1x1x4xf32> to vector<1x4xf32>
    %c2_344 = arith.constant 2 : index
    %c3_345 = arith.constant 3 : index
    %c0_346 = arith.constant 0 : index
    %693 = vector.load %arg10[%c2_344, %c3_345, %c0_346] : memref<12x12x4xf32, #tpu.memory_space<vmem>>, vector<8x8x4xf32>
    %694 = vector.shape_cast %692 : vector<1x4xf32> to vector<1x1x4xf32>
    %695 = vector.broadcast %694 : vector<1x1x4xf32> to vector<8x8x4xf32>
    %696 = arith.mulf %693, %695 : vector<8x8x4xf32>
    %697 = arith.addf %690, %696 : vector<8x8x4xf32>
    %698 = vector.extract_strided_slice %42 {offsets = [3, 14, 0], sizes = [1, 1, 4], strides = [1, 1, 1]} : vector<4x25x4xf32> to vector<1x1x4xf32>
    %699 = vector.shape_cast %698 : vector<1x1x4xf32> to vector<1x4xf32>
    %c2_347 = arith.constant 2 : index
    %c4_348 = arith.constant 4 : index
    %c0_349 = arith.constant 0 : index
    %700 = vector.load %arg10[%c2_347, %c4_348, %c0_349] : memref<12x12x4xf32, #tpu.memory_space<vmem>>, vector<8x8x4xf32>
    %701 = vector.shape_cast %699 : vector<1x4xf32> to vector<1x1x4xf32>
    %702 = vector.broadcast %701 : vector<1x1x4xf32> to vector<8x8x4xf32>
    %703 = arith.mulf %700, %702 : vector<8x8x4xf32>
    %704 = arith.addf %697, %703 : vector<8x8x4xf32>
    %705 = vector.extract_strided_slice %42 {offsets = [3, 15, 0], sizes = [1, 1, 4], strides = [1, 1, 1]} : vector<4x25x4xf32> to vector<1x1x4xf32>
    %706 = vector.shape_cast %705 : vector<1x1x4xf32> to vector<1x4xf32>
    %c3_350 = arith.constant 3 : index
    %c0_351 = arith.constant 0 : index
    %c0_352 = arith.constant 0 : index
    %707 = vector.load %arg10[%c3_350, %c0_351, %c0_352] : memref<12x12x4xf32, #tpu.memory_space<vmem>>, vector<8x8x4xf32>
    %708 = vector.shape_cast %706 : vector<1x4xf32> to vector<1x1x4xf32>
    %709 = vector.broadcast %708 : vector<1x1x4xf32> to vector<8x8x4xf32>
    %710 = arith.mulf %707, %709 : vector<8x8x4xf32>
    %711 = arith.addf %704, %710 : vector<8x8x4xf32>
    %712 = vector.extract_strided_slice %42 {offsets = [3, 16, 0], sizes = [1, 1, 4], strides = [1, 1, 1]} : vector<4x25x4xf32> to vector<1x1x4xf32>
    %713 = vector.shape_cast %712 : vector<1x1x4xf32> to vector<1x4xf32>
    %c3_353 = arith.constant 3 : index
    %c1_354 = arith.constant 1 : index
    %c0_355 = arith.constant 0 : index
    %714 = vector.load %arg10[%c3_353, %c1_354, %c0_355] : memref<12x12x4xf32, #tpu.memory_space<vmem>>, vector<8x8x4xf32>
    %715 = vector.shape_cast %713 : vector<1x4xf32> to vector<1x1x4xf32>
    %716 = vector.broadcast %715 : vector<1x1x4xf32> to vector<8x8x4xf32>
    %717 = arith.mulf %714, %716 : vector<8x8x4xf32>
    %718 = arith.addf %711, %717 : vector<8x8x4xf32>
    %719 = vector.extract_strided_slice %42 {offsets = [3, 17, 0], sizes = [1, 1, 4], strides = [1, 1, 1]} : vector<4x25x4xf32> to vector<1x1x4xf32>
    %720 = vector.shape_cast %719 : vector<1x1x4xf32> to vector<1x4xf32>
    %c3_356 = arith.constant 3 : index
    %c2_357 = arith.constant 2 : index
    %c0_358 = arith.constant 0 : index
    %721 = vector.load %arg10[%c3_356, %c2_357, %c0_358] : memref<12x12x4xf32, #tpu.memory_space<vmem>>, vector<8x8x4xf32>
    %722 = vector.shape_cast %720 : vector<1x4xf32> to vector<1x1x4xf32>
    %723 = vector.broadcast %722 : vector<1x1x4xf32> to vector<8x8x4xf32>
    %724 = arith.mulf %721, %723 : vector<8x8x4xf32>
    %725 = arith.addf %718, %724 : vector<8x8x4xf32>
    %726 = vector.extract_strided_slice %42 {offsets = [3, 18, 0], sizes = [1, 1, 4], strides = [1, 1, 1]} : vector<4x25x4xf32> to vector<1x1x4xf32>
    %727 = vector.shape_cast %726 : vector<1x1x4xf32> to vector<1x4xf32>
    %c3_359 = arith.constant 3 : index
    %c3_360 = arith.constant 3 : index
    %c0_361 = arith.constant 0 : index
    %728 = vector.load %arg10[%c3_359, %c3_360, %c0_361] : memref<12x12x4xf32, #tpu.memory_space<vmem>>, vector<8x8x4xf32>
    %729 = vector.shape_cast %727 : vector<1x4xf32> to vector<1x1x4xf32>
    %730 = vector.broadcast %729 : vector<1x1x4xf32> to vector<8x8x4xf32>
    %731 = arith.mulf %728, %730 : vector<8x8x4xf32>
    %732 = arith.addf %725, %731 : vector<8x8x4xf32>
    %733 = vector.extract_strided_slice %42 {offsets = [3, 19, 0], sizes = [1, 1, 4], strides = [1, 1, 1]} : vector<4x25x4xf32> to vector<1x1x4xf32>
    %734 = vector.shape_cast %733 : vector<1x1x4xf32> to vector<1x4xf32>
    %c3_362 = arith.constant 3 : index
    %c4_363 = arith.constant 4 : index
    %c0_364 = arith.constant 0 : index
    %735 = vector.load %arg10[%c3_362, %c4_363, %c0_364] : memref<12x12x4xf32, #tpu.memory_space<vmem>>, vector<8x8x4xf32>
    %736 = vector.shape_cast %734 : vector<1x4xf32> to vector<1x1x4xf32>
    %737 = vector.broadcast %736 : vector<1x1x4xf32> to vector<8x8x4xf32>
    %738 = arith.mulf %735, %737 : vector<8x8x4xf32>
    %739 = arith.addf %732, %738 : vector<8x8x4xf32>
    %740 = vector.extract_strided_slice %42 {offsets = [3, 20, 0], sizes = [1, 1, 4], strides = [1, 1, 1]} : vector<4x25x4xf32> to vector<1x1x4xf32>
    %741 = vector.shape_cast %740 : vector<1x1x4xf32> to vector<1x4xf32>
    %c4_365 = arith.constant 4 : index
    %c0_366 = arith.constant 0 : index
    %c0_367 = arith.constant 0 : index
    %742 = vector.load %arg10[%c4_365, %c0_366, %c0_367] : memref<12x12x4xf32, #tpu.memory_space<vmem>>, vector<8x8x4xf32>
    %743 = vector.shape_cast %741 : vector<1x4xf32> to vector<1x1x4xf32>
    %744 = vector.broadcast %743 : vector<1x1x4xf32> to vector<8x8x4xf32>
    %745 = arith.mulf %742, %744 : vector<8x8x4xf32>
    %746 = arith.addf %739, %745 : vector<8x8x4xf32>
    %747 = vector.extract_strided_slice %42 {offsets = [3, 21, 0], sizes = [1, 1, 4], strides = [1, 1, 1]} : vector<4x25x4xf32> to vector<1x1x4xf32>
    %748 = vector.shape_cast %747 : vector<1x1x4xf32> to vector<1x4xf32>
    %c4_368 = arith.constant 4 : index
    %c1_369 = arith.constant 1 : index
    %c0_370 = arith.constant 0 : index
    %749 = vector.load %arg10[%c4_368, %c1_369, %c0_370] : memref<12x12x4xf32, #tpu.memory_space<vmem>>, vector<8x8x4xf32>
    %750 = vector.shape_cast %748 : vector<1x4xf32> to vector<1x1x4xf32>
    %751 = vector.broadcast %750 : vector<1x1x4xf32> to vector<8x8x4xf32>
    %752 = arith.mulf %749, %751 : vector<8x8x4xf32>
    %753 = arith.addf %746, %752 : vector<8x8x4xf32>
    %754 = vector.extract_strided_slice %42 {offsets = [3, 22, 0], sizes = [1, 1, 4], strides = [1, 1, 1]} : vector<4x25x4xf32> to vector<1x1x4xf32>
    %755 = vector.shape_cast %754 : vector<1x1x4xf32> to vector<1x4xf32>
    %c4_371 = arith.constant 4 : index
    %c2_372 = arith.constant 2 : index
    %c0_373 = arith.constant 0 : index
    %756 = vector.load %arg10[%c4_371, %c2_372, %c0_373] : memref<12x12x4xf32, #tpu.memory_space<vmem>>, vector<8x8x4xf32>
    %757 = vector.shape_cast %755 : vector<1x4xf32> to vector<1x1x4xf32>
    %758 = vector.broadcast %757 : vector<1x1x4xf32> to vector<8x8x4xf32>
    %759 = arith.mulf %756, %758 : vector<8x8x4xf32>
    %760 = arith.addf %753, %759 : vector<8x8x4xf32>
    %761 = vector.extract_strided_slice %42 {offsets = [3, 23, 0], sizes = [1, 1, 4], strides = [1, 1, 1]} : vector<4x25x4xf32> to vector<1x1x4xf32>
    %762 = vector.shape_cast %761 : vector<1x1x4xf32> to vector<1x4xf32>
    %c4_374 = arith.constant 4 : index
    %c3_375 = arith.constant 3 : index
    %c0_376 = arith.constant 0 : index
    %763 = vector.load %arg10[%c4_374, %c3_375, %c0_376] : memref<12x12x4xf32, #tpu.memory_space<vmem>>, vector<8x8x4xf32>
    %764 = vector.shape_cast %762 : vector<1x4xf32> to vector<1x1x4xf32>
    %765 = vector.broadcast %764 : vector<1x1x4xf32> to vector<8x8x4xf32>
    %766 = arith.mulf %763, %765 : vector<8x8x4xf32>
    %767 = arith.addf %760, %766 : vector<8x8x4xf32>
    %768 = vector.extract_strided_slice %42 {offsets = [3, 24, 0], sizes = [1, 1, 4], strides = [1, 1, 1]} : vector<4x25x4xf32> to vector<1x1x4xf32>
    %769 = vector.shape_cast %768 : vector<1x1x4xf32> to vector<1x4xf32>
    %c4_377 = arith.constant 4 : index
    %c4_378 = arith.constant 4 : index
    %c0_379 = arith.constant 0 : index
    %770 = vector.load %arg10[%c4_377, %c4_378, %c0_379] : memref<12x12x4xf32, #tpu.memory_space<vmem>>, vector<8x8x4xf32>
    %771 = vector.shape_cast %769 : vector<1x4xf32> to vector<1x1x4xf32>
    %772 = vector.broadcast %771 : vector<1x1x4xf32> to vector<8x8x4xf32>
    %773 = arith.mulf %770, %772 : vector<8x8x4xf32>
    %774 = arith.addf %767, %773 : vector<8x8x4xf32>
    %775 = vector.extract_strided_slice %43 {offsets = [3, 0], sizes = [1, 4], strides = [1, 1]} : vector<4x4xf32> to vector<1x4xf32>
    %776 = vector.shape_cast %775 : vector<1x4xf32> to vector<1x1x4xf32>
    %777 = vector.broadcast %776 : vector<1x1x4xf32> to vector<8x8x4xf32>
    %778 = arith.mulf %777, %774 : vector<8x8x4xf32>
    %c3_380 = arith.constant 3 : index
    %c0_381 = arith.constant 0 : index
    %c0_382 = arith.constant 0 : index
    %c0_383 = arith.constant 0 : index
    %779 = vector.load %arg11[%c3_380, %c0_381, %c0_382, %c0_383] : memref<4x8x8x4xf32, #tpu.memory_space<vmem>>, vector<1x8x8x4xf32>
    %780 = vector.shape_cast %779 : vector<1x8x8x4xf32> to vector<8x8x4xf32>
    %781 = vector.shape_cast %778 : vector<8x8x4xf32> to vector<1x8x8x4xf32>
    tpu.vector_store %arg11[%c3_380, %c0_381, %c0_382, %c0_383], %781 {strides = array<i32>} : memref<4x8x8x4xf32, #tpu.memory_space<vmem>>, vector<1x8x8x4xf32>,
    %c0_384 = arith.constant 0 : index
    %c0_385 = arith.constant 0 : index
    %782 = vector.load %arg3[%c0_384, %c0_385] : memref<25x4xf32, #tpu.memory_space<vmem>>, vector<25x4xf32>
    %c0_386 = arith.constant 0 : index
    %c0_387 = arith.constant 0 : index
    %783 = vector.load %arg4[%c0_386, %c0_387] : memref<1x4xf32, #tpu.memory_space<vmem>>, vector<1x4xf32>
    %c0_388 = arith.constant 0 : index
    %c0_389 = arith.constant 0 : index
    %784 = vector.load %arg5[%c0_388, %c0_389] : memref<1x4xf32, #tpu.memory_space<vmem>>, vector<1x4xf32>
    %c0_390 = arith.constant 0 : index
    %c0_391 = arith.constant 0 : index
    %c0_392 = arith.constant 0 : index
    %c0_393 = arith.constant 0 : index
    %785 = vector.load %arg11[%c0_390, %c0_391, %c0_392, %c0_393] : memref<4x8x8x4xf32, #tpu.memory_space<vmem>>, vector<1x8x8x4xf32>
    %786 = vector.shape_cast %785 : vector<1x8x8x4xf32> to vector<8x8x4xf32>
    %c1_394 = arith.constant 1 : index
    %c0_395 = arith.constant 0 : index
    %c0_396 = arith.constant 0 : index
    %c0_397 = arith.constant 0 : index
    %787 = vector.load %arg11[%c1_394, %c0_395, %c0_396, %c0_397] : memref<4x8x8x4xf32, #tpu.memory_space<vmem>>, vector<1x8x8x4xf32>
    %788 = vector.shape_cast %787 : vector<1x8x8x4xf32> to vector<8x8x4xf32>
    %c2_398 = arith.constant 2 : index
    %c0_399 = arith.constant 0 : index
    %c0_400 = arith.constant 0 : index
    %c0_401 = arith.constant 0 : index
    %789 = vector.load %arg11[%c2_398, %c0_399, %c0_400, %c0_401] : memref<4x8x8x4xf32, #tpu.memory_space<vmem>>, vector<1x8x8x4xf32>
    %790 = vector.shape_cast %789 : vector<1x8x8x4xf32> to vector<8x8x4xf32>
    %c3_402 = arith.constant 3 : index
    %c0_403 = arith.constant 0 : index
    %c0_404 = arith.constant 0 : index
    %c0_405 = arith.constant 0 : index
    %791 = vector.load %arg11[%c3_402, %c0_403, %c0_404, %c0_405] : memref<4x8x8x4xf32, #tpu.memory_space<vmem>>, vector<1x8x8x4xf32>
    %792 = vector.shape_cast %791 : vector<1x8x8x4xf32> to vector<8x8x4xf32>
    %cst_406 = arith.constant 1.000000e+00 : f32
    %793 = vector.broadcast %cst_406 : f32 to vector<8x8x4xf32>
    %794 = arith.mulf %793, %788 : vector<8x8x4xf32>
    %795 = arith.addf %786, %794 : vector<8x8x4xf32>
    %cst_407 = arith.constant 1.000000e+00 : f32
    %796 = vector.broadcast %cst_407 : f32 to vector<8x8x4xf32>
    %797 = arith.mulf %796, %790 : vector<8x8x4xf32>
    %798 = arith.addf %795, %797 : vector<8x8x4xf32>
    %cst_408 = arith.constant 1.000000e+00 : f32
    %799 = vector.broadcast %cst_408 : f32 to vector<8x8x4xf32>
    %800 = arith.mulf %799, %792 : vector<8x8x4xf32>
    %801 = arith.addf %798, %800 : vector<8x8x4xf32>
    %cst_409 = arith.constant 5.000000e-01 : f32
    %802 = vector.broadcast %cst_409 : f32 to vector<8x8x4xf32>
    %803 = arith.mulf %802, %801 : vector<8x8x4xf32>
    %cst_410 = arith.constant 0.000000e+00 : f32
    %804 = vector.broadcast %cst_410 : f32 to vector<8x8x4xf32>
    %805 = vector.extract_strided_slice %782 {offsets = [0, 0], sizes = [1, 4], strides = [1, 1]} : vector<25x4xf32> to vector<1x4xf32>
    %c0_411 = arith.constant 0 : index
    %c0_412 = arith.constant 0 : index
    %c0_413 = arith.constant 0 : index
    %c0_414 = arith.constant 0 : index
    %806 = vector.load %arg9[%c0_411, %c0_412, %c0_413, %c0_414] : memref<4x10x10x4xf32, #tpu.memory_space<vmem>>, vector<1x8x8x4xf32>
    %807 = vector.shape_cast %806 : vector<1x8x8x4xf32> to vector<8x8x4xf32>
    %808 = vector.shape_cast %805 : vector<1x4xf32> to vector<1x1x4xf32>
    %809 = vector.broadcast %808 : vector<1x1x4xf32> to vector<8x8x4xf32>
    %810 = arith.mulf %807, %809 : vector<8x8x4xf32>
    %811 = arith.addf %804, %810 : vector<8x8x4xf32>
    %812 = vector.extract_strided_slice %782 {offsets = [1, 0], sizes = [1, 4], strides = [1, 1]} : vector<25x4xf32> to vector<1x4xf32>
    %c1_415 = arith.constant 1 : index
    %c0_416 = arith.constant 0 : index
    %c0_417 = arith.constant 0 : index
    %c0_418 = arith.constant 0 : index
    %813 = vector.load %arg9[%c1_415, %c0_416, %c0_417, %c0_418] : memref<4x10x10x4xf32, #tpu.memory_space<vmem>>, vector<1x8x8x4xf32>
    %814 = vector.shape_cast %813 : vector<1x8x8x4xf32> to vector<8x8x4xf32>
    %815 = vector.shape_cast %812 : vector<1x4xf32> to vector<1x1x4xf32>
    %816 = vector.broadcast %815 : vector<1x1x4xf32> to vector<8x8x4xf32>
    %817 = arith.mulf %814, %816 : vector<8x8x4xf32>
    %818 = arith.addf %811, %817 : vector<8x8x4xf32>
    %819 = vector.extract_strided_slice %782 {offsets = [2, 0], sizes = [1, 4], strides = [1, 1]} : vector<25x4xf32> to vector<1x4xf32>
    %c0_419 = arith.constant 0 : index
    %c0_420 = arith.constant 0 : index
    %c1_421 = arith.constant 1 : index
    %c0_422 = arith.constant 0 : index
    %820 = vector.load %arg9[%c0_419, %c0_420, %c1_421, %c0_422] : memref<4x10x10x4xf32, #tpu.memory_space<vmem>>, vector<1x8x8x4xf32>
    %821 = vector.shape_cast %820 : vector<1x8x8x4xf32> to vector<8x8x4xf32>
    %822 = vector.shape_cast %819 : vector<1x4xf32> to vector<1x1x4xf32>
    %823 = vector.broadcast %822 : vector<1x1x4xf32> to vector<8x8x4xf32>
    %824 = arith.mulf %821, %823 : vector<8x8x4xf32>
    %825 = arith.addf %818, %824 : vector<8x8x4xf32>
    %826 = vector.extract_strided_slice %782 {offsets = [3, 0], sizes = [1, 4], strides = [1, 1]} : vector<25x4xf32> to vector<1x4xf32>
    %c1_423 = arith.constant 1 : index
    %c0_424 = arith.constant 0 : index
    %c1_425 = arith.constant 1 : index
    %c0_426 = arith.constant 0 : index
    %827 = vector.load %arg9[%c1_423, %c0_424, %c1_425, %c0_426] : memref<4x10x10x4xf32, #tpu.memory_space<vmem>>, vector<1x8x8x4xf32>
    %828 = vector.shape_cast %827 : vector<1x8x8x4xf32> to vector<8x8x4xf32>
    %829 = vector.shape_cast %826 : vector<1x4xf32> to vector<1x1x4xf32>
    %830 = vector.broadcast %829 : vector<1x1x4xf32> to vector<8x8x4xf32>
    %831 = arith.mulf %828, %830 : vector<8x8x4xf32>
    %832 = arith.addf %825, %831 : vector<8x8x4xf32>
    %833 = vector.extract_strided_slice %782 {offsets = [4, 0], sizes = [1, 4], strides = [1, 1]} : vector<25x4xf32> to vector<1x4xf32>
    %c0_427 = arith.constant 0 : index
    %c0_428 = arith.constant 0 : index
    %c2_429 = arith.constant 2 : index
    %c0_430 = arith.constant 0 : index
    %834 = vector.load %arg9[%c0_427, %c0_428, %c2_429, %c0_430] : memref<4x10x10x4xf32, #tpu.memory_space<vmem>>, vector<1x8x8x4xf32>
    %835 = vector.shape_cast %834 : vector<1x8x8x4xf32> to vector<8x8x4xf32>
    %836 = vector.shape_cast %833 : vector<1x4xf32> to vector<1x1x4xf32>
    %837 = vector.broadcast %836 : vector<1x1x4xf32> to vector<8x8x4xf32>
    %838 = arith.mulf %835, %837 : vector<8x8x4xf32>
    %839 = arith.addf %832, %838 : vector<8x8x4xf32>
    %840 = vector.extract_strided_slice %782 {offsets = [5, 0], sizes = [1, 4], strides = [1, 1]} : vector<25x4xf32> to vector<1x4xf32>
    %c2_431 = arith.constant 2 : index
    %c0_432 = arith.constant 0 : index
    %c0_433 = arith.constant 0 : index
    %c0_434 = arith.constant 0 : index
    %841 = vector.load %arg9[%c2_431, %c0_432, %c0_433, %c0_434] : memref<4x10x10x4xf32, #tpu.memory_space<vmem>>, vector<1x8x8x4xf32>
    %842 = vector.shape_cast %841 : vector<1x8x8x4xf32> to vector<8x8x4xf32>
    %843 = vector.shape_cast %840 : vector<1x4xf32> to vector<1x1x4xf32>
    %844 = vector.broadcast %843 : vector<1x1x4xf32> to vector<8x8x4xf32>
    %845 = arith.mulf %842, %844 : vector<8x8x4xf32>
    %846 = arith.addf %839, %845 : vector<8x8x4xf32>
    %847 = vector.extract_strided_slice %782 {offsets = [6, 0], sizes = [1, 4], strides = [1, 1]} : vector<25x4xf32> to vector<1x4xf32>
    %c3_435 = arith.constant 3 : index
    %c0_436 = arith.constant 0 : index
    %c0_437 = arith.constant 0 : index
    %c0_438 = arith.constant 0 : index
    %848 = vector.load %arg9[%c3_435, %c0_436, %c0_437, %c0_438] : memref<4x10x10x4xf32, #tpu.memory_space<vmem>>, vector<1x8x8x4xf32>
    %849 = vector.shape_cast %848 : vector<1x8x8x4xf32> to vector<8x8x4xf32>
    %850 = vector.shape_cast %847 : vector<1x4xf32> to vector<1x1x4xf32>
    %851 = vector.broadcast %850 : vector<1x1x4xf32> to vector<8x8x4xf32>
    %852 = arith.mulf %849, %851 : vector<8x8x4xf32>
    %853 = arith.addf %846, %852 : vector<8x8x4xf32>
    %854 = vector.extract_strided_slice %782 {offsets = [7, 0], sizes = [1, 4], strides = [1, 1]} : vector<25x4xf32> to vector<1x4xf32>
    %c2_439 = arith.constant 2 : index
    %c0_440 = arith.constant 0 : index
    %c1_441 = arith.constant 1 : index
    %c0_442 = arith.constant 0 : index
    %855 = vector.load %arg9[%c2_439, %c0_440, %c1_441, %c0_442] : memref<4x10x10x4xf32, #tpu.memory_space<vmem>>, vector<1x8x8x4xf32>
    %856 = vector.shape_cast %855 : vector<1x8x8x4xf32> to vector<8x8x4xf32>
    %857 = vector.shape_cast %854 : vector<1x4xf32> to vector<1x1x4xf32>
    %858 = vector.broadcast %857 : vector<1x1x4xf32> to vector<8x8x4xf32>
    %859 = arith.mulf %856, %858 : vector<8x8x4xf32>
    %860 = arith.addf %853, %859 : vector<8x8x4xf32>
    %861 = vector.extract_strided_slice %782 {offsets = [8, 0], sizes = [1, 4], strides = [1, 1]} : vector<25x4xf32> to vector<1x4xf32>
    %c3_443 = arith.constant 3 : index
    %c0_444 = arith.constant 0 : index
    %c1_445 = arith.constant 1 : index
    %c0_446 = arith.constant 0 : index
    %862 = vector.load %arg9[%c3_443, %c0_444, %c1_445, %c0_446] : memref<4x10x10x4xf32, #tpu.memory_space<vmem>>, vector<1x8x8x4xf32>
    %863 = vector.shape_cast %862 : vector<1x8x8x4xf32> to vector<8x8x4xf32>
    %864 = vector.shape_cast %861 : vector<1x4xf32> to vector<1x1x4xf32>
    %865 = vector.broadcast %864 : vector<1x1x4xf32> to vector<8x8x4xf32>
    %866 = arith.mulf %863, %865 : vector<8x8x4xf32>
    %867 = arith.addf %860, %866 : vector<8x8x4xf32>
    %868 = vector.extract_strided_slice %782 {offsets = [9, 0], sizes = [1, 4], strides = [1, 1]} : vector<25x4xf32> to vector<1x4xf32>
    %c2_447 = arith.constant 2 : index
    %c0_448 = arith.constant 0 : index
    %c2_449 = arith.constant 2 : index
    %c0_450 = arith.constant 0 : index
    %869 = vector.load %arg9[%c2_447, %c0_448, %c2_449, %c0_450] : memref<4x10x10x4xf32, #tpu.memory_space<vmem>>, vector<1x8x8x4xf32>
    %870 = vector.shape_cast %869 : vector<1x8x8x4xf32> to vector<8x8x4xf32>
    %871 = vector.shape_cast %868 : vector<1x4xf32> to vector<1x1x4xf32>
    %872 = vector.broadcast %871 : vector<1x1x4xf32> to vector<8x8x4xf32>
    %873 = arith.mulf %870, %872 : vector<8x8x4xf32>
    %874 = arith.addf %867, %873 : vector<8x8x4xf32>
    %875 = vector.extract_strided_slice %782 {offsets = [10, 0], sizes = [1, 4], strides = [1, 1]} : vector<25x4xf32> to vector<1x4xf32>
    %c0_451 = arith.constant 0 : index
    %c1_452 = arith.constant 1 : index
    %c0_453 = arith.constant 0 : index
    %c0_454 = arith.constant 0 : index
    %876 = vector.load %arg9[%c0_451, %c1_452, %c0_453, %c0_454] : memref<4x10x10x4xf32, #tpu.memory_space<vmem>>, vector<1x8x8x4xf32>
    %877 = vector.shape_cast %876 : vector<1x8x8x4xf32> to vector<8x8x4xf32>
    %878 = vector.shape_cast %875 : vector<1x4xf32> to vector<1x1x4xf32>
    %879 = vector.broadcast %878 : vector<1x1x4xf32> to vector<8x8x4xf32>
    %880 = arith.mulf %877, %879 : vector<8x8x4xf32>
    %881 = arith.addf %874, %880 : vector<8x8x4xf32>
    %882 = vector.extract_strided_slice %782 {offsets = [11, 0], sizes = [1, 4], strides = [1, 1]} : vector<25x4xf32> to vector<1x4xf32>
    %c1_455 = arith.constant 1 : index
    %c1_456 = arith.constant 1 : index
    %c0_457 = arith.constant 0 : index
    %c0_458 = arith.constant 0 : index
    %883 = vector.load %arg9[%c1_455, %c1_456, %c0_457, %c0_458] : memref<4x10x10x4xf32, #tpu.memory_space<vmem>>, vector<1x8x8x4xf32>
    %884 = vector.shape_cast %883 : vector<1x8x8x4xf32> to vector<8x8x4xf32>
    %885 = vector.shape_cast %882 : vector<1x4xf32> to vector<1x1x4xf32>
    %886 = vector.broadcast %885 : vector<1x1x4xf32> to vector<8x8x4xf32>
    %887 = arith.mulf %884, %886 : vector<8x8x4xf32>
    %888 = arith.addf %881, %887 : vector<8x8x4xf32>
    %889 = vector.extract_strided_slice %782 {offsets = [12, 0], sizes = [1, 4], strides = [1, 1]} : vector<25x4xf32> to vector<1x4xf32>
    %c0_459 = arith.constant 0 : index
    %c1_460 = arith.constant 1 : index
    %c1_461 = arith.constant 1 : index
    %c0_462 = arith.constant 0 : index
    %890 = vector.load %arg9[%c0_459, %c1_460, %c1_461, %c0_462] : memref<4x10x10x4xf32, #tpu.memory_space<vmem>>, vector<1x8x8x4xf32>
    %891 = vector.shape_cast %890 : vector<1x8x8x4xf32> to vector<8x8x4xf32>
    %892 = vector.shape_cast %889 : vector<1x4xf32> to vector<1x1x4xf32>
    %893 = vector.broadcast %892 : vector<1x1x4xf32> to vector<8x8x4xf32>
    %894 = arith.mulf %891, %893 : vector<8x8x4xf32>
    %895 = arith.addf %888, %894 : vector<8x8x4xf32>
    %896 = vector.extract_strided_slice %782 {offsets = [13, 0], sizes = [1, 4], strides = [1, 1]} : vector<25x4xf32> to vector<1x4xf32>
    %c1_463 = arith.constant 1 : index
    %c1_464 = arith.constant 1 : index
    %c1_465 = arith.constant 1 : index
    %c0_466 = arith.constant 0 : index
    %897 = vector.load %arg9[%c1_463, %c1_464, %c1_465, %c0_466] : memref<4x10x10x4xf32, #tpu.memory_space<vmem>>, vector<1x8x8x4xf32>
    %898 = vector.shape_cast %897 : vector<1x8x8x4xf32> to vector<8x8x4xf32>
    %899 = vector.shape_cast %896 : vector<1x4xf32> to vector<1x1x4xf32>
    %900 = vector.broadcast %899 : vector<1x1x4xf32> to vector<8x8x4xf32>
    %901 = arith.mulf %898, %900 : vector<8x8x4xf32>
    %902 = arith.addf %895, %901 : vector<8x8x4xf32>
    %903 = vector.extract_strided_slice %782 {offsets = [14, 0], sizes = [1, 4], strides = [1, 1]} : vector<25x4xf32> to vector<1x4xf32>
    %c0_467 = arith.constant 0 : index
    %c1_468 = arith.constant 1 : index
    %c2_469 = arith.constant 2 : index
    %c0_470 = arith.constant 0 : index
    %904 = vector.load %arg9[%c0_467, %c1_468, %c2_469, %c0_470] : memref<4x10x10x4xf32, #tpu.memory_space<vmem>>, vector<1x8x8x4xf32>
    %905 = vector.shape_cast %904 : vector<1x8x8x4xf32> to vector<8x8x4xf32>
    %906 = vector.shape_cast %903 : vector<1x4xf32> to vector<1x1x4xf32>
    %907 = vector.broadcast %906 : vector<1x1x4xf32> to vector<8x8x4xf32>
    %908 = arith.mulf %905, %907 : vector<8x8x4xf32>
    %909 = arith.addf %902, %908 : vector<8x8x4xf32>
    %910 = vector.extract_strided_slice %782 {offsets = [15, 0], sizes = [1, 4], strides = [1, 1]} : vector<25x4xf32> to vector<1x4xf32>
    %c2_471 = arith.constant 2 : index
    %c1_472 = arith.constant 1 : index
    %c0_473 = arith.constant 0 : index
    %c0_474 = arith.constant 0 : index
    %911 = vector.load %arg9[%c2_471, %c1_472, %c0_473, %c0_474] : memref<4x10x10x4xf32, #tpu.memory_space<vmem>>, vector<1x8x8x4xf32>
    %912 = vector.shape_cast %911 : vector<1x8x8x4xf32> to vector<8x8x4xf32>
    %913 = vector.shape_cast %910 : vector<1x4xf32> to vector<1x1x4xf32>
    %914 = vector.broadcast %913 : vector<1x1x4xf32> to vector<8x8x4xf32>
    %915 = arith.mulf %912, %914 : vector<8x8x4xf32>
    %916 = arith.addf %909, %915 : vector<8x8x4xf32>
    %917 = vector.extract_strided_slice %782 {offsets = [16, 0], sizes = [1, 4], strides = [1, 1]} : vector<25x4xf32> to vector<1x4xf32>
    %c3_475 = arith.constant 3 : index
    %c1_476 = arith.constant 1 : index
    %c0_477 = arith.constant 0 : index
    %c0_478 = arith.constant 0 : index
    %918 = vector.load %arg9[%c3_475, %c1_476, %c0_477, %c0_478] : memref<4x10x10x4xf32, #tpu.memory_space<vmem>>, vector<1x8x8x4xf32>
    %919 = vector.shape_cast %918 : vector<1x8x8x4xf32> to vector<8x8x4xf32>
    %920 = vector.shape_cast %917 : vector<1x4xf32> to vector<1x1x4xf32>
    %921 = vector.broadcast %920 : vector<1x1x4xf32> to vector<8x8x4xf32>
    %922 = arith.mulf %919, %921 : vector<8x8x4xf32>
    %923 = arith.addf %916, %922 : vector<8x8x4xf32>
    %924 = vector.extract_strided_slice %782 {offsets = [17, 0], sizes = [1, 4], strides = [1, 1]} : vector<25x4xf32> to vector<1x4xf32>
    %c2_479 = arith.constant 2 : index
    %c1_480 = arith.constant 1 : index
    %c1_481 = arith.constant 1 : index
    %c0_482 = arith.constant 0 : index
    %925 = vector.load %arg9[%c2_479, %c1_480, %c1_481, %c0_482] : memref<4x10x10x4xf32, #tpu.memory_space<vmem>>, vector<1x8x8x4xf32>
    %926 = vector.shape_cast %925 : vector<1x8x8x4xf32> to vector<8x8x4xf32>
    %927 = vector.shape_cast %924 : vector<1x4xf32> to vector<1x1x4xf32>
    %928 = vector.broadcast %927 : vector<1x1x4xf32> to vector<8x8x4xf32>
    %929 = arith.mulf %926, %928 : vector<8x8x4xf32>
    %930 = arith.addf %923, %929 : vector<8x8x4xf32>
    %931 = vector.extract_strided_slice %782 {offsets = [18, 0], sizes = [1, 4], strides = [1, 1]} : vector<25x4xf32> to vector<1x4xf32>
    %c3_483 = arith.constant 3 : index
    %c1_484 = arith.constant 1 : index
    %c1_485 = arith.constant 1 : index
    %c0_486 = arith.constant 0 : index
    %932 = vector.load %arg9[%c3_483, %c1_484, %c1_485, %c0_486] : memref<4x10x10x4xf32, #tpu.memory_space<vmem>>, vector<1x8x8x4xf32>
    %933 = vector.shape_cast %932 : vector<1x8x8x4xf32> to vector<8x8x4xf32>
    %934 = vector.shape_cast %931 : vector<1x4xf32> to vector<1x1x4xf32>
    %935 = vector.broadcast %934 : vector<1x1x4xf32> to vector<8x8x4xf32>
    %936 = arith.mulf %933, %935 : vector<8x8x4xf32>
    %937 = arith.addf %930, %936 : vector<8x8x4xf32>
    %938 = vector.extract_strided_slice %782 {offsets = [19, 0], sizes = [1, 4], strides = [1, 1]} : vector<25x4xf32> to vector<1x4xf32>
    %c2_487 = arith.constant 2 : index
    %c1_488 = arith.constant 1 : index
    %c2_489 = arith.constant 2 : index
    %c0_490 = arith.constant 0 : index
    %939 = vector.load %arg9[%c2_487, %c1_488, %c2_489, %c0_490] : memref<4x10x10x4xf32, #tpu.memory_space<vmem>>, vector<1x8x8x4xf32>
    %940 = vector.shape_cast %939 : vector<1x8x8x4xf32> to vector<8x8x4xf32>
    %941 = vector.shape_cast %938 : vector<1x4xf32> to vector<1x1x4xf32>
    %942 = vector.broadcast %941 : vector<1x1x4xf32> to vector<8x8x4xf32>
    %943 = arith.mulf %940, %942 : vector<8x8x4xf32>
    %944 = arith.addf %937, %943 : vector<8x8x4xf32>
    %945 = vector.extract_strided_slice %782 {offsets = [20, 0], sizes = [1, 4], strides = [1, 1]} : vector<25x4xf32> to vector<1x4xf32>
    %c0_491 = arith.constant 0 : index
    %c2_492 = arith.constant 2 : index
    %c0_493 = arith.constant 0 : index
    %c0_494 = arith.constant 0 : index
    %946 = vector.load %arg9[%c0_491, %c2_492, %c0_493, %c0_494] : memref<4x10x10x4xf32, #tpu.memory_space<vmem>>, vector<1x8x8x4xf32>
    %947 = vector.shape_cast %946 : vector<1x8x8x4xf32> to vector<8x8x4xf32>
    %948 = vector.shape_cast %945 : vector<1x4xf32> to vector<1x1x4xf32>
    %949 = vector.broadcast %948 : vector<1x1x4xf32> to vector<8x8x4xf32>
    %950 = arith.mulf %947, %949 : vector<8x8x4xf32>
    %951 = arith.addf %944, %950 : vector<8x8x4xf32>
    %952 = vector.extract_strided_slice %782 {offsets = [21, 0], sizes = [1, 4], strides = [1, 1]} : vector<25x4xf32> to vector<1x4xf32>
    %c1_495 = arith.constant 1 : index
    %c2_496 = arith.constant 2 : index
    %c0_497 = arith.constant 0 : index
    %c0_498 = arith.constant 0 : index
    %953 = vector.load %arg9[%c1_495, %c2_496, %c0_497, %c0_498] : memref<4x10x10x4xf32, #tpu.memory_space<vmem>>, vector<1x8x8x4xf32>
    %954 = vector.shape_cast %953 : vector<1x8x8x4xf32> to vector<8x8x4xf32>
    %955 = vector.shape_cast %952 : vector<1x4xf32> to vector<1x1x4xf32>
    %956 = vector.broadcast %955 : vector<1x1x4xf32> to vector<8x8x4xf32>
    %957 = arith.mulf %954, %956 : vector<8x8x4xf32>
    %958 = arith.addf %951, %957 : vector<8x8x4xf32>
    %959 = vector.extract_strided_slice %782 {offsets = [22, 0], sizes = [1, 4], strides = [1, 1]} : vector<25x4xf32> to vector<1x4xf32>
    %c0_499 = arith.constant 0 : index
    %c2_500 = arith.constant 2 : index
    %c1_501 = arith.constant 1 : index
    %c0_502 = arith.constant 0 : index
    %960 = vector.load %arg9[%c0_499, %c2_500, %c1_501, %c0_502] : memref<4x10x10x4xf32, #tpu.memory_space<vmem>>, vector<1x8x8x4xf32>
    %961 = vector.shape_cast %960 : vector<1x8x8x4xf32> to vector<8x8x4xf32>
    %962 = vector.shape_cast %959 : vector<1x4xf32> to vector<1x1x4xf32>
    %963 = vector.broadcast %962 : vector<1x1x4xf32> to vector<8x8x4xf32>
    %964 = arith.mulf %961, %963 : vector<8x8x4xf32>
    %965 = arith.addf %958, %964 : vector<8x8x4xf32>
    %966 = vector.extract_strided_slice %782 {offsets = [23, 0], sizes = [1, 4], strides = [1, 1]} : vector<25x4xf32> to vector<1x4xf32>
    %c1_503 = arith.constant 1 : index
    %c2_504 = arith.constant 2 : index
    %c1_505 = arith.constant 1 : index
    %c0_506 = arith.constant 0 : index
    %967 = vector.load %arg9[%c1_503, %c2_504, %c1_505, %c0_506] : memref<4x10x10x4xf32, #tpu.memory_space<vmem>>, vector<1x8x8x4xf32>
    %968 = vector.shape_cast %967 : vector<1x8x8x4xf32> to vector<8x8x4xf32>
    %969 = vector.shape_cast %966 : vector<1x4xf32> to vector<1x1x4xf32>
    %970 = vector.broadcast %969 : vector<1x1x4xf32> to vector<8x8x4xf32>
    %971 = arith.mulf %968, %970 : vector<8x8x4xf32>
    %972 = arith.addf %965, %971 : vector<8x8x4xf32>
    %973 = vector.extract_strided_slice %782 {offsets = [24, 0], sizes = [1, 4], strides = [1, 1]} : vector<25x4xf32> to vector<1x4xf32>
    %c0_507 = arith.constant 0 : index
    %c2_508 = arith.constant 2 : index
    %c2_509 = arith.constant 2 : index
    %c0_510 = arith.constant 0 : index
    %974 = vector.load %arg9[%c0_507, %c2_508, %c2_509, %c0_510] : memref<4x10x10x4xf32, #tpu.memory_space<vmem>>, vector<1x8x8x4xf32>
    %975 = vector.shape_cast %974 : vector<1x8x8x4xf32> to vector<8x8x4xf32>
    %976 = vector.shape_cast %973 : vector<1x4xf32> to vector<1x1x4xf32>
    %977 = vector.broadcast %976 : vector<1x1x4xf32> to vector<8x8x4xf32>
    %978 = arith.mulf %975, %977 : vector<8x8x4xf32>
    %979 = arith.addf %972, %978 : vector<8x8x4xf32>
    %980 = vector.shape_cast %783 : vector<1x4xf32> to vector<1x1x4xf32>
    %981 = vector.broadcast %980 : vector<1x1x4xf32> to vector<8x8x4xf32>
    %982 = arith.addf %979, %981 : vector<8x8x4xf32>
    %983 = vector.shape_cast %784 : vector<1x4xf32> to vector<1x1x4xf32>
    %984 = vector.broadcast %983 : vector<1x1x4xf32> to vector<8x8x4xf32>
    %985 = arith.mulf %984, %982 : vector<8x8x4xf32>
    %986 = arith.addf %985, %803 : vector<8x8x4xf32>
    %c0_511 = arith.constant 0 : index
    %c0_512 = arith.constant 0 : index
    %c0_513 = arith.constant 0 : index
    %c0_514 = arith.constant 0 : index
    %c0_515 = arith.constant 0 : index
    %c0_516 = arith.constant 0 : index
    %987 = vector.load %arg8[%c0_511, %c0_512, %c0_513, %c0_514, %c0_515, %c0_516] : memref<1x8x2x2x8x4xf32, #tpu.memory_space<vmem>>, vector<1x8x1x1x8x4xf32>
    %988 = vector.shape_cast %987 : vector<1x8x1x1x8x4xf32> to vector<8x8x4xf32>
    %989 = vector.shape_cast %986 : vector<8x8x4xf32> to vector<1x8x1x1x8x4xf32>
    tpu.vector_store %arg8[%c0_511, %c0_512, %c0_513, %c0_514, %c0_515, %c0_516], %989 {strides = array<i32>} : memref<1x8x2x2x8x4xf32, #tpu.memory_space<vmem>>, vector<1x8x1x1x8x4xf32>,
    %cst_517 = arith.constant 1.000000e+00 : f32
    %990 = vector.broadcast %cst_517 : f32 to vector<8x8x4xf32>
    %991 = arith.mulf %990, %788 : vector<8x8x4xf32>
    %992 = arith.addf %786, %991 : vector<8x8x4xf32>
    %cst_518 = arith.constant -1.000000e+00 : f32
    %993 = vector.broadcast %cst_518 : f32 to vector<8x8x4xf32>
    %994 = arith.mulf %993, %790 : vector<8x8x4xf32>
    %995 = arith.addf %992, %994 : vector<8x8x4xf32>
    %cst_519 = arith.constant -1.000000e+00 : f32
    %996 = vector.broadcast %cst_519 : f32 to vector<8x8x4xf32>
    %997 = arith.mulf %996, %792 : vector<8x8x4xf32>
    %998 = arith.addf %995, %997 : vector<8x8x4xf32>
    %cst_520 = arith.constant 5.000000e-01 : f32
    %999 = vector.broadcast %cst_520 : f32 to vector<8x8x4xf32>
    %1000 = arith.mulf %999, %998 : vector<8x8x4xf32>
    %cst_521 = arith.constant 0.000000e+00 : f32
    %1001 = vector.broadcast %cst_521 : f32 to vector<8x8x4xf32>
    %1002 = vector.extract_strided_slice %782 {offsets = [0, 0], sizes = [1, 4], strides = [1, 1]} : vector<25x4xf32> to vector<1x4xf32>
    %c1_522 = arith.constant 1 : index
    %c0_523 = arith.constant 0 : index
    %c0_524 = arith.constant 0 : index
    %c0_525 = arith.constant 0 : index
    %1003 = vector.load %arg9[%c1_522, %c0_523, %c0_524, %c0_525] : memref<4x10x10x4xf32, #tpu.memory_space<vmem>>, vector<1x8x8x4xf32>
    %1004 = vector.shape_cast %1003 : vector<1x8x8x4xf32> to vector<8x8x4xf32>
    %1005 = vector.shape_cast %1002 : vector<1x4xf32> to vector<1x1x4xf32>
    %1006 = vector.broadcast %1005 : vector<1x1x4xf32> to vector<8x8x4xf32>
    %1007 = arith.mulf %1004, %1006 : vector<8x8x4xf32>
    %1008 = arith.addf %1001, %1007 : vector<8x8x4xf32>
    %1009 = vector.extract_strided_slice %782 {offsets = [1, 0], sizes = [1, 4], strides = [1, 1]} : vector<25x4xf32> to vector<1x4xf32>
    %c0_526 = arith.constant 0 : index
    %c0_527 = arith.constant 0 : index
    %c1_528 = arith.constant 1 : index
    %c0_529 = arith.constant 0 : index
    %1010 = vector.load %arg9[%c0_526, %c0_527, %c1_528, %c0_529] : memref<4x10x10x4xf32, #tpu.memory_space<vmem>>, vector<1x8x8x4xf32>
    %1011 = vector.shape_cast %1010 : vector<1x8x8x4xf32> to vector<8x8x4xf32>
    %1012 = vector.shape_cast %1009 : vector<1x4xf32> to vector<1x1x4xf32>
    %1013 = vector.broadcast %1012 : vector<1x1x4xf32> to vector<8x8x4xf32>
    %1014 = arith.mulf %1011, %1013 : vector<8x8x4xf32>
    %1015 = arith.addf %1008, %1014 : vector<8x8x4xf32>
    %1016 = vector.extract_strided_slice %782 {offsets = [2, 0], sizes = [1, 4], strides = [1, 1]} : vector<25x4xf32> to vector<1x4xf32>
    %c1_530 = arith.constant 1 : index
    %c0_531 = arith.constant 0 : index
    %c1_532 = arith.constant 1 : index
    %c0_533 = arith.constant 0 : index
    %1017 = vector.load %arg9[%c1_530, %c0_531, %c1_532, %c0_533] : memref<4x10x10x4xf32, #tpu.memory_space<vmem>>, vector<1x8x8x4xf32>
    %1018 = vector.shape_cast %1017 : vector<1x8x8x4xf32> to vector<8x8x4xf32>
    %1019 = vector.shape_cast %1016 : vector<1x4xf32> to vector<1x1x4xf32>
    %1020 = vector.broadcast %1019 : vector<1x1x4xf32> to vector<8x8x4xf32>
    %1021 = arith.mulf %1018, %1020 : vector<8x8x4xf32>
    %1022 = arith.addf %1015, %1021 : vector<8x8x4xf32>
    %1023 = vector.extract_strided_slice %782 {offsets = [3, 0], sizes = [1, 4], strides = [1, 1]} : vector<25x4xf32> to vector<1x4xf32>
    %c0_534 = arith.constant 0 : index
    %c0_535 = arith.constant 0 : index
    %c2_536 = arith.constant 2 : index
    %c0_537 = arith.constant 0 : index
    %1024 = vector.load %arg9[%c0_534, %c0_535, %c2_536, %c0_537] : memref<4x10x10x4xf32, #tpu.memory_space<vmem>>, vector<1x8x8x4xf32>
    %1025 = vector.shape_cast %1024 : vector<1x8x8x4xf32> to vector<8x8x4xf32>
    %1026 = vector.shape_cast %1023 : vector<1x4xf32> to vector<1x1x4xf32>
    %1027 = vector.broadcast %1026 : vector<1x1x4xf32> to vector<8x8x4xf32>
    %1028 = arith.mulf %1025, %1027 : vector<8x8x4xf32>
    %1029 = arith.addf %1022, %1028 : vector<8x8x4xf32>
    %1030 = vector.extract_strided_slice %782 {offsets = [4, 0], sizes = [1, 4], strides = [1, 1]} : vector<25x4xf32> to vector<1x4xf32>
    %c1_538 = arith.constant 1 : index
    %c0_539 = arith.constant 0 : index
    %c2_540 = arith.constant 2 : index
    %c0_541 = arith.constant 0 : index
    %1031 = vector.load %arg9[%c1_538, %c0_539, %c2_540, %c0_541] : memref<4x10x10x4xf32, #tpu.memory_space<vmem>>, vector<1x8x8x4xf32>
    %1032 = vector.shape_cast %1031 : vector<1x8x8x4xf32> to vector<8x8x4xf32>
    %1033 = vector.shape_cast %1030 : vector<1x4xf32> to vector<1x1x4xf32>
    %1034 = vector.broadcast %1033 : vector<1x1x4xf32> to vector<8x8x4xf32>
    %1035 = arith.mulf %1032, %1034 : vector<8x8x4xf32>
    %1036 = arith.addf %1029, %1035 : vector<8x8x4xf32>
    %1037 = vector.extract_strided_slice %782 {offsets = [5, 0], sizes = [1, 4], strides = [1, 1]} : vector<25x4xf32> to vector<1x4xf32>
    %c3_542 = arith.constant 3 : index
    %c0_543 = arith.constant 0 : index
    %c0_544 = arith.constant 0 : index
    %c0_545 = arith.constant 0 : index
    %1038 = vector.load %arg9[%c3_542, %c0_543, %c0_544, %c0_545] : memref<4x10x10x4xf32, #tpu.memory_space<vmem>>, vector<1x8x8x4xf32>
    %1039 = vector.shape_cast %1038 : vector<1x8x8x4xf32> to vector<8x8x4xf32>
    %1040 = vector.shape_cast %1037 : vector<1x4xf32> to vector<1x1x4xf32>
    %1041 = vector.broadcast %1040 : vector<1x1x4xf32> to vector<8x8x4xf32>
    %1042 = arith.mulf %1039, %1041 : vector<8x8x4xf32>
    %1043 = arith.addf %1036, %1042 : vector<8x8x4xf32>
    %1044 = vector.extract_strided_slice %782 {offsets = [6, 0], sizes = [1, 4], strides = [1, 1]} : vector<25x4xf32> to vector<1x4xf32>
    %c2_546 = arith.constant 2 : index
    %c0_547 = arith.constant 0 : index
    %c1_548 = arith.constant 1 : index
    %c0_549 = arith.constant 0 : index
    %1045 = vector.load %arg9[%c2_546, %c0_547, %c1_548, %c0_549] : memref<4x10x10x4xf32, #tpu.memory_space<vmem>>, vector<1x8x8x4xf32>
    %1046 = vector.shape_cast %1045 : vector<1x8x8x4xf32> to vector<8x8x4xf32>
    %1047 = vector.shape_cast %1044 : vector<1x4xf32> to vector<1x1x4xf32>
    %1048 = vector.broadcast %1047 : vector<1x1x4xf32> to vector<8x8x4xf32>
    %1049 = arith.mulf %1046, %1048 : vector<8x8x4xf32>
    %1050 = arith.addf %1043, %1049 : vector<8x8x4xf32>
    %1051 = vector.extract_strided_slice %782 {offsets = [7, 0], sizes = [1, 4], strides = [1, 1]} : vector<25x4xf32> to vector<1x4xf32>
    %c3_550 = arith.constant 3 : index
    %c0_551 = arith.constant 0 : index
    %c1_552 = arith.constant 1 : index
    %c0_553 = arith.constant 0 : index
    %1052 = vector.load %arg9[%c3_550, %c0_551, %c1_552, %c0_553] : memref<4x10x10x4xf32, #tpu.memory_space<vmem>>, vector<1x8x8x4xf32>
    %1053 = vector.shape_cast %1052 : vector<1x8x8x4xf32> to vector<8x8x4xf32>
    %1054 = vector.shape_cast %1051 : vector<1x4xf32> to vector<1x1x4xf32>
    %1055 = vector.broadcast %1054 : vector<1x1x4xf32> to vector<8x8x4xf32>
    %1056 = arith.mulf %1053, %1055 : vector<8x8x4xf32>
    %1057 = arith.addf %1050, %1056 : vector<8x8x4xf32>
    %1058 = vector.extract_strided_slice %782 {offsets = [8, 0], sizes = [1, 4], strides = [1, 1]} : vector<25x4xf32> to vector<1x4xf32>
    %c2_554 = arith.constant 2 : index
    %c0_555 = arith.constant 0 : index
    %c2_556 = arith.constant 2 : index
    %c0_557 = arith.constant 0 : index
    %1059 = vector.load %arg9[%c2_554, %c0_555, %c2_556, %c0_557] : memref<4x10x10x4xf32, #tpu.memory_space<vmem>>, vector<1x8x8x4xf32>
    %1060 = vector.shape_cast %1059 : vector<1x8x8x4xf32> to vector<8x8x4xf32>
    %1061 = vector.shape_cast %1058 : vector<1x4xf32> to vector<1x1x4xf32>
    %1062 = vector.broadcast %1061 : vector<1x1x4xf32> to vector<8x8x4xf32>
    %1063 = arith.mulf %1060, %1062 : vector<8x8x4xf32>
    %1064 = arith.addf %1057, %1063 : vector<8x8x4xf32>
    %1065 = vector.extract_strided_slice %782 {offsets = [9, 0], sizes = [1, 4], strides = [1, 1]} : vector<25x4xf32> to vector<1x4xf32>
    %c3_558 = arith.constant 3 : index
    %c0_559 = arith.constant 0 : index
    %c2_560 = arith.constant 2 : index
    %c0_561 = arith.constant 0 : index
    %1066 = vector.load %arg9[%c3_558, %c0_559, %c2_560, %c0_561] : memref<4x10x10x4xf32, #tpu.memory_space<vmem>>, vector<1x8x8x4xf32>
    %1067 = vector.shape_cast %1066 : vector<1x8x8x4xf32> to vector<8x8x4xf32>
    %1068 = vector.shape_cast %1065 : vector<1x4xf32> to vector<1x1x4xf32>
    %1069 = vector.broadcast %1068 : vector<1x1x4xf32> to vector<8x8x4xf32>
    %1070 = arith.mulf %1067, %1069 : vector<8x8x4xf32>
    %1071 = arith.addf %1064, %1070 : vector<8x8x4xf32>
    %1072 = vector.extract_strided_slice %782 {offsets = [10, 0], sizes = [1, 4], strides = [1, 1]} : vector<25x4xf32> to vector<1x4xf32>
    %c1_562 = arith.constant 1 : index
    %c1_563 = arith.constant 1 : index
    %c0_564 = arith.constant 0 : index
    %c0_565 = arith.constant 0 : index
    %1073 = vector.load %arg9[%c1_562, %c1_563, %c0_564, %c0_565] : memref<4x10x10x4xf32, #tpu.memory_space<vmem>>, vector<1x8x8x4xf32>
    %1074 = vector.shape_cast %1073 : vector<1x8x8x4xf32> to vector<8x8x4xf32>
    %1075 = vector.shape_cast %1072 : vector<1x4xf32> to vector<1x1x4xf32>
    %1076 = vector.broadcast %1075 : vector<1x1x4xf32> to vector<8x8x4xf32>
    %1077 = arith.mulf %1074, %1076 : vector<8x8x4xf32>
    %1078 = arith.addf %1071, %1077 : vector<8x8x4xf32>
    %1079 = vector.extract_strided_slice %782 {offsets = [11, 0], sizes = [1, 4], strides = [1, 1]} : vector<25x4xf32> to vector<1x4xf32>
    %c0_566 = arith.constant 0 : index
    %c1_567 = arith.constant 1 : index
    %c1_568 = arith.constant 1 : index
    %c0_569 = arith.constant 0 : index
    %1080 = vector.load %arg9[%c0_566, %c1_567, %c1_568, %c0_569] : memref<4x10x10x4xf32, #tpu.memory_space<vmem>>, vector<1x8x8x4xf32>
    %1081 = vector.shape_cast %1080 : vector<1x8x8x4xf32> to vector<8x8x4xf32>
    %1082 = vector.shape_cast %1079 : vector<1x4xf32> to vector<1x1x4xf32>
    %1083 = vector.broadcast %1082 : vector<1x1x4xf32> to vector<8x8x4xf32>
    %1084 = arith.mulf %1081, %1083 : vector<8x8x4xf32>
    %1085 = arith.addf %1078, %1084 : vector<8x8x4xf32>
    %1086 = vector.extract_strided_slice %782 {offsets = [12, 0], sizes = [1, 4], strides = [1, 1]} : vector<25x4xf32> to vector<1x4xf32>
    %c1_570 = arith.constant 1 : index
    %c1_571 = arith.constant 1 : index
    %c1_572 = arith.constant 1 : index
    %c0_573 = arith.constant 0 : index
    %1087 = vector.load %arg9[%c1_570, %c1_571, %c1_572, %c0_573] : memref<4x10x10x4xf32, #tpu.memory_space<vmem>>, vector<1x8x8x4xf32>
    %1088 = vector.shape_cast %1087 : vector<1x8x8x4xf32> to vector<8x8x4xf32>
    %1089 = vector.shape_cast %1086 : vector<1x4xf32> to vector<1x1x4xf32>
    %1090 = vector.broadcast %1089 : vector<1x1x4xf32> to vector<8x8x4xf32>
    %1091 = arith.mulf %1088, %1090 : vector<8x8x4xf32>
    %1092 = arith.addf %1085, %1091 : vector<8x8x4xf32>
    %1093 = vector.extract_strided_slice %782 {offsets = [13, 0], sizes = [1, 4], strides = [1, 1]} : vector<25x4xf32> to vector<1x4xf32>
    %c0_574 = arith.constant 0 : index
    %c1_575 = arith.constant 1 : index
    %c2_576 = arith.constant 2 : index
    %c0_577 = arith.constant 0 : index
    %1094 = vector.load %arg9[%c0_574, %c1_575, %c2_576, %c0_577] : memref<4x10x10x4xf32, #tpu.memory_space<vmem>>, vector<1x8x8x4xf32>
    %1095 = vector.shape_cast %1094 : vector<1x8x8x4xf32> to vector<8x8x4xf32>
    %1096 = vector.shape_cast %1093 : vector<1x4xf32> to vector<1x1x4xf32>
    %1097 = vector.broadcast %1096 : vector<1x1x4xf32> to vector<8x8x4xf32>
    %1098 = arith.mulf %1095, %1097 : vector<8x8x4xf32>
    %1099 = arith.addf %1092, %1098 : vector<8x8x4xf32>
    %1100 = vector.extract_strided_slice %782 {offsets = [14, 0], sizes = [1, 4], strides = [1, 1]} : vector<25x4xf32> to vector<1x4xf32>
    %c1_578 = arith.constant 1 : index
    %c1_579 = arith.constant 1 : index
    %c2_580 = arith.constant 2 : index
    %c0_581 = arith.constant 0 : index
    %1101 = vector.load %arg9[%c1_578, %c1_579, %c2_580, %c0_581] : memref<4x10x10x4xf32, #tpu.memory_space<vmem>>, vector<1x8x8x4xf32>
    %1102 = vector.shape_cast %1101 : vector<1x8x8x4xf32> to vector<8x8x4xf32>
    %1103 = vector.shape_cast %1100 : vector<1x4xf32> to vector<1x1x4xf32>
    %1104 = vector.broadcast %1103 : vector<1x1x4xf32> to vector<8x8x4xf32>
    %1105 = arith.mulf %1102, %1104 : vector<8x8x4xf32>
    %1106 = arith.addf %1099, %1105 : vector<8x8x4xf32>
    %1107 = vector.extract_strided_slice %782 {offsets = [15, 0], sizes = [1, 4], strides = [1, 1]} : vector<25x4xf32> to vector<1x4xf32>
    %c3_582 = arith.constant 3 : index
    %c1_583 = arith.constant 1 : index
    %c0_584 = arith.constant 0 : index
    %c0_585 = arith.constant 0 : index
    %1108 = vector.load %arg9[%c3_582, %c1_583, %c0_584, %c0_585] : memref<4x10x10x4xf32, #tpu.memory_space<vmem>>, vector<1x8x8x4xf32>
    %1109 = vector.shape_cast %1108 : vector<1x8x8x4xf32> to vector<8x8x4xf32>
    %1110 = vector.shape_cast %1107 : vector<1x4xf32> to vector<1x1x4xf32>
    %1111 = vector.broadcast %1110 : vector<1x1x4xf32> to vector<8x8x4xf32>
    %1112 = arith.mulf %1109, %1111 : vector<8x8x4xf32>
    %1113 = arith.addf %1106, %1112 : vector<8x8x4xf32>
    %1114 = vector.extract_strided_slice %782 {offsets = [16, 0], sizes = [1, 4], strides = [1, 1]} : vector<25x4xf32> to vector<1x4xf32>
    %c2_586 = arith.constant 2 : index
    %c1_587 = arith.constant 1 : index
    %c1_588 = arith.constant 1 : index
    %c0_589 = arith.constant 0 : index
    %1115 = vector.load %arg9[%c2_586, %c1_587, %c1_588, %c0_589] : memref<4x10x10x4xf32, #tpu.memory_space<vmem>>, vector<1x8x8x4xf32>
    %1116 = vector.shape_cast %1115 : vector<1x8x8x4xf32> to vector<8x8x4xf32>
    %1117 = vector.shape_cast %1114 : vector<1x4xf32> to vector<1x1x4xf32>
    %1118 = vector.broadcast %1117 : vector<1x1x4xf32> to vector<8x8x4xf32>
    %1119 = arith.mulf %1116, %1118 : vector<8x8x4xf32>
    %1120 = arith.addf %1113, %1119 : vector<8x8x4xf32>
    %1121 = vector.extract_strided_slice %782 {offsets = [17, 0], sizes = [1, 4], strides = [1, 1]} : vector<25x4xf32> to vector<1x4xf32>
    %c3_590 = arith.constant 3 : index
    %c1_591 = arith.constant 1 : index
    %c1_592 = arith.constant 1 : index
    %c0_593 = arith.constant 0 : index
    %1122 = vector.load %arg9[%c3_590, %c1_591, %c1_592, %c0_593] : memref<4x10x10x4xf32, #tpu.memory_space<vmem>>, vector<1x8x8x4xf32>
    %1123 = vector.shape_cast %1122 : vector<1x8x8x4xf32> to vector<8x8x4xf32>
    %1124 = vector.shape_cast %1121 : vector<1x4xf32> to vector<1x1x4xf32>
    %1125 = vector.broadcast %1124 : vector<1x1x4xf32> to vector<8x8x4xf32>
    %1126 = arith.mulf %1123, %1125 : vector<8x8x4xf32>
    %1127 = arith.addf %1120, %1126 : vector<8x8x4xf32>
    %1128 = vector.extract_strided_slice %782 {offsets = [18, 0], sizes = [1, 4], strides = [1, 1]} : vector<25x4xf32> to vector<1x4xf32>
    %c2_594 = arith.constant 2 : index
    %c1_595 = arith.constant 1 : index
    %c2_596 = arith.constant 2 : index
    %c0_597 = arith.constant 0 : index
    %1129 = vector.load %arg9[%c2_594, %c1_595, %c2_596, %c0_597] : memref<4x10x10x4xf32, #tpu.memory_space<vmem>>, vector<1x8x8x4xf32>
    %1130 = vector.shape_cast %1129 : vector<1x8x8x4xf32> to vector<8x8x4xf32>
    %1131 = vector.shape_cast %1128 : vector<1x4xf32> to vector<1x1x4xf32>
    %1132 = vector.broadcast %1131 : vector<1x1x4xf32> to vector<8x8x4xf32>
    %1133 = arith.mulf %1130, %1132 : vector<8x8x4xf32>
    %1134 = arith.addf %1127, %1133 : vector<8x8x4xf32>
    %1135 = vector.extract_strided_slice %782 {offsets = [19, 0], sizes = [1, 4], strides = [1, 1]} : vector<25x4xf32> to vector<1x4xf32>
    %c3_598 = arith.constant 3 : index
    %c1_599 = arith.constant 1 : index
    %c2_600 = arith.constant 2 : index
    %c0_601 = arith.constant 0 : index
    %1136 = vector.load %arg9[%c3_598, %c1_599, %c2_600, %c0_601] : memref<4x10x10x4xf32, #tpu.memory_space<vmem>>, vector<1x8x8x4xf32>
    %1137 = vector.shape_cast %1136 : vector<1x8x8x4xf32> to vector<8x8x4xf32>
    %1138 = vector.shape_cast %1135 : vector<1x4xf32> to vector<1x1x4xf32>
    %1139 = vector.broadcast %1138 : vector<1x1x4xf32> to vector<8x8x4xf32>
    %1140 = arith.mulf %1137, %1139 : vector<8x8x4xf32>
    %1141 = arith.addf %1134, %1140 : vector<8x8x4xf32>
    %1142 = vector.extract_strided_slice %782 {offsets = [20, 0], sizes = [1, 4], strides = [1, 1]} : vector<25x4xf32> to vector<1x4xf32>
    %c1_602 = arith.constant 1 : index
    %c2_603 = arith.constant 2 : index
    %c0_604 = arith.constant 0 : index
    %c0_605 = arith.constant 0 : index
    %1143 = vector.load %arg9[%c1_602, %c2_603, %c0_604, %c0_605] : memref<4x10x10x4xf32, #tpu.memory_space<vmem>>, vector<1x8x8x4xf32>
    %1144 = vector.shape_cast %1143 : vector<1x8x8x4xf32> to vector<8x8x4xf32>
    %1145 = vector.shape_cast %1142 : vector<1x4xf32> to vector<1x1x4xf32>
    %1146 = vector.broadcast %1145 : vector<1x1x4xf32> to vector<8x8x4xf32>
    %1147 = arith.mulf %1144, %1146 : vector<8x8x4xf32>
    %1148 = arith.addf %1141, %1147 : vector<8x8x4xf32>
    %1149 = vector.extract_strided_slice %782 {offsets = [21, 0], sizes = [1, 4], strides = [1, 1]} : vector<25x4xf32> to vector<1x4xf32>
    %c0_606 = arith.constant 0 : index
    %c2_607 = arith.constant 2 : index
    %c1_608 = arith.constant 1 : index
    %c0_609 = arith.constant 0 : index
    %1150 = vector.load %arg9[%c0_606, %c2_607, %c1_608, %c0_609] : memref<4x10x10x4xf32, #tpu.memory_space<vmem>>, vector<1x8x8x4xf32>
    %1151 = vector.shape_cast %1150 : vector<1x8x8x4xf32> to vector<8x8x4xf32>
    %1152 = vector.shape_cast %1149 : vector<1x4xf32> to vector<1x1x4xf32>
    %1153 = vector.broadcast %1152 : vector<1x1x4xf32> to vector<8x8x4xf32>
    %1154 = arith.mulf %1151, %1153 : vector<8x8x4xf32>
    %1155 = arith.addf %1148, %1154 : vector<8x8x4xf32>
    %1156 = vector.extract_strided_slice %782 {offsets = [22, 0], sizes = [1, 4], strides = [1, 1]} : vector<25x4xf32> to vector<1x4xf32>
    %c1_610 = arith.constant 1 : index
    %c2_611 = arith.constant 2 : index
    %c1_612 = arith.constant 1 : index
    %c0_613 = arith.constant 0 : index
    %1157 = vector.load %arg9[%c1_610, %c2_611, %c1_612, %c0_613] : memref<4x10x10x4xf32, #tpu.memory_space<vmem>>, vector<1x8x8x4xf32>
    %1158 = vector.shape_cast %1157 : vector<1x8x8x4xf32> to vector<8x8x4xf32>
    %1159 = vector.shape_cast %1156 : vector<1x4xf32> to vector<1x1x4xf32>
    %1160 = vector.broadcast %1159 : vector<1x1x4xf32> to vector<8x8x4xf32>
    %1161 = arith.mulf %1158, %1160 : vector<8x8x4xf32>
    %1162 = arith.addf %1155, %1161 : vector<8x8x4xf32>
    %1163 = vector.extract_strided_slice %782 {offsets = [23, 0], sizes = [1, 4], strides = [1, 1]} : vector<25x4xf32> to vector<1x4xf32>
    %c0_614 = arith.constant 0 : index
    %c2_615 = arith.constant 2 : index
    %c2_616 = arith.constant 2 : index
    %c0_617 = arith.constant 0 : index
    %1164 = vector.load %arg9[%c0_614, %c2_615, %c2_616, %c0_617] : memref<4x10x10x4xf32, #tpu.memory_space<vmem>>, vector<1x8x8x4xf32>
    %1165 = vector.shape_cast %1164 : vector<1x8x8x4xf32> to vector<8x8x4xf32>
    %1166 = vector.shape_cast %1163 : vector<1x4xf32> to vector<1x1x4xf32>
    %1167 = vector.broadcast %1166 : vector<1x1x4xf32> to vector<8x8x4xf32>
    %1168 = arith.mulf %1165, %1167 : vector<8x8x4xf32>
    %1169 = arith.addf %1162, %1168 : vector<8x8x4xf32>
    %1170 = vector.extract_strided_slice %782 {offsets = [24, 0], sizes = [1, 4], strides = [1, 1]} : vector<25x4xf32> to vector<1x4xf32>
    %c1_618 = arith.constant 1 : index
    %c2_619 = arith.constant 2 : index
    %c2_620 = arith.constant 2 : index
    %c0_621 = arith.constant 0 : index
    %1171 = vector.load %arg9[%c1_618, %c2_619, %c2_620, %c0_621] : memref<4x10x10x4xf32, #tpu.memory_space<vmem>>, vector<1x8x8x4xf32>
    %1172 = vector.shape_cast %1171 : vector<1x8x8x4xf32> to vector<8x8x4xf32>
    %1173 = vector.shape_cast %1170 : vector<1x4xf32> to vector<1x1x4xf32>
    %1174 = vector.broadcast %1173 : vector<1x1x4xf32> to vector<8x8x4xf32>
    %1175 = arith.mulf %1172, %1174 : vector<8x8x4xf32>
    %1176 = arith.addf %1169, %1175 : vector<8x8x4xf32>
    %1177 = vector.shape_cast %783 : vector<1x4xf32> to vector<1x1x4xf32>
    %1178 = vector.broadcast %1177 : vector<1x1x4xf32> to vector<8x8x4xf32>
    %1179 = arith.addf %1176, %1178 : vector<8x8x4xf32>
    %1180 = vector.shape_cast %784 : vector<1x4xf32> to vector<1x1x4xf32>
    %1181 = vector.broadcast %1180 : vector<1x1x4xf32> to vector<8x8x4xf32>
    %1182 = arith.mulf %1181, %1179 : vector<8x8x4xf32>
    %1183 = arith.addf %1182, %1000 : vector<8x8x4xf32>
    %c0_622 = arith.constant 0 : index
    %c0_623 = arith.constant 0 : index
    %c0_624 = arith.constant 0 : index
    %c1_625 = arith.constant 1 : index
    %c0_626 = arith.constant 0 : index
    %c0_627 = arith.constant 0 : index
    %1184 = vector.load %arg8[%c0_622, %c0_623, %c0_624, %c1_625, %c0_626, %c0_627] : memref<1x8x2x2x8x4xf32, #tpu.memory_space<vmem>>, vector<1x8x1x1x8x4xf32>
    %1185 = vector.shape_cast %1184 : vector<1x8x1x1x8x4xf32> to vector<8x8x4xf32>
    %1186 = vector.shape_cast %1183 : vector<8x8x4xf32> to vector<1x8x1x1x8x4xf32>
    tpu.vector_store %arg8[%c0_622, %c0_623, %c0_624, %c1_625, %c0_626, %c0_627], %1186 {strides = array<i32>} : memref<1x8x2x2x8x4xf32, #tpu.memory_space<vmem>>, vector<1x8x1x1x8x4xf32>,
    %cst_628 = arith.constant -1.000000e+00 : f32
    %1187 = vector.broadcast %cst_628 : f32 to vector<8x8x4xf32>
    %1188 = arith.mulf %1187, %788 : vector<8x8x4xf32>
    %1189 = arith.addf %786, %1188 : vector<8x8x4xf32>
    %cst_629 = arith.constant 1.000000e+00 : f32
    %1190 = vector.broadcast %cst_629 : f32 to vector<8x8x4xf32>
    %1191 = arith.mulf %1190, %790 : vector<8x8x4xf32>
    %1192 = arith.addf %1189, %1191 : vector<8x8x4xf32>
    %cst_630 = arith.constant -1.000000e+00 : f32
    %1193 = vector.broadcast %cst_630 : f32 to vector<8x8x4xf32>
    %1194 = arith.mulf %1193, %792 : vector<8x8x4xf32>
    %1195 = arith.addf %1192, %1194 : vector<8x8x4xf32>
    %cst_631 = arith.constant 5.000000e-01 : f32
    %1196 = vector.broadcast %cst_631 : f32 to vector<8x8x4xf32>
    %1197 = arith.mulf %1196, %1195 : vector<8x8x4xf32>
    %cst_632 = arith.constant 0.000000e+00 : f32
    %1198 = vector.broadcast %cst_632 : f32 to vector<8x8x4xf32>
    %1199 = vector.extract_strided_slice %782 {offsets = [0, 0], sizes = [1, 4], strides = [1, 1]} : vector<25x4xf32> to vector<1x4xf32>
    %c2_633 = arith.constant 2 : index
    %c0_634 = arith.constant 0 : index
    %c0_635 = arith.constant 0 : index
    %c0_636 = arith.constant 0 : index
    %1200 = vector.load %arg9[%c2_633, %c0_634, %c0_635, %c0_636] : memref<4x10x10x4xf32, #tpu.memory_space<vmem>>, vector<1x8x8x4xf32>
    %1201 = vector.shape_cast %1200 : vector<1x8x8x4xf32> to vector<8x8x4xf32>
    %1202 = vector.shape_cast %1199 : vector<1x4xf32> to vector<1x1x4xf32>
    %1203 = vector.broadcast %1202 : vector<1x1x4xf32> to vector<8x8x4xf32>
    %1204 = arith.mulf %1201, %1203 : vector<8x8x4xf32>
    %1205 = arith.addf %1198, %1204 : vector<8x8x4xf32>
    %1206 = vector.extract_strided_slice %782 {offsets = [1, 0], sizes = [1, 4], strides = [1, 1]} : vector<25x4xf32> to vector<1x4xf32>
    %c3_637 = arith.constant 3 : index
    %c0_638 = arith.constant 0 : index
    %c0_639 = arith.constant 0 : index
    %c0_640 = arith.constant 0 : index
    %1207 = vector.load %arg9[%c3_637, %c0_638, %c0_639, %c0_640] : memref<4x10x10x4xf32, #tpu.memory_space<vmem>>, vector<1x8x8x4xf32>
    %1208 = vector.shape_cast %1207 : vector<1x8x8x4xf32> to vector<8x8x4xf32>
    %1209 = vector.shape_cast %1206 : vector<1x4xf32> to vector<1x1x4xf32>
    %1210 = vector.broadcast %1209 : vector<1x1x4xf32> to vector<8x8x4xf32>
    %1211 = arith.mulf %1208, %1210 : vector<8x8x4xf32>
    %1212 = arith.addf %1205, %1211 : vector<8x8x4xf32>
    %1213 = vector.extract_strided_slice %782 {offsets = [2, 0], sizes = [1, 4], strides = [1, 1]} : vector<25x4xf32> to vector<1x4xf32>
    %c2_641 = arith.constant 2 : index
    %c0_642 = arith.constant 0 : index
    %c1_643 = arith.constant 1 : index
    %c0_644 = arith.constant 0 : index
    %1214 = vector.load %arg9[%c2_641, %c0_642, %c1_643, %c0_644] : memref<4x10x10x4xf32, #tpu.memory_space<vmem>>, vector<1x8x8x4xf32>
    %1215 = vector.shape_cast %1214 : vector<1x8x8x4xf32> to vector<8x8x4xf32>
    %1216 = vector.shape_cast %1213 : vector<1x4xf32> to vector<1x1x4xf32>
    %1217 = vector.broadcast %1216 : vector<1x1x4xf32> to vector<8x8x4xf32>
    %1218 = arith.mulf %1215, %1217 : vector<8x8x4xf32>
    %1219 = arith.addf %1212, %1218 : vector<8x8x4xf32>
    %1220 = vector.extract_strided_slice %782 {offsets = [3, 0], sizes = [1, 4], strides = [1, 1]} : vector<25x4xf32> to vector<1x4xf32>
    %c3_645 = arith.constant 3 : index
    %c0_646 = arith.constant 0 : index
    %c1_647 = arith.constant 1 : index
    %c0_648 = arith.constant 0 : index
    %1221 = vector.load %arg9[%c3_645, %c0_646, %c1_647, %c0_648] : memref<4x10x10x4xf32, #tpu.memory_space<vmem>>, vector<1x8x8x4xf32>
    %1222 = vector.shape_cast %1221 : vector<1x8x8x4xf32> to vector<8x8x4xf32>
    %1223 = vector.shape_cast %1220 : vector<1x4xf32> to vector<1x1x4xf32>
    %1224 = vector.broadcast %1223 : vector<1x1x4xf32> to vector<8x8x4xf32>
    %1225 = arith.mulf %1222, %1224 : vector<8x8x4xf32>
    %1226 = arith.addf %1219, %1225 : vector<8x8x4xf32>
    %1227 = vector.extract_strided_slice %782 {offsets = [4, 0], sizes = [1, 4], strides = [1, 1]} : vector<25x4xf32> to vector<1x4xf32>
    %c2_649 = arith.constant 2 : index
    %c0_650 = arith.constant 0 : index
    %c2_651 = arith.constant 2 : index
    %c0_652 = arith.constant 0 : index
    %1228 = vector.load %arg9[%c2_649, %c0_650, %c2_651, %c0_652] : memref<4x10x10x4xf32, #tpu.memory_space<vmem>>, vector<1x8x8x4xf32>
    %1229 = vector.shape_cast %1228 : vector<1x8x8x4xf32> to vector<8x8x4xf32>
    %1230 = vector.shape_cast %1227 : vector<1x4xf32> to vector<1x1x4xf32>
    %1231 = vector.broadcast %1230 : vector<1x1x4xf32> to vector<8x8x4xf32>
    %1232 = arith.mulf %1229, %1231 : vector<8x8x4xf32>
    %1233 = arith.addf %1226, %1232 : vector<8x8x4xf32>
    %1234 = vector.extract_strided_slice %782 {offsets = [5, 0], sizes = [1, 4], strides = [1, 1]} : vector<25x4xf32> to vector<1x4xf32>
    %c0_653 = arith.constant 0 : index
    %c1_654 = arith.constant 1 : index
    %c0_655 = arith.constant 0 : index
    %c0_656 = arith.constant 0 : index
    %1235 = vector.load %arg9[%c0_653, %c1_654, %c0_655, %c0_656] : memref<4x10x10x4xf32, #tpu.memory_space<vmem>>, vector<1x8x8x4xf32>
    %1236 = vector.shape_cast %1235 : vector<1x8x8x4xf32> to vector<8x8x4xf32>
    %1237 = vector.shape_cast %1234 : vector<1x4xf32> to vector<1x1x4xf32>
    %1238 = vector.broadcast %1237 : vector<1x1x4xf32> to vector<8x8x4xf32>
    %1239 = arith.mulf %1236, %1238 : vector<8x8x4xf32>
    %1240 = arith.addf %1233, %1239 : vector<8x8x4xf32>
    %1241 = vector.extract_strided_slice %782 {offsets = [6, 0], sizes = [1, 4], strides = [1, 1]} : vector<25x4xf32> to vector<1x4xf32>
    %c1_657 = arith.constant 1 : index
    %c1_658 = arith.constant 1 : index
    %c0_659 = arith.constant 0 : index
    %c0_660 = arith.constant 0 : index
    %1242 = vector.load %arg9[%c1_657, %c1_658, %c0_659, %c0_660] : memref<4x10x10x4xf32, #tpu.memory_space<vmem>>, vector<1x8x8x4xf32>
    %1243 = vector.shape_cast %1242 : vector<1x8x8x4xf32> to vector<8x8x4xf32>
    %1244 = vector.shape_cast %1241 : vector<1x4xf32> to vector<1x1x4xf32>
    %1245 = vector.broadcast %1244 : vector<1x1x4xf32> to vector<8x8x4xf32>
    %1246 = arith.mulf %1243, %1245 : vector<8x8x4xf32>
    %1247 = arith.addf %1240, %1246 : vector<8x8x4xf32>
    %1248 = vector.extract_strided_slice %782 {offsets = [7, 0], sizes = [1, 4], strides = [1, 1]} : vector<25x4xf32> to vector<1x4xf32>
    %c0_661 = arith.constant 0 : index
    %c1_662 = arith.constant 1 : index
    %c1_663 = arith.constant 1 : index
    %c0_664 = arith.constant 0 : index
    %1249 = vector.load %arg9[%c0_661, %c1_662, %c1_663, %c0_664] : memref<4x10x10x4xf32, #tpu.memory_space<vmem>>, vector<1x8x8x4xf32>
    %1250 = vector.shape_cast %1249 : vector<1x8x8x4xf32> to vector<8x8x4xf32>
    %1251 = vector.shape_cast %1248 : vector<1x4xf32> to vector<1x1x4xf32>
    %1252 = vector.broadcast %1251 : vector<1x1x4xf32> to vector<8x8x4xf32>
    %1253 = arith.mulf %1250, %1252 : vector<8x8x4xf32>
    %1254 = arith.addf %1247, %1253 : vector<8x8x4xf32>
    %1255 = vector.extract_strided_slice %782 {offsets = [8, 0], sizes = [1, 4], strides = [1, 1]} : vector<25x4xf32> to vector<1x4xf32>
    %c1_665 = arith.constant 1 : index
    %c1_666 = arith.constant 1 : index
    %c1_667 = arith.constant 1 : index
    %c0_668 = arith.constant 0 : index
    %1256 = vector.load %arg9[%c1_665, %c1_666, %c1_667, %c0_668] : memref<4x10x10x4xf32, #tpu.memory_space<vmem>>, vector<1x8x8x4xf32>
    %1257 = vector.shape_cast %1256 : vector<1x8x8x4xf32> to vector<8x8x4xf32>
    %1258 = vector.shape_cast %1255 : vector<1x4xf32> to vector<1x1x4xf32>
    %1259 = vector.broadcast %1258 : vector<1x1x4xf32> to vector<8x8x4xf32>
    %1260 = arith.mulf %1257, %1259 : vector<8x8x4xf32>
    %1261 = arith.addf %1254, %1260 : vector<8x8x4xf32>
    %1262 = vector.extract_strided_slice %782 {offsets = [9, 0], sizes = [1, 4], strides = [1, 1]} : vector<25x4xf32> to vector<1x4xf32>
    %c0_669 = arith.constant 0 : index
    %c1_670 = arith.constant 1 : index
    %c2_671 = arith.constant 2 : index
    %c0_672 = arith.constant 0 : index
    %1263 = vector.load %arg9[%c0_669, %c1_670, %c2_671, %c0_672] : memref<4x10x10x4xf32, #tpu.memory_space<vmem>>, vector<1x8x8x4xf32>
    %1264 = vector.shape_cast %1263 : vector<1x8x8x4xf32> to vector<8x8x4xf32>
    %1265 = vector.shape_cast %1262 : vector<1x4xf32> to vector<1x1x4xf32>
    %1266 = vector.broadcast %1265 : vector<1x1x4xf32> to vector<8x8x4xf32>
    %1267 = arith.mulf %1264, %1266 : vector<8x8x4xf32>
    %1268 = arith.addf %1261, %1267 : vector<8x8x4xf32>
    %1269 = vector.extract_strided_slice %782 {offsets = [10, 0], sizes = [1, 4], strides = [1, 1]} : vector<25x4xf32> to vector<1x4xf32>
    %c2_673 = arith.constant 2 : index
    %c1_674 = arith.constant 1 : index
    %c0_675 = arith.constant 0 : index
    %c0_676 = arith.constant 0 : index
    %1270 = vector.load %arg9[%c2_673, %c1_674, %c0_675, %c0_676] : memref<4x10x10x4xf32, #tpu.memory_space<vmem>>, vector<1x8x8x4xf32>
    %1271 = vector.shape_cast %1270 : vector<1x8x8x4xf32> to vector<8x8x4xf32>
    %1272 = vector.shape_cast %1269 : vector<1x4xf32> to vector<1x1x4xf32>
    %1273 = vector.broadcast %1272 : vector<1x1x4xf32> to vector<8x8x4xf32>
    %1274 = arith.mulf %1271, %1273 : vector<8x8x4xf32>
    %1275 = arith.addf %1268, %1274 : vector<8x8x4xf32>
    %1276 = vector.extract_strided_slice %782 {offsets = [11, 0], sizes = [1, 4], strides = [1, 1]} : vector<25x4xf32> to vector<1x4xf32>
    %c3_677 = arith.constant 3 : index
    %c1_678 = arith.constant 1 : index
    %c0_679 = arith.constant 0 : index
    %c0_680 = arith.constant 0 : index
    %1277 = vector.load %arg9[%c3_677, %c1_678, %c0_679, %c0_680] : memref<4x10x10x4xf32, #tpu.memory_space<vmem>>, vector<1x8x8x4xf32>
    %1278 = vector.shape_cast %1277 : vector<1x8x8x4xf32> to vector<8x8x4xf32>
    %1279 = vector.shape_cast %1276 : vector<1x4xf32> to vector<1x1x4xf32>
    %1280 = vector.broadcast %1279 : vector<1x1x4xf32> to vector<8x8x4xf32>
    %1281 = arith.mulf %1278, %1280 : vector<8x8x4xf32>
    %1282 = arith.addf %1275, %1281 : vector<8x8x4xf32>
    %1283 = vector.extract_strided_slice %782 {offsets = [12, 0], sizes = [1, 4], strides = [1, 1]} : vector<25x4xf32> to vector<1x4xf32>
    %c2_681 = arith.constant 2 : index
    %c1_682 = arith.constant 1 : index
    %c1_683 = arith.constant 1 : index
    %c0_684 = arith.constant 0 : index
    %1284 = vector.load %arg9[%c2_681, %c1_682, %c1_683, %c0_684] : memref<4x10x10x4xf32, #tpu.memory_space<vmem>>, vector<1x8x8x4xf32>
    %1285 = vector.shape_cast %1284 : vector<1x8x8x4xf32> to vector<8x8x4xf32>
    %1286 = vector.shape_cast %1283 : vector<1x4xf32> to vector<1x1x4xf32>
    %1287 = vector.broadcast %1286 : vector<1x1x4xf32> to vector<8x8x4xf32>
    %1288 = arith.mulf %1285, %1287 : vector<8x8x4xf32>
    %1289 = arith.addf %1282, %1288 : vector<8x8x4xf32>
    %1290 = vector.extract_strided_slice %782 {offsets = [13, 0], sizes = [1, 4], strides = [1, 1]} : vector<25x4xf32> to vector<1x4xf32>
    %c3_685 = arith.constant 3 : index
    %c1_686 = arith.constant 1 : index
    %c1_687 = arith.constant 1 : index
    %c0_688 = arith.constant 0 : index
    %1291 = vector.load %arg9[%c3_685, %c1_686, %c1_687, %c0_688] : memref<4x10x10x4xf32, #tpu.memory_space<vmem>>, vector<1x8x8x4xf32>
    %1292 = vector.shape_cast %1291 : vector<1x8x8x4xf32> to vector<8x8x4xf32>
    %1293 = vector.shape_cast %1290 : vector<1x4xf32> to vector<1x1x4xf32>
    %1294 = vector.broadcast %1293 : vector<1x1x4xf32> to vector<8x8x4xf32>
    %1295 = arith.mulf %1292, %1294 : vector<8x8x4xf32>
    %1296 = arith.addf %1289, %1295 : vector<8x8x4xf32>
    %1297 = vector.extract_strided_slice %782 {offsets = [14, 0], sizes = [1, 4], strides = [1, 1]} : vector<25x4xf32> to vector<1x4xf32>
    %c2_689 = arith.constant 2 : index
    %c1_690 = arith.constant 1 : index
    %c2_691 = arith.constant 2 : index
    %c0_692 = arith.constant 0 : index
    %1298 = vector.load %arg9[%c2_689, %c1_690, %c2_691, %c0_692] : memref<4x10x10x4xf32, #tpu.memory_space<vmem>>, vector<1x8x8x4xf32>
    %1299 = vector.shape_cast %1298 : vector<1x8x8x4xf32> to vector<8x8x4xf32>
    %1300 = vector.shape_cast %1297 : vector<1x4xf32> to vector<1x1x4xf32>
    %1301 = vector.broadcast %1300 : vector<1x1x4xf32> to vector<8x8x4xf32>
    %1302 = arith.mulf %1299, %1301 : vector<8x8x4xf32>
    %1303 = arith.addf %1296, %1302 : vector<8x8x4xf32>
    %1304 = vector.extract_strided_slice %782 {offsets = [15, 0], sizes = [1, 4], strides = [1, 1]} : vector<25x4xf32> to vector<1x4xf32>
    %c0_693 = arith.constant 0 : index
    %c2_694 = arith.constant 2 : index
    %c0_695 = arith.constant 0 : index
    %c0_696 = arith.constant 0 : index
    %1305 = vector.load %arg9[%c0_693, %c2_694, %c0_695, %c0_696] : memref<4x10x10x4xf32, #tpu.memory_space<vmem>>, vector<1x8x8x4xf32>
    %1306 = vector.shape_cast %1305 : vector<1x8x8x4xf32> to vector<8x8x4xf32>
    %1307 = vector.shape_cast %1304 : vector<1x4xf32> to vector<1x1x4xf32>
    %1308 = vector.broadcast %1307 : vector<1x1x4xf32> to vector<8x8x4xf32>
    %1309 = arith.mulf %1306, %1308 : vector<8x8x4xf32>
    %1310 = arith.addf %1303, %1309 : vector<8x8x4xf32>
    %1311 = vector.extract_strided_slice %782 {offsets = [16, 0], sizes = [1, 4], strides = [1, 1]} : vector<25x4xf32> to vector<1x4xf32>
    %c1_697 = arith.constant 1 : index
    %c2_698 = arith.constant 2 : index
    %c0_699 = arith.constant 0 : index
    %c0_700 = arith.constant 0 : index
    %1312 = vector.load %arg9[%c1_697, %c2_698, %c0_699, %c0_700] : memref<4x10x10x4xf32, #tpu.memory_space<vmem>>, vector<1x8x8x4xf32>
    %1313 = vector.shape_cast %1312 : vector<1x8x8x4xf32> to vector<8x8x4xf32>
    %1314 = vector.shape_cast %1311 : vector<1x4xf32> to vector<1x1x4xf32>
    %1315 = vector.broadcast %1314 : vector<1x1x4xf32> to vector<8x8x4xf32>
    %1316 = arith.mulf %1313, %1315 : vector<8x8x4xf32>
    %1317 = arith.addf %1310, %1316 : vector<8x8x4xf32>
    %1318 = vector.extract_strided_slice %782 {offsets = [17, 0], sizes = [1, 4], strides = [1, 1]} : vector<25x4xf32> to vector<1x4xf32>
    %c0_701 = arith.constant 0 : index
    %c2_702 = arith.constant 2 : index
    %c1_703 = arith.constant 1 : index
    %c0_704 = arith.constant 0 : index
    %1319 = vector.load %arg9[%c0_701, %c2_702, %c1_703, %c0_704] : memref<4x10x10x4xf32, #tpu.memory_space<vmem>>, vector<1x8x8x4xf32>
    %1320 = vector.shape_cast %1319 : vector<1x8x8x4xf32> to vector<8x8x4xf32>
    %1321 = vector.shape_cast %1318 : vector<1x4xf32> to vector<1x1x4xf32>
    %1322 = vector.broadcast %1321 : vector<1x1x4xf32> to vector<8x8x4xf32>
    %1323 = arith.mulf %1320, %1322 : vector<8x8x4xf32>
    %1324 = arith.addf %1317, %1323 : vector<8x8x4xf32>
    %1325 = vector.extract_strided_slice %782 {offsets = [18, 0], sizes = [1, 4], strides = [1, 1]} : vector<25x4xf32> to vector<1x4xf32>
    %c1_705 = arith.constant 1 : index
    %c2_706 = arith.constant 2 : index
    %c1_707 = arith.constant 1 : index
    %c0_708 = arith.constant 0 : index
    %1326 = vector.load %arg9[%c1_705, %c2_706, %c1_707, %c0_708] : memref<4x10x10x4xf32, #tpu.memory_space<vmem>>, vector<1x8x8x4xf32>
    %1327 = vector.shape_cast %1326 : vector<1x8x8x4xf32> to vector<8x8x4xf32>
    %1328 = vector.shape_cast %1325 : vector<1x4xf32> to vector<1x1x4xf32>
    %1329 = vector.broadcast %1328 : vector<1x1x4xf32> to vector<8x8x4xf32>
    %1330 = arith.mulf %1327, %1329 : vector<8x8x4xf32>
    %1331 = arith.addf %1324, %1330 : vector<8x8x4xf32>
    %1332 = vector.extract_strided_slice %782 {offsets = [19, 0], sizes = [1, 4], strides = [1, 1]} : vector<25x4xf32> to vector<1x4xf32>
    %c0_709 = arith.constant 0 : index
    %c2_710 = arith.constant 2 : index
    %c2_711 = arith.constant 2 : index
    %c0_712 = arith.constant 0 : index
    %1333 = vector.load %arg9[%c0_709, %c2_710, %c2_711, %c0_712] : memref<4x10x10x4xf32, #tpu.memory_space<vmem>>, vector<1x8x8x4xf32>
    %1334 = vector.shape_cast %1333 : vector<1x8x8x4xf32> to vector<8x8x4xf32>
    %1335 = vector.shape_cast %1332 : vector<1x4xf32> to vector<1x1x4xf32>
    %1336 = vector.broadcast %1335 : vector<1x1x4xf32> to vector<8x8x4xf32>
    %1337 = arith.mulf %1334, %1336 : vector<8x8x4xf32>
    %1338 = arith.addf %1331, %1337 : vector<8x8x4xf32>
    %1339 = vector.extract_strided_slice %782 {offsets = [20, 0], sizes = [1, 4], strides = [1, 1]} : vector<25x4xf32> to vector<1x4xf32>
    %c2_713 = arith.constant 2 : index
    %c2_714 = arith.constant 2 : index
    %c0_715 = arith.constant 0 : index
    %c0_716 = arith.constant 0 : index
    %1340 = vector.load %arg9[%c2_713, %c2_714, %c0_715, %c0_716] : memref<4x10x10x4xf32, #tpu.memory_space<vmem>>, vector<1x8x8x4xf32>
    %1341 = vector.shape_cast %1340 : vector<1x8x8x4xf32> to vector<8x8x4xf32>
    %1342 = vector.shape_cast %1339 : vector<1x4xf32> to vector<1x1x4xf32>
    %1343 = vector.broadcast %1342 : vector<1x1x4xf32> to vector<8x8x4xf32>
    %1344 = arith.mulf %1341, %1343 : vector<8x8x4xf32>
    %1345 = arith.addf %1338, %1344 : vector<8x8x4xf32>
    %1346 = vector.extract_strided_slice %782 {offsets = [21, 0], sizes = [1, 4], strides = [1, 1]} : vector<25x4xf32> to vector<1x4xf32>
    %c3_717 = arith.constant 3 : index
    %c2_718 = arith.constant 2 : index
    %c0_719 = arith.constant 0 : index
    %c0_720 = arith.constant 0 : index
    %1347 = vector.load %arg9[%c3_717, %c2_718, %c0_719, %c0_720] : memref<4x10x10x4xf32, #tpu.memory_space<vmem>>, vector<1x8x8x4xf32>
    %1348 = vector.shape_cast %1347 : vector<1x8x8x4xf32> to vector<8x8x4xf32>
    %1349 = vector.shape_cast %1346 : vector<1x4xf32> to vector<1x1x4xf32>
    %1350 = vector.broadcast %1349 : vector<1x1x4xf32> to vector<8x8x4xf32>
    %1351 = arith.mulf %1348, %1350 : vector<8x8x4xf32>
    %1352 = arith.addf %1345, %1351 : vector<8x8x4xf32>
    %1353 = vector.extract_strided_slice %782 {offsets = [22, 0], sizes = [1, 4], strides = [1, 1]} : vector<25x4xf32> to vector<1x4xf32>
    %c2_721 = arith.constant 2 : index
    %c2_722 = arith.constant 2 : index
    %c1_723 = arith.constant 1 : index
    %c0_724 = arith.constant 0 : index
    %1354 = vector.load %arg9[%c2_721, %c2_722, %c1_723, %c0_724] : memref<4x10x10x4xf32, #tpu.memory_space<vmem>>, vector<1x8x8x4xf32>
    %1355 = vector.shape_cast %1354 : vector<1x8x8x4xf32> to vector<8x8x4xf32>
    %1356 = vector.shape_cast %1353 : vector<1x4xf32> to vector<1x1x4xf32>
    %1357 = vector.broadcast %1356 : vector<1x1x4xf32> to vector<8x8x4xf32>
    %1358 = arith.mulf %1355, %1357 : vector<8x8x4xf32>
    %1359 = arith.addf %1352, %1358 : vector<8x8x4xf32>
    %1360 = vector.extract_strided_slice %782 {offsets = [23, 0], sizes = [1, 4], strides = [1, 1]} : vector<25x4xf32> to vector<1x4xf32>
    %c3_725 = arith.constant 3 : index
    %c2_726 = arith.constant 2 : index
    %c1_727 = arith.constant 1 : index
    %c0_728 = arith.constant 0 : index
    %1361 = vector.load %arg9[%c3_725, %c2_726, %c1_727, %c0_728] : memref<4x10x10x4xf32, #tpu.memory_space<vmem>>, vector<1x8x8x4xf32>
    %1362 = vector.shape_cast %1361 : vector<1x8x8x4xf32> to vector<8x8x4xf32>
    %1363 = vector.shape_cast %1360 : vector<1x4xf32> to vector<1x1x4xf32>
    %1364 = vector.broadcast %1363 : vector<1x1x4xf32> to vector<8x8x4xf32>
    %1365 = arith.mulf %1362, %1364 : vector<8x8x4xf32>
    %1366 = arith.addf %1359, %1365 : vector<8x8x4xf32>
    %1367 = vector.extract_strided_slice %782 {offsets = [24, 0], sizes = [1, 4], strides = [1, 1]} : vector<25x4xf32> to vector<1x4xf32>
    %c2_729 = arith.constant 2 : index
    %c2_730 = arith.constant 2 : index
    %c2_731 = arith.constant 2 : index
    %c0_732 = arith.constant 0 : index
    %1368 = vector.load %arg9[%c2_729, %c2_730, %c2_731, %c0_732] : memref<4x10x10x4xf32, #tpu.memory_space<vmem>>, vector<1x8x8x4xf32>
    %1369 = vector.shape_cast %1368 : vector<1x8x8x4xf32> to vector<8x8x4xf32>
    %1370 = vector.shape_cast %1367 : vector<1x4xf32> to vector<1x1x4xf32>
    %1371 = vector.broadcast %1370 : vector<1x1x4xf32> to vector<8x8x4xf32>
    %1372 = arith.mulf %1369, %1371 : vector<8x8x4xf32>
    %1373 = arith.addf %1366, %1372 : vector<8x8x4xf32>
    %1374 = vector.shape_cast %783 : vector<1x4xf32> to vector<1x1x4xf32>
    %1375 = vector.broadcast %1374 : vector<1x1x4xf32> to vector<8x8x4xf32>
    %1376 = arith.addf %1373, %1375 : vector<8x8x4xf32>
    %1377 = vector.shape_cast %784 : vector<1x4xf32> to vector<1x1x4xf32>
    %1378 = vector.broadcast %1377 : vector<1x1x4xf32> to vector<8x8x4xf32>
    %1379 = arith.mulf %1378, %1376 : vector<8x8x4xf32>
    %1380 = arith.addf %1379, %1197 : vector<8x8x4xf32>
    %c0_733 = arith.constant 0 : index
    %c0_734 = arith.constant 0 : index
    %c1_735 = arith.constant 1 : index
    %c0_736 = arith.constant 0 : index
    %c0_737 = arith.constant 0 : index
    %c0_738 = arith.constant 0 : index
    %1381 = vector.load %arg8[%c0_733, %c0_734, %c1_735, %c0_736, %c0_737, %c0_738] : memref<1x8x2x2x8x4xf32, #tpu.memory_space<vmem>>, vector<1x8x1x1x8x4xf32>
    %1382 = vector.shape_cast %1381 : vector<1x8x1x1x8x4xf32> to vector<8x8x4xf32>
    %1383 = vector.shape_cast %1380 : vector<8x8x4xf32> to vector<1x8x1x1x8x4xf32>
    tpu.vector_store %arg8[%c0_733, %c0_734, %c1_735, %c0_736, %c0_737, %c0_738], %1383 {strides = array<i32>} : memref<1x8x2x2x8x4xf32, #tpu.memory_space<vmem>>, vector<1x8x1x1x8x4xf32>,
    %cst_739 = arith.constant -1.000000e+00 : f32
    %1384 = vector.broadcast %cst_739 : f32 to vector<8x8x4xf32>
    %1385 = arith.mulf %1384, %788 : vector<8x8x4xf32>
    %1386 = arith.addf %786, %1385 : vector<8x8x4xf32>
    %cst_740 = arith.constant -1.000000e+00 : f32
    %1387 = vector.broadcast %cst_740 : f32 to vector<8x8x4xf32>
    %1388 = arith.mulf %1387, %790 : vector<8x8x4xf32>
    %1389 = arith.addf %1386, %1388 : vector<8x8x4xf32>
    %cst_741 = arith.constant 1.000000e+00 : f32
    %1390 = vector.broadcast %cst_741 : f32 to vector<8x8x4xf32>
    %1391 = arith.mulf %1390, %792 : vector<8x8x4xf32>
    %1392 = arith.addf %1389, %1391 : vector<8x8x4xf32>
    %cst_742 = arith.constant 5.000000e-01 : f32
    %1393 = vector.broadcast %cst_742 : f32 to vector<8x8x4xf32>
    %1394 = arith.mulf %1393, %1392 : vector<8x8x4xf32>
    %cst_743 = arith.constant 0.000000e+00 : f32
    %1395 = vector.broadcast %cst_743 : f32 to vector<8x8x4xf32>
    %1396 = vector.extract_strided_slice %782 {offsets = [0, 0], sizes = [1, 4], strides = [1, 1]} : vector<25x4xf32> to vector<1x4xf32>
    %c3_744 = arith.constant 3 : index
    %c0_745 = arith.constant 0 : index
    %c0_746 = arith.constant 0 : index
    %c0_747 = arith.constant 0 : index
    %1397 = vector.load %arg9[%c3_744, %c0_745, %c0_746, %c0_747] : memref<4x10x10x4xf32, #tpu.memory_space<vmem>>, vector<1x8x8x4xf32>
    %1398 = vector.shape_cast %1397 : vector<1x8x8x4xf32> to vector<8x8x4xf32>
    %1399 = vector.shape_cast %1396 : vector<1x4xf32> to vector<1x1x4xf32>
    %1400 = vector.broadcast %1399 : vector<1x1x4xf32> to vector<8x8x4xf32>
    %1401 = arith.mulf %1398, %1400 : vector<8x8x4xf32>
    %1402 = arith.addf %1395, %1401 : vector<8x8x4xf32>
    %1403 = vector.extract_strided_slice %782 {offsets = [1, 0], sizes = [1, 4], strides = [1, 1]} : vector<25x4xf32> to vector<1x4xf32>
    %c2_748 = arith.constant 2 : index
    %c0_749 = arith.constant 0 : index
    %c1_750 = arith.constant 1 : index
    %c0_751 = arith.constant 0 : index
    %1404 = vector.load %arg9[%c2_748, %c0_749, %c1_750, %c0_751] : memref<4x10x10x4xf32, #tpu.memory_space<vmem>>, vector<1x8x8x4xf32>
    %1405 = vector.shape_cast %1404 : vector<1x8x8x4xf32> to vector<8x8x4xf32>
    %1406 = vector.shape_cast %1403 : vector<1x4xf32> to vector<1x1x4xf32>
    %1407 = vector.broadcast %1406 : vector<1x1x4xf32> to vector<8x8x4xf32>
    %1408 = arith.mulf %1405, %1407 : vector<8x8x4xf32>
    %1409 = arith.addf %1402, %1408 : vector<8x8x4xf32>
    %1410 = vector.extract_strided_slice %782 {offsets = [2, 0], sizes = [1, 4], strides = [1, 1]} : vector<25x4xf32> to vector<1x4xf32>
    %c3_752 = arith.constant 3 : index
    %c0_753 = arith.constant 0 : index
    %c1_754 = arith.constant 1 : index
    %c0_755 = arith.constant 0 : index
    %1411 = vector.load %arg9[%c3_752, %c0_753, %c1_754, %c0_755] : memref<4x10x10x4xf32, #tpu.memory_space<vmem>>, vector<1x8x8x4xf32>
    %1412 = vector.shape_cast %1411 : vector<1x8x8x4xf32> to vector<8x8x4xf32>
    %1413 = vector.shape_cast %1410 : vector<1x4xf32> to vector<1x1x4xf32>
    %1414 = vector.broadcast %1413 : vector<1x1x4xf32> to vector<8x8x4xf32>
    %1415 = arith.mulf %1412, %1414 : vector<8x8x4xf32>
    %1416 = arith.addf %1409, %1415 : vector<8x8x4xf32>
    %1417 = vector.extract_strided_slice %782 {offsets = [3, 0], sizes = [1, 4], strides = [1, 1]} : vector<25x4xf32> to vector<1x4xf32>
    %c2_756 = arith.constant 2 : index
    %c0_757 = arith.constant 0 : index
    %c2_758 = arith.constant 2 : index
    %c0_759 = arith.constant 0 : index
    %1418 = vector.load %arg9[%c2_756, %c0_757, %c2_758, %c0_759] : memref<4x10x10x4xf32, #tpu.memory_space<vmem>>, vector<1x8x8x4xf32>
    %1419 = vector.shape_cast %1418 : vector<1x8x8x4xf32> to vector<8x8x4xf32>
    %1420 = vector.shape_cast %1417 : vector<1x4xf32> to vector<1x1x4xf32>
    %1421 = vector.broadcast %1420 : vector<1x1x4xf32> to vector<8x8x4xf32>
    %1422 = arith.mulf %1419, %1421 : vector<8x8x4xf32>
    %1423 = arith.addf %1416, %1422 : vector<8x8x4xf32>
    %1424 = vector.extract_strided_slice %782 {offsets = [4, 0], sizes = [1, 4], strides = [1, 1]} : vector<25x4xf32> to vector<1x4xf32>
    %c3_760 = arith.constant 3 : index
    %c0_761 = arith.constant 0 : index
    %c2_762 = arith.constant 2 : index
    %c0_763 = arith.constant 0 : index
    %1425 = vector.load %arg9[%c3_760, %c0_761, %c2_762, %c0_763] : memref<4x10x10x4xf32, #tpu.memory_space<vmem>>, vector<1x8x8x4xf32>
    %1426 = vector.shape_cast %1425 : vector<1x8x8x4xf32> to vector<8x8x4xf32>
    %1427 = vector.shape_cast %1424 : vector<1x4xf32> to vector<1x1x4xf32>
    %1428 = vector.broadcast %1427 : vector<1x1x4xf32> to vector<8x8x4xf32>
    %1429 = arith.mulf %1426, %1428 : vector<8x8x4xf32>
    %1430 = arith.addf %1423, %1429 : vector<8x8x4xf32>
    %1431 = vector.extract_strided_slice %782 {offsets = [5, 0], sizes = [1, 4], strides = [1, 1]} : vector<25x4xf32> to vector<1x4xf32>
    %c1_764 = arith.constant 1 : index
    %c1_765 = arith.constant 1 : index
    %c0_766 = arith.constant 0 : index
    %c0_767 = arith.constant 0 : index
    %1432 = vector.load %arg9[%c1_764, %c1_765, %c0_766, %c0_767] : memref<4x10x10x4xf32, #tpu.memory_space<vmem>>, vector<1x8x8x4xf32>
    %1433 = vector.shape_cast %1432 : vector<1x8x8x4xf32> to vector<8x8x4xf32>
    %1434 = vector.shape_cast %1431 : vector<1x4xf32> to vector<1x1x4xf32>
    %1435 = vector.broadcast %1434 : vector<1x1x4xf32> to vector<8x8x4xf32>
    %1436 = arith.mulf %1433, %1435 : vector<8x8x4xf32>
    %1437 = arith.addf %1430, %1436 : vector<8x8x4xf32>
    %1438 = vector.extract_strided_slice %782 {offsets = [6, 0], sizes = [1, 4], strides = [1, 1]} : vector<25x4xf32> to vector<1x4xf32>
    %c0_768 = arith.constant 0 : index
    %c1_769 = arith.constant 1 : index
    %c1_770 = arith.constant 1 : index
    %c0_771 = arith.constant 0 : index
    %1439 = vector.load %arg9[%c0_768, %c1_769, %c1_770, %c0_771] : memref<4x10x10x4xf32, #tpu.memory_space<vmem>>, vector<1x8x8x4xf32>
    %1440 = vector.shape_cast %1439 : vector<1x8x8x4xf32> to vector<8x8x4xf32>
    %1441 = vector.shape_cast %1438 : vector<1x4xf32> to vector<1x1x4xf32>
    %1442 = vector.broadcast %1441 : vector<1x1x4xf32> to vector<8x8x4xf32>
    %1443 = arith.mulf %1440, %1442 : vector<8x8x4xf32>
    %1444 = arith.addf %1437, %1443 : vector<8x8x4xf32>
    %1445 = vector.extract_strided_slice %782 {offsets = [7, 0], sizes = [1, 4], strides = [1, 1]} : vector<25x4xf32> to vector<1x4xf32>
    %c1_772 = arith.constant 1 : index
    %c1_773 = arith.constant 1 : index
    %c1_774 = arith.constant 1 : index
    %c0_775 = arith.constant 0 : index
    %1446 = vector.load %arg9[%c1_772, %c1_773, %c1_774, %c0_775] : memref<4x10x10x4xf32, #tpu.memory_space<vmem>>, vector<1x8x8x4xf32>
    %1447 = vector.shape_cast %1446 : vector<1x8x8x4xf32> to vector<8x8x4xf32>
    %1448 = vector.shape_cast %1445 : vector<1x4xf32> to vector<1x1x4xf32>
    %1449 = vector.broadcast %1448 : vector<1x1x4xf32> to vector<8x8x4xf32>
    %1450 = arith.mulf %1447, %1449 : vector<8x8x4xf32>
    %1451 = arith.addf %1444, %1450 : vector<8x8x4xf32>
    %1452 = vector.extract_strided_slice %782 {offsets = [8, 0], sizes = [1, 4], strides = [1, 1]} : vector<25x4xf32> to vector<1x4xf32>
    %c0_776 = arith.constant 0 : index
    %c1_777 = arith.constant 1 : index
    %c2_778 = arith.constant 2 : index
    %c0_779 = arith.constant 0 : index
    %1453 = vector.load %arg9[%c0_776, %c1_777, %c2_778, %c0_779] : memref<4x10x10x4xf32, #tpu.memory_space<vmem>>, vector<1x8x8x4xf32>
    %1454 = vector.shape_cast %1453 : vector<1x8x8x4xf32> to vector<8x8x4xf32>
    %1455 = vector.shape_cast %1452 : vector<1x4xf32> to vector<1x1x4xf32>
    %1456 = vector.broadcast %1455 : vector<1x1x4xf32> to vector<8x8x4xf32>
    %1457 = arith.mulf %1454, %1456 : vector<8x8x4xf32>
    %1458 = arith.addf %1451, %1457 : vector<8x8x4xf32>
    %1459 = vector.extract_strided_slice %782 {offsets = [9, 0], sizes = [1, 4], strides = [1, 1]} : vector<25x4xf32> to vector<1x4xf32>
    %c1_780 = arith.constant 1 : index
    %c1_781 = arith.constant 1 : index
    %c2_782 = arith.constant 2 : index
    %c0_783 = arith.constant 0 : index
    %1460 = vector.load %arg9[%c1_780, %c1_781, %c2_782, %c0_783] : memref<4x10x10x4xf32, #tpu.memory_space<vmem>>, vector<1x8x8x4xf32>
    %1461 = vector.shape_cast %1460 : vector<1x8x8x4xf32> to vector<8x8x4xf32>
    %1462 = vector.shape_cast %1459 : vector<1x4xf32> to vector<1x1x4xf32>
    %1463 = vector.broadcast %1462 : vector<1x1x4xf32> to vector<8x8x4xf32>
    %1464 = arith.mulf %1461, %1463 : vector<8x8x4xf32>
    %1465 = arith.addf %1458, %1464 : vector<8x8x4xf32>
    %1466 = vector.extract_strided_slice %782 {offsets = [10, 0], sizes = [1, 4], strides = [1, 1]} : vector<25x4xf32> to vector<1x4xf32>
    %c3_784 = arith.constant 3 : index
    %c1_785 = arith.constant 1 : index
    %c0_786 = arith.constant 0 : index
    %c0_787 = arith.constant 0 : index
    %1467 = vector.load %arg9[%c3_784, %c1_785, %c0_786, %c0_787] : memref<4x10x10x4xf32, #tpu.memory_space<vmem>>, vector<1x8x8x4xf32>
    %1468 = vector.shape_cast %1467 : vector<1x8x8x4xf32> to vector<8x8x4xf32>
    %1469 = vector.shape_cast %1466 : vector<1x4xf32> to vector<1x1x4xf32>
    %1470 = vector.broadcast %1469 : vector<1x1x4xf32> to vector<8x8x4xf32>
    %1471 = arith.mulf %1468, %1470 : vector<8x8x4xf32>
    %1472 = arith.addf %1465, %1471 : vector<8x8x4xf32>
    %1473 = vector.extract_strided_slice %782 {offsets = [11, 0], sizes = [1, 4], strides = [1, 1]} : vector<25x4xf32> to vector<1x4xf32>
    %c2_788 = arith.constant 2 : index
    %c1_789 = arith.constant 1 : index
    %c1_790 = arith.constant 1 : index
    %c0_791 = arith.constant 0 : index
    %1474 = vector.load %arg9[%c2_788, %c1_789, %c1_790, %c0_791] : memref<4x10x10x4xf32, #tpu.memory_space<vmem>>, vector<1x8x8x4xf32>
    %1475 = vector.shape_cast %1474 : vector<1x8x8x4xf32> to vector<8x8x4xf32>
    %1476 = vector.shape_cast %1473 : vector<1x4xf32> to vector<1x1x4xf32>
    %1477 = vector.broadcast %1476 : vector<1x1x4xf32> to vector<8x8x4xf32>
    %1478 = arith.mulf %1475, %1477 : vector<8x8x4xf32>
    %1479 = arith.addf %1472, %1478 : vector<8x8x4xf32>
    %1480 = vector.extract_strided_slice %782 {offsets = [12, 0], sizes = [1, 4], strides = [1, 1]} : vector<25x4xf32> to vector<1x4xf32>
    %c3_792 = arith.constant 3 : index
    %c1_793 = arith.constant 1 : index
    %c1_794 = arith.constant 1 : index
    %c0_795 = arith.constant 0 : index
    %1481 = vector.load %arg9[%c3_792, %c1_793, %c1_794, %c0_795] : memref<4x10x10x4xf32, #tpu.memory_space<vmem>>, vector<1x8x8x4xf32>
    %1482 = vector.shape_cast %1481 : vector<1x8x8x4xf32> to vector<8x8x4xf32>
    %1483 = vector.shape_cast %1480 : vector<1x4xf32> to vector<1x1x4xf32>
    %1484 = vector.broadcast %1483 : vector<1x1x4xf32> to vector<8x8x4xf32>
    %1485 = arith.mulf %1482, %1484 : vector<8x8x4xf32>
    %1486 = arith.addf %1479, %1485 : vector<8x8x4xf32>
    %1487 = vector.extract_strided_slice %782 {offsets = [13, 0], sizes = [1, 4], strides = [1, 1]} : vector<25x4xf32> to vector<1x4xf32>
    %c2_796 = arith.constant 2 : index
    %c1_797 = arith.constant 1 : index
    %c2_798 = arith.constant 2 : index
    %c0_799 = arith.constant 0 : index
    %1488 = vector.load %arg9[%c2_796, %c1_797, %c2_798, %c0_799] : memref<4x10x10x4xf32, #tpu.memory_space<vmem>>, vector<1x8x8x4xf32>
    %1489 = vector.shape_cast %1488 : vector<1x8x8x4xf32> to vector<8x8x4xf32>
    %1490 = vector.shape_cast %1487 : vector<1x4xf32> to vector<1x1x4xf32>
    %1491 = vector.broadcast %1490 : vector<1x1x4xf32> to vector<8x8x4xf32>
    %1492 = arith.mulf %1489, %1491 : vector<8x8x4xf32>
    %1493 = arith.addf %1486, %1492 : vector<8x8x4xf32>
    %1494 = vector.extract_strided_slice %782 {offsets = [14, 0], sizes = [1, 4], strides = [1, 1]} : vector<25x4xf32> to vector<1x4xf32>
    %c3_800 = arith.constant 3 : index
    %c1_801 = arith.constant 1 : index
    %c2_802 = arith.constant 2 : index
    %c0_803 = arith.constant 0 : index
    %1495 = vector.load %arg9[%c3_800, %c1_801, %c2_802, %c0_803] : memref<4x10x10x4xf32, #tpu.memory_space<vmem>>, vector<1x8x8x4xf32>
    %1496 = vector.shape_cast %1495 : vector<1x8x8x4xf32> to vector<8x8x4xf32>
    %1497 = vector.shape_cast %1494 : vector<1x4xf32> to vector<1x1x4xf32>
    %1498 = vector.broadcast %1497 : vector<1x1x4xf32> to vector<8x8x4xf32>
    %1499 = arith.mulf %1496, %1498 : vector<8x8x4xf32>
    %1500 = arith.addf %1493, %1499 : vector<8x8x4xf32>
    %1501 = vector.extract_strided_slice %782 {offsets = [15, 0], sizes = [1, 4], strides = [1, 1]} : vector<25x4xf32> to vector<1x4xf32>
    %c1_804 = arith.constant 1 : index
    %c2_805 = arith.constant 2 : index
    %c0_806 = arith.constant 0 : index
    %c0_807 = arith.constant 0 : index
    %1502 = vector.load %arg9[%c1_804, %c2_805, %c0_806, %c0_807] : memref<4x10x10x4xf32, #tpu.memory_space<vmem>>, vector<1x8x8x4xf32>
    %1503 = vector.shape_cast %1502 : vector<1x8x8x4xf32> to vector<8x8x4xf32>
    %1504 = vector.shape_cast %1501 : vector<1x4xf32> to vector<1x1x4xf32>
    %1505 = vector.broadcast %1504 : vector<1x1x4xf32> to vector<8x8x4xf32>
    %1506 = arith.mulf %1503, %1505 : vector<8x8x4xf32>
    %1507 = arith.addf %1500, %1506 : vector<8x8x4xf32>
    %1508 = vector.extract_strided_slice %782 {offsets = [16, 0], sizes = [1, 4], strides = [1, 1]} : vector<25x4xf32> to vector<1x4xf32>
    %c0_808 = arith.constant 0 : index
    %c2_809 = arith.constant 2 : index
    %c1_810 = arith.constant 1 : index
    %c0_811 = arith.constant 0 : index
    %1509 = vector.load %arg9[%c0_808, %c2_809, %c1_810, %c0_811] : memref<4x10x10x4xf32, #tpu.memory_space<vmem>>, vector<1x8x8x4xf32>
    %1510 = vector.shape_cast %1509 : vector<1x8x8x4xf32> to vector<8x8x4xf32>
    %1511 = vector.shape_cast %1508 : vector<1x4xf32> to vector<1x1x4xf32>
    %1512 = vector.broadcast %1511 : vector<1x1x4xf32> to vector<8x8x4xf32>
    %1513 = arith.mulf %1510, %1512 : vector<8x8x4xf32>
    %1514 = arith.addf %1507, %1513 : vector<8x8x4xf32>
    %1515 = vector.extract_strided_slice %782 {offsets = [17, 0], sizes = [1, 4], strides = [1, 1]} : vector<25x4xf32> to vector<1x4xf32>
    %c1_812 = arith.constant 1 : index
    %c2_813 = arith.constant 2 : index
    %c1_814 = arith.constant 1 : index
    %c0_815 = arith.constant 0 : index
    %1516 = vector.load %arg9[%c1_812, %c2_813, %c1_814, %c0_815] : memref<4x10x10x4xf32, #tpu.memory_space<vmem>>, vector<1x8x8x4xf32>
    %1517 = vector.shape_cast %1516 : vector<1x8x8x4xf32> to vector<8x8x4xf32>
    %1518 = vector.shape_cast %1515 : vector<1x4xf32> to vector<1x1x4xf32>
    %1519 = vector.broadcast %1518 : vector<1x1x4xf32> to vector<8x8x4xf32>
    %1520 = arith.mulf %1517, %1519 : vector<8x8x4xf32>
    %1521 = arith.addf %1514, %1520 : vector<8x8x4xf32>
    %1522 = vector.extract_strided_slice %782 {offsets = [18, 0], sizes = [1, 4], strides = [1, 1]} : vector<25x4xf32> to vector<1x4xf32>
    %c0_816 = arith.constant 0 : index
    %c2_817 = arith.constant 2 : index
    %c2_818 = arith.constant 2 : index
    %c0_819 = arith.constant 0 : index
    %1523 = vector.load %arg9[%c0_816, %c2_817, %c2_818, %c0_819] : memref<4x10x10x4xf32, #tpu.memory_space<vmem>>, vector<1x8x8x4xf32>
    %1524 = vector.shape_cast %1523 : vector<1x8x8x4xf32> to vector<8x8x4xf32>
    %1525 = vector.shape_cast %1522 : vector<1x4xf32> to vector<1x1x4xf32>
    %1526 = vector.broadcast %1525 : vector<1x1x4xf32> to vector<8x8x4xf32>
    %1527 = arith.mulf %1524, %1526 : vector<8x8x4xf32>
    %1528 = arith.addf %1521, %1527 : vector<8x8x4xf32>
    %1529 = vector.extract_strided_slice %782 {offsets = [19, 0], sizes = [1, 4], strides = [1, 1]} : vector<25x4xf32> to vector<1x4xf32>
    %c1_820 = arith.constant 1 : index
    %c2_821 = arith.constant 2 : index
    %c2_822 = arith.constant 2 : index
    %c0_823 = arith.constant 0 : index
    %1530 = vector.load %arg9[%c1_820, %c2_821, %c2_822, %c0_823] : memref<4x10x10x4xf32, #tpu.memory_space<vmem>>, vector<1x8x8x4xf32>
    %1531 = vector.shape_cast %1530 : vector<1x8x8x4xf32> to vector<8x8x4xf32>
    %1532 = vector.shape_cast %1529 : vector<1x4xf32> to vector<1x1x4xf32>
    %1533 = vector.broadcast %1532 : vector<1x1x4xf32> to vector<8x8x4xf32>
    %1534 = arith.mulf %1531, %1533 : vector<8x8x4xf32>
    %1535 = arith.addf %1528, %1534 : vector<8x8x4xf32>
    %1536 = vector.extract_strided_slice %782 {offsets = [20, 0], sizes = [1, 4], strides = [1, 1]} : vector<25x4xf32> to vector<1x4xf32>
    %c3_824 = arith.constant 3 : index
    %c2_825 = arith.constant 2 : index
    %c0_826 = arith.constant 0 : index
    %c0_827 = arith.constant 0 : index
    %1537 = vector.load %arg9[%c3_824, %c2_825, %c0_826, %c0_827] : memref<4x10x10x4xf32, #tpu.memory_space<vmem>>, vector<1x8x8x4xf32>
    %1538 = vector.shape_cast %1537 : vector<1x8x8x4xf32> to vector<8x8x4xf32>
    %1539 = vector.shape_cast %1536 : vector<1x4xf32> to vector<1x1x4xf32>
    %1540 = vector.broadcast %1539 : vector<1x1x4xf32> to vector<8x8x4xf32>
    %1541 = arith.mulf %1538, %1540 : vector<8x8x4xf32>
    %1542 = arith.addf %1535, %1541 : vector<8x8x4xf32>
    %1543 = vector.extract_strided_slice %782 {offsets = [21, 0], sizes = [1, 4], strides = [1, 1]} : vector<25x4xf32> to vector<1x4xf32>
    %c2_828 = arith.constant 2 : index
    %c2_829 = arith.constant 2 : index
    %c1_830 = arith.constant 1 : index
    %c0_831 = arith.constant 0 : index
    %1544 = vector.load %arg9[%c2_828, %c2_829, %c1_830, %c0_831] : memref<4x10x10x4xf32, #tpu.memory_space<vmem>>, vector<1x8x8x4xf32>
    %1545 = vector.shape_cast %1544 : vector<1x8x8x4xf32> to vector<8x8x4xf32>
    %1546 = vector.shape_cast %1543 : vector<1x4xf32> to vector<1x1x4xf32>
    %1547 = vector.broadcast %1546 : vector<1x1x4xf32> to vector<8x8x4xf32>
    %1548 = arith.mulf %1545, %1547 : vector<8x8x4xf32>
    %1549 = arith.addf %1542, %1548 : vector<8x8x4xf32>
    %1550 = vector.extract_strided_slice %782 {offsets = [22, 0], sizes = [1, 4], strides = [1, 1]} : vector<25x4xf32> to vector<1x4xf32>
    %c3_832 = arith.constant 3 : index
    %c2_833 = arith.constant 2 : index
    %c1_834 = arith.constant 1 : index
    %c0_835 = arith.constant 0 : index
    %1551 = vector.load %arg9[%c3_832, %c2_833, %c1_834, %c0_835] : memref<4x10x10x4xf32, #tpu.memory_space<vmem>>, vector<1x8x8x4xf32>
    %1552 = vector.shape_cast %1551 : vector<1x8x8x4xf32> to vector<8x8x4xf32>
    %1553 = vector.shape_cast %1550 : vector<1x4xf32> to vector<1x1x4xf32>
    %1554 = vector.broadcast %1553 : vector<1x1x4xf32> to vector<8x8x4xf32>
    %1555 = arith.mulf %1552, %1554 : vector<8x8x4xf32>
    %1556 = arith.addf %1549, %1555 : vector<8x8x4xf32>
    %1557 = vector.extract_strided_slice %782 {offsets = [23, 0], sizes = [1, 4], strides = [1, 1]} : vector<25x4xf32> to vector<1x4xf32>
    %c2_836 = arith.constant 2 : index
    %c2_837 = arith.constant 2 : index
    %c2_838 = arith.constant 2 : index
    %c0_839 = arith.constant 0 : index
    %1558 = vector.load %arg9[%c2_836, %c2_837, %c2_838, %c0_839] : memref<4x10x10x4xf32, #tpu.memory_space<vmem>>, vector<1x8x8x4xf32>
    %1559 = vector.shape_cast %1558 : vector<1x8x8x4xf32> to vector<8x8x4xf32>
    %1560 = vector.shape_cast %1557 : vector<1x4xf32> to vector<1x1x4xf32>
    %1561 = vector.broadcast %1560 : vector<1x1x4xf32> to vector<8x8x4xf32>
    %1562 = arith.mulf %1559, %1561 : vector<8x8x4xf32>
    %1563 = arith.addf %1556, %1562 : vector<8x8x4xf32>
    %1564 = vector.extract_strided_slice %782 {offsets = [24, 0], sizes = [1, 4], strides = [1, 1]} : vector<25x4xf32> to vector<1x4xf32>
    %c3_840 = arith.constant 3 : index
    %c2_841 = arith.constant 2 : index
    %c2_842 = arith.constant 2 : index
    %c0_843 = arith.constant 0 : index
    %1565 = vector.load %arg9[%c3_840, %c2_841, %c2_842, %c0_843] : memref<4x10x10x4xf32, #tpu.memory_space<vmem>>, vector<1x8x8x4xf32>
    %1566 = vector.shape_cast %1565 : vector<1x8x8x4xf32> to vector<8x8x4xf32>
    %1567 = vector.shape_cast %1564 : vector<1x4xf32> to vector<1x1x4xf32>
    %1568 = vector.broadcast %1567 : vector<1x1x4xf32> to vector<8x8x4xf32>
    %1569 = arith.mulf %1566, %1568 : vector<8x8x4xf32>
    %1570 = arith.addf %1563, %1569 : vector<8x8x4xf32>
    %1571 = vector.shape_cast %783 : vector<1x4xf32> to vector<1x1x4xf32>
    %1572 = vector.broadcast %1571 : vector<1x1x4xf32> to vector<8x8x4xf32>
    %1573 = arith.addf %1570, %1572 : vector<8x8x4xf32>
    %1574 = vector.shape_cast %784 : vector<1x4xf32> to vector<1x1x4xf32>
    %1575 = vector.broadcast %1574 : vector<1x1x4xf32> to vector<8x8x4xf32>
    %1576 = arith.mulf %1575, %1573 : vector<8x8x4xf32>
    %1577 = arith.addf %1576, %1394 : vector<8x8x4xf32>
    %c0_844 = arith.constant 0 : index
    %c0_845 = arith.constant 0 : index
    %c1_846 = arith.constant 1 : index
    %c1_847 = arith.constant 1 : index
    %c0_848 = arith.constant 0 : index
    %c0_849 = arith.constant 0 : index
    %1578 = vector.load %arg8[%c0_844, %c0_845, %c1_846, %c1_847, %c0_848, %c0_849] : memref<1x8x2x2x8x4xf32, #tpu.memory_space<vmem>>, vector<1x8x1x1x8x4xf32>
    %1579 = vector.shape_cast %1578 : vector<1x8x1x1x8x4xf32> to vector<8x8x4xf32>
    %1580 = vector.shape_cast %1577 : vector<8x8x4xf32> to vector<1x8x1x1x8x4xf32>
    tpu.vector_store %arg8[%c0_844, %c0_845, %c1_846, %c1_847, %c0_848, %c0_849], %1580 {strides = array<i32>} : memref<1x8x2x2x8x4xf32, #tpu.memory_space<vmem>>, vector<1x8x1x1x8x4xf32>,
    return
  }
  func.func @transform_0(%arg0: i32, %arg1: i32) -> (i32, i32, i32, i32, i32, i32) {
    %c0_i32 = arith.constant 0 : i32
    %c0_i32_0 = arith.constant 0 : i32
    %c0_i32_1 = arith.constant 0 : i32
    %c0_i32_2 = arith.constant 0 : i32
    %c0_i32_3 = arith.constant 0 : i32
    return %arg0, %c0_i32, %c0_i32_0, %c0_i32_1, %c0_i32_2, %arg1 : i32, i32, i32, i32, i32, i32
  }
  func.func @transform_1(%arg0: i32, %arg1: i32) -> (i32, i32) {
    %c0_i32 = arith.constant 0 : i32
    %c0_i32_0 = arith.constant 0 : i32
    return %c0_i32, %arg1 : i32, i32
  }
  func.func @transform_2(%arg0: i32, %arg1: i32) -> (i32, i32) {
    %c0_i32 = arith.constant 0 : i32
    %c0_i32_0 = arith.constant 0 : i32
    return %c0_i32, %arg1 : i32, i32
  }
  func.func @transform_3(%arg0: i32, %arg1: i32) -> (i32, i32) {
    %c0_i32 = arith.constant 0 : i32
    %c0_i32_0 = arith.constant 0 : i32
    return %c0_i32, %arg1 : i32, i32
  }
  func.func @transform_4(%arg0: i32, %arg1: i32) -> (i32, i32, i32) {
    %c0_i32 = arith.constant 0 : i32
    %c0_i32_0 = arith.constant 0 : i32
    %c0_i32_1 = arith.constant 0 : i32
    return %c0_i32, %c0_i32_0, %arg1 : i32, i32, i32
  }
  func.func @transform_5(%arg0: i32, %arg1: i32) -> (i32, i32) {
    %c0_i32 = arith.constant 0 : i32
    %c0_i32_0 = arith.constant 0 : i32
    return %c0_i32, %arg1 : i32, i32
  }
  func.func @transform_6(%arg0: i32, %arg1: i32) -> (i32, i32, i32, i32, i32, i32) {
    %c0_i32 = arith.constant 0 : i32
    %c0_i32_0 = arith.constant 0 : i32
    %c0_i32_1 = arith.constant 0 : i32
    %c0_i32_2 = arith.constant 0 : i32
    %c0_i32_3 = arith.constant 0 : i32
    return %arg0, %c0_i32, %c0_i32_0, %c0_i32_1, %c0_i32_2, %arg1 : i32, i32, i32, i32, i32, i32
  }
}

</mosaic_0001>

<llo_original>
// kernel: _lambda_.1
$region0: #{_lambda_.1}
  #allocation0 [shape = 'u32[]', space=smem, size = 0x4, offset = 0x4, fixed_abs, tag = 'smem constant byte address 0x4 - core index']
  #allocation1 [shape = 'u32[144,128]{1,0:T(1,128)}', space=vmem, size = 0x12000, scoped, tag = 'internal scratch']
  #allocation2 [shape = 'f32[4,10,10,4]{3,2,1,0:T(8,128)}', space=vmem, size = 0x50000, scoped, tag = 'scratch operand']
  #allocation3 [shape = 'f32[12,12,4]{2,1,0:T(8,128)}', space=vmem, size = 0x18000, scoped, tag = 'scratch operand']
  #allocation4 [shape = 'f32[4,8,8,4]{3,2,1,0:T(8,128)}', space=vmem, size = 0x20000, scoped, tag = 'scratch operand']
  %s0 = inlined_call_operand.vmem [shape: f32[2,8,2,2,8,4], index: 0, kind: input, shape index: {}]
  %s1 = inlined_call_operand.vmem [shape: f32[25,4], index: 1, kind: input, shape index: {}]
  %s2 = inlined_call_operand.vmem [shape: f32[1,4], index: 2, kind: input, shape index: {}]
  %s3 = inlined_call_operand.vmem [shape: f32[1,4], index: 3, kind: input, shape index: {}]
  %s4 = inlined_call_operand.vmem [shape: f32[4,25,4], index: 4, kind: input, shape index: {}]
  %s5 = inlined_call_operand.vmem [shape: f32[4,4], index: 5, kind: input, shape index: {}]
  %s6 = inlined_call_operand.vmem [shape: f32[2,8,2,2,8,4], index: 6, kind: output, shape index: {}]
  %s7 = sld [smem:[#allocation0]]
  $region57: #{_lambda_.1} parent=0
    _
  %s9 = ssub.s32 1, %s7
  %s10 = scalar_select 0, %s9, %s7
  loop: start=0, step=1, limit=4
  $region2: #{_lambda_.1} parent=0 // loop_pre_header
    _
  $region3: #{_lambda_.1} parent=0 // loop_header
    %s12 = sphi 0, %s16
    %p13 = scmp.ge.s32.totalorder %s12, 4
    %s19 = sphi 0, %s31
    %s20 = sphi 0, %s27
    %s21 = sphi 0, %s19
    %s22 = sphi 0, %s20
    %s23 = sphi 0, %s21
    %s24 = sphi 0, %s22
    %s36 = sphi 0, %s38
    %s39 = sphi 0, %s36
    %s40 = sphi 0, %s39
    %s56 = sphi 0, %s40
    %s62 = sphi 0, %s64
    %s65 = sphi 0, %s62
    %s66 = sphi 0, %s65
    %s82 = sphi 0, %s66
    %s88 = sphi 0, %s90
    %s91 = sphi 0, %s88
    %s92 = sphi 0, %s91
    %s108 = sphi 0, %s92
    %s114 = sphi 0, %s116
    %s117 = sphi 0, %s114
    %s118 = sphi 0, %s117
    %s134 = sphi 0, %s118
    %s140 = sphi 0, %s142
    %s143 = sphi 0, %s140
    %s144 = sphi 0, %s143
    %s160 = sphi 0, %s144
    %s166 = sphi 0, %s168
    %s169 = sphi 0, %s166
    %s170 = sphi 0, %s169
    %s186 = sphi 0, %s170
    %s194 = sphi 0, %s196
    %s197 = sphi 0, %s194
    %s198 = sphi 0, %s197
    %s214 = sphi 0, %s198
  $region4: #{_lambda_.1} parent=0 // loop_header_branch
    %15 = sbr.rel (%p13) target = $region8
  $region5: #{_lambda_.1} parent=0 // loop_body
    %s17 = ssub.s32 %s12, 1
    %s18 = ssub.s32 %s12, 2
    %s25 = sadd.s32 1, %s20
    %p26 = scmp.ge.s32.totalorder %s25, 1
    %s27 = scalar_select %p26, 0, %s25
    %s28 = sadd.s32 1, %s19
    %s29 = scalar_select %p26, %s28, %s19
    %p30 = scmp.ge.s32.totalorder %s29, 2
    %s31 = scalar_select %p30, 0, %s29
    %s32 = ssub.s32 %s19, %s31
    %s33 = ssub.s32 %s20, %s27
    %s34 = sor.u32 %s32, %s33
    %p35 = scmp.eq.s32.totalorder %s34, 0
    %s37 = sadd.s32 %s36, 1
    %s38 = scalar_select %p35, %s36, %s37
    %p41 = pneg %p35
    %p42 = scmp.eq.s32.totalorder %s12, 1
    %p43 = por %p41, %p42
    %p44 = scmp.ne.s32.totalorder %s36, %s39
    %p45 = scmp.eq.s32.totalorder %s12, 0
    %p46 = por %p44, %p45
    %p47 = scmp.ne.s32.totalorder %s36, %s39
    %p48 = scmp.eq.s32.totalorder %s17, 1
    %p49 = por %p47, %p48
    %p50 = scmp.ne.s32.totalorder %s39, %s40
    %p51 = scmp.eq.s32.totalorder %s17, 0
    %p52 = por %p50, %p51
    %p53 = scmp.ne.s32.totalorder %s39, %s40
    %p54 = scmp.eq.s32.totalorder %s18, 1
    %p55 = por %p53, %p54
    %p57 = scmp.ne.s32.totalorder %s40, %s56
    %p58 = scmp.eq.s32.totalorder %s18, 0
    %p59 = por %p57, %p58
    %s60 = ssub.s32 %s20, %s27
    %p61 = scmp.eq.s32.totalorder %s60, 0
    %s63 = sadd.s32 %s62, 1
    %s64 = scalar_select %p61, %s62, %s63
    %p67 = pneg %p61
    %p68 = scmp.eq.s32.totalorder %s12, 1
    %p69 = por %p67, %p68
    %p70 = scmp.ne.s32.totalorder %s62, %s65
    %p71 = scmp.eq.s32.totalorder %s12, 0
    %p72 = por %p70, %p71
    %p73 = scmp.ne.s32.totalorder %s62, %s65
    %p74 = scmp.eq.s32.totalorder %s17, 1
    %p75 = por %p73, %p74
    %p76 = scmp.ne.s32.totalorder %s65, %s66
    %p77 = scmp.eq.s32.totalorder %s17, 0
    %p78 = por %p76, %p77
    %p79 = scmp.ne.s32.totalorder %s65, %s66
    %p80 = scmp.eq.s32.totalorder %s18, 1
    %p81 = por %p79, %p80
    %p83 = scmp.ne.s32.totalorder %s66, %s82
    %p84 = scmp.eq.s32.totalorder %s18, 0
    %p85 = por %p83, %p84
    %s86 = ssub.s32 %s20, %s27
    %p87 = scmp.eq.s32.totalorder %s86, 0
    %s89 = sadd.s32 %s88, 1
    %s90 = scalar_select %p87, %s88, %s89
    %p93 = pneg %p87
    %p94 = scmp.eq.s32.totalorder %s12, 1
    %p95 = por %p93, %p94
    %p96 = scmp.ne.s32.totalorder %s88, %s91
    %p97 = scmp.eq.s32.totalorder %s12, 0
    %p98 = por %p96, %p97
    %p99 = scmp.ne.s32.totalorder %s88, %s91
    %p100 = scmp.eq.s32.totalorder %s17, 1
    %p101 = por %p99, %p100
    %p102 = scmp.ne.s32.totalorder %s91, %s92
    %p103 = scmp.eq.s32.totalorder %s17, 0
    %p104 = por %p102, %p103
    %p105 = scmp.ne.s32.totalorder %s91, %s92
    %p106 = scmp.eq.s32.totalorder %s18, 1
    %p107 = por %p105, %p106
    %p109 = scmp.ne.s32.totalorder %s92, %s108
    %p110 = scmp.eq.s32.totalorder %s18, 0
    %p111 = por %p109, %p110
    %s112 = ssub.s32 %s20, %s27
    %p113 = scmp.eq.s32.totalorder %s112, 0
    %s115 = sadd.s32 %s114, 1
    %s116 = scalar_select %p113, %s114, %s115
    %p119 = pneg %p113
    %p120 = scmp.eq.s32.totalorder %s12, 1
    %p121 = por %p119, %p120
    %p122 = scmp.ne.s32.totalorder %s114, %s117
    %p123 = scmp.eq.s32.totalorder %s12, 0
    %p124 = por %p122, %p123
    %p125 = scmp.ne.s32.totalorder %s114, %s117
    %p126 = scmp.eq.s32.totalorder %s17, 1
    %p127 = por %p125, %p126
    %p128 = scmp.ne.s32.totalorder %s117, %s118
    %p129 = scmp.eq.s32.totalorder %s17, 0
    %p130 = por %p128, %p129
    %p131 = scmp.ne.s32.totalorder %s117, %s118
    %p132 = scmp.eq.s32.totalorder %s18, 1
    %p133 = por %p131, %p132
    %p135 = scmp.ne.s32.totalorder %s118, %s134
    %p136 = scmp.eq.s32.totalorder %s18, 0
    %p137 = por %p135, %p136
    %s138 = ssub.s32 %s20, %s27
    %p139 = scmp.eq.s32.totalorder %s138, 0
    %s141 = sadd.s32 %s140, 1
    %s142 = scalar_select %p139, %s140, %s141
    %p145 = pneg %p139
    %p146 = scmp.eq.s32.totalorder %s12, 1
    %p147 = por %p145, %p146
    %p148 = scmp.ne.s32.totalorder %s140, %s143
    %p149 = scmp.eq.s32.totalorder %s12, 0
    %p150 = por %p148, %p149
    %p151 = scmp.ne.s32.totalorder %s140, %s143
    %p152 = scmp.eq.s32.totalorder %s17, 1
    %p153 = por %p151, %p152
    %p154 = scmp.ne.s32.totalorder %s143, %s144
    %p155 = scmp.eq.s32.totalorder %s17, 0
    %p156 = por %p154, %p155
    %p157 = scmp.ne.s32.totalorder %s143, %s144
    %p158 = scmp.eq.s32.totalorder %s18, 1
    %p159 = por %p157, %p158
    %p161 = scmp.ne.s32.totalorder %s144, %s160
    %p162 = scmp.eq.s32.totalorder %s18, 0
    %p163 = por %p161, %p162
    %s164 = ssub.s32 %s20, %s27
    %p165 = scmp.eq.s32.totalorder %s164, 0
    %s167 = sadd.s32 %s166, 1
    %s168 = scalar_select %p165, %s166, %s167
    %p171 = pneg %p165
    %p172 = scmp.eq.s32.totalorder %s12, 1
    %p173 = por %p171, %p172
    %p174 = scmp.ne.s32.totalorder %s166, %s169
    %p175 = scmp.eq.s32.totalorder %s12, 0
    %p176 = por %p174, %p175
    %p177 = scmp.ne.s32.totalorder %s166, %s169
    %p178 = scmp.eq.s32.totalorder %s17, 1
    %p179 = por %p177, %p178
    %p180 = scmp.ne.s32.totalorder %s169, %s170
    %p181 = scmp.eq.s32.totalorder %s17, 0
    %p182 = por %p180, %p181
    %p183 = scmp.ne.s32.totalorder %s169, %s170
    %p184 = scmp.eq.s32.totalorder %s18, 1
    %p185 = por %p183, %p184
    %p187 = scmp.ne.s32.totalorder %s170, %s186
    %p188 = scmp.eq.s32.totalorder %s18, 0
    %p189 = por %p187, %p188
    %s190 = ssub.s32 %s19, %s31
    %s191 = ssub.s32 %s20, %s27
    %s192 = sor.u32 %s190, %s191
    %p193 = scmp.eq.s32.totalorder %s192, 0
    %s195 = sadd.s32 %s194, 1
    %s196 = scalar_select %p193, %s194, %s195
    %p199 = pneg %p193
    %p200 = scmp.eq.s32.totalorder %s12, 1
    %p201 = por %p199, %p200
    %p202 = scmp.ne.s32.totalorder %s194, %s197
    %p203 = scmp.eq.s32.totalorder %s12, 0
    %p204 = por %p202, %p203
    %p205 = scmp.ne.s32.totalorder %s194, %s197
    %p206 = scmp.eq.s32.totalorder %s17, 1
    %p207 = por %p205, %p206
    %p208 = scmp.ne.s32.totalorder %s197, %s198
    %p209 = scmp.eq.s32.totalorder %s17, 0
    %p210 = por %p208, %p209
    %p211 = scmp.ne.s32.totalorder %s197, %s198
    %p212 = scmp.eq.s32.totalorder %s18, 1
    %p213 = por %p211, %p212
    %p215 = scmp.ne.s32.totalorder %s198, %s214
    %p216 = scmp.eq.s32.totalorder %s18, 0
    %p217 = por %p215, %p216
    %p218 = scmp.le.s32.totalorder 1, %s12
    %p219 = scmp.lt.s32.totalorder %s12, 3
    %p220 = pnand %p218, %p219
    %p221 = pneg %p220
    // Predicated region
    $region9: #{_lambda_.1} parent=5 // pred_check
      _
    $region10: #{_lambda_.1} parent=5 // pred_check_branch
      %223 = sbr.rel (%p220) target = $region12
    $region11: #{_lambda_.1} parent=5 // pred_region
      %s224 = ssub.s32 %s12, 1
      // Predicated region
      $region13: #{_lambda_.1} parent=11 // pred_check
        %p225 = pneg %p78
      $region14: #{_lambda_.1} parent=11 // pred_check_branch
        %227 = sbr.rel (%p225) target = $region16
      $region15: #{_lambda_.1} parent=11 // pred_region
        %p228 = scmp.lt.s32.totalorder %s22, 0
        %s229 = scalar_select %p228, %s22, 0
        %s230 = smul.addr %s229, 8
        %s231 = scalar_lea.vmem %s1, %s230
      $region16: #{_lambda_.1} parent=11 // pred_fallthru
        _
      // Predicated region
      $region17: #{_lambda_.1} parent=11 // pred_check
        %p232 = pneg %p104
      $region18: #{_lambda_.1} parent=11 // pred_check_branch
        %234 = sbr.rel (%p232) target = $region20
      $region19: #{_lambda_.1} parent=11 // pred_region
        %p235 = scmp.lt.s32.totalorder %s22, 0
        %s236 = scalar_select %p235, %s22, 0
        %s237 = scalar_lea.vmem %s2, %s236
      $region20: #{_lambda_.1} parent=11 // pred_fallthru
        _
      // Predicated region
      $region21: #{_lambda_.1} parent=11 // pred_check
        %p238 = pneg %p130
      $region22: #{_lambda_.1} parent=11 // pred_check_branch
        %240 = sbr.rel (%p238) target = $region24
      $region23: #{_lambda_.1} parent=11 // pred_region
        %p241 = scmp.lt.s32.totalorder %s22, 0
        %s242 = scalar_select %p241, %s22, 0
        %s243 = scalar_lea.vmem %s3, %s242
      $region24: #{_lambda_.1} parent=11 // pred_fallthru
        _
      // Predicated region
      $region25: #{_lambda_.1} parent=11 // pred_check
        %p244 = pneg %p156
      $region26: #{_lambda_.1} parent=11 // pred_check_branch
        %246 = sbr.rel (%p244) target = $region28
      $region27: #{_lambda_.1} parent=11 // pred_region
        %p247 = scmp.lt.s32.totalorder %s22, 0
        %s248 = scalar_select %p247, %s22, 0
        %s249 = smul.addr %s248, 8
        %s250 = scalar_lea.vmem %s4, %s249
      $region28: #{_lambda_.1} parent=11 // pred_fallthru
        _
      // Predicated region
      $region29: #{_lambda_.1} parent=11 // pred_check
        %p251 = pneg %p182
      $region30: #{_lambda_.1} parent=11 // pred_check_branch
        %253 = sbr.rel (%p251) target = $region32
      $region31: #{_lambda_.1} parent=11 // pred_region
        %p254 = scmp.lt.s32.totalorder %s22, 0
        %s255 = scalar_select %p254, %s22, 0
        %s256 = smul.addr %s255, 4
        %s257 = scalar_lea.vmem %s5, %s256
      $region32: #{_lambda_.1} parent=11 // pred_fallthru
        _
    $region12: #{_lambda_.1} parent=5 // pred_fallthru
      _
    %p258 = scmp.lt.s32.totalorder %s12, 2
    // Predicated region
    $region33: #{_lambda_.1} parent=5 // pred_check
      %p259 = pneg %p258
    $region34: #{_lambda_.1} parent=5 // pred_check_branch
      %261 = sbr.rel (%p259) target = $region36
    $region35: #{_lambda_.1} parent=5 // pred_region
      // Predicated region
      $region37: #{_lambda_.1} parent=35 // pred_check
        %p262 = pneg %p46
      $region38: #{_lambda_.1} parent=35 // pred_check_branch
        %264 = sbr.rel (%p262) target = $region40
      $region39: #{_lambda_.1} parent=35 // pred_region
        %p265 = scmp.lt.s32.totalorder %s19, 1
        %s266 = scalar_select %p265, %s19, 1
        %p267 = scmp.lt.s32.totalorder %s20, 0
        %s268 = scalar_select %p267, %s20, 0
        %s269 = smul.addr %s266, 32
        %s270 = sadd.s32 %s268, %s269
        %s271 = smul.addr %s270, 8
        %s272 = scalar_lea.vmem %s0, %s271
      $region40: #{_lambda_.1} parent=35 // pred_fallthru
        _
    $region36: #{_lambda_.1} parent=5 // pred_fallthru
      _
    %p273 = scmp.le.s32.totalorder 1, %s12
    %p274 = scmp.lt.s32.totalorder %s12, 3
    %p275 = pnand %p273, %p274
    %p276 = pneg %p275
    // Predicated region
    $region41: #{_lambda_.1} parent=5 // pred_check
      _
    $region42: #{_lambda_.1} parent=5 // pred_check_branch
      %278 = sbr.rel (%p275) target = $region44
    $region43: #{_lambda_.1} parent=5 // pred_region
      %s279 = ssub.s32 %s12, 1
      %p280 = scmp.lt.s32.totalorder %s21, 1
      %s281 = scalar_select %p280, %s21, 1
      %p282 = scmp.lt.s32.totalorder %s22, 0
      %s283 = scalar_select %p282, %s22, 0
      %s284 = smul.addr %s281, 32
      %s285 = sadd.s32 %s283, %s284
      %s286 = smul.addr %s285, 8
      %s287 = scalar_lea.vmem %s0, %s286
      %p288 = pneg %p52
      %p289 = pneg %p49
      %p290 = scmp.lt.s32.totalorder %s22, 0
      %s291 = scalar_select %p290, %s22, 0
      %s292 = smul.addr %s291, 8
      %s293 = scalar_lea.vmem %s1, %s292
      %p294 = pneg %p78
      %p295 = pneg %p75
      %p296 = scmp.lt.s32.totalorder %s22, 0
      %s297 = scalar_select %p296, %s22, 0
      %s298 = scalar_lea.vmem %s2, %s297
      %p299 = pneg %p104
      %p300 = pneg %p101
      %p301 = scmp.lt.s32.totalorder %s22, 0
      %s302 = scalar_select %p301, %s22, 0
      %s303 = scalar_lea.vmem %s3, %s302
      %p304 = pneg %p130
      %p305 = pneg %p127
      %p306 = scmp.lt.s32.totalorder %s22, 0
      %s307 = scalar_select %p306, %s22, 0
      %s308 = smul.addr %s307, 8
      %s309 = scalar_lea.vmem %s4, %s308
      %p310 = pneg %p156
      %p311 = pneg %p153
      %p312 = scmp.lt.s32.totalorder %s22, 0
      %s313 = scalar_select %p312, %s22, 0
      %s314 = smul.addr %s313, 4
      %s315 = scalar_lea.vmem %s5, %s314
      %p316 = pneg %p182
      %p317 = pneg %p179
      %p318 = pneg %p210
      %p319 = pneg %p207
      %p320 = scmp.lt.s32.totalorder %s21, 1
      %s321 = scalar_select %p320, %s21, 1
      %p322 = scmp.lt.s32.totalorder %s22, 0
      %s323 = scalar_select %p322, %s22, 0
      %s324 = smul.addr %s321, 32
      %s325 = sadd.s32 %s323, %s324
      %s326 = smul.addr %s325, 8
      %s327 = scalar_lea.vmem %s6, %s326
      %p328 = scmp.lt.s32.totalorder %s21, 1
      %s329 = scalar_select %p328, %s21, 1
      %p330 = scmp.lt.s32.totalorder %s22, 0
      %s331 = scalar_select %p330, %s22, 0
      %s332 = smul.addr %s329, 32
      %s333 = sadd.s32 %s331, %s332
      %s334 = smul.addr %s333, 8
      %s335 = scalar_lea.vmem %s0, %s334
      %p336 = scmp.lt.s32.totalorder %s22, 0
      %s337 = scalar_select %p336, %s22, 0
      %s338 = smul.addr %s337, 8
      %s339 = scalar_lea.vmem %s1, %s338
      %p340 = scmp.lt.s32.totalorder %s22, 0
      %s341 = scalar_select %p340, %s22, 0
      %s342 = scalar_lea.vmem %s2, %s341
      %p343 = scmp.lt.s32.totalorder %s22, 0
      %s344 = scalar_select %p343, %s22, 0
      %s345 = scalar_lea.vmem %s3, %s344
      %p346 = scmp.lt.s32.totalorder %s22, 0
      %s347 = scalar_select %p346, %s22, 0
      %s348 = smul.addr %s347, 8
      %s349 = scalar_lea.vmem %s4, %s348
      %p350 = scmp.lt.s32.totalorder %s22, 0
      %s351 = scalar_select %p350, %s22, 0
      %s352 = smul.addr %s351, 4
      %s353 = scalar_lea.vmem %s5, %s352
      %p354 = scmp.lt.s32.totalorder %s21, 1
      %s355 = scalar_select %p354, %s21, 1
      %p356 = scmp.lt.s32.totalorder %s22, 0
      %s357 = scalar_select %p356, %s22, 0
      %s358 = smul.addr %s355, 32
      %s359 = sadd.s32 %s357, %s358
      %s360 = smul.addr %s359, 8
      %s361 = scalar_lea.vmem %s6, %s360
      %vm362 = vcmask 31744
      %363 = vst.msk [vmem:[#allocation2] sm:$0xff] %vm362, 0.0
      %vm364 = vcmask 25600
      %365 = vst.msk [vmem:[#allocation2 + $0x8] sm:$0x3] %vm364, 0.0
      %366 = vst.msk [vmem:[#allocation2 + $0x10] sm:$0xff] %vm362, 0.0
      %367 = vst.msk [vmem:[#allocation2 + $0x18] sm:$0x3] %vm364, 0.0
      %368 = vst.msk [vmem:[#allocation2 + $0x20] sm:$0xff] %vm362, 0.0
      %369 = vst.msk [vmem:[#allocation2 + $0x28] sm:$0x3] %vm364, 0.0
      %370 = vst.msk [vmem:[#allocation2 + $0x30] sm:$0xff] %vm362, 0.0
      %371 = vst.msk [vmem:[#allocation2 + $0x38] sm:$0x3] %vm364, 0.0
      %372 = vst.msk [vmem:[#allocation2 + $0x40] sm:$0xff] %vm362, 0.0
      %373 = vst.msk [vmem:[#allocation2 + $0x48] sm:$0x3] %vm364, 0.0
      %374 = vst.msk [vmem:[#allocation2 + $0x50] sm:$0xff] %vm362, 0.0
      %375 = vst.msk [vmem:[#allocation2 + $0x58] sm:$0x3] %vm364, 0.0
      %376 = vst.msk [vmem:[#allocation2 + $0x60] sm:$0xff] %vm362, 0.0
      %377 = vst.msk [vmem:[#allocation2 + $0x68] sm:$0x3] %vm364, 0.0
      %378 = vst.msk [vmem:[#allocation2 + $0x70] sm:$0xff] %vm362, 0.0
      %379 = vst.msk [vmem:[#allocation2 + $0x78] sm:$0x3] %vm364, 0.0
      %380 = vst.msk [vmem:[#allocation2 + $0x80] sm:$0xff] %vm362, 0.0
      %381 = vst.msk [vmem:[#allocation2 + $0x88] sm:$0x3] %vm364, 0.0
      %382 = vst.msk [vmem:[#allocation2 + $0x90] sm:$0xff] %vm362, 0.0
      %383 = vst.msk [vmem:[#allocation2 + $0x98] sm:$0x3] %vm364, 0.0
      %384 = vst.msk [vmem:[#allocation2 + $0xa0] sm:$0xff] %vm362, 0.0
      %385 = vst.msk [vmem:[#allocation2 + $0xa8] sm:$0x3] %vm364, 0.0
      %386 = vst.msk [vmem:[#allocation2 + $0xb0] sm:$0xff] %vm362, 0.0
      %387 = vst.msk [vmem:[#allocation2 + $0xb8] sm:$0x3] %vm364, 0.0
      %388 = vst.msk [vmem:[#allocation2 + $0xc0] sm:$0xff] %vm362, 0.0
      %389 = vst.msk [vmem:[#allocation2 + $0xc8] sm:$0x3] %vm364, 0.0
      %390 = vst.msk [vmem:[#allocation2 + $0xd0] sm:$0xff] %vm362, 0.0
      %391 = vst.msk [vmem:[#allocation2 + $0xd8] sm:$0x3] %vm364, 0.0
      %392 = vst.msk [vmem:[#allocation2 + $0xe0] sm:$0xff] %vm362, 0.0
      %393 = vst.msk [vmem:[#allocation2 + $0xe8] sm:$0x3] %vm364, 0.0
      %394 = vst.msk [vmem:[#allocation2 + $0xf0] sm:$0xff] %vm362, 0.0
      %395 = vst.msk [vmem:[#allocation2 + $0xf8] sm:$0x3] %vm364, 0.0
      %396 = vst.msk [vmem:[#allocation2 + $0x100] sm:$0xff] %vm362, 0.0
      %397 = vst.msk [vmem:[#allocation2 + $0x108] sm:$0x3] %vm364, 0.0
      %398 = vst.msk [vmem:[#allocation2 + $0x110] sm:$0xff] %vm362, 0.0
      %399 = vst.msk [vmem:[#allocation2 + $0x118] sm:$0x3] %vm364, 0.0
      %400 = vst.msk [vmem:[#allocation2 + $0x120] sm:$0xff] %vm362, 0.0
      %401 = vst.msk [vmem:[#allocation2 + $0x128] sm:$0x3] %vm364, 0.0
      %402 = vst.msk [vmem:[#allocation2 + $0x130] sm:$0xff] %vm362, 0.0
      %403 = vst.msk [vmem:[#allocation2 + $0x138] sm:$0x3] %vm364, 0.0
      %404 = vst.msk [vmem:[#allocation2 + $0x140] sm:$0xff] %vm362, 0.0
      %405 = vst.msk [vmem:[#allocation2 + $0x148] sm:$0x3] %vm364, 0.0
      %406 = vst.msk [vmem:[#allocation2 + $0x150] sm:$0xff] %vm362, 0.0
      %407 = vst.msk [vmem:[#allocation2 + $0x158] sm:$0x3] %vm364, 0.0
      %408 = vst.msk [vmem:[#allocation2 + $0x160] sm:$0xff] %vm362, 0.0
      %409 = vst.msk [vmem:[#allocation2 + $0x168] sm:$0x3] %vm364, 0.0
      %410 = vst.msk [vmem:[#allocation2 + $0x170] sm:$0xff] %vm362, 0.0
      %411 = vst.msk [vmem:[#allocation2 + $0x178] sm:$0x3] %vm364, 0.0
      %412 = vst.msk [vmem:[#allocation2 + $0x180] sm:$0xff] %vm362, 0.0
      %413 = vst.msk [vmem:[#allocation2 + $0x188] sm:$0x3] %vm364, 0.0
      %414 = vst.msk [vmem:[#allocation2 + $0x190] sm:$0xff] %vm362, 0.0
      %415 = vst.msk [vmem:[#allocation2 + $0x198] sm:$0x3] %vm364, 0.0
      %416 = vst.msk [vmem:[#allocation2 + $0x1a0] sm:$0xff] %vm362, 0.0
      %417 = vst.msk [vmem:[#allocation2 + $0x1a8] sm:$0x3] %vm364, 0.0
      %418 = vst.msk [vmem:[#allocation2 + $0x1b0] sm:$0xff] %vm362, 0.0
      %419 = vst.msk [vmem:[#allocation2 + $0x1b8] sm:$0x3] %vm364, 0.0
      %420 = vst.msk [vmem:[#allocation2 + $0x1c0] sm:$0xff] %vm362, 0.0
      %421 = vst.msk [vmem:[#allocation2 + $0x1c8] sm:$0x3] %vm364, 0.0
      %422 = vst.msk [vmem:[#allocation2 + $0x1d0] sm:$0xff] %vm362, 0.0
      %423 = vst.msk [vmem:[#allocation2 + $0x1d8] sm:$0x3] %vm364, 0.0
      %424 = vst.msk [vmem:[#allocation2 + $0x1e0] sm:$0xff] %vm362, 0.0
      %425 = vst.msk [vmem:[#allocation2 + $0x1e8] sm:$0x3] %vm364, 0.0
      %426 = vst.msk [vmem:[#allocation2 + $0x1f0] sm:$0xff] %vm362, 0.0
      %427 = vst.msk [vmem:[#allocation2 + $0x1f8] sm:$0x3] %vm364, 0.0
      %428 = vst.msk [vmem:[#allocation2 + $0x200] sm:$0xff] %vm362, 0.0
      %429 = vst.msk [vmem:[#allocation2 + $0x208] sm:$0x3] %vm364, 0.0
      %430 = vst.msk [vmem:[#allocation2 + $0x210] sm:$0xff] %vm362, 0.0
      %431 = vst.msk [vmem:[#allocation2 + $0x218] sm:$0x3] %vm364, 0.0
      %432 = vst.msk [vmem:[#allocation2 + $0x220] sm:$0xff] %vm362, 0.0
      %433 = vst.msk [vmem:[#allocation2 + $0x228] sm:$0x3] %vm364, 0.0
      %434 = vst.msk [vmem:[#allocation2 + $0x230] sm:$0xff] %vm362, 0.0
      %435 = vst.msk [vmem:[#allocation2 + $0x238] sm:$0x3] %vm364, 0.0
      %436 = vst.msk [vmem:[#allocation2 + $0x240] sm:$0xff] %vm362, 0.0
      %437 = vst.msk [vmem:[#allocation2 + $0x248] sm:$0x3] %vm364, 0.0
      %438 = vst.msk [vmem:[#allocation2 + $0x250] sm:$0xff] %vm362, 0.0
      %439 = vst.msk [vmem:[#allocation2 + $0x258] sm:$0x3] %vm364, 0.0
      %440 = vst.msk [vmem:[#allocation2 + $0x260] sm:$0xff] %vm362, 0.0
      %441 = vst.msk [vmem:[#allocation2 + $0x268] sm:$0x3] %vm364, 0.0
      %442 = vst.msk [vmem:[#allocation2 + $0x270] sm:$0xff] %vm362, 0.0
      %443 = vst.msk [vmem:[#allocation2 + $0x278] sm:$0x3] %vm364, 0.0
      %v444 = vld [vmem:[%s335] sm:$0xff]
      %v445 = vld [vmem:[%s335 + $0x20] sm:$0xff]
      %v446 = vld [vmem:[%s335 + $0x40] sm:$0xff]
      %v447 = vld [vmem:[%s335 + $0x60] sm:$0xff]
      %v448 = vld [vmem:[%s335 + $0x80] sm:$0xff]
      %v449 = vld [vmem:[%s335 + $0xa0] sm:$0xff]
      %v450 = vld [vmem:[%s335 + $0xc0] sm:$0xff]
      %v451 = vld [vmem:[%s335 + $0xe0] sm:$0xff]
      %s452 = scalar_lea.vmem [#allocation2], 16
      %453 = vst.msk [vmem:[%s452 + $0x1] sm:$0xff] %vm362, %v444
      %454 = vst.msk [vmem:[%s452 + $0x11] sm:$0xff] %vm362, %v445
      %455 = vst.msk [vmem:[%s452 + $0x21] sm:$0xff] %vm362, %v446
      %456 = vst.msk [vmem:[%s452 + $0x31] sm:$0xff] %vm362, %v447
      %457 = vst.msk [vmem:[%s452 + $0x41] sm:$0xff] %vm362, %v448
      %458 = vst.msk [vmem:[%s452 + $0x51] sm:$0xff] %vm362, %v449
      %459 = vst.msk [vmem:[%s452 + $0x61] sm:$0xff] %vm362, %v450
      %460 = vst.msk [vmem:[%s452 + $0x71] sm:$0xff] %vm362, %v451
      %s461 = scalar_lea.vmem %s335, 8
      %v462 = vld [vmem:[%s461] sm:$0xff]
      %v463 = vld [vmem:[%s461 + $0x20] sm:$0xff]
      %v464 = vld [vmem:[%s461 + $0x40] sm:$0xff]
      %v465 = vld [vmem:[%s461 + $0x60] sm:$0xff]
      %v466 = vld [vmem:[%s461 + $0x80] sm:$0xff]
      %v467 = vld [vmem:[%s461 + $0xa0] sm:$0xff]
      %v468 = vld [vmem:[%s461 + $0xc0] sm:$0xff]
      %v469 = vld [vmem:[%s461 + $0xe0] sm:$0xff]
      %s470 = scalar_lea.vmem [#allocation2], 176
      %471 = vst.msk [vmem:[%s470 + $0x1] sm:$0xff] %vm362, %v462
      %472 = vst.msk [vmem:[%s470 + $0x11] sm:$0xff] %vm362, %v463
      %473 = vst.msk [vmem:[%s470 + $0x21] sm:$0xff] %vm362, %v464
      %474 = vst.msk [vmem:[%s470 + $0x31] sm:$0xff] %vm362, %v465
      %475 = vst.msk [vmem:[%s470 + $0x41] sm:$0xff] %vm362, %v466
      %476 = vst.msk [vmem:[%s470 + $0x51] sm:$0xff] %vm362, %v467
      %477 = vst.msk [vmem:[%s470 + $0x61] sm:$0xff] %vm362, %v468
      %478 = vst.msk [vmem:[%s470 + $0x71] sm:$0xff] %vm362, %v469
      %s479 = scalar_lea.vmem %s335, 16
      %v480 = vld [vmem:[%s479] sm:$0xff]
      %v481 = vld [vmem:[%s479 + $0x20] sm:$0xff]
      %v482 = vld [vmem:[%s479 + $0x40] sm:$0xff]
      %v483 = vld [vmem:[%s479 + $0x60] sm:$0xff]
      %v484 = vld [vmem:[%s479 + $0x80] sm:$0xff]
      %v485 = vld [vmem:[%s479 + $0xa0] sm:$0xff]
      %v486 = vld [vmem:[%s479 + $0xc0] sm:$0xff]
      %v487 = vld [vmem:[%s479 + $0xe0] sm:$0xff]
      %s488 = scalar_lea.vmem [#allocation2], 336
      %489 = vst.msk [vmem:[%s488 + $0x1] sm:$0xff] %vm362, %v480
      %490 = vst.msk [vmem:[%s488 + $0x11] sm:$0xff] %vm362, %v481
      %491 = vst.msk [vmem:[%s488 + $0x21] sm:$0xff] %vm362, %v482
      %492 = vst.msk [vmem:[%s488 + $0x31] sm:$0xff] %vm362, %v483
      %493 = vst.msk [vmem:[%s488 + $0x41] sm:$0xff] %vm362, %v484
      %494 = vst.msk [vmem:[%s488 + $0x51] sm:$0xff] %vm362, %v485
      %495 = vst.msk [vmem:[%s488 + $0x61] sm:$0xff] %vm362, %v486
      %496 = vst.msk [vmem:[%s488 + $0x71] sm:$0xff] %vm362, %v487
      %s497 = scalar_lea.vmem %s335, 24
      %v498 = vld [vmem:[%s497] sm:$0xff]
      %v499 = vld [vmem:[%s497 + $0x20] sm:$0xff]
      %v500 = vld [vmem:[%s497 + $0x40] sm:$0xff]
      %v501 = vld [vmem:[%s497 + $0x60] sm:$0xff]
      %v502 = vld [vmem:[%s497 + $0x80] sm:$0xff]
      %v503 = vld [vmem:[%s497 + $0xa0] sm:$0xff]
      %v504 = vld [vmem:[%s497 + $0xc0] sm:$0xff]
      %v505 = vld [vmem:[%s497 + $0xe0] sm:$0xff]
      %s506 = scalar_lea.vmem [#allocation2], 496
      %507 = vst.msk [vmem:[%s506 + $0x1] sm:$0xff] %vm362, %v498
      %508 = vst.msk [vmem:[%s506 + $0x11] sm:$0xff] %vm362, %v499
      %509 = vst.msk [vmem:[%s506 + $0x21] sm:$0xff] %vm362, %v500
      %510 = vst.msk [vmem:[%s506 + $0x31] sm:$0xff] %vm362, %v501
      %511 = vst.msk [vmem:[%s506 + $0x41] sm:$0xff] %vm362, %v502
      %512 = vst.msk [vmem:[%s506 + $0x51] sm:$0xff] %vm362, %v503
      %513 = vst.msk [vmem:[%s506 + $0x61] sm:$0xff] %vm362, %v504
      %514 = vst.msk [vmem:[%s506 + $0x71] sm:$0xff] %vm362, %v505
      %v515 = vadd.f32 %v444, %v462
      %v516 = vadd.f32 %v445, %v463
      %v517 = vadd.f32 %v446, %v464
      %v518 = vadd.f32 %v447, %v465
      %v519 = vadd.f32 %v448, %v466
      %v520 = vadd.f32 %v449, %v467
      %v521 = vadd.f32 %v450, %v468
      %v522 = vadd.f32 %v451, %v469
      %v523 = vadd.f32 %v515, %v480
      %v524 = vadd.f32 %v516, %v481
      %v525 = vadd.f32 %v517, %v482
      %v526 = vadd.f32 %v518, %v483
      %v527 = vadd.f32 %v519, %v484
      %v528 = vadd.f32 %v520, %v485
      %v529 = vadd.f32 %v521, %v486
      %v530 = vadd.f32 %v522, %v487
      %v531 = vadd.f32 %v523, %v498
      %v532 = vadd.f32 %v524, %v499
      %v533 = vadd.f32 %v525, %v500
      %v534 = vadd.f32 %v526, %v501
      %v535 = vadd.f32 %v527, %v502
      %v536 = vadd.f32 %v528, %v503
      %v537 = vadd.f32 %v529, %v504
      %v538 = vadd.f32 %v530, %v505
      %v539 = vmul.f32 %v531, 0.5
      %v540 = vmul.f32 %v532, 0.5
      %v541 = vmul.f32 %v533, 0.5
      %v542 = vmul.f32 %v534, 0.5
      %v543 = vmul.f32 %v535, 0.5
      %v544 = vmul.f32 %v536, 0.5
      %v545 = vmul.f32 %v537, 0.5
      %v546 = vmul.f32 %v538, 0.5
      %v547 = vsub.f32 %v515, %v480
      %v548 = vsub.f32 %v516, %v481
      %v549 = vsub.f32 %v517, %v482
      %v550 = vsub.f32 %v518, %v483
      %v551 = vsub.f32 %v519, %v484
      %v552 = vsub.f32 %v520, %v485
      %v553 = vsub.f32 %v521, %v486
      %v554 = vsub.f32 %v522, %v487
      %v555 = vsub.f32 %v547, %v498
      %v556 = vsub.f32 %v548, %v499
      %v557 = vsub.f32 %v549, %v500
      %v558 = vsub.f32 %v550, %v501
      %v559 = vsub.f32 %v551, %v502
      %v560 = vsub.f32 %v552, %v503
      %v561 = vsub.f32 %v553, %v504
      %v562 = vsub.f32 %v554, %v505
      %v563 = vmul.f32 %v555, 0.5
      %v564 = vmul.f32 %v556, 0.5
      %v565 = vmul.f32 %v557, 0.5
      %v566 = vmul.f32 %v558, 0.5
      %v567 = vmul.f32 %v559, 0.5
      %v568 = vmul.f32 %v560, 0.5
      %v569 = vmul.f32 %v561, 0.5
      %v570 = vmul.f32 %v562, 0.5
      %v571 = vsub.f32 %v444, %v462
      %v572 = vsub.f32 %v445, %v463
      %v573 = vsub.f32 %v446, %v464
      %v574 = vsub.f32 %v447, %v465
      %v575 = vsub.f32 %v448, %v466
      %v576 = vsub.f32 %v449, %v467
      %v577 = vsub.f32 %v450, %v468
      %v578 = vsub.f32 %v451, %v469
      %v579 = vadd.f32 %v571, %v480
      %v580 = vadd.f32 %v572, %v481
      %v581 = vadd.f32 %v573, %v482
      %v582 = vadd.f32 %v574, %v483
      %v583 = vadd.f32 %v575, %v484
      %v584 = vadd.f32 %v576, %v485
      %v585 = vadd.f32 %v577, %v486
      %v586 = vadd.f32 %v578, %v487
      %v587 = vsub.f32 %v579, %v498
      %v588 = vsub.f32 %v580, %v499
      %v589 = vsub.f32 %v581, %v500
      %v590 = vsub.f32 %v582, %v501
      %v591 = vsub.f32 %v583, %v502
      %v592 = vsub.f32 %v584, %v503
      %v593 = vsub.f32 %v585, %v504
      %v594 = vsub.f32 %v586, %v505
      %v595 = vmul.f32 %v587, 0.5
      %v596 = vmul.f32 %v588, 0.5
      %v597 = vmul.f32 %v589, 0.5
      %v598 = vmul.f32 %v590, 0.5
      %v599 = vmul.f32 %v591, 0.5
      %v600 = vmul.f32 %v592, 0.5
      %v601 = vmul.f32 %v593, 0.5
      %v602 = vmul.f32 %v594, 0.5
      %v603 = vsub.f32 %v571, %v480
      %v604 = vsub.f32 %v572, %v481
      %v605 = vsub.f32 %v573, %v482
      %v606 = vsub.f32 %v574, %v483
      %v607 = vsub.f32 %v575, %v484
      %v608 = vsub.f32 %v576, %v485
      %v609 = vsub.f32 %v577, %v486
      %v610 = vsub.f32 %v578, %v487
      %v611 = vadd.f32 %v603, %v498
      %v612 = vadd.f32 %v604, %v499
      %v613 = vadd.f32 %v605, %v500
      %v614 = vadd.f32 %v606, %v501
      %v615 = vadd.f32 %v607, %v502
      %v616 = vadd.f32 %v608, %v503
      %v617 = vadd.f32 %v609, %v504
      %v618 = vadd.f32 %v610, %v505
      %v619 = vmul.f32 %v611, 0.5
      %v620 = vmul.f32 %v612, 0.5
      %v621 = vmul.f32 %v613, 0.5
      %v622 = vmul.f32 %v614, 0.5
      %v623 = vmul.f32 %v615, 0.5
      %v624 = vmul.f32 %v616, 0.5
      %v625 = vmul.f32 %v617, 0.5
      %v626 = vmul.f32 %v618, 0.5
      %v627 = vld [vmem:[%s349] sm:$0xff]
      %v628 = vld [vmem:[%s349 + $0x8] sm:$0xff]
      %v629 = vld [vmem:[%s349 + $0x10] sm:$0xff]
      %v630 = vld [vmem:[%s349 + $0x18] sm:$0x1]
      %v631 = vld [vmem:[%s349 + $0x20] sm:$0xff]
      %v632 = vld [vmem:[%s349 + $0x28] sm:$0xff]
      %v633 = vld [vmem:[%s349 + $0x30] sm:$0xff]
      %v634 = vld [vmem:[%s349 + $0x38] sm:$0x1]
      %v635 = vld [vmem:[%s349 + $0x40] sm:$0xff]
      %v636 = vld [vmem:[%s349 + $0x48] sm:$0xff]
      %v637 = vld [vmem:[%s349 + $0x50] sm:$0xff]
      %v638 = vld [vmem:[%s349 + $0x58] sm:$0x1]
      %v639 = vld [vmem:[%s349 + $0x60] sm:$0xff]
      %v640 = vld [vmem:[%s349 + $0x68] sm:$0xff]
      %v641 = vld [vmem:[%s349 + $0x70] sm:$0xff]
      %v642 = vld [vmem:[%s349 + $0x78] sm:$0x1]
      %v643 = vld [vmem:[%s353] sm:$0xf]
      %644 = vst.msk [vmem:[#allocation3] sm:$0xff] %vm362, 0.0
      %vm645 = vcmask 27648
      %646 = vst.msk [vmem:[#allocation3 + $0x8] sm:$0xf] %vm645, 0.0
      %647 = vst.msk [vmem:[#allocation3 + $0x10] sm:$0xff] %vm362, 0.0
      %648 = vst.msk [vmem:[#allocation3 + $0x18] sm:$0xf] %vm645, 0.0
      %649 = vst.msk [vmem:[#allocation3 + $0x20] sm:$0xff] %vm362, 0.0
      %650 = vst.msk [vmem:[#allocation3 + $0x28] sm:$0xf] %vm645, 0.0
      %651 = vst.msk [vmem:[#allocation3 + $0x30] sm:$0xff] %vm362, 0.0
      %652 = vst.msk [vmem:[#allocation3 + $0x38] sm:$0xf] %vm645, 0.0
      %653 = vst.msk [vmem:[#allocation3 + $0x40] sm:$0xff] %vm362, 0.0
      %654 = vst.msk [vmem:[#allocation3 + $0x48] sm:$0xf] %vm645, 0.0
      %655 = vst.msk [vmem:[#allocation3 + $0x50] sm:$0xff] %vm362, 0.0
      %656 = vst.msk [vmem:[#allocation3 + $0x58] sm:$0xf] %vm645, 0.0
      %657 = vst.msk [vmem:[#allocation3 + $0x60] sm:$0xff] %vm362, 0.0
      %658 = vst.msk [vmem:[#allocation3 + $0x68] sm:$0xf] %vm645, 0.0
      %659 = vst.msk [vmem:[#allocation3 + $0x70] sm:$0xff] %vm362, 0.0
      %660 = vst.msk [vmem:[#allocation3 + $0x78] sm:$0xf] %vm645, 0.0
      %661 = vst.msk [vmem:[#allocation3 + $0x80] sm:$0xff] %vm362, 0.0
      %662 = vst.msk [vmem:[#allocation3 + $0x88] sm:$0xf] %vm645, 0.0
      %663 = vst.msk [vmem:[#allocation3 + $0x90] sm:$0xff] %vm362, 0.0
      %664 = vst.msk [vmem:[#allocation3 + $0x98] sm:$0xf] %vm645, 0.0
      %665 = vst.msk [vmem:[#allocation3 + $0xa0] sm:$0xff] %vm362, 0.0
      %666 = vst.msk [vmem:[#allocation3 + $0xa8] sm:$0xf] %vm645, 0.0
      %667 = vst.msk [vmem:[#allocation3 + $0xb0] sm:$0xff] %vm362, 0.0
      %668 = vst.msk [vmem:[#allocation3 + $0xb8] sm:$0xf] %vm645, 0.0
      %s669 = scalar_lea.vmem [#allocation3], 32
      %670 = vst.msk [vmem:[%s669 + $0x2] sm:$0xff] %vm362, %v539
      %671 = vst.msk [vmem:[%s669 + $0x12] sm:$0xff] %vm362, %v540
      %672 = vst.msk [vmem:[%s669 + $0x22] sm:$0xff] %vm362, %v541
      %673 = vst.msk [vmem:[%s669 + $0x32] sm:$0xff] %vm362, %v542
      %674 = vst.msk [vmem:[%s669 + $0x42] sm:$0xff] %vm362, %v543
      %675 = vst.msk [vmem:[%s669 + $0x52] sm:$0xff] %vm362, %v544
      %676 = vst.msk [vmem:[%s669 + $0x62] sm:$0xff] %vm362, %v545
      %677 = vst.msk [vmem:[%s669 + $0x72] sm:$0xff] %vm362, %v546
      %v678 = vld [vmem:[#allocation3] sm:$0xff]
      %v679 = vld [vmem:[#allocation3 + $0x10] sm:$0xff]
      %v680 = vld [vmem:[#allocation3 + $0x20] sm:$0xff]
      %v681 = vld [vmem:[#allocation3 + $0x30] sm:$0xff]
      %v682 = vld [vmem:[#allocation3 + $0x40] sm:$0xff]
      %v683 = vld [vmem:[#allocation3 + $0x50] sm:$0xff]
      %v684 = vld [vmem:[#allocation3 + $0x60] sm:$0xff]
      %v685 = vld [vmem:[#allocation3 + $0x70] sm:$0xff]
      %v686 = vlaneseq
      %v687 = vshrl.u32 %v686, 7
      %v688 = vsub.s32 0, %v687
      %v689 = vrot.slane %v627, %v688
      %v690 = vmul.f32 %v678, %v689
      %v691 = vmul.f32 %v679, %v689
      %v692 = vmul.f32 %v680, %v689
      %v693 = vmul.f32 %v681, %v689
      %v694 = vmul.f32 %v682, %v689
      %v695 = vmul.f32 %v683, %v689
      %v696 = vmul.f32 %v684, %v689
      %v697 = vmul.f32 %v685, %v689
      %v698 = vadd.f32 %v690, 0.0
      %v699 = vadd.f32 %v691, 0.0
      %v700 = vadd.f32 %v692, 0.0
      %v701 = vadd.f32 %v693, 0.0
      %v702 = vadd.f32 %v694, 0.0
      %v703 = vadd.f32 %v695, 0.0
      %v704 = vadd.f32 %v696, 0.0
      %v705 = vadd.f32 %v697, 0.0
      %v706 = vld [vmem:[#allocation3 + $0x1] sm:$0xff]
      %v707 = vld [vmem:[#allocation3 + $0x11] sm:$0xff]
      %v708 = vld [vmem:[#allocation3 + $0x21] sm:$0xff]
      %v709 = vld [vmem:[#allocation3 + $0x31] sm:$0xff]
      %v710 = vld [vmem:[#allocation3 + $0x41] sm:$0xff]
      %v711 = vld [vmem:[#allocation3 + $0x51] sm:$0xff]
      %v712 = vld [vmem:[#allocation3 + $0x61] sm:$0xff]
      %v713 = vld [vmem:[#allocation3 + $0x71] sm:$0xff]
      %v714 = vlaneseq
      %v715 = vshrl.u32 %v714, 7
      %v716 = vsub.s32 1, %v715
      %v717 = vrot.slane %v627, %v716
      %v718 = vmul.f32 %v706, %v717
      %v719 = vmul.f32 %v707, %v717
      %v720 = vmul.f32 %v708, %v717
      %v721 = vmul.f32 %v709, %v717
      %v722 = vmul.f32 %v710, %v717
      %v723 = vmul.f32 %v711, %v717
      %v724 = vmul.f32 %v712, %v717
      %v725 = vmul.f32 %v713, %v717
      %v726 = vadd.f32 %v698, %v718
      %v727 = vadd.f32 %v699, %v719
      %v728 = vadd.f32 %v700, %v720
      %v729 = vadd.f32 %v701, %v721
      %v730 = vadd.f32 %v702, %v722
      %v731 = vadd.f32 %v703, %v723
      %v732 = vadd.f32 %v704, %v724
      %v733 = vadd.f32 %v705, %v725
      %v734 = vld [vmem:[#allocation3 + $0x2] sm:$0xff]
      %v735 = vld [vmem:[#allocation3 + $0x12] sm:$0xff]
      %v736 = vld [vmem:[#allocation3 + $0x22] sm:$0xff]
      %v737 = vld [vmem:[#allocation3 + $0x32] sm:$0xff]
      %v738 = vld [vmem:[#allocation3 + $0x42] sm:$0xff]
      %v739 = vld [vmem:[#allocation3 + $0x52] sm:$0xff]
      %v740 = vld [vmem:[#allocation3 + $0x62] sm:$0xff]
      %v741 = vld [vmem:[#allocation3 + $0x72] sm:$0xff]
      %v742 = vlaneseq
      %v743 = vshrl.u32 %v742, 7
      %v744 = vsub.s32 2, %v743
      %v745 = vrot.slane %v627, %v744
      %v746 = vmul.f32 %v734, %v745
      %v747 = vmul.f32 %v735, %v745
      %v748 = vmul.f32 %v736, %v745
      %v749 = vmul.f32 %v737, %v745
      %v750 = vmul.f32 %v738, %v745
      %v751 = vmul.f32 %v739, %v745
      %v752 = vmul.f32 %v740, %v745
      %v753 = vmul.f32 %v741, %v745
      %v754 = vadd.f32 %v726, %v746
      %v755 = vadd.f32 %v727, %v747
      %v756 = vadd.f32 %v728, %v748
      %v757 = vadd.f32 %v729, %v749
      %v758 = vadd.f32 %v730, %v750
      %v759 = vadd.f32 %v731, %v751
      %v760 = vadd.f32 %v732, %v752
      %v761 = vadd.f32 %v733, %v753
      %v762 = vld [vmem:[#allocation3 + $0x3] sm:$0xff]
      %v763 = vld [vmem:[#allocation3 + $0x13] sm:$0xff]
      %v764 = vld [vmem:[#allocation3 + $0x23] sm:$0xff]
      %v765 = vld [vmem:[#allocation3 + $0x33] sm:$0xff]
      %v766 = vld [vmem:[#allocation3 + $0x43] sm:$0xff]
      %v767 = vld [vmem:[#allocation3 + $0x53] sm:$0xff]
      %v768 = vld [vmem:[#allocation3 + $0x63] sm:$0xff]
      %v769 = vld [vmem:[#allocation3 + $0x73] sm:$0xff]
      %v770 = vlaneseq
      %v771 = vshrl.u32 %v770, 7
      %v772 = vsub.s32 3, %v771
      %v773 = vrot.slane %v627, %v772
      %v774 = vmul.f32 %v762, %v773
      %v775 = vmul.f32 %v763, %v773
      %v776 = vmul.f32 %v764, %v773
      %v777 = vmul.f32 %v765, %v773
      %v778 = vmul.f32 %v766, %v773
      %v779 = vmul.f32 %v767, %v773
      %v780 = vmul.f32 %v768, %v773
      %v781 = vmul.f32 %v769, %v773
      %v782 = vadd.f32 %v754, %v774
      %v783 = vadd.f32 %v755, %v775
      %v784 = vadd.f32 %v756, %v776
      %v785 = vadd.f32 %v757, %v777
      %v786 = vadd.f32 %v758, %v778
      %v787 = vadd.f32 %v759, %v779
      %v788 = vadd.f32 %v760, %v780
      %v789 = vadd.f32 %v761, %v781
      %v790 = vld [vmem:[#allocation3 + $0x4] sm:$0xff]
      %v791 = vld [vmem:[#allocation3 + $0x14] sm:$0xff]
      %v792 = vld [vmem:[#allocation3 + $0x24] sm:$0xff]
      %v793 = vld [vmem:[#allocation3 + $0x34] sm:$0xff]
      %v794 = vld [vmem:[#allocation3 + $0x44] sm:$0xff]
      %v795 = vld [vmem:[#allocation3 + $0x54] sm:$0xff]
      %v796 = vld [vmem:[#allocation3 + $0x64] sm:$0xff]
      %v797 = vld [vmem:[#allocation3 + $0x74] sm:$0xff]
      %v798 = vlaneseq
      %v799 = vshrl.u32 %v798, 7
      %v800 = vsub.s32 4, %v799
      %v801 = vrot.slane %v627, %v800
      %v802 = vmul.f32 %v790, %v801
      %v803 = vmul.f32 %v791, %v801
      %v804 = vmul.f32 %v792, %v801
      %v805 = vmul.f32 %v793, %v801
      %v806 = vmul.f32 %v794, %v801
      %v807 = vmul.f32 %v795, %v801
      %v808 = vmul.f32 %v796, %v801
      %v809 = vmul.f32 %v797, %v801
      %v810 = vadd.f32 %v782, %v802
      %v811 = vadd.f32 %v783, %v803
      %v812 = vadd.f32 %v784, %v804
      %v813 = vadd.f32 %v785, %v805
      %v814 = vadd.f32 %v786, %v806
      %v815 = vadd.f32 %v787, %v807
      %v816 = vadd.f32 %v788, %v808
      %v817 = vadd.f32 %v789, %v809
      %s818 = scalar_lea.vmem [#allocation3], 16
      %v819 = vld [vmem:[%s818] sm:$0xff]
      %v820 = vld [vmem:[%s818 + $0x10] sm:$0xff]
      %v821 = vld [vmem:[%s818 + $0x20] sm:$0xff]
      %v822 = vld [vmem:[%s818 + $0x30] sm:$0xff]
      %v823 = vld [vmem:[%s818 + $0x40] sm:$0xff]
      %v824 = vld [vmem:[%s818 + $0x50] sm:$0xff]
      %v825 = vld [vmem:[%s818 + $0x60] sm:$0xff]
      %v826 = vld [vmem:[%s818 + $0x70] sm:$0xff]
      %v827 = vlaneseq
      %v828 = vshrl.u32 %v827, 7
      %v829 = vsub.s32 5, %v828
      %v830 = vrot.slane %v627, %v829
      %v831 = vmul.f32 %v819, %v830
      %v832 = vmul.f32 %v820, %v830
      %v833 = vmul.f32 %v821, %v830
      %v834 = vmul.f32 %v822, %v830
      %v835 = vmul.f32 %v823, %v830
      %v836 = vmul.f32 %v824, %v830
      %v837 = vmul.f32 %v825, %v830
      %v838 = vmul.f32 %v826, %v830
      %v839 = vadd.f32 %v810, %v831
      %v840 = vadd.f32 %v811, %v832
      %v841 = vadd.f32 %v812, %v833
      %v842 = vadd.f32 %v813, %v834
      %v843 = vadd.f32 %v814, %v835
      %v844 = vadd.f32 %v815, %v836
      %v845 = vadd.f32 %v816, %v837
      %v846 = vadd.f32 %v817, %v838
      %v847 = vld [vmem:[%s818 + $0x1] sm:$0xff]
      %v848 = vld [vmem:[%s818 + $0x11] sm:$0xff]
      %v849 = vld [vmem:[%s818 + $0x21] sm:$0xff]
      %v850 = vld [vmem:[%s818 + $0x31] sm:$0xff]
      %v851 = vld [vmem:[%s818 + $0x41] sm:$0xff]
      %v852 = vld [vmem:[%s818 + $0x51] sm:$0xff]
      %v853 = vld [vmem:[%s818 + $0x61] sm:$0xff]
      %v854 = vld [vmem:[%s818 + $0x71] sm:$0xff]
      %v855 = vlaneseq
      %v856 = vshrl.u32 %v855, 7
      %v857 = vsub.s32 6, %v856
      %v858 = vrot.slane %v627, %v857
      %v859 = vmul.f32 %v847, %v858
      %v860 = vmul.f32 %v848, %v858
      %v861 = vmul.f32 %v849, %v858
      %v862 = vmul.f32 %v850, %v858
      %v863 = vmul.f32 %v851, %v858
      %v864 = vmul.f32 %v852, %v858
      %v865 = vmul.f32 %v853, %v858
      %v866 = vmul.f32 %v854, %v858
      %v867 = vadd.f32 %v839, %v859
      %v868 = vadd.f32 %v840, %v860
      %v869 = vadd.f32 %v841, %v861
      %v870 = vadd.f32 %v842, %v862
      %v871 = vadd.f32 %v843, %v863
      %v872 = vadd.f32 %v844, %v864
      %v873 = vadd.f32 %v845, %v865
      %v874 = vadd.f32 %v846, %v866
      %v875 = vld [vmem:[%s818 + $0x2] sm:$0xff]
      %v876 = vld [vmem:[%s818 + $0x12] sm:$0xff]
      %v877 = vld [vmem:[%s818 + $0x22] sm:$0xff]
      %v878 = vld [vmem:[%s818 + $0x32] sm:$0xff]
      %v879 = vld [vmem:[%s818 + $0x42] sm:$0xff]
      %v880 = vld [vmem:[%s818 + $0x52] sm:$0xff]
      %v881 = vld [vmem:[%s818 + $0x62] sm:$0xff]
      %v882 = vld [vmem:[%s818 + $0x72] sm:$0xff]
      %v883 = vlaneseq
      %v884 = vshrl.u32 %v883, 7
      %v885 = vsub.s32 7, %v884
      %v886 = vrot.slane %v627, %v885
      %v887 = vmul.f32 %v875, %v886
      %v888 = vmul.f32 %v876, %v886
      %v889 = vmul.f32 %v877, %v886
      %v890 = vmul.f32 %v878, %v886
      %v891 = vmul.f32 %v879, %v886
      %v892 = vmul.f32 %v880, %v886
      %v893 = vmul.f32 %v881, %v886
      %v894 = vmul.f32 %v882, %v886
      %v895 = vadd.f32 %v867, %v887
      %v896 = vadd.f32 %v868, %v888
      %v897 = vadd.f32 %v869, %v889
      %v898 = vadd.f32 %v870, %v890
      %v899 = vadd.f32 %v871, %v891
      %v900 = vadd.f32 %v872, %v892
      %v901 = vadd.f32 %v873, %v893
      %v902 = vadd.f32 %v874, %v894
      %v903 = vld [vmem:[%s818 + $0x3] sm:$0xff]
      %v904 = vld [vmem:[%s818 + $0x13] sm:$0xff]
      %v905 = vld [vmem:[%s818 + $0x23] sm:$0xff]
      %v906 = vld [vmem:[%s818 + $0x33] sm:$0xff]
      %v907 = vld [vmem:[%s818 + $0x43] sm:$0xff]
      %v908 = vld [vmem:[%s818 + $0x53] sm:$0xff]
      %v909 = vld [vmem:[%s818 + $0x63] sm:$0xff]
      %v910 = vld [vmem:[%s818 + $0x73] sm:$0xff]
      %v911 = vlaneseq
      %v912 = vshrl.u32 %v911, 7
      %v913 = vsub.s32 0, %v912
      %v914 = vrot.slane %v628, %v913
      %v915 = vmul.f32 %v903, %v914
      %v916 = vmul.f32 %v904, %v914
      %v917 = vmul.f32 %v905, %v914
      %v918 = vmul.f32 %v906, %v914
      %v919 = vmul.f32 %v907, %v914
      %v920 = vmul.f32 %v908, %v914
      %v921 = vmul.f32 %v909, %v914
      %v922 = vmul.f32 %v910, %v914
      %v923 = vadd.f32 %v895, %v915
      %v924 = vadd.f32 %v896, %v916
      %v925 = vadd.f32 %v897, %v917
      %v926 = vadd.f32 %v898, %v918
      %v927 = vadd.f32 %v899, %v919
      %v928 = vadd.f32 %v900, %v920
      %v929 = vadd.f32 %v901, %v921
      %v930 = vadd.f32 %v902, %v922
      %v931 = vld [vmem:[%s818 + $0x4] sm:$0xff]
      %v932 = vld [vmem:[%s818 + $0x14] sm:$0xff]
      %v933 = vld [vmem:[%s818 + $0x24] sm:$0xff]
      %v934 = vld [vmem:[%s818 + $0x34] sm:$0xff]
      %v935 = vld [vmem:[%s818 + $0x44] sm:$0xff]
      %v936 = vld [vmem:[%s818 + $0x54] sm:$0xff]
      %v937 = vld [vmem:[%s818 + $0x64] sm:$0xff]
      %v938 = vld [vmem:[%s818 + $0x74] sm:$0xff]
      %v939 = vlaneseq
      %v940 = vshrl.u32 %v939, 7
      %v941 = vsub.s32 1, %v940
      %v942 = vrot.slane %v628, %v941
      %v943 = vmul.f32 %v931, %v942
      %v944 = vmul.f32 %v932, %v942
      %v945 = vmul.f32 %v933, %v942
      %v946 = vmul.f32 %v934, %v942
      %v947 = vmul.f32 %v935, %v942
      %v948 = vmul.f32 %v936, %v942
      %v949 = vmul.f32 %v937, %v942
      %v950 = vmul.f32 %v938, %v942
      %v951 = vadd.f32 %v923, %v943
      %v952 = vadd.f32 %v924, %v944
      %v953 = vadd.f32 %v925, %v945
      %v954 = vadd.f32 %v926, %v946
      %v955 = vadd.f32 %v927, %v947
      %v956 = vadd.f32 %v928, %v948
      %v957 = vadd.f32 %v929, %v949
      %v958 = vadd.f32 %v930, %v950
      %v959 = vld [vmem:[%s669] sm:$0xff]
      %v960 = vld [vmem:[%s669 + $0x10] sm:$0xff]
      %v961 = vld [vmem:[%s669 + $0x20] sm:$0xff]
      %v962 = vld [vmem:[%s669 + $0x30] sm:$0xff]
      %v963 = vld [vmem:[%s669 + $0x40] sm:$0xff]
      %v964 = vld [vmem:[%s669 + $0x50] sm:$0xff]
      %v965 = vld [vmem:[%s669 + $0x60] sm:$0xff]
      %v966 = vld [vmem:[%s669 + $0x70] sm:$0xff]
      %v967 = vlaneseq
      %v968 = vshrl.u32 %v967, 7
      %v969 = vsub.s32 2, %v968
      %v970 = vrot.slane %v628, %v969
      %v971 = vmul.f32 %v959, %v970
      %v972 = vmul.f32 %v960, %v970
      %v973 = vmul.f32 %v961, %v970
      %v974 = vmul.f32 %v962, %v970
      %v975 = vmul.f32 %v963, %v970
      %v976 = vmul.f32 %v964, %v970
      %v977 = vmul.f32 %v965, %v970
      %v978 = vmul.f32 %v966, %v970
      %v979 = vadd.f32 %v951, %v971
      %v980 = vadd.f32 %v952, %v972
      %v981 = vadd.f32 %v953, %v973
      %v982 = vadd.f32 %v954, %v974
      %v983 = vadd.f32 %v955, %v975
      %v984 = vadd.f32 %v956, %v976
      %v985 = vadd.f32 %v957, %v977
      %v986 = vadd.f32 %v958, %v978
      %v987 = vld [vmem:[%s669 + $0x1] sm:$0xff]
      %v988 = vld [vmem:[%s669 + $0x11] sm:$0xff]
      %v989 = vld [vmem:[%s669 + $0x21] sm:$0xff]
      %v990 = vld [vmem:[%s669 + $0x31] sm:$0xff]
      %v991 = vld [vmem:[%s669 + $0x41] sm:$0xff]
      %v992 = vld [vmem:[%s669 + $0x51] sm:$0xff]
      %v993 = vld [vmem:[%s669 + $0x61] sm:$0xff]
      %v994 = vld [vmem:[%s669 + $0x71] sm:$0xff]
      %v995 = vlaneseq
      %v996 = vshrl.u32 %v995, 7
      %v997 = vsub.s32 3, %v996
      %v998 = vrot.slane %v628, %v997
      %v999 = vmul.f32 %v987, %v998
      %v1000 = vmul.f32 %v988, %v998
      %v1001 = vmul.f32 %v989, %v998
      %v1002 = vmul.f32 %v990, %v998
      %v1003 = vmul.f32 %v991, %v998
      %v1004 = vmul.f32 %v992, %v998
      %v1005 = vmul.f32 %v993, %v998
      %v1006 = vmul.f32 %v994, %v998
      %v1007 = vadd.f32 %v979, %v999
      %v1008 = vadd.f32 %v980, %v1000
      %v1009 = vadd.f32 %v981, %v1001
      %v1010 = vadd.f32 %v982, %v1002
      %v1011 = vadd.f32 %v983, %v1003
      %v1012 = vadd.f32 %v984, %v1004
      %v1013 = vadd.f32 %v985, %v1005
      %v1014 = vadd.f32 %v986, %v1006
      %v1015 = vld [vmem:[%s669 + $0x2] sm:$0xff]
      %v1016 = vld [vmem:[%s669 + $0x12] sm:$0xff]
      %v1017 = vld [vmem:[%s669 + $0x22] sm:$0xff]
      %v1018 = vld [vmem:[%s669 + $0x32] sm:$0xff]
      %v1019 = vld [vmem:[%s669 + $0x42] sm:$0xff]
      %v1020 = vld [vmem:[%s669 + $0x52] sm:$0xff]
      %v1021 = vld [vmem:[%s669 + $0x62] sm:$0xff]
      %v1022 = vld [vmem:[%s669 + $0x72] sm:$0xff]
      %v1023 = vlaneseq
      %v1024 = vshrl.u32 %v1023, 7
      %v1025 = vsub.s32 4, %v1024
      %v1026 = vrot.slane %v628, %v1025
      %v1027 = vmul.f32 %v1015, %v1026
      %v1028 = vmul.f32 %v1016, %v1026
      %v1029 = vmul.f32 %v1017, %v1026
      %v1030 = vmul.f32 %v1018, %v1026
      %v1031 = vmul.f32 %v1019, %v1026
      %v1032 = vmul.f32 %v1020, %v1026
      %v1033 = vmul.f32 %v1021, %v1026
      %v1034 = vmul.f32 %v1022, %v1026
      %v1035 = vadd.f32 %v1007, %v1027
      %v1036 = vadd.f32 %v1008, %v1028
      %v1037 = vadd.f32 %v1009, %v1029
      %v1038 = vadd.f32 %v1010, %v1030
      %v1039 = vadd.f32 %v1011, %v1031
      %v1040 = vadd.f32 %v1012, %v1032
      %v1041 = vadd.f32 %v1013, %v1033
      %v1042 = vadd.f32 %v1014, %v1034
      %v1043 = vld [vmem:[%s669 + $0x3] sm:$0xff]
      %v1044 = vld [vmem:[%s669 + $0x13] sm:$0xff]
      %v1045 = vld [vmem:[%s669 + $0x23] sm:$0xff]
      %v1046 = vld [vmem:[%s669 + $0x33] sm:$0xff]
      %v1047 = vld [vmem:[%s669 + $0x43] sm:$0xff]
      %v1048 = vld [vmem:[%s669 + $0x53] sm:$0xff]
      %v1049 = vld [vmem:[%s669 + $0x63] sm:$0xff]
      %v1050 = vld [vmem:[%s669 + $0x73] sm:$0xff]
      %v1051 = vlaneseq
      %v1052 = vshrl.u32 %v1051, 7
      %v1053 = vsub.s32 5, %v1052
      %v1054 = vrot.slane %v628, %v1053
      %v1055 = vmul.f32 %v1043, %v1054
      %v1056 = vmul.f32 %v1044, %v1054
      %v1057 = vmul.f32 %v1045, %v1054
      %v1058 = vmul.f32 %v1046, %v1054
      %v1059 = vmul.f32 %v1047, %v1054
      %v1060 = vmul.f32 %v1048, %v1054
      %v1061 = vmul.f32 %v1049, %v1054
      %v1062 = vmul.f32 %v1050, %v1054
      %v1063 = vadd.f32 %v1035, %v1055
      %v1064 = vadd.f32 %v1036, %v1056
      %v1065 = vadd.f32 %v1037, %v1057
      %v1066 = vadd.f32 %v1038, %v1058
      %v1067 = vadd.f32 %v1039, %v1059
      %v1068 = vadd.f32 %v1040, %v1060
      %v1069 = vadd.f32 %v1041, %v1061
      %v1070 = vadd.f32 %v1042, %v1062
      %v1071 = vld [vmem:[%s669 + $0x4] sm:$0xff]
      %v1072 = vld [vmem:[%s669 + $0x14] sm:$0xff]
      %v1073 = vld [vmem:[%s669 + $0x24] sm:$0xff]
      %v1074 = vld [vmem:[%s669 + $0x34] sm:$0xff]
      %v1075 = vld [vmem:[%s669 + $0x44] sm:$0xff]
      %v1076 = vld [vmem:[%s669 + $0x54] sm:$0xff]
      %v1077 = vld [vmem:[%s669 + $0x64] sm:$0xff]
      %v1078 = vld [vmem:[%s669 + $0x74] sm:$0xff]
      %v1079 = vlaneseq
      %v1080 = vshrl.u32 %v1079, 7
      %v1081 = vsub.s32 6, %v1080
      %v1082 = vrot.slane %v628, %v1081
      %v1083 = vmul.f32 %v1071, %v1082
      %v1084 = vmul.f32 %v1072, %v1082
      %v1085 = vmul.f32 %v1073, %v1082
      %v1086 = vmul.f32 %v1074, %v1082
      %v1087 = vmul.f32 %v1075, %v1082
      %v1088 = vmul.f32 %v1076, %v1082
      %v1089 = vmul.f32 %v1077, %v1082
      %v1090 = vmul.f32 %v1078, %v1082
      %v1091 = vadd.f32 %v1063, %v1083
      %v1092 = vadd.f32 %v1064, %v1084
      %v1093 = vadd.f32 %v1065, %v1085
      %v1094 = vadd.f32 %v1066, %v1086
      %v1095 = vadd.f32 %v1067, %v1087
      %v1096 = vadd.f32 %v1068, %v1088
      %v1097 = vadd.f32 %v1069, %v1089
      %v1098 = vadd.f32 %v1070, %v1090
      %s1099 = scalar_lea.vmem [#allocation3], 48
      %v1100 = vld [vmem:[%s1099] sm:$0xff]
      %v1101 = vld [vmem:[%s1099 + $0x10] sm:$0xff]
      %v1102 = vld [vmem:[%s1099 + $0x20] sm:$0xff]
      %v1103 = vld [vmem:[%s1099 + $0x30] sm:$0xff]
      %v1104 = vld [vmem:[%s1099 + $0x40] sm:$0xff]
      %v1105 = vld [vmem:[%s1099 + $0x50] sm:$0xff]
      %v1106 = vld [vmem:[%s1099 + $0x60] sm:$0xff]
      %v1107 = vld [vmem:[%s1099 + $0x70] sm:$0xff]
      %v1108 = vlaneseq
      %v1109 = vshrl.u32 %v1108, 7
      %v1110 = vsub.s32 7, %v1109
      %v1111 = vrot.slane %v628, %v1110
      %v1112 = vmul.f32 %v1100, %v1111
      %v1113 = vmul.f32 %v1101, %v1111
      %v1114 = vmul.f32 %v1102, %v1111
      %v1115 = vmul.f32 %v1103, %v1111
      %v1116 = vmul.f32 %v1104, %v1111
      %v1117 = vmul.f32 %v1105, %v1111
      %v1118 = vmul.f32 %v1106, %v1111
      %v1119 = vmul.f32 %v1107, %v1111
      %v1120 = vadd.f32 %v1091, %v1112
      %v1121 = vadd.f32 %v1092, %v1113
      %v1122 = vadd.f32 %v1093, %v1114
      %v1123 = vadd.f32 %v1094, %v1115
      %v1124 = vadd.f32 %v1095, %v1116
      %v1125 = vadd.f32 %v1096, %v1117
      %v1126 = vadd.f32 %v1097, %v1118
      %v1127 = vadd.f32 %v1098, %v1119
      %v1128 = vld [vmem:[%s1099 + $0x1] sm:$0xff]
      %v1129 = vld [vmem:[%s1099 + $0x11] sm:$0xff]
      %v1130 = vld [vmem:[%s1099 + $0x21] sm:$0xff]
      %v1131 = vld [vmem:[%s1099 + $0x31] sm:$0xff]
      %v1132 = vld [vmem:[%s1099 + $0x41] sm:$0xff]
      %v1133 = vld [vmem:[%s1099 + $0x51] sm:$0xff]
      %v1134 = vld [vmem:[%s1099 + $0x61] sm:$0xff]
      %v1135 = vld [vmem:[%s1099 + $0x71] sm:$0xff]
      %v1136 = vlaneseq
      %v1137 = vshrl.u32 %v1136, 7
      %v1138 = vsub.s32 0, %v1137
      %v1139 = vrot.slane %v629, %v1138
      %v1140 = vmul.f32 %v1128, %v1139
      %v1141 = vmul.f32 %v1129, %v1139
      %v1142 = vmul.f32 %v1130, %v1139
      %v1143 = vmul.f32 %v1131, %v1139
      %v1144 = vmul.f32 %v1132, %v1139
      %v1145 = vmul.f32 %v1133, %v1139
      %v1146 = vmul.f32 %v1134, %v1139
      %v1147 = vmul.f32 %v1135, %v1139
      %v1148 = vadd.f32 %v1120, %v1140
      %v1149 = vadd.f32 %v1121, %v1141
      %v1150 = vadd.f32 %v1122, %v1142
      %v1151 = vadd.f32 %v1123, %v1143
      %v1152 = vadd.f32 %v1124, %v1144
      %v1153 = vadd.f32 %v1125, %v1145
      %v1154 = vadd.f32 %v1126, %v1146
      %v1155 = vadd.f32 %v1127, %v1147
      %v1156 = vld [vmem:[%s1099 + $0x2] sm:$0xff]
      %v1157 = vld [vmem:[%s1099 + $0x12] sm:$0xff]
      %v1158 = vld [vmem:[%s1099 + $0x22] sm:$0xff]
      %v1159 = vld [vmem:[%s1099 + $0x32] sm:$0xff]
      %v1160 = vld [vmem:[%s1099 + $0x42] sm:$0xff]
      %v1161 = vld [vmem:[%s1099 + $0x52] sm:$0xff]
      %v1162 = vld [vmem:[%s1099 + $0x62] sm:$0xff]
      %v1163 = vld [vmem:[%s1099 + $0x72] sm:$0xff]
      %v1164 = vlaneseq
      %v1165 = vshrl.u32 %v1164, 7
      %v1166 = vsub.s32 1, %v1165
      %v1167 = vrot.slane %v629, %v1166
      %v1168 = vmul.f32 %v1156, %v1167
      %v1169 = vmul.f32 %v1157, %v1167
      %v1170 = vmul.f32 %v1158, %v1167
      %v1171 = vmul.f32 %v1159, %v1167
      %v1172 = vmul.f32 %v1160, %v1167
      %v1173 = vmul.f32 %v1161, %v1167
      %v1174 = vmul.f32 %v1162, %v1167
      %v1175 = vmul.f32 %v1163, %v1167
      %v1176 = vadd.f32 %v1148, %v1168
      %v1177 = vadd.f32 %v1149, %v1169
      %v1178 = vadd.f32 %v1150, %v1170
      %v1179 = vadd.f32 %v1151, %v1171
      %v1180 = vadd.f32 %v1152, %v1172
      %v1181 = vadd.f32 %v1153, %v1173
      %v1182 = vadd.f32 %v1154, %v1174
      %v1183 = vadd.f32 %v1155, %v1175
      %v1184 = vld [vmem:[%s1099 + $0x3] sm:$0xff]
      %v1185 = vld [vmem:[%s1099 + $0x13] sm:$0xff]
      %v1186 = vld [vmem:[%s1099 + $0x23] sm:$0xff]
      %v1187 = vld [vmem:[%s1099 + $0x33] sm:$0xff]
      %v1188 = vld [vmem:[%s1099 + $0x43] sm:$0xff]
      %v1189 = vld [vmem:[%s1099 + $0x53] sm:$0xff]
      %v1190 = vld [vmem:[%s1099 + $0x63] sm:$0xff]
      %v1191 = vld [vmem:[%s1099 + $0x73] sm:$0xff]
      %v1192 = vlaneseq
      %v1193 = vshrl.u32 %v1192, 7
      %v1194 = vsub.s32 2, %v1193
      %v1195 = vrot.slane %v629, %v1194
      %v1196 = vmul.f32 %v1184, %v1195
      %v1197 = vmul.f32 %v1185, %v1195
      %v1198 = vmul.f32 %v1186, %v1195
      %v1199 = vmul.f32 %v1187, %v1195
      %v1200 = vmul.f32 %v1188, %v1195
      %v1201 = vmul.f32 %v1189, %v1195
      %v1202 = vmul.f32 %v1190, %v1195
      %v1203 = vmul.f32 %v1191, %v1195
      %v1204 = vadd.f32 %v1176, %v1196
      %v1205 = vadd.f32 %v1177, %v1197
      %v1206 = vadd.f32 %v1178, %v1198
      %v1207 = vadd.f32 %v1179, %v1199
      %v1208 = vadd.f32 %v1180, %v1200
      %v1209 = vadd.f32 %v1181, %v1201
      %v1210 = vadd.f32 %v1182, %v1202
      %v1211 = vadd.f32 %v1183, %v1203
      %v1212 = vld [vmem:[%s1099 + $0x4] sm:$0xff]
      %v1213 = vld [vmem:[%s1099 + $0x14] sm:$0xff]
      %v1214 = vld [vmem:[%s1099 + $0x24] sm:$0xff]
      %v1215 = vld [vmem:[%s1099 + $0x34] sm:$0xff]
      %v1216 = vld [vmem:[%s1099 + $0x44] sm:$0xff]
      %v1217 = vld [vmem:[%s1099 + $0x54] sm:$0xff]
      %v1218 = vld [vmem:[%s1099 + $0x64] sm:$0xff]
      %v1219 = vld [vmem:[%s1099 + $0x74] sm:$0xff]
      %v1220 = vlaneseq
      %v1221 = vshrl.u32 %v1220, 7
      %v1222 = vsub.s32 3, %v1221
      %v1223 = vrot.slane %v629, %v1222
      %v1224 = vmul.f32 %v1212, %v1223
      %v1225 = vmul.f32 %v1213, %v1223
      %v1226 = vmul.f32 %v1214, %v1223
      %v1227 = vmul.f32 %v1215, %v1223
      %v1228 = vmul.f32 %v1216, %v1223
      %v1229 = vmul.f32 %v1217, %v1223
      %v1230 = vmul.f32 %v1218, %v1223
      %v1231 = vmul.f32 %v1219, %v1223
      %v1232 = vadd.f32 %v1204, %v1224
      %v1233 = vadd.f32 %v1205, %v1225
      %v1234 = vadd.f32 %v1206, %v1226
      %v1235 = vadd.f32 %v1207, %v1227
      %v1236 = vadd.f32 %v1208, %v1228
      %v1237 = vadd.f32 %v1209, %v1229
      %v1238 = vadd.f32 %v1210, %v1230
      %v1239 = vadd.f32 %v1211, %v1231
      %s1240 = scalar_lea.vmem [#allocation3], 64
      %v1241 = vld [vmem:[%s1240] sm:$0xff]
      %v1242 = vld [vmem:[%s1240 + $0x10] sm:$0xff]
      %v1243 = vld [vmem:[%s1240 + $0x20] sm:$0xff]
      %v1244 = vld [vmem:[%s1240 + $0x30] sm:$0xff]
      %v1245 = vld [vmem:[%s1240 + $0x40] sm:$0xff]
      %v1246 = vld [vmem:[%s1240 + $0x50] sm:$0xff]
      %v1247 = vld [vmem:[%s1240 + $0x60] sm:$0xff]
      %v1248 = vld [vmem:[%s1240 + $0x70] sm:$0xff]
      %v1249 = vlaneseq
      %v1250 = vshrl.u32 %v1249, 7
      %v1251 = vsub.s32 4, %v1250
      %v1252 = vrot.slane %v629, %v1251
      %v1253 = vmul.f32 %v1241, %v1252
      %v1254 = vmul.f32 %v1242, %v1252
      %v1255 = vmul.f32 %v1243, %v1252
      %v1256 = vmul.f32 %v1244, %v1252
      %v1257 = vmul.f32 %v1245, %v1252
      %v1258 = vmul.f32 %v1246, %v1252
      %v1259 = vmul.f32 %v1247, %v1252
      %v1260 = vmul.f32 %v1248, %v1252
      %v1261 = vadd.f32 %v1232, %v1253
      %v1262 = vadd.f32 %v1233, %v1254
      %v1263 = vadd.f32 %v1234, %v1255
      %v1264 = vadd.f32 %v1235, %v1256
      %v1265 = vadd.f32 %v1236, %v1257
      %v1266 = vadd.f32 %v1237, %v1258
      %v1267 = vadd.f32 %v1238, %v1259
      %v1268 = vadd.f32 %v1239, %v1260
      %v1269 = vld [vmem:[%s1240 + $0x1] sm:$0xff]
      %v1270 = vld [vmem:[%s1240 + $0x11] sm:$0xff]
      %v1271 = vld [vmem:[%s1240 + $0x21] sm:$0xff]
      %v1272 = vld [vmem:[%s1240 + $0x31] sm:$0xff]
      %v1273 = vld [vmem:[%s1240 + $0x41] sm:$0xff]
      %v1274 = vld [vmem:[%s1240 + $0x51] sm:$0xff]
      %v1275 = vld [vmem:[%s1240 + $0x61] sm:$0xff]
      %v1276 = vld [vmem:[%s1240 + $0x71] sm:$0xff]
      %v1277 = vlaneseq
      %v1278 = vshrl.u32 %v1277, 7
      %v1279 = vsub.s32 5, %v1278
      %v1280 = vrot.slane %v629, %v1279
      %v1281 = vmul.f32 %v1269, %v1280
      %v1282 = vmul.f32 %v1270, %v1280
      %v1283 = vmul.f32 %v1271, %v1280
      %v1284 = vmul.f32 %v1272, %v1280
      %v1285 = vmul.f32 %v1273, %v1280
      %v1286 = vmul.f32 %v1274, %v1280
      %v1287 = vmul.f32 %v1275, %v1280
      %v1288 = vmul.f32 %v1276, %v1280
      %v1289 = vadd.f32 %v1261, %v1281
      %v1290 = vadd.f32 %v1262, %v1282
      %v1291 = vadd.f32 %v1263, %v1283
      %v1292 = vadd.f32 %v1264, %v1284
      %v1293 = vadd.f32 %v1265, %v1285
      %v1294 = vadd.f32 %v1266, %v1286
      %v1295 = vadd.f32 %v1267, %v1287
      %v1296 = vadd.f32 %v1268, %v1288
      %v1297 = vld [vmem:[%s1240 + $0x2] sm:$0xff]
      %v1298 = vld [vmem:[%s1240 + $0x12] sm:$0xff]
      %v1299 = vld [vmem:[%s1240 + $0x22] sm:$0xff]
      %v1300 = vld [vmem:[%s1240 + $0x32] sm:$0xff]
      %v1301 = vld [vmem:[%s1240 + $0x42] sm:$0xff]
      %v1302 = vld [vmem:[%s1240 + $0x52] sm:$0xff]
      %v1303 = vld [vmem:[%s1240 + $0x62] sm:$0xff]
      %v1304 = vld [vmem:[%s1240 + $0x72] sm:$0xff]
      %v1305 = vlaneseq
      %v1306 = vshrl.u32 %v1305, 7
      %v1307 = vsub.s32 6, %v1306
      %v1308 = vrot.slane %v629, %v1307
      %v1309 = vmul.f32 %v1297, %v1308
      %v1310 = vmul.f32 %v1298, %v1308
      %v1311 = vmul.f32 %v1299, %v1308
      %v1312 = vmul.f32 %v1300, %v1308
      %v1313 = vmul.f32 %v1301, %v1308
      %v1314 = vmul.f32 %v1302, %v1308
      %v1315 = vmul.f32 %v1303, %v1308
      %v1316 = vmul.f32 %v1304, %v1308
      %v1317 = vadd.f32 %v1289, %v1309
      %v1318 = vadd.f32 %v1290, %v1310
      %v1319 = vadd.f32 %v1291, %v1311
      %v1320 = vadd.f32 %v1292, %v1312
      %v1321 = vadd.f32 %v1293, %v1313
      %v1322 = vadd.f32 %v1294, %v1314
      %v1323 = vadd.f32 %v1295, %v1315
      %v1324 = vadd.f32 %v1296, %v1316
      %v1325 = vld [vmem:[%s1240 + $0x3] sm:$0xff]
      %v1326 = vld [vmem:[%s1240 + $0x13] sm:$0xff]
      %v1327 = vld [vmem:[%s1240 + $0x23] sm:$0xff]
      %v1328 = vld [vmem:[%s1240 + $0x33] sm:$0xff]
      %v1329 = vld [vmem:[%s1240 + $0x43] sm:$0xff]
      %v1330 = vld [vmem:[%s1240 + $0x53] sm:$0xff]
      %v1331 = vld [vmem:[%s1240 + $0x63] sm:$0xff]
      %v1332 = vld [vmem:[%s1240 + $0x73] sm:$0xff]
      %v1333 = vlaneseq
      %v1334 = vshrl.u32 %v1333, 7
      %v1335 = vsub.s32 7, %v1334
      %v1336 = vrot.slane %v629, %v1335
      %v1337 = vmul.f32 %v1325, %v1336
      %v1338 = vmul.f32 %v1326, %v1336
      %v1339 = vmul.f32 %v1327, %v1336
      %v1340 = vmul.f32 %v1328, %v1336
      %v1341 = vmul.f32 %v1329, %v1336
      %v1342 = vmul.f32 %v1330, %v1336
      %v1343 = vmul.f32 %v1331, %v1336
      %v1344 = vmul.f32 %v1332, %v1336
      %v1345 = vadd.f32 %v1317, %v1337
      %v1346 = vadd.f32 %v1318, %v1338
      %v1347 = vadd.f32 %v1319, %v1339
      %v1348 = vadd.f32 %v1320, %v1340
      %v1349 = vadd.f32 %v1321, %v1341
      %v1350 = vadd.f32 %v1322, %v1342
      %v1351 = vadd.f32 %v1323, %v1343
      %v1352 = vadd.f32 %v1324, %v1344
      %v1353 = vld [vmem:[%s1240 + $0x4] sm:$0xff]
      %v1354 = vld [vmem:[%s1240 + $0x14] sm:$0xff]
      %v1355 = vld [vmem:[%s1240 + $0x24] sm:$0xff]
      %v1356 = vld [vmem:[%s1240 + $0x34] sm:$0xff]
      %v1357 = vld [vmem:[%s1240 + $0x44] sm:$0xff]
      %v1358 = vld [vmem:[%s1240 + $0x54] sm:$0xff]
      %v1359 = vld [vmem:[%s1240 + $0x64] sm:$0xff]
      %v1360 = vld [vmem:[%s1240 + $0x74] sm:$0xff]
      %v1361 = vlaneseq
      %v1362 = vshrl.u32 %v1361, 7
      %v1363 = vsub.s32 0, %v1362
      %v1364 = vrot.slane %v630, %v1363
      %v1365 = vmul.f32 %v1353, %v1364
      %v1366 = vmul.f32 %v1354, %v1364
      %v1367 = vmul.f32 %v1355, %v1364
      %v1368 = vmul.f32 %v1356, %v1364
      %v1369 = vmul.f32 %v1357, %v1364
      %v1370 = vmul.f32 %v1358, %v1364
      %v1371 = vmul.f32 %v1359, %v1364
      %v1372 = vmul.f32 %v1360, %v1364
      %v1373 = vadd.f32 %v1345, %v1365
      %v1374 = vadd.f32 %v1346, %v1366
      %v1375 = vadd.f32 %v1347, %v1367
      %v1376 = vadd.f32 %v1348, %v1368
      %v1377 = vadd.f32 %v1349, %v1369
      %v1378 = vadd.f32 %v1350, %v1370
      %v1379 = vadd.f32 %v1351, %v1371
      %v1380 = vadd.f32 %v1352, %v1372
      %v1381 = vlaneseq
      %v1382 = vshrl.u32 %v1381, 7
      %v1383 = vsub.s32 0, %v1382
      %v1384 = vrot.slane %v643, %v1383
      %v1385 = vmul.f32 %v1384, %v1373
      %v1386 = vmul.f32 %v1384, %v1374
      %v1387 = vmul.f32 %v1384, %v1375
      %v1388 = vmul.f32 %v1384, %v1376
      %v1389 = vmul.f32 %v1384, %v1377
      %v1390 = vmul.f32 %v1384, %v1378
      %v1391 = vmul.f32 %v1384, %v1379
      %v1392 = vmul.f32 %v1384, %v1380
      %1393 = vst.msk [vmem:[#allocation4] sm:$0xff] %vm362, %v1385
      %1394 = vst.msk [vmem:[#allocation4 + $0x8] sm:$0xff] %vm362, %v1386
      %1395 = vst.msk [vmem:[#allocation4 + $0x10] sm:$0xff] %vm362, %v1387
      %1396 = vst.msk [vmem:[#allocation4 + $0x18] sm:$0xff] %vm362, %v1388
      %1397 = vst.msk [vmem:[#allocation4 + $0x20] sm:$0xff] %vm362, %v1389
      %1398 = vst.msk [vmem:[#allocation4 + $0x28] sm:$0xff] %vm362, %v1390
      %1399 = vst.msk [vmem:[#allocation4 + $0x30] sm:$0xff] %vm362, %v1391
      %1400 = vst.msk [vmem:[#allocation4 + $0x38] sm:$0xff] %vm362, %v1392
      %1401 = vst.msk [vmem:[%s669 + $0x2] sm:$0xff] %vm362, %v563
      %1402 = vst.msk [vmem:[%s669 + $0x12] sm:$0xff] %vm362, %v564
      %1403 = vst.msk [vmem:[%s669 + $0x22] sm:$0xff] %vm362, %v565
      %1404 = vst.msk [vmem:[%s669 + $0x32] sm:$0xff] %vm362, %v566
      %1405 = vst.msk [vmem:[%s669 + $0x42] sm:$0xff] %vm362, %v567
      %1406 = vst.msk [vmem:[%s669 + $0x52] sm:$0xff] %vm362, %v568
      %1407 = vst.msk [vmem:[%s669 + $0x62] sm:$0xff] %vm362, %v569
      %1408 = vst.msk [vmem:[%s669 + $0x72] sm:$0xff] %vm362, %v570
      %v1409 = vld [vmem:[#allocation3] sm:$0xff]
      %v1410 = vld [vmem:[#allocation3 + $0x10] sm:$0xff]
      %v1411 = vld [vmem:[#allocation3 + $0x20] sm:$0xff]
      %v1412 = vld [vmem:[#allocation3 + $0x30] sm:$0xff]
      %v1413 = vld [vmem:[#allocation3 + $0x40] sm:$0xff]
      %v1414 = vld [vmem:[#allocation3 + $0x50] sm:$0xff]
      %v1415 = vld [vmem:[#allocation3 + $0x60] sm:$0xff]
      %v1416 = vld [vmem:[#allocation3 + $0x70] sm:$0xff]
      %v1417 = vlaneseq
      %v1418 = vshrl.u32 %v1417, 7
      %v1419 = vsub.s32 0, %v1418
      %v1420 = vrot.slane %v631, %v1419
      %v1421 = vmul.f32 %v1409, %v1420
      %v1422 = vmul.f32 %v1410, %v1420
      %v1423 = vmul.f32 %v1411, %v1420
      %v1424 = vmul.f32 %v1412, %v1420
      %v1425 = vmul.f32 %v1413, %v1420
      %v1426 = vmul.f32 %v1414, %v1420
      %v1427 = vmul.f32 %v1415, %v1420
      %v1428 = vmul.f32 %v1416, %v1420
      %v1429 = vadd.f32 %v1421, 0.0
      %v1430 = vadd.f32 %v1422, 0.0
      %v1431 = vadd.f32 %v1423, 0.0
      %v1432 = vadd.f32 %v1424, 0.0
      %v1433 = vadd.f32 %v1425, 0.0
      %v1434 = vadd.f32 %v1426, 0.0
      %v1435 = vadd.f32 %v1427, 0.0
      %v1436 = vadd.f32 %v1428, 0.0
      %v1437 = vld [vmem:[#allocation3 + $0x1] sm:$0xff]
      %v1438 = vld [vmem:[#allocation3 + $0x11] sm:$0xff]
      %v1439 = vld [vmem:[#allocation3 + $0x21] sm:$0xff]
      %v1440 = vld [vmem:[#allocation3 + $0x31] sm:$0xff]
      %v1441 = vld [vmem:[#allocation3 + $0x41] sm:$0xff]
      %v1442 = vld [vmem:[#allocation3 + $0x51] sm:$0xff]
      %v1443 = vld [vmem:[#allocation3 + $0x61] sm:$0xff]
      %v1444 = vld [vmem:[#allocation3 + $0x71] sm:$0xff]
      %v1445 = vlaneseq
      %v1446 = vshrl.u32 %v1445, 7
      %v1447 = vsub.s32 1, %v1446
      %v1448 = vrot.slane %v631, %v1447
      %v1449 = vmul.f32 %v1437, %v1448
      %v1450 = vmul.f32 %v1438, %v1448
      %v1451 = vmul.f32 %v1439, %v1448
      %v1452 = vmul.f32 %v1440, %v1448
      %v1453 = vmul.f32 %v1441, %v1448
      %v1454 = vmul.f32 %v1442, %v1448
      %v1455 = vmul.f32 %v1443, %v1448
      %v1456 = vmul.f32 %v1444, %v1448
      %v1457 = vadd.f32 %v1429, %v1449
      %v1458 = vadd.f32 %v1430, %v1450
      %v1459 = vadd.f32 %v1431, %v1451
      %v1460 = vadd.f32 %v1432, %v1452
      %v1461 = vadd.f32 %v1433, %v1453
      %v1462 = vadd.f32 %v1434, %v1454
      %v1463 = vadd.f32 %v1435, %v1455
      %v1464 = vadd.f32 %v1436, %v1456
      %v1465 = vld [vmem:[#allocation3 + $0x2] sm:$0xff]
      %v1466 = vld [vmem:[#allocation3 + $0x12] sm:$0xff]
      %v1467 = vld [vmem:[#allocation3 + $0x22] sm:$0xff]
      %v1468 = vld [vmem:[#allocation3 + $0x32] sm:$0xff]
      %v1469 = vld [vmem:[#allocation3 + $0x42] sm:$0xff]
      %v1470 = vld [vmem:[#allocation3 + $0x52] sm:$0xff]
      %v1471 = vld [vmem:[#allocation3 + $0x62] sm:$0xff]
      %v1472 = vld [vmem:[#allocation3 + $0x72] sm:$0xff]
      %v1473 = vlaneseq
      %v1474 = vshrl.u32 %v1473, 7
      %v1475 = vsub.s32 2, %v1474
      %v1476 = vrot.slane %v631, %v1475
      %v1477 = vmul.f32 %v1465, %v1476
      %v1478 = vmul.f32 %v1466, %v1476
      %v1479 = vmul.f32 %v1467, %v1476
      %v1480 = vmul.f32 %v1468, %v1476
      %v1481 = vmul.f32 %v1469, %v1476
      %v1482 = vmul.f32 %v1470, %v1476
      %v1483 = vmul.f32 %v1471, %v1476
      %v1484 = vmul.f32 %v1472, %v1476
      %v1485 = vadd.f32 %v1457, %v1477
      %v1486 = vadd.f32 %v1458, %v1478
      %v1487 = vadd.f32 %v1459, %v1479
      %v1488 = vadd.f32 %v1460, %v1480
      %v1489 = vadd.f32 %v1461, %v1481
      %v1490 = vadd.f32 %v1462, %v1482
      %v1491 = vadd.f32 %v1463, %v1483
      %v1492 = vadd.f32 %v1464, %v1484
      %v1493 = vld [vmem:[#allocation3 + $0x3] sm:$0xff]
      %v1494 = vld [vmem:[#allocation3 + $0x13] sm:$0xff]
      %v1495 = vld [vmem:[#allocation3 + $0x23] sm:$0xff]
      %v1496 = vld [vmem:[#allocation3 + $0x33] sm:$0xff]
      %v1497 = vld [vmem:[#allocation3 + $0x43] sm:$0xff]
      %v1498 = vld [vmem:[#allocation3 + $0x53] sm:$0xff]
      %v1499 = vld [vmem:[#allocation3 + $0x63] sm:$0xff]
      %v1500 = vld [vmem:[#allocation3 + $0x73] sm:$0xff]
      %v1501 = vlaneseq
      %v1502 = vshrl.u32 %v1501, 7
      %v1503 = vsub.s32 3, %v1502
      %v1504 = vrot.slane %v631, %v1503
      %v1505 = vmul.f32 %v1493, %v1504
      %v1506 = vmul.f32 %v1494, %v1504
      %v1507 = vmul.f32 %v1495, %v1504
      %v1508 = vmul.f32 %v1496, %v1504
      %v1509 = vmul.f32 %v1497, %v1504
      %v1510 = vmul.f32 %v1498, %v1504
      %v1511 = vmul.f32 %v1499, %v1504
      %v1512 = vmul.f32 %v1500, %v1504
      %v1513 = vadd.f32 %v1485, %v1505
      %v1514 = vadd.f32 %v1486, %v1506
      %v1515 = vadd.f32 %v1487, %v1507
      %v1516 = vadd.f32 %v1488, %v1508
      %v1517 = vadd.f32 %v1489, %v1509
      %v1518 = vadd.f32 %v1490, %v1510
      %v1519 = vadd.f32 %v1491, %v1511
      %v1520 = vadd.f32 %v1492, %v1512
      %v1521 = vld [vmem:[#allocation3 + $0x4] sm:$0xff]
      %v1522 = vld [vmem:[#allocation3 + $0x14] sm:$0xff]
      %v1523 = vld [vmem:[#allocation3 + $0x24] sm:$0xff]
      %v1524 = vld [vmem:[#allocation3 + $0x34] sm:$0xff]
      %v1525 = vld [vmem:[#allocation3 + $0x44] sm:$0xff]
      %v1526 = vld [vmem:[#allocation3 + $0x54] sm:$0xff]
      %v1527 = vld [vmem:[#allocation3 + $0x64] sm:$0xff]
      %v1528 = vld [vmem:[#allocation3 + $0x74] sm:$0xff]
      %v1529 = vlaneseq
      %v1530 = vshrl.u32 %v1529, 7
      %v1531 = vsub.s32 4, %v1530
      %v1532 = vrot.slane %v631, %v1531
      %v1533 = vmul.f32 %v1521, %v1532
      %v1534 = vmul.f32 %v1522, %v1532
      %v1535 = vmul.f32 %v1523, %v1532
      %v1536 = vmul.f32 %v1524, %v1532
      %v1537 = vmul.f32 %v1525, %v1532
      %v1538 = vmul.f32 %v1526, %v1532
      %v1539 = vmul.f32 %v1527, %v1532
      %v1540 = vmul.f32 %v1528, %v1532
      %v1541 = vadd.f32 %v1513, %v1533
      %v1542 = vadd.f32 %v1514, %v1534
      %v1543 = vadd.f32 %v1515, %v1535
      %v1544 = vadd.f32 %v1516, %v1536
      %v1545 = vadd.f32 %v1517, %v1537
      %v1546 = vadd.f32 %v1518, %v1538
      %v1547 = vadd.f32 %v1519, %v1539
      %v1548 = vadd.f32 %v1520, %v1540
      %v1549 = vld [vmem:[%s818] sm:$0xff]
      %v1550 = vld [vmem:[%s818 + $0x10] sm:$0xff]
      %v1551 = vld [vmem:[%s818 + $0x20] sm:$0xff]
      %v1552 = vld [vmem:[%s818 + $0x30] sm:$0xff]
      %v1553 = vld [vmem:[%s818 + $0x40] sm:$0xff]
      %v1554 = vld [vmem:[%s818 + $0x50] sm:$0xff]
      %v1555 = vld [vmem:[%s818 + $0x60] sm:$0xff]
      %v1556 = vld [vmem:[%s818 + $0x70] sm:$0xff]
      %v1557 = vlaneseq
      %v1558 = vshrl.u32 %v1557, 7
      %v1559 = vsub.s32 5, %v1558
      %v1560 = vrot.slane %v631, %v1559
      %v1561 = vmul.f32 %v1549, %v1560
      %v1562 = vmul.f32 %v1550, %v1560
      %v1563 = vmul.f32 %v1551, %v1560
      %v1564 = vmul.f32 %v1552, %v1560
      %v1565 = vmul.f32 %v1553, %v1560
      %v1566 = vmul.f32 %v1554, %v1560
      %v1567 = vmul.f32 %v1555, %v1560
      %v1568 = vmul.f32 %v1556, %v1560
      %v1569 = vadd.f32 %v1541, %v1561
      %v1570 = vadd.f32 %v1542, %v1562
      %v1571 = vadd.f32 %v1543, %v1563
      %v1572 = vadd.f32 %v1544, %v1564
      %v1573 = vadd.f32 %v1545, %v1565
      %v1574 = vadd.f32 %v1546, %v1566
      %v1575 = vadd.f32 %v1547, %v1567
      %v1576 = vadd.f32 %v1548, %v1568
      %v1577 = vld [vmem:[%s818 + $0x1] sm:$0xff]
      %v1578 = vld [vmem:[%s818 + $0x11] sm:$0xff]
      %v1579 = vld [vmem:[%s818 + $0x21] sm:$0xff]
      %v1580 = vld [vmem:[%s818 + $0x31] sm:$0xff]
      %v1581 = vld [vmem:[%s818 + $0x41] sm:$0xff]
      %v1582 = vld [vmem:[%s818 + $0x51] sm:$0xff]
      %v1583 = vld [vmem:[%s818 + $0x61] sm:$0xff]
      %v1584 = vld [vmem:[%s818 + $0x71] sm:$0xff]
      %v1585 = vlaneseq
      %v1586 = vshrl.u32 %v1585, 7
      %v1587 = vsub.s32 6, %v1586
      %v1588 = vrot.slane %v631, %v1587
      %v1589 = vmul.f32 %v1577, %v1588
      %v1590 = vmul.f32 %v1578, %v1588
      %v1591 = vmul.f32 %v1579, %v1588
      %v1592 = vmul.f32 %v1580, %v1588
      %v1593 = vmul.f32 %v1581, %v1588
      %v1594 = vmul.f32 %v1582, %v1588
      %v1595 = vmul.f32 %v1583, %v1588
      %v1596 = vmul.f32 %v1584, %v1588
      %v1597 = vadd.f32 %v1569, %v1589
      %v1598 = vadd.f32 %v1570, %v1590
      %v1599 = vadd.f32 %v1571, %v1591
      %v1600 = vadd.f32 %v1572, %v1592
      %v1601 = vadd.f32 %v1573, %v1593
      %v1602 = vadd.f32 %v1574, %v1594
      %v1603 = vadd.f32 %v1575, %v1595
      %v1604 = vadd.f32 %v1576, %v1596
      %v1605 = vld [vmem:[%s818 + $0x2] sm:$0xff]
      %v1606 = vld [vmem:[%s818 + $0x12] sm:$0xff]
      %v1607 = vld [vmem:[%s818 + $0x22] sm:$0xff]
      %v1608 = vld [vmem:[%s818 + $0x32] sm:$0xff]
      %v1609 = vld [vmem:[%s818 + $0x42] sm:$0xff]
      %v1610 = vld [vmem:[%s818 + $0x52] sm:$0xff]
      %v1611 = vld [vmem:[%s818 + $0x62] sm:$0xff]
      %v1612 = vld [vmem:[%s818 + $0x72] sm:$0xff]
      %v1613 = vlaneseq
      %v1614 = vshrl.u32 %v1613, 7
      %v1615 = vsub.s32 7, %v1614
      %v1616 = vrot.slane %v631, %v1615
      %v1617 = vmul.f32 %v1605, %v1616
      %v1618 = vmul.f32 %v1606, %v1616
      %v1619 = vmul.f32 %v1607, %v1616
      %v1620 = vmul.f32 %v1608, %v1616
      %v1621 = vmul.f32 %v1609, %v1616
      %v1622 = vmul.f32 %v1610, %v1616
      %v1623 = vmul.f32 %v1611, %v1616
      %v1624 = vmul.f32 %v1612, %v1616
      %v1625 = vadd.f32 %v1597, %v1617
      %v1626 = vadd.f32 %v1598, %v1618
      %v1627 = vadd.f32 %v1599, %v1619
      %v1628 = vadd.f32 %v1600, %v1620
      %v1629 = vadd.f32 %v1601, %v1621
      %v1630 = vadd.f32 %v1602, %v1622
      %v1631 = vadd.f32 %v1603, %v1623
      %v1632 = vadd.f32 %v1604, %v1624
      %v1633 = vld [vmem:[%s818 + $0x3] sm:$0xff]
      %v1634 = vld [vmem:[%s818 + $0x13] sm:$0xff]
      %v1635 = vld [vmem:[%s818 + $0x23] sm:$0xff]
      %v1636 = vld [vmem:[%s818 + $0x33] sm:$0xff]
      %v1637 = vld [vmem:[%s818 + $0x43] sm:$0xff]
      %v1638 = vld [vmem:[%s818 + $0x53] sm:$0xff]
      %v1639 = vld [vmem:[%s818 + $0x63] sm:$0xff]
      %v1640 = vld [vmem:[%s818 + $0x73] sm:$0xff]
      %v1641 = vlaneseq
      %v1642 = vshrl.u32 %v1641, 7
      %v1643 = vsub.s32 0, %v1642
      %v1644 = vrot.slane %v632, %v1643
      %v1645 = vmul.f32 %v1633, %v1644
      %v1646 = vmul.f32 %v1634, %v1644
      %v1647 = vmul.f32 %v1635, %v1644
      %v1648 = vmul.f32 %v1636, %v1644
      %v1649 = vmul.f32 %v1637, %v1644
      %v1650 = vmul.f32 %v1638, %v1644
      %v1651 = vmul.f32 %v1639, %v1644
      %v1652 = vmul.f32 %v1640, %v1644
      %v1653 = vadd.f32 %v1625, %v1645
      %v1654 = vadd.f32 %v1626, %v1646
      %v1655 = vadd.f32 %v1627, %v1647
      %v1656 = vadd.f32 %v1628, %v1648
      %v1657 = vadd.f32 %v1629, %v1649
      %v1658 = vadd.f32 %v1630, %v1650
      %v1659 = vadd.f32 %v1631, %v1651
      %v1660 = vadd.f32 %v1632, %v1652
      %v1661 = vld [vmem:[%s818 + $0x4] sm:$0xff]
      %v1662 = vld [vmem:[%s818 + $0x14] sm:$0xff]
      %v1663 = vld [vmem:[%s818 + $0x24] sm:$0xff]
      %v1664 = vld [vmem:[%s818 + $0x34] sm:$0xff]
      %v1665 = vld [vmem:[%s818 + $0x44] sm:$0xff]
      %v1666 = vld [vmem:[%s818 + $0x54] sm:$0xff]
      %v1667 = vld [vmem:[%s818 + $0x64] sm:$0xff]
      %v1668 = vld [vmem:[%s818 + $0x74] sm:$0xff]
      %v1669 = vlaneseq
      %v1670 = vshrl.u32 %v1669, 7
      %v1671 = vsub.s32 1, %v1670
      %v1672 = vrot.slane %v632, %v1671
      %v1673 = vmul.f32 %v1661, %v1672
      %v1674 = vmul.f32 %v1662, %v1672
      %v1675 = vmul.f32 %v1663, %v1672
      %v1676 = vmul.f32 %v1664, %v1672
      %v1677 = vmul.f32 %v1665, %v1672
      %v1678 = vmul.f32 %v1666, %v1672
      %v1679 = vmul.f32 %v1667, %v1672
      %v1680 = vmul.f32 %v1668, %v1672
      %v1681 = vadd.f32 %v1653, %v1673
      %v1682 = vadd.f32 %v1654, %v1674
      %v1683 = vadd.f32 %v1655, %v1675
      %v1684 = vadd.f32 %v1656, %v1676
      %v1685 = vadd.f32 %v1657, %v1677
      %v1686 = vadd.f32 %v1658, %v1678
      %v1687 = vadd.f32 %v1659, %v1679
      %v1688 = vadd.f32 %v1660, %v1680
      %v1689 = vld [vmem:[%s669] sm:$0xff]
      %v1690 = vld [vmem:[%s669 + $0x10] sm:$0xff]
      %v1691 = vld [vmem:[%s669 + $0x20] sm:$0xff]
      %v1692 = vld [vmem:[%s669 + $0x30] sm:$0xff]
      %v1693 = vld [vmem:[%s669 + $0x40] sm:$0xff]
      %v1694 = vld [vmem:[%s669 + $0x50] sm:$0xff]
      %v1695 = vld [vmem:[%s669 + $0x60] sm:$0xff]
      %v1696 = vld [vmem:[%s669 + $0x70] sm:$0xff]
      %v1697 = vlaneseq
      %v1698 = vshrl.u32 %v1697, 7
      %v1699 = vsub.s32 2, %v1698
      %v1700 = vrot.slane %v632, %v1699
      %v1701 = vmul.f32 %v1689, %v1700
      %v1702 = vmul.f32 %v1690, %v1700
      %v1703 = vmul.f32 %v1691, %v1700
      %v1704 = vmul.f32 %v1692, %v1700
      %v1705 = vmul.f32 %v1693, %v1700
      %v1706 = vmul.f32 %v1694, %v1700
      %v1707 = vmul.f32 %v1695, %v1700
      %v1708 = vmul.f32 %v1696, %v1700
      %v1709 = vadd.f32 %v1681, %v1701
      %v1710 = vadd.f32 %v1682, %v1702
      %v1711 = vadd.f32 %v1683, %v1703
      %v1712 = vadd.f32 %v1684, %v1704
      %v1713 = vadd.f32 %v1685, %v1705
      %v1714 = vadd.f32 %v1686, %v1706
      %v1715 = vadd.f32 %v1687, %v1707
      %v1716 = vadd.f32 %v1688, %v1708
      %v1717 = vld [vmem:[%s669 + $0x1] sm:$0xff]
      %v1718 = vld [vmem:[%s669 + $0x11] sm:$0xff]
      %v1719 = vld [vmem:[%s669 + $0x21] sm:$0xff]
      %v1720 = vld [vmem:[%s669 + $0x31] sm:$0xff]
      %v1721 = vld [vmem:[%s669 + $0x41] sm:$0xff]
      %v1722 = vld [vmem:[%s669 + $0x51] sm:$0xff]
      %v1723 = vld [vmem:[%s669 + $0x61] sm:$0xff]
      %v1724 = vld [vmem:[%s669 + $0x71] sm:$0xff]
      %v1725 = vlaneseq
      %v1726 = vshrl.u32 %v1725, 7
      %v1727 = vsub.s32 3, %v1726
      %v1728 = vrot.slane %v632, %v1727
      %v1729 = vmul.f32 %v1717, %v1728
      %v1730 = vmul.f32 %v1718, %v1728
      %v1731 = vmul.f32 %v1719, %v1728
      %v1732 = vmul.f32 %v1720, %v1728
      %v1733 = vmul.f32 %v1721, %v1728
      %v1734 = vmul.f32 %v1722, %v1728
      %v1735 = vmul.f32 %v1723, %v1728
      %v1736 = vmul.f32 %v1724, %v1728
      %v1737 = vadd.f32 %v1709, %v1729
      %v1738 = vadd.f32 %v1710, %v1730
      %v1739 = vadd.f32 %v1711, %v1731
      %v1740 = vadd.f32 %v1712, %v1732
      %v1741 = vadd.f32 %v1713, %v1733
      %v1742 = vadd.f32 %v1714, %v1734
      %v1743 = vadd.f32 %v1715, %v1735
      %v1744 = vadd.f32 %v1716, %v1736
      %v1745 = vld [vmem:[%s669 + $0x2] sm:$0xff]
      %v1746 = vld [vmem:[%s669 + $0x12] sm:$0xff]
      %v1747 = vld [vmem:[%s669 + $0x22] sm:$0xff]
      %v1748 = vld [vmem:[%s669 + $0x32] sm:$0xff]
      %v1749 = vld [vmem:[%s669 + $0x42] sm:$0xff]
      %v1750 = vld [vmem:[%s669 + $0x52] sm:$0xff]
      %v1751 = vld [vmem:[%s669 + $0x62] sm:$0xff]
      %v1752 = vld [vmem:[%s669 + $0x72] sm:$0xff]
      %v1753 = vlaneseq
      %v1754 = vshrl.u32 %v1753, 7
      %v1755 = vsub.s32 4, %v1754
      %v1756 = vrot.slane %v632, %v1755
      %v1757 = vmul.f32 %v1745, %v1756
      %v1758 = vmul.f32 %v1746, %v1756
      %v1759 = vmul.f32 %v1747, %v1756
      %v1760 = vmul.f32 %v1748, %v1756
      %v1761 = vmul.f32 %v1749, %v1756
      %v1762 = vmul.f32 %v1750, %v1756
      %v1763 = vmul.f32 %v1751, %v1756
      %v1764 = vmul.f32 %v1752, %v1756
      %v1765 = vadd.f32 %v1737, %v1757
      %v1766 = vadd.f32 %v1738, %v1758
      %v1767 = vadd.f32 %v1739, %v1759
      %v1768 = vadd.f32 %v1740, %v1760
      %v1769 = vadd.f32 %v1741, %v1761
      %v1770 = vadd.f32 %v1742, %v1762
      %v1771 = vadd.f32 %v1743, %v1763
      %v1772 = vadd.f32 %v1744, %v1764
      %v1773 = vld [vmem:[%s669 + $0x3] sm:$0xff]
      %v1774 = vld [vmem:[%s669 + $0x13] sm:$0xff]
      %v1775 = vld [vmem:[%s669 + $0x23] sm:$0xff]
      %v1776 = vld [vmem:[%s669 + $0x33] sm:$0xff]
      %v1777 = vld [vmem:[%s669 + $0x43] sm:$0xff]
      %v1778 = vld [vmem:[%s669 + $0x53] sm:$0xff]
      %v1779 = vld [vmem:[%s669 + $0x63] sm:$0xff]
      %v1780 = vld [vmem:[%s669 + $0x73] sm:$0xff]
      %v1781 = vlaneseq
      %v1782 = vshrl.u32 %v1781, 7
      %v1783 = vsub.s32 5, %v1782
      %v1784 = vrot.slane %v632, %v1783
      %v1785 = vmul.f32 %v1773, %v1784
      %v1786 = vmul.f32 %v1774, %v1784
      %v1787 = vmul.f32 %v1775, %v1784
      %v1788 = vmul.f32 %v1776, %v1784
      %v1789 = vmul.f32 %v1777, %v1784
      %v1790 = vmul.f32 %v1778, %v1784
      %v1791 = vmul.f32 %v1779, %v1784
      %v1792 = vmul.f32 %v1780, %v1784
      %v1793 = vadd.f32 %v1765, %v1785
      %v1794 = vadd.f32 %v1766, %v1786
      %v1795 = vadd.f32 %v1767, %v1787
      %v1796 = vadd.f32 %v1768, %v1788
      %v1797 = vadd.f32 %v1769, %v1789
      %v1798 = vadd.f32 %v1770, %v1790
      %v1799 = vadd.f32 %v1771, %v1791
      %v1800 = vadd.f32 %v1772, %v1792
      %v1801 = vld [vmem:[%s669 + $0x4] sm:$0xff]
      %v1802 = vld [vmem:[%s669 + $0x14] sm:$0xff]
      %v1803 = vld [vmem:[%s669 + $0x24] sm:$0xff]
      %v1804 = vld [vmem:[%s669 + $0x34] sm:$0xff]
      %v1805 = vld [vmem:[%s669 + $0x44] sm:$0xff]
      %v1806 = vld [vmem:[%s669 + $0x54] sm:$0xff]
      %v1807 = vld [vmem:[%s669 + $0x64] sm:$0xff]
      %v1808 = vld [vmem:[%s669 + $0x74] sm:$0xff]
      %v1809 = vlaneseq
      %v1810 = vshrl.u32 %v1809, 7
      %v1811 = vsub.s32 6, %v1810
      %v1812 = vrot.slane %v632, %v1811
      %v1813 = vmul.f32 %v1801, %v1812
      %v1814 = vmul.f32 %v1802, %v1812
      %v1815 = vmul.f32 %v1803, %v1812
      %v1816 = vmul.f32 %v1804, %v1812
      %v1817 = vmul.f32 %v1805, %v1812
      %v1818 = vmul.f32 %v1806, %v1812
      %v1819 = vmul.f32 %v1807, %v1812
      %v1820 = vmul.f32 %v1808, %v1812
      %v1821 = vadd.f32 %v1793, %v1813
      %v1822 = vadd.f32 %v1794, %v1814
      %v1823 = vadd.f32 %v1795, %v1815
      %v1824 = vadd.f32 %v1796, %v1816
      %v1825 = vadd.f32 %v1797, %v1817
      %v1826 = vadd.f32 %v1798, %v1818
      %v1827 = vadd.f32 %v1799, %v1819
      %v1828 = vadd.f32 %v1800, %v1820
      %v1829 = vld [vmem:[%s1099] sm:$0xff]
      %v1830 = vld [vmem:[%s1099 + $0x10] sm:$0xff]
      %v1831 = vld [vmem:[%s1099 + $0x20] sm:$0xff]
      %v1832 = vld [vmem:[%s1099 + $0x30] sm:$0xff]
      %v1833 = vld [vmem:[%s1099 + $0x40] sm:$0xff]
      %v1834 = vld [vmem:[%s1099 + $0x50] sm:$0xff]
      %v1835 = vld [vmem:[%s1099 + $0x60] sm:$0xff]
      %v1836 = vld [vmem:[%s1099 + $0x70] sm:$0xff]
      %v1837 = vlaneseq
      %v1838 = vshrl.u32 %v1837, 7
      %v1839 = vsub.s32 7, %v1838
      %v1840 = vrot.slane %v632, %v1839
      %v1841 = vmul.f32 %v1829, %v1840
      %v1842 = vmul.f32 %v1830, %v1840
      %v1843 = vmul.f32 %v1831, %v1840
      %v1844 = vmul.f32 %v1832, %v1840
      %v1845 = vmul.f32 %v1833, %v1840
      %v1846 = vmul.f32 %v1834, %v1840
      %v1847 = vmul.f32 %v1835, %v1840
      %v1848 = vmul.f32 %v1836, %v1840
      %v1849 = vadd.f32 %v1821, %v1841
      %v1850 = vadd.f32 %v1822, %v1842
      %v1851 = vadd.f32 %v1823, %v1843
      %v1852 = vadd.f32 %v1824, %v1844
      %v1853 = vadd.f32 %v1825, %v1845
      %v1854 = vadd.f32 %v1826, %v1846
      %v1855 = vadd.f32 %v1827, %v1847
      %v1856 = vadd.f32 %v1828, %v1848
      %v1857 = vld [vmem:[%s1099 + $0x1] sm:$0xff]
      %v1858 = vld [vmem:[%s1099 + $0x11] sm:$0xff]
      %v1859 = vld [vmem:[%s1099 + $0x21] sm:$0xff]
      %v1860 = vld [vmem:[%s1099 + $0x31] sm:$0xff]
      %v1861 = vld [vmem:[%s1099 + $0x41] sm:$0xff]
      %v1862 = vld [vmem:[%s1099 + $0x51] sm:$0xff]
      %v1863 = vld [vmem:[%s1099 + $0x61] sm:$0xff]
      %v1864 = vld [vmem:[%s1099 + $0x71] sm:$0xff]
      %v1865 = vlaneseq
      %v1866 = vshrl.u32 %v1865, 7
      %v1867 = vsub.s32 0, %v1866
      %v1868 = vrot.slane %v633, %v1867
      %v1869 = vmul.f32 %v1857, %v1868
      %v1870 = vmul.f32 %v1858, %v1868
      %v1871 = vmul.f32 %v1859, %v1868
      %v1872 = vmul.f32 %v1860, %v1868
      %v1873 = vmul.f32 %v1861, %v1868
      %v1874 = vmul.f32 %v1862, %v1868
      %v1875 = vmul.f32 %v1863, %v1868
      %v1876 = vmul.f32 %v1864, %v1868
      %v1877 = vadd.f32 %v1849, %v1869
      %v1878 = vadd.f32 %v1850, %v1870
      %v1879 = vadd.f32 %v1851, %v1871
      %v1880 = vadd.f32 %v1852, %v1872
      %v1881 = vadd.f32 %v1853, %v1873
      %v1882 = vadd.f32 %v1854, %v1874
      %v1883 = vadd.f32 %v1855, %v1875
      %v1884 = vadd.f32 %v1856, %v1876
      %v1885 = vld [vmem:[%s1099 + $0x2] sm:$0xff]
      %v1886 = vld [vmem:[%s1099 + $0x12] sm:$0xff]
      %v1887 = vld [vmem:[%s1099 + $0x22] sm:$0xff]
      %v1888 = vld [vmem:[%s1099 + $0x32] sm:$0xff]
      %v1889 = vld [vmem:[%s1099 + $0x42] sm:$0xff]
      %v1890 = vld [vmem:[%s1099 + $0x52] sm:$0xff]
      %v1891 = vld [vmem:[%s1099 + $0x62] sm:$0xff]
      %v1892 = vld [vmem:[%s1099 + $0x72] sm:$0xff]
      %v1893 = vlaneseq
      %v1894 = vshrl.u32 %v1893, 7
      %v1895 = vsub.s32 1, %v1894
      %v1896 = vrot.slane %v633, %v1895
      %v1897 = vmul.f32 %v1885, %v1896
      %v1898 = vmul.f32 %v1886, %v1896
      %v1899 = vmul.f32 %v1887, %v1896
      %v1900 = vmul.f32 %v1888, %v1896
      %v1901 = vmul.f32 %v1889, %v1896
      %v1902 = vmul.f32 %v1890, %v1896
      %v1903 = vmul.f32 %v1891, %v1896
      %v1904 = vmul.f32 %v1892, %v1896
      %v1905 = vadd.f32 %v1877, %v1897
      %v1906 = vadd.f32 %v1878, %v1898
      %v1907 = vadd.f32 %v1879, %v1899
      %v1908 = vadd.f32 %v1880, %v1900
      %v1909 = vadd.f32 %v1881, %v1901
      %v1910 = vadd.f32 %v1882, %v1902
      %v1911 = vadd.f32 %v1883, %v1903
      %v1912 = vadd.f32 %v1884, %v1904
      %v1913 = vld [vmem:[%s1099 + $0x3] sm:$0xff]
      %v1914 = vld [vmem:[%s1099 + $0x13] sm:$0xff]
      %v1915 = vld [vmem:[%s1099 + $0x23] sm:$0xff]
      %v1916 = vld [vmem:[%s1099 + $0x33] sm:$0xff]
      %v1917 = vld [vmem:[%s1099 + $0x43] sm:$0xff]
      %v1918 = vld [vmem:[%s1099 + $0x53] sm:$0xff]
      %v1919 = vld [vmem:[%s1099 + $0x63] sm:$0xff]
      %v1920 = vld [vmem:[%s1099 + $0x73] sm:$0xff]
      %v1921 = vlaneseq
      %v1922 = vshrl.u32 %v1921, 7
      %v1923 = vsub.s32 2, %v1922
      %v1924 = vrot.slane %v633, %v1923
      %v1925 = vmul.f32 %v1913, %v1924
      %v1926 = vmul.f32 %v1914, %v1924
      %v1927 = vmul.f32 %v1915, %v1924
      %v1928 = vmul.f32 %v1916, %v1924
      %v1929 = vmul.f32 %v1917, %v1924
      %v1930 = vmul.f32 %v1918, %v1924
      %v1931 = vmul.f32 %v1919, %v1924
      %v1932 = vmul.f32 %v1920, %v1924
      %v1933 = vadd.f32 %v1905, %v1925
      %v1934 = vadd.f32 %v1906, %v1926
      %v1935 = vadd.f32 %v1907, %v1927
      %v1936 = vadd.f32 %v1908, %v1928
      %v1937 = vadd.f32 %v1909, %v1929
      %v1938 = vadd.f32 %v1910, %v1930
      %v1939 = vadd.f32 %v1911, %v1931
      %v1940 = vadd.f32 %v1912, %v1932
      %v1941 = vld [vmem:[%s1099 + $0x4] sm:$0xff]
      %v1942 = vld [vmem:[%s1099 + $0x14] sm:$0xff]
      %v1943 = vld [vmem:[%s1099 + $0x24] sm:$0xff]
      %v1944 = vld [vmem:[%s1099 + $0x34] sm:$0xff]
      %v1945 = vld [vmem:[%s1099 + $0x44] sm:$0xff]
      %v1946 = vld [vmem:[%s1099 + $0x54] sm:$0xff]
      %v1947 = vld [vmem:[%s1099 + $0x64] sm:$0xff]
      %v1948 = vld [vmem:[%s1099 + $0x74] sm:$0xff]
      %v1949 = vlaneseq
      %v1950 = vshrl.u32 %v1949, 7
      %v1951 = vsub.s32 3, %v1950
      %v1952 = vrot.slane %v633, %v1951
      %v1953 = vmul.f32 %v1941, %v1952
      %v1954 = vmul.f32 %v1942, %v1952
      %v1955 = vmul.f32 %v1943, %v1952
      %v1956 = vmul.f32 %v1944, %v1952
      %v1957 = vmul.f32 %v1945, %v1952
      %v1958 = vmul.f32 %v1946, %v1952
      %v1959 = vmul.f32 %v1947, %v1952
      %v1960 = vmul.f32 %v1948, %v1952
      %v1961 = vadd.f32 %v1933, %v1953
      %v1962 = vadd.f32 %v1934, %v1954
      %v1963 = vadd.f32 %v1935, %v1955
      %v1964 = vadd.f32 %v1936, %v1956
      %v1965 = vadd.f32 %v1937, %v1957
      %v1966 = vadd.f32 %v1938, %v1958
      %v1967 = vadd.f32 %v1939, %v1959
      %v1968 = vadd.f32 %v1940, %v1960
      %v1969 = vld [vmem:[%s1240] sm:$0xff]
      %v1970 = vld [vmem:[%s1240 + $0x10] sm:$0xff]
      %v1971 = vld [vmem:[%s1240 + $0x20] sm:$0xff]
      %v1972 = vld [vmem:[%s1240 + $0x30] sm:$0xff]
      %v1973 = vld [vmem:[%s1240 + $0x40] sm:$0xff]
      %v1974 = vld [vmem:[%s1240 + $0x50] sm:$0xff]
      %v1975 = vld [vmem:[%s1240 + $0x60] sm:$0xff]
      %v1976 = vld [vmem:[%s1240 + $0x70] sm:$0xff]
      %v1977 = vlaneseq
      %v1978 = vshrl.u32 %v1977, 7
      %v1979 = vsub.s32 4, %v1978
      %v1980 = vrot.slane %v633, %v1979
      %v1981 = vmul.f32 %v1969, %v1980
      %v1982 = vmul.f32 %v1970, %v1980
      %v1983 = vmul.f32 %v1971, %v1980
      %v1984 = vmul.f32 %v1972, %v1980
      %v1985 = vmul.f32 %v1973, %v1980
      %v1986 = vmul.f32 %v1974, %v1980
      %v1987 = vmul.f32 %v1975, %v1980
      %v1988 = vmul.f32 %v1976, %v1980
      %v1989 = vadd.f32 %v1961, %v1981
      %v1990 = vadd.f32 %v1962, %v1982
      %v1991 = vadd.f32 %v1963, %v1983
      %v1992 = vadd.f32 %v1964, %v1984
      %v1993 = vadd.f32 %v1965, %v1985
      %v1994 = vadd.f32 %v1966, %v1986
      %v1995 = vadd.f32 %v1967, %v1987
      %v1996 = vadd.f32 %v1968, %v1988
      %v1997 = vld [vmem:[%s1240 + $0x1] sm:$0xff]
      %v1998 = vld [vmem:[%s1240 + $0x11] sm:$0xff]
      %v1999 = vld [vmem:[%s1240 + $0x21] sm:$0xff]
      %v2000 = vld [vmem:[%s1240 + $0x31] sm:$0xff]
      %v2001 = vld [vmem:[%s1240 + $0x41] sm:$0xff]
      %v2002 = vld [vmem:[%s1240 + $0x51] sm:$0xff]
      %v2003 = vld [vmem:[%s1240 + $0x61] sm:$0xff]
      %v2004 = vld [vmem:[%s1240 + $0x71] sm:$0xff]
      %v2005 = vlaneseq
      %v2006 = vshrl.u32 %v2005, 7
      %v2007 = vsub.s32 5, %v2006
      %v2008 = vrot.slane %v633, %v2007
      %v2009 = vmul.f32 %v1997, %v2008
      %v2010 = vmul.f32 %v1998, %v2008
      %v2011 = vmul.f32 %v1999, %v2008
      %v2012 = vmul.f32 %v2000, %v2008
      %v2013 = vmul.f32 %v2001, %v2008
      %v2014 = vmul.f32 %v2002, %v2008
      %v2015 = vmul.f32 %v2003, %v2008
      %v2016 = vmul.f32 %v2004, %v2008
      %v2017 = vadd.f32 %v1989, %v2009
      %v2018 = vadd.f32 %v1990, %v2010
      %v2019 = vadd.f32 %v1991, %v2011
      %v2020 = vadd.f32 %v1992, %v2012
      %v2021 = vadd.f32 %v1993, %v2013
      %v2022 = vadd.f32 %v1994, %v2014
      %v2023 = vadd.f32 %v1995, %v2015
      %v2024 = vadd.f32 %v1996, %v2016
      %v2025 = vld [vmem:[%s1240 + $0x2] sm:$0xff]
      %v2026 = vld [vmem:[%s1240 + $0x12] sm:$0xff]
      %v2027 = vld [vmem:[%s1240 + $0x22] sm:$0xff]
      %v2028 = vld [vmem:[%s1240 + $0x32] sm:$0xff]
      %v2029 = vld [vmem:[%s1240 + $0x42] sm:$0xff]
      %v2030 = vld [vmem:[%s1240 + $0x52] sm:$0xff]
      %v2031 = vld [vmem:[%s1240 + $0x62] sm:$0xff]
      %v2032 = vld [vmem:[%s1240 + $0x72] sm:$0xff]
      %v2033 = vlaneseq
      %v2034 = vshrl.u32 %v2033, 7
      %v2035 = vsub.s32 6, %v2034
      %v2036 = vrot.slane %v633, %v2035
      %v2037 = vmul.f32 %v2025, %v2036
      %v2038 = vmul.f32 %v2026, %v2036
      %v2039 = vmul.f32 %v2027, %v2036
      %v2040 = vmul.f32 %v2028, %v2036
      %v2041 = vmul.f32 %v2029, %v2036
      %v2042 = vmul.f32 %v2030, %v2036
      %v2043 = vmul.f32 %v2031, %v2036
      %v2044 = vmul.f32 %v2032, %v2036
      %v2045 = vadd.f32 %v2017, %v2037
      %v2046 = vadd.f32 %v2018, %v2038
      %v2047 = vadd.f32 %v2019, %v2039
      %v2048 = vadd.f32 %v2020, %v2040
      %v2049 = vadd.f32 %v2021, %v2041
      %v2050 = vadd.f32 %v2022, %v2042
      %v2051 = vadd.f32 %v2023, %v2043
      %v2052 = vadd.f32 %v2024, %v2044
      %v2053 = vld [vmem:[%s1240 + $0x3] sm:$0xff]
      %v2054 = vld [vmem:[%s1240 + $0x13] sm:$0xff]
      %v2055 = vld [vmem:[%s1240 + $0x23] sm:$0xff]
      %v2056 = vld [vmem:[%s1240 + $0x33] sm:$0xff]
      %v2057 = vld [vmem:[%s1240 + $0x43] sm:$0xff]
      %v2058 = vld [vmem:[%s1240 + $0x53] sm:$0xff]
      %v2059 = vld [vmem:[%s1240 + $0x63] sm:$0xff]
      %v2060 = vld [vmem:[%s1240 + $0x73] sm:$0xff]
      %v2061 = vlaneseq
      %v2062 = vshrl.u32 %v2061, 7
      %v2063 = vsub.s32 7, %v2062
      %v2064 = vrot.slane %v633, %v2063
      %v2065 = vmul.f32 %v2053, %v2064
      %v2066 = vmul.f32 %v2054, %v2064
      %v2067 = vmul.f32 %v2055, %v2064
      %v2068 = vmul.f32 %v2056, %v2064
      %v2069 = vmul.f32 %v2057, %v2064
      %v2070 = vmul.f32 %v2058, %v2064
      %v2071 = vmul.f32 %v2059, %v2064
      %v2072 = vmul.f32 %v2060, %v2064
      %v2073 = vadd.f32 %v2045, %v2065
      %v2074 = vadd.f32 %v2046, %v2066
      %v2075 = vadd.f32 %v2047, %v2067
      %v2076 = vadd.f32 %v2048, %v2068
      %v2077 = vadd.f32 %v2049, %v2069
      %v2078 = vadd.f32 %v2050, %v2070
      %v2079 = vadd.f32 %v2051, %v2071
      %v2080 = vadd.f32 %v2052, %v2072
      %v2081 = vld [vmem:[%s1240 + $0x4] sm:$0xff]
      %v2082 = vld [vmem:[%s1240 + $0x14] sm:$0xff]
      %v2083 = vld [vmem:[%s1240 + $0x24] sm:$0xff]
      %v2084 = vld [vmem:[%s1240 + $0x34] sm:$0xff]
      %v2085 = vld [vmem:[%s1240 + $0x44] sm:$0xff]
      %v2086 = vld [vmem:[%s1240 + $0x54] sm:$0xff]
      %v2087 = vld [vmem:[%s1240 + $0x64] sm:$0xff]
      %v2088 = vld [vmem:[%s1240 + $0x74] sm:$0xff]
      %v2089 = vlaneseq
      %v2090 = vshrl.u32 %v2089, 7
      %v2091 = vsub.s32 0, %v2090
      %v2092 = vrot.slane %v634, %v2091
      %v2093 = vmul.f32 %v2081, %v2092
      %v2094 = vmul.f32 %v2082, %v2092
      %v2095 = vmul.f32 %v2083, %v2092
      %v2096 = vmul.f32 %v2084, %v2092
      %v2097 = vmul.f32 %v2085, %v2092
      %v2098 = vmul.f32 %v2086, %v2092
      %v2099 = vmul.f32 %v2087, %v2092
      %v2100 = vmul.f32 %v2088, %v2092
      %v2101 = vadd.f32 %v2073, %v2093
      %v2102 = vadd.f32 %v2074, %v2094
      %v2103 = vadd.f32 %v2075, %v2095
      %v2104 = vadd.f32 %v2076, %v2096
      %v2105 = vadd.f32 %v2077, %v2097
      %v2106 = vadd.f32 %v2078, %v2098
      %v2107 = vadd.f32 %v2079, %v2099
      %v2108 = vadd.f32 %v2080, %v2100
      %v2109 = vlaneseq
      %v2110 = vshrl.u32 %v2109, 7
      %v2111 = vsub.s32 1, %v2110
      %v2112 = vrot.slane %v643, %v2111
      %v2113 = vmul.f32 %v2112, %v2101
      %v2114 = vmul.f32 %v2112, %v2102
      %v2115 = vmul.f32 %v2112, %v2103
      %v2116 = vmul.f32 %v2112, %v2104
      %v2117 = vmul.f32 %v2112, %v2105
      %v2118 = vmul.f32 %v2112, %v2106
      %v2119 = vmul.f32 %v2112, %v2107
      %v2120 = vmul.f32 %v2112, %v2108
      %s2121 = scalar_lea.vmem [#allocation4], 64
      %2122 = vst.msk [vmem:[%s2121] sm:$0xff] %vm362, %v2113
      %2123 = vst.msk [vmem:[%s2121 + $0x8] sm:$0xff] %vm362, %v2114
      %2124 = vst.msk [vmem:[%s2121 + $0x10] sm:$0xff] %vm362, %v2115
      %2125 = vst.msk [vmem:[%s2121 + $0x18] sm:$0xff] %vm362, %v2116
      %2126 = vst.msk [vmem:[%s2121 + $0x20] sm:$0xff] %vm362, %v2117
      %2127 = vst.msk [vmem:[%s2121 + $0x28] sm:$0xff] %vm362, %v2118
      %2128 = vst.msk [vmem:[%s2121 + $0x30] sm:$0xff] %vm362, %v2119
      %2129 = vst.msk [vmem:[%s2121 + $0x38] sm:$0xff] %vm362, %v2120
      %2130 = vst.msk [vmem:[%s669 + $0x2] sm:$0xff] %vm362, %v595
      %2131 = vst.msk [vmem:[%s669 + $0x12] sm:$0xff] %vm362, %v596
      %2132 = vst.msk [vmem:[%s669 + $0x22] sm:$0xff] %vm362, %v597
      %2133 = vst.msk [vmem:[%s669 + $0x32] sm:$0xff] %vm362, %v598
      %2134 = vst.msk [vmem:[%s669 + $0x42] sm:$0xff] %vm362, %v599
      %2135 = vst.msk [vmem:[%s669 + $0x52] sm:$0xff] %vm362, %v600
      %2136 = vst.msk [vmem:[%s669 + $0x62] sm:$0xff] %vm362, %v601
      %2137 = vst.msk [vmem:[%s669 + $0x72] sm:$0xff] %vm362, %v602
      %v2138 = vld [vmem:[#allocation3] sm:$0xff]
      %v2139 = vld [vmem:[#allocation3 + $0x10] sm:$0xff]
      %v2140 = vld [vmem:[#allocation3 + $0x20] sm:$0xff]
      %v2141 = vld [vmem:[#allocation3 + $0x30] sm:$0xff]
      %v2142 = vld [vmem:[#allocation3 + $0x40] sm:$0xff]
      %v2143 = vld [vmem:[#allocation3 + $0x50] sm:$0xff]
      %v2144 = vld [vmem:[#allocation3 + $0x60] sm:$0xff]
      %v2145 = vld [vmem:[#allocation3 + $0x70] sm:$0xff]
      %v2146 = vlaneseq
      %v2147 = vshrl.u32 %v2146, 7
      %v2148 = vsub.s32 0, %v2147
      %v2149 = vrot.slane %v635, %v2148
      %v2150 = vmul.f32 %v2138, %v2149
      %v2151 = vmul.f32 %v2139, %v2149
      %v2152 = vmul.f32 %v2140, %v2149
      %v2153 = vmul.f32 %v2141, %v2149
      %v2154 = vmul.f32 %v2142, %v2149
      %v2155 = vmul.f32 %v2143, %v2149
      %v2156 = vmul.f32 %v2144, %v2149
      %v2157 = vmul.f32 %v2145, %v2149
      %v2158 = vadd.f32 %v2150, 0.0
      %v2159 = vadd.f32 %v2151, 0.0
      %v2160 = vadd.f32 %v2152, 0.0
      %v2161 = vadd.f32 %v2153, 0.0
      %v2162 = vadd.f32 %v2154, 0.0
      %v2163 = vadd.f32 %v2155, 0.0
      %v2164 = vadd.f32 %v2156, 0.0
      %v2165 = vadd.f32 %v2157, 0.0
      %v2166 = vld [vmem:[#allocation3 + $0x1] sm:$0xff]
      %v2167 = vld [vmem:[#allocation3 + $0x11] sm:$0xff]
      %v2168 = vld [vmem:[#allocation3 + $0x21] sm:$0xff]
      %v2169 = vld [vmem:[#allocation3 + $0x31] sm:$0xff]
      %v2170 = vld [vmem:[#allocation3 + $0x41] sm:$0xff]
      %v2171 = vld [vmem:[#allocation3 + $0x51] sm:$0xff]
      %v2172 = vld [vmem:[#allocation3 + $0x61] sm:$0xff]
      %v2173 = vld [vmem:[#allocation3 + $0x71] sm:$0xff]
      %v2174 = vlaneseq
      %v2175 = vshrl.u32 %v2174, 7
      %v2176 = vsub.s32 1, %v2175
      %v2177 = vrot.slane %v635, %v2176
      %v2178 = vmul.f32 %v2166, %v2177
      %v2179 = vmul.f32 %v2167, %v2177
      %v2180 = vmul.f32 %v2168, %v2177
      %v2181 = vmul.f32 %v2169, %v2177
      %v2182 = vmul.f32 %v2170, %v2177
      %v2183 = vmul.f32 %v2171, %v2177
      %v2184 = vmul.f32 %v2172, %v2177
      %v2185 = vmul.f32 %v2173, %v2177
      %v2186 = vadd.f32 %v2158, %v2178
      %v2187 = vadd.f32 %v2159, %v2179
      %v2188 = vadd.f32 %v2160, %v2180
      %v2189 = vadd.f32 %v2161, %v2181
      %v2190 = vadd.f32 %v2162, %v2182
      %v2191 = vadd.f32 %v2163, %v2183
      %v2192 = vadd.f32 %v2164, %v2184
      %v2193 = vadd.f32 %v2165, %v2185
      %v2194 = vld [vmem:[#allocation3 + $0x2] sm:$0xff]
      %v2195 = vld [vmem:[#allocation3 + $0x12] sm:$0xff]
      %v2196 = vld [vmem:[#allocation3 + $0x22] sm:$0xff]
      %v2197 = vld [vmem:[#allocation3 + $0x32] sm:$0xff]
      %v2198 = vld [vmem:[#allocation3 + $0x42] sm:$0xff]
      %v2199 = vld [vmem:[#allocation3 + $0x52] sm:$0xff]
      %v2200 = vld [vmem:[#allocation3 + $0x62] sm:$0xff]
      %v2201 = vld [vmem:[#allocation3 + $0x72] sm:$0xff]
      %v2202 = vlaneseq
      %v2203 = vshrl.u32 %v2202, 7
      %v2204 = vsub.s32 2, %v2203
      %v2205 = vrot.slane %v635, %v2204
      %v2206 = vmul.f32 %v2194, %v2205
      %v2207 = vmul.f32 %v2195, %v2205
      %v2208 = vmul.f32 %v2196, %v2205
      %v2209 = vmul.f32 %v2197, %v2205
      %v2210 = vmul.f32 %v2198, %v2205
      %v2211 = vmul.f32 %v2199, %v2205
      %v2212 = vmul.f32 %v2200, %v2205
      %v2213 = vmul.f32 %v2201, %v2205
      %v2214 = vadd.f32 %v2186, %v2206
      %v2215 = vadd.f32 %v2187, %v2207
      %v2216 = vadd.f32 %v2188, %v2208
      %v2217 = vadd.f32 %v2189, %v2209
      %v2218 = vadd.f32 %v2190, %v2210
      %v2219 = vadd.f32 %v2191, %v2211
      %v2220 = vadd.f32 %v2192, %v2212
      %v2221 = vadd.f32 %v2193, %v2213
      %v2222 = vld [vmem:[#allocation3 + $0x3] sm:$0xff]
      %v2223 = vld [vmem:[#allocation3 + $0x13] sm:$0xff]
      %v2224 = vld [vmem:[#allocation3 + $0x23] sm:$0xff]
      %v2225 = vld [vmem:[#allocation3 + $0x33] sm:$0xff]
      %v2226 = vld [vmem:[#allocation3 + $0x43] sm:$0xff]
      %v2227 = vld [vmem:[#allocation3 + $0x53] sm:$0xff]
      %v2228 = vld [vmem:[#allocation3 + $0x63] sm:$0xff]
      %v2229 = vld [vmem:[#allocation3 + $0x73] sm:$0xff]
      %v2230 = vlaneseq
      %v2231 = vshrl.u32 %v2230, 7
      %v2232 = vsub.s32 3, %v2231
      %v2233 = vrot.slane %v635, %v2232
      %v2234 = vmul.f32 %v2222, %v2233
      %v2235 = vmul.f32 %v2223, %v2233
      %v2236 = vmul.f32 %v2224, %v2233
      %v2237 = vmul.f32 %v2225, %v2233
      %v2238 = vmul.f32 %v2226, %v2233
      %v2239 = vmul.f32 %v2227, %v2233
      %v2240 = vmul.f32 %v2228, %v2233
      %v2241 = vmul.f32 %v2229, %v2233
      %v2242 = vadd.f32 %v2214, %v2234
      %v2243 = vadd.f32 %v2215, %v2235
      %v2244 = vadd.f32 %v2216, %v2236
      %v2245 = vadd.f32 %v2217, %v2237
      %v2246 = vadd.f32 %v2218, %v2238
      %v2247 = vadd.f32 %v2219, %v2239
      %v2248 = vadd.f32 %v2220, %v2240
      %v2249 = vadd.f32 %v2221, %v2241
      %v2250 = vld [vmem:[#allocation3 + $0x4] sm:$0xff]
      %v2251 = vld [vmem:[#allocation3 + $0x14] sm:$0xff]
      %v2252 = vld [vmem:[#allocation3 + $0x24] sm:$0xff]
      %v2253 = vld [vmem:[#allocation3 + $0x34] sm:$0xff]
      %v2254 = vld [vmem:[#allocation3 + $0x44] sm:$0xff]
      %v2255 = vld [vmem:[#allocation3 + $0x54] sm:$0xff]
      %v2256 = vld [vmem:[#allocation3 + $0x64] sm:$0xff]
      %v2257 = vld [vmem:[#allocation3 + $0x74] sm:$0xff]
      %v2258 = vlaneseq
      %v2259 = vshrl.u32 %v2258, 7
      %v2260 = vsub.s32 4, %v2259
      %v2261 = vrot.slane %v635, %v2260
      %v2262 = vmul.f32 %v2250, %v2261
      %v2263 = vmul.f32 %v2251, %v2261
      %v2264 = vmul.f32 %v2252, %v2261
      %v2265 = vmul.f32 %v2253, %v2261
      %v2266 = vmul.f32 %v2254, %v2261
      %v2267 = vmul.f32 %v2255, %v2261
      %v2268 = vmul.f32 %v2256, %v2261
      %v2269 = vmul.f32 %v2257, %v2261
      %v2270 = vadd.f32 %v2242, %v2262
      %v2271 = vadd.f32 %v2243, %v2263
      %v2272 = vadd.f32 %v2244, %v2264
      %v2273 = vadd.f32 %v2245, %v2265
      %v2274 = vadd.f32 %v2246, %v2266
      %v2275 = vadd.f32 %v2247, %v2267
      %v2276 = vadd.f32 %v2248, %v2268
      %v2277 = vadd.f32 %v2249, %v2269
      %v2278 = vld [vmem:[%s818] sm:$0xff]
      %v2279 = vld [vmem:[%s818 + $0x10] sm:$0xff]
      %v2280 = vld [vmem:[%s818 + $0x20] sm:$0xff]
      %v2281 = vld [vmem:[%s818 + $0x30] sm:$0xff]
      %v2282 = vld [vmem:[%s818 + $0x40] sm:$0xff]
      %v2283 = vld [vmem:[%s818 + $0x50] sm:$0xff]
      %v2284 = vld [vmem:[%s818 + $0x60] sm:$0xff]
      %v2285 = vld [vmem:[%s818 + $0x70] sm:$0xff]
      %v2286 = vlaneseq
      %v2287 = vshrl.u32 %v2286, 7
      %v2288 = vsub.s32 5, %v2287
      %v2289 = vrot.slane %v635, %v2288
      %v2290 = vmul.f32 %v2278, %v2289
      %v2291 = vmul.f32 %v2279, %v2289
      %v2292 = vmul.f32 %v2280, %v2289
      %v2293 = vmul.f32 %v2281, %v2289
      %v2294 = vmul.f32 %v2282, %v2289
      %v2295 = vmul.f32 %v2283, %v2289
      %v2296 = vmul.f32 %v2284, %v2289
      %v2297 = vmul.f32 %v2285, %v2289
      %v2298 = vadd.f32 %v2270, %v2290
      %v2299 = vadd.f32 %v2271, %v2291
      %v2300 = vadd.f32 %v2272, %v2292
      %v2301 = vadd.f32 %v2273, %v2293
      %v2302 = vadd.f32 %v2274, %v2294
      %v2303 = vadd.f32 %v2275, %v2295
      %v2304 = vadd.f32 %v2276, %v2296
      %v2305 = vadd.f32 %v2277, %v2297
      %v2306 = vld [vmem:[%s818 + $0x1] sm:$0xff]
      %v2307 = vld [vmem:[%s818 + $0x11] sm:$0xff]
      %v2308 = vld [vmem:[%s818 + $0x21] sm:$0xff]
      %v2309 = vld [vmem:[%s818 + $0x31] sm:$0xff]
      %v2310 = vld [vmem:[%s818 + $0x41] sm:$0xff]
      %v2311 = vld [vmem:[%s818 + $0x51] sm:$0xff]
      %v2312 = vld [vmem:[%s818 + $0x61] sm:$0xff]
      %v2313 = vld [vmem:[%s818 + $0x71] sm:$0xff]
      %v2314 = vlaneseq
      %v2315 = vshrl.u32 %v2314, 7
      %v2316 = vsub.s32 6, %v2315
      %v2317 = vrot.slane %v635, %v2316
      %v2318 = vmul.f32 %v2306, %v2317
      %v2319 = vmul.f32 %v2307, %v2317
      %v2320 = vmul.f32 %v2308, %v2317
      %v2321 = vmul.f32 %v2309, %v2317
      %v2322 = vmul.f32 %v2310, %v2317
      %v2323 = vmul.f32 %v2311, %v2317
      %v2324 = vmul.f32 %v2312, %v2317
      %v2325 = vmul.f32 %v2313, %v2317
      %v2326 = vadd.f32 %v2298, %v2318
      %v2327 = vadd.f32 %v2299, %v2319
      %v2328 = vadd.f32 %v2300, %v2320
      %v2329 = vadd.f32 %v2301, %v2321
      %v2330 = vadd.f32 %v2302, %v2322
      %v2331 = vadd.f32 %v2303, %v2323
      %v2332 = vadd.f32 %v2304, %v2324
      %v2333 = vadd.f32 %v2305, %v2325
      %v2334 = vld [vmem:[%s818 + $0x2] sm:$0xff]
      %v2335 = vld [vmem:[%s818 + $0x12] sm:$0xff]
      %v2336 = vld [vmem:[%s818 + $0x22] sm:$0xff]
      %v2337 = vld [vmem:[%s818 + $0x32] sm:$0xff]
      %v2338 = vld [vmem:[%s818 + $0x42] sm:$0xff]
      %v2339 = vld [vmem:[%s818 + $0x52] sm:$0xff]
      %v2340 = vld [vmem:[%s818 + $0x62] sm:$0xff]
      %v2341 = vld [vmem:[%s818 + $0x72] sm:$0xff]
      %v2342 = vlaneseq
      %v2343 = vshrl.u32 %v2342, 7
      %v2344 = vsub.s32 7, %v2343
      %v2345 = vrot.slane %v635, %v2344
      %v2346 = vmul.f32 %v2334, %v2345
      %v2347 = vmul.f32 %v2335, %v2345
      %v2348 = vmul.f32 %v2336, %v2345
      %v2349 = vmul.f32 %v2337, %v2345
      %v2350 = vmul.f32 %v2338, %v2345
      %v2351 = vmul.f32 %v2339, %v2345
      %v2352 = vmul.f32 %v2340, %v2345
      %v2353 = vmul.f32 %v2341, %v2345
      %v2354 = vadd.f32 %v2326, %v2346
      %v2355 = vadd.f32 %v2327, %v2347
      %v2356 = vadd.f32 %v2328, %v2348
      %v2357 = vadd.f32 %v2329, %v2349
      %v2358 = vadd.f32 %v2330, %v2350
      %v2359 = vadd.f32 %v2331, %v2351
      %v2360 = vadd.f32 %v2332, %v2352
      %v2361 = vadd.f32 %v2333, %v2353
      %v2362 = vld [vmem:[%s818 + $0x3] sm:$0xff]
      %v2363 = vld [vmem:[%s818 + $0x13] sm:$0xff]
      %v2364 = vld [vmem:[%s818 + $0x23] sm:$0xff]
      %v2365 = vld [vmem:[%s818 + $0x33] sm:$0xff]
      %v2366 = vld [vmem:[%s818 + $0x43] sm:$0xff]
      %v2367 = vld [vmem:[%s818 + $0x53] sm:$0xff]
      %v2368 = vld [vmem:[%s818 + $0x63] sm:$0xff]
      %v2369 = vld [vmem:[%s818 + $0x73] sm:$0xff]
      %v2370 = vlaneseq
      %v2371 = vshrl.u32 %v2370, 7
      %v2372 = vsub.s32 0, %v2371
      %v2373 = vrot.slane %v636, %v2372
      %v2374 = vmul.f32 %v2362, %v2373
      %v2375 = vmul.f32 %v2363, %v2373
      %v2376 = vmul.f32 %v2364, %v2373
      %v2377 = vmul.f32 %v2365, %v2373
      %v2378 = vmul.f32 %v2366, %v2373
      %v2379 = vmul.f32 %v2367, %v2373
      %v2380 = vmul.f32 %v2368, %v2373
      %v2381 = vmul.f32 %v2369, %v2373
      %v2382 = vadd.f32 %v2354, %v2374
      %v2383 = vadd.f32 %v2355, %v2375
      %v2384 = vadd.f32 %v2356, %v2376
      %v2385 = vadd.f32 %v2357, %v2377
      %v2386 = vadd.f32 %v2358, %v2378
      %v2387 = vadd.f32 %v2359, %v2379
      %v2388 = vadd.f32 %v2360, %v2380
      %v2389 = vadd.f32 %v2361, %v2381
      %v2390 = vld [vmem:[%s818 + $0x4] sm:$0xff]
      %v2391 = vld [vmem:[%s818 + $0x14] sm:$0xff]
      %v2392 = vld [vmem:[%s818 + $0x24] sm:$0xff]
      %v2393 = vld [vmem:[%s818 + $0x34] sm:$0xff]
      %v2394 = vld [vmem:[%s818 + $0x44] sm:$0xff]
      %v2395 = vld [vmem:[%s818 + $0x54] sm:$0xff]
      %v2396 = vld [vmem:[%s818 + $0x64] sm:$0xff]
      %v2397 = vld [vmem:[%s818 + $0x74] sm:$0xff]
      %v2398 = vlaneseq
      %v2399 = vshrl.u32 %v2398, 7
      %v2400 = vsub.s32 1, %v2399
      %v2401 = vrot.slane %v636, %v2400
      %v2402 = vmul.f32 %v2390, %v2401
      %v2403 = vmul.f32 %v2391, %v2401
      %v2404 = vmul.f32 %v2392, %v2401
      %v2405 = vmul.f32 %v2393, %v2401
      %v2406 = vmul.f32 %v2394, %v2401
      %v2407 = vmul.f32 %v2395, %v2401
      %v2408 = vmul.f32 %v2396, %v2401
      %v2409 = vmul.f32 %v2397, %v2401
      %v2410 = vadd.f32 %v2382, %v2402
      %v2411 = vadd.f32 %v2383, %v2403
      %v2412 = vadd.f32 %v2384, %v2404
      %v2413 = vadd.f32 %v2385, %v2405
      %v2414 = vadd.f32 %v2386, %v2406
      %v2415 = vadd.f32 %v2387, %v2407
      %v2416 = vadd.f32 %v2388, %v2408
      %v2417 = vadd.f32 %v2389, %v2409
      %v2418 = vld [vmem:[%s669] sm:$0xff]
      %v2419 = vld [vmem:[%s669 + $0x10] sm:$0xff]
      %v2420 = vld [vmem:[%s669 + $0x20] sm:$0xff]
      %v2421 = vld [vmem:[%s669 + $0x30] sm:$0xff]
      %v2422 = vld [vmem:[%s669 + $0x40] sm:$0xff]
      %v2423 = vld [vmem:[%s669 + $0x50] sm:$0xff]
      %v2424 = vld [vmem:[%s669 + $0x60] sm:$0xff]
      %v2425 = vld [vmem:[%s669 + $0x70] sm:$0xff]
      %v2426 = vlaneseq
      %v2427 = vshrl.u32 %v2426, 7
      %v2428 = vsub.s32 2, %v2427
      %v2429 = vrot.slane %v636, %v2428
      %v2430 = vmul.f32 %v2418, %v2429
      %v2431 = vmul.f32 %v2419, %v2429
      %v2432 = vmul.f32 %v2420, %v2429
      %v2433 = vmul.f32 %v2421, %v2429
      %v2434 = vmul.f32 %v2422, %v2429
      %v2435 = vmul.f32 %v2423, %v2429
      %v2436 = vmul.f32 %v2424, %v2429
      %v2437 = vmul.f32 %v2425, %v2429
      %v2438 = vadd.f32 %v2410, %v2430
      %v2439 = vadd.f32 %v2411, %v2431
      %v2440 = vadd.f32 %v2412, %v2432
      %v2441 = vadd.f32 %v2413, %v2433
      %v2442 = vadd.f32 %v2414, %v2434
      %v2443 = vadd.f32 %v2415, %v2435
      %v2444 = vadd.f32 %v2416, %v2436
      %v2445 = vadd.f32 %v2417, %v2437
      %v2446 = vld [vmem:[%s669 + $0x1] sm:$0xff]
      %v2447 = vld [vmem:[%s669 + $0x11] sm:$0xff]
      %v2448 = vld [vmem:[%s669 + $0x21] sm:$0xff]
      %v2449 = vld [vmem:[%s669 + $0x31] sm:$0xff]
      %v2450 = vld [vmem:[%s669 + $0x41] sm:$0xff]
      %v2451 = vld [vmem:[%s669 + $0x51] sm:$0xff]
      %v2452 = vld [vmem:[%s669 + $0x61] sm:$0xff]
      %v2453 = vld [vmem:[%s669 + $0x71] sm:$0xff]
      %v2454 = vlaneseq
      %v2455 = vshrl.u32 %v2454, 7
      %v2456 = vsub.s32 3, %v2455
      %v2457 = vrot.slane %v636, %v2456
      %v2458 = vmul.f32 %v2446, %v2457
      %v2459 = vmul.f32 %v2447, %v2457
      %v2460 = vmul.f32 %v2448, %v2457
      %v2461 = vmul.f32 %v2449, %v2457
      %v2462 = vmul.f32 %v2450, %v2457
      %v2463 = vmul.f32 %v2451, %v2457
      %v2464 = vmul.f32 %v2452, %v2457
      %v2465 = vmul.f32 %v2453, %v2457
      %v2466 = vadd.f32 %v2438, %v2458
      %v2467 = vadd.f32 %v2439, %v2459
      %v2468 = vadd.f32 %v2440, %v2460
      %v2469 = vadd.f32 %v2441, %v2461
      %v2470 = vadd.f32 %v2442, %v2462
      %v2471 = vadd.f32 %v2443, %v2463
      %v2472 = vadd.f32 %v2444, %v2464
      %v2473 = vadd.f32 %v2445, %v2465
      %v2474 = vld [vmem:[%s669 + $0x2] sm:$0xff]
      %v2475 = vld [vmem:[%s669 + $0x12] sm:$0xff]
      %v2476 = vld [vmem:[%s669 + $0x22] sm:$0xff]
      %v2477 = vld [vmem:[%s669 + $0x32] sm:$0xff]
      %v2478 = vld [vmem:[%s669 + $0x42] sm:$0xff]
      %v2479 = vld [vmem:[%s669 + $0x52] sm:$0xff]
      %v2480 = vld [vmem:[%s669 + $0x62] sm:$0xff]
      %v2481 = vld [vmem:[%s669 + $0x72] sm:$0xff]
      %v2482 = vlaneseq
      %v2483 = vshrl.u32 %v2482, 7
      %v2484 = vsub.s32 4, %v2483
      %v2485 = vrot.slane %v636, %v2484
      %v2486 = vmul.f32 %v2474, %v2485
      %v2487 = vmul.f32 %v2475, %v2485
      %v2488 = vmul.f32 %v2476, %v2485
      %v2489 = vmul.f32 %v2477, %v2485
      %v2490 = vmul.f32 %v2478, %v2485
      %v2491 = vmul.f32 %v2479, %v2485
      %v2492 = vmul.f32 %v2480, %v2485
      %v2493 = vmul.f32 %v2481, %v2485
      %v2494 = vadd.f32 %v2466, %v2486
      %v2495 = vadd.f32 %v2467, %v2487
      %v2496 = vadd.f32 %v2468, %v2488
      %v2497 = vadd.f32 %v2469, %v2489
      %v2498 = vadd.f32 %v2470, %v2490
      %v2499 = vadd.f32 %v2471, %v2491
      %v2500 = vadd.f32 %v2472, %v2492
      %v2501 = vadd.f32 %v2473, %v2493
      %v2502 = vld [vmem:[%s669 + $0x3] sm:$0xff]
      %v2503 = vld [vmem:[%s669 + $0x13] sm:$0xff]
      %v2504 = vld [vmem:[%s669 + $0x23] sm:$0xff]
      %v2505 = vld [vmem:[%s669 + $0x33] sm:$0xff]
      %v2506 = vld [vmem:[%s669 + $0x43] sm:$0xff]
      %v2507 = vld [vmem:[%s669 + $0x53] sm:$0xff]
      %v2508 = vld [vmem:[%s669 + $0x63] sm:$0xff]
      %v2509 = vld [vmem:[%s669 + $0x73] sm:$0xff]
      %v2510 = vlaneseq
      %v2511 = vshrl.u32 %v2510, 7
      %v2512 = vsub.s32 5, %v2511
      %v2513 = vrot.slane %v636, %v2512
      %v2514 = vmul.f32 %v2502, %v2513
      %v2515 = vmul.f32 %v2503, %v2513
      %v2516 = vmul.f32 %v2504, %v2513
      %v2517 = vmul.f32 %v2505, %v2513
      %v2518 = vmul.f32 %v2506, %v2513
      %v2519 = vmul.f32 %v2507, %v2513
      %v2520 = vmul.f32 %v2508, %v2513
      %v2521 = vmul.f32 %v2509, %v2513
      %v2522 = vadd.f32 %v2494, %v2514
      %v2523 = vadd.f32 %v2495, %v2515
      %v2524 = vadd.f32 %v2496, %v2516
      %v2525 = vadd.f32 %v2497, %v2517
      %v2526 = vadd.f32 %v2498, %v2518
      %v2527 = vadd.f32 %v2499, %v2519
      %v2528 = vadd.f32 %v2500, %v2520
      %v2529 = vadd.f32 %v2501, %v2521
      %v2530 = vld [vmem:[%s669 + $0x4] sm:$0xff]
      %v2531 = vld [vmem:[%s669 + $0x14] sm:$0xff]
      %v2532 = vld [vmem:[%s669 + $0x24] sm:$0xff]
      %v2533 = vld [vmem:[%s669 + $0x34] sm:$0xff]
      %v2534 = vld [vmem:[%s669 + $0x44] sm:$0xff]
      %v2535 = vld [vmem:[%s669 + $0x54] sm:$0xff]
      %v2536 = vld [vmem:[%s669 + $0x64] sm:$0xff]
      %v2537 = vld [vmem:[%s669 + $0x74] sm:$0xff]
      %v2538 = vlaneseq
      %v2539 = vshrl.u32 %v2538, 7
      %v2540 = vsub.s32 6, %v2539
      %v2541 = vrot.slane %v636, %v2540
      %v2542 = vmul.f32 %v2530, %v2541
      %v2543 = vmul.f32 %v2531, %v2541
      %v2544 = vmul.f32 %v2532, %v2541
      %v2545 = vmul.f32 %v2533, %v2541
      %v2546 = vmul.f32 %v2534, %v2541
      %v2547 = vmul.f32 %v2535, %v2541
      %v2548 = vmul.f32 %v2536, %v2541
      %v2549 = vmul.f32 %v2537, %v2541
      %v2550 = vadd.f32 %v2522, %v2542
      %v2551 = vadd.f32 %v2523, %v2543
      %v2552 = vadd.f32 %v2524, %v2544
      %v2553 = vadd.f32 %v2525, %v2545
      %v2554 = vadd.f32 %v2526, %v2546
      %v2555 = vadd.f32 %v2527, %v2547
      %v2556 = vadd.f32 %v2528, %v2548
      %v2557 = vadd.f32 %v2529, %v2549
      %v2558 = vld [vmem:[%s1099] sm:$0xff]
      %v2559 = vld [vmem:[%s1099 + $0x10] sm:$0xff]
      %v2560 = vld [vmem:[%s1099 + $0x20] sm:$0xff]
      %v2561 = vld [vmem:[%s1099 + $0x30] sm:$0xff]
      %v2562 = vld [vmem:[%s1099 + $0x40] sm:$0xff]
      %v2563 = vld [vmem:[%s1099 + $0x50] sm:$0xff]
      %v2564 = vld [vmem:[%s1099 + $0x60] sm:$0xff]
      %v2565 = vld [vmem:[%s1099 + $0x70] sm:$0xff]
      %v2566 = vlaneseq
      %v2567 = vshrl.u32 %v2566, 7
      %v2568 = vsub.s32 7, %v2567
      %v2569 = vrot.slane %v636, %v2568
      %v2570 = vmul.f32 %v2558, %v2569
      %v2571 = vmul.f32 %v2559, %v2569
      %v2572 = vmul.f32 %v2560, %v2569
      %v2573 = vmul.f32 %v2561, %v2569
      %v2574 = vmul.f32 %v2562, %v2569
      %v2575 = vmul.f32 %v2563, %v2569
      %v2576 = vmul.f32 %v2564, %v2569
      %v2577 = vmul.f32 %v2565, %v2569
      %v2578 = vadd.f32 %v2550, %v2570
      %v2579 = vadd.f32 %v2551, %v2571
      %v2580 = vadd.f32 %v2552, %v2572
      %v2581 = vadd.f32 %v2553, %v2573
      %v2582 = vadd.f32 %v2554, %v2574
      %v2583 = vadd.f32 %v2555, %v2575
      %v2584 = vadd.f32 %v2556, %v2576
      %v2585 = vadd.f32 %v2557, %v2577
      %v2586 = vld [vmem:[%s1099 + $0x1] sm:$0xff]
      %v2587 = vld [vmem:[%s1099 + $0x11] sm:$0xff]
      %v2588 = vld [vmem:[%s1099 + $0x21] sm:$0xff]
      %v2589 = vld [vmem:[%s1099 + $0x31] sm:$0xff]
      %v2590 = vld [vmem:[%s1099 + $0x41] sm:$0xff]
      %v2591 = vld [vmem:[%s1099 + $0x51] sm:$0xff]
      %v2592 = vld [vmem:[%s1099 + $0x61] sm:$0xff]
      %v2593 = vld [vmem:[%s1099 + $0x71] sm:$0xff]
      %v2594 = vlaneseq
      %v2595 = vshrl.u32 %v2594, 7
      %v2596 = vsub.s32 0, %v2595
      %v2597 = vrot.slane %v637, %v2596
      %v2598 = vmul.f32 %v2586, %v2597
      %v2599 = vmul.f32 %v2587, %v2597
      %v2600 = vmul.f32 %v2588, %v2597
      %v2601 = vmul.f32 %v2589, %v2597
      %v2602 = vmul.f32 %v2590, %v2597
      %v2603 = vmul.f32 %v2591, %v2597
      %v2604 = vmul.f32 %v2592, %v2597
      %v2605 = vmul.f32 %v2593, %v2597
      %v2606 = vadd.f32 %v2578, %v2598
      %v2607 = vadd.f32 %v2579, %v2599
      %v2608 = vadd.f32 %v2580, %v2600
      %v2609 = vadd.f32 %v2581, %v2601
      %v2610 = vadd.f32 %v2582, %v2602
      %v2611 = vadd.f32 %v2583, %v2603
      %v2612 = vadd.f32 %v2584, %v2604
      %v2613 = vadd.f32 %v2585, %v2605
      %v2614 = vld [vmem:[%s1099 + $0x2] sm:$0xff]
      %v2615 = vld [vmem:[%s1099 + $0x12] sm:$0xff]
      %v2616 = vld [vmem:[%s1099 + $0x22] sm:$0xff]
      %v2617 = vld [vmem:[%s1099 + $0x32] sm:$0xff]
      %v2618 = vld [vmem:[%s1099 + $0x42] sm:$0xff]
      %v2619 = vld [vmem:[%s1099 + $0x52] sm:$0xff]
      %v2620 = vld [vmem:[%s1099 + $0x62] sm:$0xff]
      %v2621 = vld [vmem:[%s1099 + $0x72] sm:$0xff]
      %v2622 = vlaneseq
      %v2623 = vshrl.u32 %v2622, 7
      %v2624 = vsub.s32 1, %v2623
      %v2625 = vrot.slane %v637, %v2624
      %v2626 = vmul.f32 %v2614, %v2625
      %v2627 = vmul.f32 %v2615, %v2625
      %v2628 = vmul.f32 %v2616, %v2625
      %v2629 = vmul.f32 %v2617, %v2625
      %v2630 = vmul.f32 %v2618, %v2625
      %v2631 = vmul.f32 %v2619, %v2625
      %v2632 = vmul.f32 %v2620, %v2625
      %v2633 = vmul.f32 %v2621, %v2625
      %v2634 = vadd.f32 %v2606, %v2626
      %v2635 = vadd.f32 %v2607, %v2627
      %v2636 = vadd.f32 %v2608, %v2628
      %v2637 = vadd.f32 %v2609, %v2629
      %v2638 = vadd.f32 %v2610, %v2630
      %v2639 = vadd.f32 %v2611, %v2631
      %v2640 = vadd.f32 %v2612, %v2632
      %v2641 = vadd.f32 %v2613, %v2633
      %v2642 = vld [vmem:[%s1099 + $0x3] sm:$0xff]
      %v2643 = vld [vmem:[%s1099 + $0x13] sm:$0xff]
      %v2644 = vld [vmem:[%s1099 + $0x23] sm:$0xff]
      %v2645 = vld [vmem:[%s1099 + $0x33] sm:$0xff]
      %v2646 = vld [vmem:[%s1099 + $0x43] sm:$0xff]
      %v2647 = vld [vmem:[%s1099 + $0x53] sm:$0xff]
      %v2648 = vld [vmem:[%s1099 + $0x63] sm:$0xff]
      %v2649 = vld [vmem:[%s1099 + $0x73] sm:$0xff]
      %v2650 = vlaneseq
      %v2651 = vshrl.u32 %v2650, 7
      %v2652 = vsub.s32 2, %v2651
      %v2653 = vrot.slane %v637, %v2652
      %v2654 = vmul.f32 %v2642, %v2653
      %v2655 = vmul.f32 %v2643, %v2653
      %v2656 = vmul.f32 %v2644, %v2653
      %v2657 = vmul.f32 %v2645, %v2653
      %v2658 = vmul.f32 %v2646, %v2653
      %v2659 = vmul.f32 %v2647, %v2653
      %v2660 = vmul.f32 %v2648, %v2653
      %v2661 = vmul.f32 %v2649, %v2653
      %v2662 = vadd.f32 %v2634, %v2654
      %v2663 = vadd.f32 %v2635, %v2655
      %v2664 = vadd.f32 %v2636, %v2656
      %v2665 = vadd.f32 %v2637, %v2657
      %v2666 = vadd.f32 %v2638, %v2658
      %v2667 = vadd.f32 %v2639, %v2659
      %v2668 = vadd.f32 %v2640, %v2660
      %v2669 = vadd.f32 %v2641, %v2661
      %v2670 = vld [vmem:[%s1099 + $0x4] sm:$0xff]
      %v2671 = vld [vmem:[%s1099 + $0x14] sm:$0xff]
      %v2672 = vld [vmem:[%s1099 + $0x24] sm:$0xff]
      %v2673 = vld [vmem:[%s1099 + $0x34] sm:$0xff]
      %v2674 = vld [vmem:[%s1099 + $0x44] sm:$0xff]
      %v2675 = vld [vmem:[%s1099 + $0x54] sm:$0xff]
      %v2676 = vld [vmem:[%s1099 + $0x64] sm:$0xff]
      %v2677 = vld [vmem:[%s1099 + $0x74] sm:$0xff]
      %v2678 = vlaneseq
      %v2679 = vshrl.u32 %v2678, 7
      %v2680 = vsub.s32 3, %v2679
      %v2681 = vrot.slane %v637, %v2680
      %v2682 = vmul.f32 %v2670, %v2681
      %v2683 = vmul.f32 %v2671, %v2681
      %v2684 = vmul.f32 %v2672, %v2681
      %v2685 = vmul.f32 %v2673, %v2681
      %v2686 = vmul.f32 %v2674, %v2681
      %v2687 = vmul.f32 %v2675, %v2681
      %v2688 = vmul.f32 %v2676, %v2681
      %v2689 = vmul.f32 %v2677, %v2681
      %v2690 = vadd.f32 %v2662, %v2682
      %v2691 = vadd.f32 %v2663, %v2683
      %v2692 = vadd.f32 %v2664, %v2684
      %v2693 = vadd.f32 %v2665, %v2685
      %v2694 = vadd.f32 %v2666, %v2686
      %v2695 = vadd.f32 %v2667, %v2687
      %v2696 = vadd.f32 %v2668, %v2688
      %v2697 = vadd.f32 %v2669, %v2689
      %v2698 = vld [vmem:[%s1240] sm:$0xff]
      %v2699 = vld [vmem:[%s1240 + $0x10] sm:$0xff]
      %v2700 = vld [vmem:[%s1240 + $0x20] sm:$0xff]
      %v2701 = vld [vmem:[%s1240 + $0x30] sm:$0xff]
      %v2702 = vld [vmem:[%s1240 + $0x40] sm:$0xff]
      %v2703 = vld [vmem:[%s1240 + $0x50] sm:$0xff]
      %v2704 = vld [vmem:[%s1240 + $0x60] sm:$0xff]
      %v2705 = vld [vmem:[%s1240 + $0x70] sm:$0xff]
      %v2706 = vlaneseq
      %v2707 = vshrl.u32 %v2706, 7
      %v2708 = vsub.s32 4, %v2707
      %v2709 = vrot.slane %v637, %v2708
      %v2710 = vmul.f32 %v2698, %v2709
      %v2711 = vmul.f32 %v2699, %v2709
      %v2712 = vmul.f32 %v2700, %v2709
      %v2713 = vmul.f32 %v2701, %v2709
      %v2714 = vmul.f32 %v2702, %v2709
      %v2715 = vmul.f32 %v2703, %v2709
      %v2716 = vmul.f32 %v2704, %v2709
      %v2717 = vmul.f32 %v2705, %v2709
      %v2718 = vadd.f32 %v2690, %v2710
      %v2719 = vadd.f32 %v2691, %v2711
      %v2720 = vadd.f32 %v2692, %v2712
      %v2721 = vadd.f32 %v2693, %v2713
      %v2722 = vadd.f32 %v2694, %v2714
      %v2723 = vadd.f32 %v2695, %v2715
      %v2724 = vadd.f32 %v2696, %v2716
      %v2725 = vadd.f32 %v2697, %v2717
      %v2726 = vld [vmem:[%s1240 + $0x1] sm:$0xff]
      %v2727 = vld [vmem:[%s1240 + $0x11] sm:$0xff]
      %v2728 = vld [vmem:[%s1240 + $0x21] sm:$0xff]
      %v2729 = vld [vmem:[%s1240 + $0x31] sm:$0xff]
      %v2730 = vld [vmem:[%s1240 + $0x41] sm:$0xff]
      %v2731 = vld [vmem:[%s1240 + $0x51] sm:$0xff]
      %v2732 = vld [vmem:[%s1240 + $0x61] sm:$0xff]
      %v2733 = vld [vmem:[%s1240 + $0x71] sm:$0xff]
      %v2734 = vlaneseq
      %v2735 = vshrl.u32 %v2734, 7
      %v2736 = vsub.s32 5, %v2735
      %v2737 = vrot.slane %v637, %v2736
      %v2738 = vmul.f32 %v2726, %v2737
      %v2739 = vmul.f32 %v2727, %v2737
      %v2740 = vmul.f32 %v2728, %v2737
      %v2741 = vmul.f32 %v2729, %v2737
      %v2742 = vmul.f32 %v2730, %v2737
      %v2743 = vmul.f32 %v2731, %v2737
      %v2744 = vmul.f32 %v2732, %v2737
      %v2745 = vmul.f32 %v2733, %v2737
      %v2746 = vadd.f32 %v2718, %v2738
      %v2747 = vadd.f32 %v2719, %v2739
      %v2748 = vadd.f32 %v2720, %v2740
      %v2749 = vadd.f32 %v2721, %v2741
      %v2750 = vadd.f32 %v2722, %v2742
      %v2751 = vadd.f32 %v2723, %v2743
      %v2752 = vadd.f32 %v2724, %v2744
      %v2753 = vadd.f32 %v2725, %v2745
      %v2754 = vld [vmem:[%s1240 + $0x2] sm:$0xff]
      %v2755 = vld [vmem:[%s1240 + $0x12] sm:$0xff]
      %v2756 = vld [vmem:[%s1240 + $0x22] sm:$0xff]
      %v2757 = vld [vmem:[%s1240 + $0x32] sm:$0xff]
      %v2758 = vld [vmem:[%s1240 + $0x42] sm:$0xff]
      %v2759 = vld [vmem:[%s1240 + $0x52] sm:$0xff]
      %v2760 = vld [vmem:[%s1240 + $0x62] sm:$0xff]
      %v2761 = vld [vmem:[%s1240 + $0x72] sm:$0xff]
      %v2762 = vlaneseq
      %v2763 = vshrl.u32 %v2762, 7
      %v2764 = vsub.s32 6, %v2763
      %v2765 = vrot.slane %v637, %v2764
      %v2766 = vmul.f32 %v2754, %v2765
      %v2767 = vmul.f32 %v2755, %v2765
      %v2768 = vmul.f32 %v2756, %v2765
      %v2769 = vmul.f32 %v2757, %v2765
      %v2770 = vmul.f32 %v2758, %v2765
      %v2771 = vmul.f32 %v2759, %v2765
      %v2772 = vmul.f32 %v2760, %v2765
      %v2773 = vmul.f32 %v2761, %v2765
      %v2774 = vadd.f32 %v2746, %v2766
      %v2775 = vadd.f32 %v2747, %v2767
      %v2776 = vadd.f32 %v2748, %v2768
      %v2777 = vadd.f32 %v2749, %v2769
      %v2778 = vadd.f32 %v2750, %v2770
      %v2779 = vadd.f32 %v2751, %v2771
      %v2780 = vadd.f32 %v2752, %v2772
      %v2781 = vadd.f32 %v2753, %v2773
      %v2782 = vld [vmem:[%s1240 + $0x3] sm:$0xff]
      %v2783 = vld [vmem:[%s1240 + $0x13] sm:$0xff]
      %v2784 = vld [vmem:[%s1240 + $0x23] sm:$0xff]
      %v2785 = vld [vmem:[%s1240 + $0x33] sm:$0xff]
      %v2786 = vld [vmem:[%s1240 + $0x43] sm:$0xff]
      %v2787 = vld [vmem:[%s1240 + $0x53] sm:$0xff]
      %v2788 = vld [vmem:[%s1240 + $0x63] sm:$0xff]
      %v2789 = vld [vmem:[%s1240 + $0x73] sm:$0xff]
      %v2790 = vlaneseq
      %v2791 = vshrl.u32 %v2790, 7
      %v2792 = vsub.s32 7, %v2791
      %v2793 = vrot.slane %v637, %v2792
      %v2794 = vmul.f32 %v2782, %v2793
      %v2795 = vmul.f32 %v2783, %v2793
      %v2796 = vmul.f32 %v2784, %v2793
      %v2797 = vmul.f32 %v2785, %v2793
      %v2798 = vmul.f32 %v2786, %v2793
      %v2799 = vmul.f32 %v2787, %v2793
      %v2800 = vmul.f32 %v2788, %v2793
      %v2801 = vmul.f32 %v2789, %v2793
      %v2802 = vadd.f32 %v2774, %v2794
      %v2803 = vadd.f32 %v2775, %v2795
      %v2804 = vadd.f32 %v2776, %v2796
      %v2805 = vadd.f32 %v2777, %v2797
      %v2806 = vadd.f32 %v2778, %v2798
      %v2807 = vadd.f32 %v2779, %v2799
      %v2808 = vadd.f32 %v2780, %v2800
      %v2809 = vadd.f32 %v2781, %v2801
      %v2810 = vld [vmem:[%s1240 + $0x4] sm:$0xff]
      %v2811 = vld [vmem:[%s1240 + $0x14] sm:$0xff]
      %v2812 = vld [vmem:[%s1240 + $0x24] sm:$0xff]
      %v2813 = vld [vmem:[%s1240 + $0x34] sm:$0xff]
      %v2814 = vld [vmem:[%s1240 + $0x44] sm:$0xff]
      %v2815 = vld [vmem:[%s1240 + $0x54] sm:$0xff]
      %v2816 = vld [vmem:[%s1240 + $0x64] sm:$0xff]
      %v2817 = vld [vmem:[%s1240 + $0x74] sm:$0xff]
      %v2818 = vlaneseq
      %v2819 = vshrl.u32 %v2818, 7
      %v2820 = vsub.s32 0, %v2819
      %v2821 = vrot.slane %v638, %v2820
      %v2822 = vmul.f32 %v2810, %v2821
      %v2823 = vmul.f32 %v2811, %v2821
      %v2824 = vmul.f32 %v2812, %v2821
      %v2825 = vmul.f32 %v2813, %v2821
      %v2826 = vmul.f32 %v2814, %v2821
      %v2827 = vmul.f32 %v2815, %v2821
      %v2828 = vmul.f32 %v2816, %v2821
      %v2829 = vmul.f32 %v2817, %v2821
      %v2830 = vadd.f32 %v2802, %v2822
      %v2831 = vadd.f32 %v2803, %v2823
      %v2832 = vadd.f32 %v2804, %v2824
      %v2833 = vadd.f32 %v2805, %v2825
      %v2834 = vadd.f32 %v2806, %v2826
      %v2835 = vadd.f32 %v2807, %v2827
      %v2836 = vadd.f32 %v2808, %v2828
      %v2837 = vadd.f32 %v2809, %v2829
      %v2838 = vlaneseq
      %v2839 = vshrl.u32 %v2838, 7
      %v2840 = vsub.s32 2, %v2839
      %v2841 = vrot.slane %v643, %v2840
      %v2842 = vmul.f32 %v2841, %v2830
      %v2843 = vmul.f32 %v2841, %v2831
      %v2844 = vmul.f32 %v2841, %v2832
      %v2845 = vmul.f32 %v2841, %v2833
      %v2846 = vmul.f32 %v2841, %v2834
      %v2847 = vmul.f32 %v2841, %v2835
      %v2848 = vmul.f32 %v2841, %v2836
      %v2849 = vmul.f32 %v2841, %v2837
      %s2850 = scalar_lea.vmem [#allocation4], 128
      %2851 = vst.msk [vmem:[%s2850] sm:$0xff] %vm362, %v2842
      %2852 = vst.msk [vmem:[%s2850 + $0x8] sm:$0xff] %vm362, %v2843
      %2853 = vst.msk [vmem:[%s2850 + $0x10] sm:$0xff] %vm362, %v2844
      %2854 = vst.msk [vmem:[%s2850 + $0x18] sm:$0xff] %vm362, %v2845
      %2855 = vst.msk [vmem:[%s2850 + $0x20] sm:$0xff] %vm362, %v2846
      %2856 = vst.msk [vmem:[%s2850 + $0x28] sm:$0xff] %vm362, %v2847
      %2857 = vst.msk [vmem:[%s2850 + $0x30] sm:$0xff] %vm362, %v2848
      %2858 = vst.msk [vmem:[%s2850 + $0x38] sm:$0xff] %vm362, %v2849
      %2859 = vst.msk [vmem:[%s669 + $0x2] sm:$0xff] %vm362, %v619
      %2860 = vst.msk [vmem:[%s669 + $0x12] sm:$0xff] %vm362, %v620
      %2861 = vst.msk [vmem:[%s669 + $0x22] sm:$0xff] %vm362, %v621
      %2862 = vst.msk [vmem:[%s669 + $0x32] sm:$0xff] %vm362, %v622
      %2863 = vst.msk [vmem:[%s669 + $0x42] sm:$0xff] %vm362, %v623
      %2864 = vst.msk [vmem:[%s669 + $0x52] sm:$0xff] %vm362, %v624
      %2865 = vst.msk [vmem:[%s669 + $0x62] sm:$0xff] %vm362, %v625
      %2866 = vst.msk [vmem:[%s669 + $0x72] sm:$0xff] %vm362, %v626
      %v2867 = vld [vmem:[#allocation3] sm:$0xff]
      %v2868 = vld [vmem:[#allocation3 + $0x10] sm:$0xff]
      %v2869 = vld [vmem:[#allocation3 + $0x20] sm:$0xff]
      %v2870 = vld [vmem:[#allocation3 + $0x30] sm:$0xff]
      %v2871 = vld [vmem:[#allocation3 + $0x40] sm:$0xff]
      %v2872 = vld [vmem:[#allocation3 + $0x50] sm:$0xff]
      %v2873 = vld [vmem:[#allocation3 + $0x60] sm:$0xff]
      %v2874 = vld [vmem:[#allocation3 + $0x70] sm:$0xff]
      %v2875 = vlaneseq
      %v2876 = vshrl.u32 %v2875, 7
      %v2877 = vsub.s32 0, %v2876
      %v2878 = vrot.slane %v639, %v2877
      %v2879 = vmul.f32 %v2867, %v2878
      %v2880 = vmul.f32 %v2868, %v2878
      %v2881 = vmul.f32 %v2869, %v2878
      %v2882 = vmul.f32 %v2870, %v2878
      %v2883 = vmul.f32 %v2871, %v2878
      %v2884 = vmul.f32 %v2872, %v2878
      %v2885 = vmul.f32 %v2873, %v2878
      %v2886 = vmul.f32 %v2874, %v2878
      %v2887 = vadd.f32 %v2879, 0.0
      %v2888 = vadd.f32 %v2880, 0.0
      %v2889 = vadd.f32 %v2881, 0.0
      %v2890 = vadd.f32 %v2882, 0.0
      %v2891 = vadd.f32 %v2883, 0.0
      %v2892 = vadd.f32 %v2884, 0.0
      %v2893 = vadd.f32 %v2885, 0.0
      %v2894 = vadd.f32 %v2886, 0.0
      %v2895 = vld [vmem:[#allocation3 + $0x1] sm:$0xff]
      %v2896 = vld [vmem:[#allocation3 + $0x11] sm:$0xff]
      %v2897 = vld [vmem:[#allocation3 + $0x21] sm:$0xff]
      %v2898 = vld [vmem:[#allocation3 + $0x31] sm:$0xff]
      %v2899 = vld [vmem:[#allocation3 + $0x41] sm:$0xff]
      %v2900 = vld [vmem:[#allocation3 + $0x51] sm:$0xff]
      %v2901 = vld [vmem:[#allocation3 + $0x61] sm:$0xff]
      %v2902 = vld [vmem:[#allocation3 + $0x71] sm:$0xff]
      %v2903 = vlaneseq
      %v2904 = vshrl.u32 %v2903, 7
      %v2905 = vsub.s32 1, %v2904
      %v2906 = vrot.slane %v639, %v2905
      %v2907 = vmul.f32 %v2895, %v2906
      %v2908 = vmul.f32 %v2896, %v2906
      %v2909 = vmul.f32 %v2897, %v2906
      %v2910 = vmul.f32 %v2898, %v2906
      %v2911 = vmul.f32 %v2899, %v2906
      %v2912 = vmul.f32 %v2900, %v2906
      %v2913 = vmul.f32 %v2901, %v2906
      %v2914 = vmul.f32 %v2902, %v2906
      %v2915 = vadd.f32 %v2887, %v2907
      %v2916 = vadd.f32 %v2888, %v2908
      %v2917 = vadd.f32 %v2889, %v2909
      %v2918 = vadd.f32 %v2890, %v2910
      %v2919 = vadd.f32 %v2891, %v2911
      %v2920 = vadd.f32 %v2892, %v2912
      %v2921 = vadd.f32 %v2893, %v2913
      %v2922 = vadd.f32 %v2894, %v2914
      %v2923 = vld [vmem:[#allocation3 + $0x2] sm:$0xff]
      %v2924 = vld [vmem:[#allocation3 + $0x12] sm:$0xff]
      %v2925 = vld [vmem:[#allocation3 + $0x22] sm:$0xff]
      %v2926 = vld [vmem:[#allocation3 + $0x32] sm:$0xff]
      %v2927 = vld [vmem:[#allocation3 + $0x42] sm:$0xff]
      %v2928 = vld [vmem:[#allocation3 + $0x52] sm:$0xff]
      %v2929 = vld [vmem:[#allocation3 + $0x62] sm:$0xff]
      %v2930 = vld [vmem:[#allocation3 + $0x72] sm:$0xff]
      %v2931 = vlaneseq
      %v2932 = vshrl.u32 %v2931, 7
      %v2933 = vsub.s32 2, %v2932
      %v2934 = vrot.slane %v639, %v2933
      %v2935 = vmul.f32 %v2923, %v2934
      %v2936 = vmul.f32 %v2924, %v2934
      %v2937 = vmul.f32 %v2925, %v2934
      %v2938 = vmul.f32 %v2926, %v2934
      %v2939 = vmul.f32 %v2927, %v2934
      %v2940 = vmul.f32 %v2928, %v2934
      %v2941 = vmul.f32 %v2929, %v2934
      %v2942 = vmul.f32 %v2930, %v2934
      %v2943 = vadd.f32 %v2915, %v2935
      %v2944 = vadd.f32 %v2916, %v2936
      %v2945 = vadd.f32 %v2917, %v2937
      %v2946 = vadd.f32 %v2918, %v2938
      %v2947 = vadd.f32 %v2919, %v2939
      %v2948 = vadd.f32 %v2920, %v2940
      %v2949 = vadd.f32 %v2921, %v2941
      %v2950 = vadd.f32 %v2922, %v2942
      %v2951 = vld [vmem:[#allocation3 + $0x3] sm:$0xff]
      %v2952 = vld [vmem:[#allocation3 + $0x13] sm:$0xff]
      %v2953 = vld [vmem:[#allocation3 + $0x23] sm:$0xff]
      %v2954 = vld [vmem:[#allocation3 + $0x33] sm:$0xff]
      %v2955 = vld [vmem:[#allocation3 + $0x43] sm:$0xff]
      %v2956 = vld [vmem:[#allocation3 + $0x53] sm:$0xff]
      %v2957 = vld [vmem:[#allocation3 + $0x63] sm:$0xff]
      %v2958 = vld [vmem:[#allocation3 + $0x73] sm:$0xff]
      %v2959 = vlaneseq
      %v2960 = vshrl.u32 %v2959, 7
      %v2961 = vsub.s32 3, %v2960
      %v2962 = vrot.slane %v639, %v2961
      %v2963 = vmul.f32 %v2951, %v2962
      %v2964 = vmul.f32 %v2952, %v2962
      %v2965 = vmul.f32 %v2953, %v2962
      %v2966 = vmul.f32 %v2954, %v2962
      %v2967 = vmul.f32 %v2955, %v2962
      %v2968 = vmul.f32 %v2956, %v2962
      %v2969 = vmul.f32 %v2957, %v2962
      %v2970 = vmul.f32 %v2958, %v2962
      %v2971 = vadd.f32 %v2943, %v2963
      %v2972 = vadd.f32 %v2944, %v2964
      %v2973 = vadd.f32 %v2945, %v2965
      %v2974 = vadd.f32 %v2946, %v2966
      %v2975 = vadd.f32 %v2947, %v2967
      %v2976 = vadd.f32 %v2948, %v2968
      %v2977 = vadd.f32 %v2949, %v2969
      %v2978 = vadd.f32 %v2950, %v2970
      %v2979 = vld [vmem:[#allocation3 + $0x4] sm:$0xff]
      %v2980 = vld [vmem:[#allocation3 + $0x14] sm:$0xff]
      %v2981 = vld [vmem:[#allocation3 + $0x24] sm:$0xff]
      %v2982 = vld [vmem:[#allocation3 + $0x34] sm:$0xff]
      %v2983 = vld [vmem:[#allocation3 + $0x44] sm:$0xff]
      %v2984 = vld [vmem:[#allocation3 + $0x54] sm:$0xff]
      %v2985 = vld [vmem:[#allocation3 + $0x64] sm:$0xff]
      %v2986 = vld [vmem:[#allocation3 + $0x74] sm:$0xff]
      %v2987 = vlaneseq
      %v2988 = vshrl.u32 %v2987, 7
      %v2989 = vsub.s32 4, %v2988
      %v2990 = vrot.slane %v639, %v2989
      %v2991 = vmul.f32 %v2979, %v2990
      %v2992 = vmul.f32 %v2980, %v2990
      %v2993 = vmul.f32 %v2981, %v2990
      %v2994 = vmul.f32 %v2982, %v2990
      %v2995 = vmul.f32 %v2983, %v2990
      %v2996 = vmul.f32 %v2984, %v2990
      %v2997 = vmul.f32 %v2985, %v2990
      %v2998 = vmul.f32 %v2986, %v2990
      %v2999 = vadd.f32 %v2971, %v2991
      %v3000 = vadd.f32 %v2972, %v2992
      %v3001 = vadd.f32 %v2973, %v2993
      %v3002 = vadd.f32 %v2974, %v2994
      %v3003 = vadd.f32 %v2975, %v2995
      %v3004 = vadd.f32 %v2976, %v2996
      %v3005 = vadd.f32 %v2977, %v2997
      %v3006 = vadd.f32 %v2978, %v2998
      %v3007 = vld [vmem:[%s818] sm:$0xff]
      %v3008 = vld [vmem:[%s818 + $0x10] sm:$0xff]
      %v3009 = vld [vmem:[%s818 + $0x20] sm:$0xff]
      %v3010 = vld [vmem:[%s818 + $0x30] sm:$0xff]
      %v3011 = vld [vmem:[%s818 + $0x40] sm:$0xff]
      %v3012 = vld [vmem:[%s818 + $0x50] sm:$0xff]
      %v3013 = vld [vmem:[%s818 + $0x60] sm:$0xff]
      %v3014 = vld [vmem:[%s818 + $0x70] sm:$0xff]
      %v3015 = vlaneseq
      %v3016 = vshrl.u32 %v3015, 7
      %v3017 = vsub.s32 5, %v3016
      %v3018 = vrot.slane %v639, %v3017
      %v3019 = vmul.f32 %v3007, %v3018
      %v3020 = vmul.f32 %v3008, %v3018
      %v3021 = vmul.f32 %v3009, %v3018
      %v3022 = vmul.f32 %v3010, %v3018
      %v3023 = vmul.f32 %v3011, %v3018
      %v3024 = vmul.f32 %v3012, %v3018
      %v3025 = vmul.f32 %v3013, %v3018
      %v3026 = vmul.f32 %v3014, %v3018
      %v3027 = vadd.f32 %v2999, %v3019
      %v3028 = vadd.f32 %v3000, %v3020
      %v3029 = vadd.f32 %v3001, %v3021
      %v3030 = vadd.f32 %v3002, %v3022
      %v3031 = vadd.f32 %v3003, %v3023
      %v3032 = vadd.f32 %v3004, %v3024
      %v3033 = vadd.f32 %v3005, %v3025
      %v3034 = vadd.f32 %v3006, %v3026
      %v3035 = vld [vmem:[%s818 + $0x1] sm:$0xff]
      %v3036 = vld [vmem:[%s818 + $0x11] sm:$0xff]
      %v3037 = vld [vmem:[%s818 + $0x21] sm:$0xff]
      %v3038 = vld [vmem:[%s818 + $0x31] sm:$0xff]
      %v3039 = vld [vmem:[%s818 + $0x41] sm:$0xff]
      %v3040 = vld [vmem:[%s818 + $0x51] sm:$0xff]
      %v3041 = vld [vmem:[%s818 + $0x61] sm:$0xff]
      %v3042 = vld [vmem:[%s818 + $0x71] sm:$0xff]
      %v3043 = vlaneseq
      %v3044 = vshrl.u32 %v3043, 7
      %v3045 = vsub.s32 6, %v3044
      %v3046 = vrot.slane %v639, %v3045
      %v3047 = vmul.f32 %v3035, %v3046
      %v3048 = vmul.f32 %v3036, %v3046
      %v3049 = vmul.f32 %v3037, %v3046
      %v3050 = vmul.f32 %v3038, %v3046
      %v3051 = vmul.f32 %v3039, %v3046
      %v3052 = vmul.f32 %v3040, %v3046
      %v3053 = vmul.f32 %v3041, %v3046
      %v3054 = vmul.f32 %v3042, %v3046
      %v3055 = vadd.f32 %v3027, %v3047
      %v3056 = vadd.f32 %v3028, %v3048
      %v3057 = vadd.f32 %v3029, %v3049
      %v3058 = vadd.f32 %v3030, %v3050
      %v3059 = vadd.f32 %v3031, %v3051
      %v3060 = vadd.f32 %v3032, %v3052
      %v3061 = vadd.f32 %v3033, %v3053
      %v3062 = vadd.f32 %v3034, %v3054
      %v3063 = vld [vmem:[%s818 + $0x2] sm:$0xff]
      %v3064 = vld [vmem:[%s818 + $0x12] sm:$0xff]
      %v3065 = vld [vmem:[%s818 + $0x22] sm:$0xff]
      %v3066 = vld [vmem:[%s818 + $0x32] sm:$0xff]
      %v3067 = vld [vmem:[%s818 + $0x42] sm:$0xff]
      %v3068 = vld [vmem:[%s818 + $0x52] sm:$0xff]
      %v3069 = vld [vmem:[%s818 + $0x62] sm:$0xff]
      %v3070 = vld [vmem:[%s818 + $0x72] sm:$0xff]
      %v3071 = vlaneseq
      %v3072 = vshrl.u32 %v3071, 7
      %v3073 = vsub.s32 7, %v3072
      %v3074 = vrot.slane %v639, %v3073
      %v3075 = vmul.f32 %v3063, %v3074
      %v3076 = vmul.f32 %v3064, %v3074
      %v3077 = vmul.f32 %v3065, %v3074
      %v3078 = vmul.f32 %v3066, %v3074
      %v3079 = vmul.f32 %v3067, %v3074
      %v3080 = vmul.f32 %v3068, %v3074
      %v3081 = vmul.f32 %v3069, %v3074
      %v3082 = vmul.f32 %v3070, %v3074
      %v3083 = vadd.f32 %v3055, %v3075
      %v3084 = vadd.f32 %v3056, %v3076
      %v3085 = vadd.f32 %v3057, %v3077
      %v3086 = vadd.f32 %v3058, %v3078
      %v3087 = vadd.f32 %v3059, %v3079
      %v3088 = vadd.f32 %v3060, %v3080
      %v3089 = vadd.f32 %v3061, %v3081
      %v3090 = vadd.f32 %v3062, %v3082
      %v3091 = vld [vmem:[%s818 + $0x3] sm:$0xff]
      %v3092 = vld [vmem:[%s818 + $0x13] sm:$0xff]
      %v3093 = vld [vmem:[%s818 + $0x23] sm:$0xff]
      %v3094 = vld [vmem:[%s818 + $0x33] sm:$0xff]
      %v3095 = vld [vmem:[%s818 + $0x43] sm:$0xff]
      %v3096 = vld [vmem:[%s818 + $0x53] sm:$0xff]
      %v3097 = vld [vmem:[%s818 + $0x63] sm:$0xff]
      %v3098 = vld [vmem:[%s818 + $0x73] sm:$0xff]
      %v3099 = vlaneseq
      %v3100 = vshrl.u32 %v3099, 7
      %v3101 = vsub.s32 0, %v3100
      %v3102 = vrot.slane %v640, %v3101
      %v3103 = vmul.f32 %v3091, %v3102
      %v3104 = vmul.f32 %v3092, %v3102
      %v3105 = vmul.f32 %v3093, %v3102
      %v3106 = vmul.f32 %v3094, %v3102
      %v3107 = vmul.f32 %v3095, %v3102
      %v3108 = vmul.f32 %v3096, %v3102
      %v3109 = vmul.f32 %v3097, %v3102
      %v3110 = vmul.f32 %v3098, %v3102
      %v3111 = vadd.f32 %v3083, %v3103
      %v3112 = vadd.f32 %v3084, %v3104
      %v3113 = vadd.f32 %v3085, %v3105
      %v3114 = vadd.f32 %v3086, %v3106
      %v3115 = vadd.f32 %v3087, %v3107
      %v3116 = vadd.f32 %v3088, %v3108
      %v3117 = vadd.f32 %v3089, %v3109
      %v3118 = vadd.f32 %v3090, %v3110
      %v3119 = vld [vmem:[%s818 + $0x4] sm:$0xff]
      %v3120 = vld [vmem:[%s818 + $0x14] sm:$0xff]
      %v3121 = vld [vmem:[%s818 + $0x24] sm:$0xff]
      %v3122 = vld [vmem:[%s818 + $0x34] sm:$0xff]
      %v3123 = vld [vmem:[%s818 + $0x44] sm:$0xff]
      %v3124 = vld [vmem:[%s818 + $0x54] sm:$0xff]
      %v3125 = vld [vmem:[%s818 + $0x64] sm:$0xff]
      %v3126 = vld [vmem:[%s818 + $0x74] sm:$0xff]
      %v3127 = vlaneseq
      %v3128 = vshrl.u32 %v3127, 7
      %v3129 = vsub.s32 1, %v3128
      %v3130 = vrot.slane %v640, %v3129
      %v3131 = vmul.f32 %v3119, %v3130
      %v3132 = vmul.f32 %v3120, %v3130
      %v3133 = vmul.f32 %v3121, %v3130
      %v3134 = vmul.f32 %v3122, %v3130
      %v3135 = vmul.f32 %v3123, %v3130
      %v3136 = vmul.f32 %v3124, %v3130
      %v3137 = vmul.f32 %v3125, %v3130
      %v3138 = vmul.f32 %v3126, %v3130
      %v3139 = vadd.f32 %v3111, %v3131
      %v3140 = vadd.f32 %v3112, %v3132
      %v3141 = vadd.f32 %v3113, %v3133
      %v3142 = vadd.f32 %v3114, %v3134
      %v3143 = vadd.f32 %v3115, %v3135
      %v3144 = vadd.f32 %v3116, %v3136
      %v3145 = vadd.f32 %v3117, %v3137
      %v3146 = vadd.f32 %v3118, %v3138
      %v3147 = vld [vmem:[%s669] sm:$0xff]
      %v3148 = vld [vmem:[%s669 + $0x10] sm:$0xff]
      %v3149 = vld [vmem:[%s669 + $0x20] sm:$0xff]
      %v3150 = vld [vmem:[%s669 + $0x30] sm:$0xff]
      %v3151 = vld [vmem:[%s669 + $0x40] sm:$0xff]
      %v3152 = vld [vmem:[%s669 + $0x50] sm:$0xff]
      %v3153 = vld [vmem:[%s669 + $0x60] sm:$0xff]
      %v3154 = vld [vmem:[%s669 + $0x70] sm:$0xff]
      %v3155 = vlaneseq
      %v3156 = vshrl.u32 %v3155, 7
      %v3157 = vsub.s32 2, %v3156
      %v3158 = vrot.slane %v640, %v3157
      %v3159 = vmul.f32 %v3147, %v3158
      %v3160 = vmul.f32 %v3148, %v3158
      %v3161 = vmul.f32 %v3149, %v3158
      %v3162 = vmul.f32 %v3150, %v3158
      %v3163 = vmul.f32 %v3151, %v3158
      %v3164 = vmul.f32 %v3152, %v3158
      %v3165 = vmul.f32 %v3153, %v3158
      %v3166 = vmul.f32 %v3154, %v3158
      %v3167 = vadd.f32 %v3139, %v3159
      %v3168 = vadd.f32 %v3140, %v3160
      %v3169 = vadd.f32 %v3141, %v3161
      %v3170 = vadd.f32 %v3142, %v3162
      %v3171 = vadd.f32 %v3143, %v3163
      %v3172 = vadd.f32 %v3144, %v3164
      %v3173 = vadd.f32 %v3145, %v3165
      %v3174 = vadd.f32 %v3146, %v3166
      %v3175 = vld [vmem:[%s669 + $0x1] sm:$0xff]
      %v3176 = vld [vmem:[%s669 + $0x11] sm:$0xff]
      %v3177 = vld [vmem:[%s669 + $0x21] sm:$0xff]
      %v3178 = vld [vmem:[%s669 + $0x31] sm:$0xff]
      %v3179 = vld [vmem:[%s669 + $0x41] sm:$0xff]
      %v3180 = vld [vmem:[%s669 + $0x51] sm:$0xff]
      %v3181 = vld [vmem:[%s669 + $0x61] sm:$0xff]
      %v3182 = vld [vmem:[%s669 + $0x71] sm:$0xff]
      %v3183 = vlaneseq
      %v3184 = vshrl.u32 %v3183, 7
      %v3185 = vsub.s32 3, %v3184
      %v3186 = vrot.slane %v640, %v3185
      %v3187 = vmul.f32 %v3175, %v3186
      %v3188 = vmul.f32 %v3176, %v3186
      %v3189 = vmul.f32 %v3177, %v3186
      %v3190 = vmul.f32 %v3178, %v3186
      %v3191 = vmul.f32 %v3179, %v3186
      %v3192 = vmul.f32 %v3180, %v3186
      %v3193 = vmul.f32 %v3181, %v3186
      %v3194 = vmul.f32 %v3182, %v3186
      %v3195 = vadd.f32 %v3167, %v3187
      %v3196 = vadd.f32 %v3168, %v3188
      %v3197 = vadd.f32 %v3169, %v3189
      %v3198 = vadd.f32 %v3170, %v3190
      %v3199 = vadd.f32 %v3171, %v3191
      %v3200 = vadd.f32 %v3172, %v3192
      %v3201 = vadd.f32 %v3173, %v3193
      %v3202 = vadd.f32 %v3174, %v3194
      %v3203 = vld [vmem:[%s669 + $0x2] sm:$0xff]
      %v3204 = vld [vmem:[%s669 + $0x12] sm:$0xff]
      %v3205 = vld [vmem:[%s669 + $0x22] sm:$0xff]
      %v3206 = vld [vmem:[%s669 + $0x32] sm:$0xff]
      %v3207 = vld [vmem:[%s669 + $0x42] sm:$0xff]
      %v3208 = vld [vmem:[%s669 + $0x52] sm:$0xff]
      %v3209 = vld [vmem:[%s669 + $0x62] sm:$0xff]
      %v3210 = vld [vmem:[%s669 + $0x72] sm:$0xff]
      %v3211 = vlaneseq
      %v3212 = vshrl.u32 %v3211, 7
      %v3213 = vsub.s32 4, %v3212
      %v3214 = vrot.slane %v640, %v3213
      %v3215 = vmul.f32 %v3203, %v3214
      %v3216 = vmul.f32 %v3204, %v3214
      %v3217 = vmul.f32 %v3205, %v3214
      %v3218 = vmul.f32 %v3206, %v3214
      %v3219 = vmul.f32 %v3207, %v3214
      %v3220 = vmul.f32 %v3208, %v3214
      %v3221 = vmul.f32 %v3209, %v3214
      %v3222 = vmul.f32 %v3210, %v3214
      %v3223 = vadd.f32 %v3195, %v3215
      %v3224 = vadd.f32 %v3196, %v3216
      %v3225 = vadd.f32 %v3197, %v3217
      %v3226 = vadd.f32 %v3198, %v3218
      %v3227 = vadd.f32 %v3199, %v3219
      %v3228 = vadd.f32 %v3200, %v3220
      %v3229 = vadd.f32 %v3201, %v3221
      %v3230 = vadd.f32 %v3202, %v3222
      %v3231 = vld [vmem:[%s669 + $0x3] sm:$0xff]
      %v3232 = vld [vmem:[%s669 + $0x13] sm:$0xff]
      %v3233 = vld [vmem:[%s669 + $0x23] sm:$0xff]
      %v3234 = vld [vmem:[%s669 + $0x33] sm:$0xff]
      %v3235 = vld [vmem:[%s669 + $0x43] sm:$0xff]
      %v3236 = vld [vmem:[%s669 + $0x53] sm:$0xff]
      %v3237 = vld [vmem:[%s669 + $0x63] sm:$0xff]
      %v3238 = vld [vmem:[%s669 + $0x73] sm:$0xff]
      %v3239 = vlaneseq
      %v3240 = vshrl.u32 %v3239, 7
      %v3241 = vsub.s32 5, %v3240
      %v3242 = vrot.slane %v640, %v3241
      %v3243 = vmul.f32 %v3231, %v3242
      %v3244 = vmul.f32 %v3232, %v3242
      %v3245 = vmul.f32 %v3233, %v3242
      %v3246 = vmul.f32 %v3234, %v3242
      %v3247 = vmul.f32 %v3235, %v3242
      %v3248 = vmul.f32 %v3236, %v3242
      %v3249 = vmul.f32 %v3237, %v3242
      %v3250 = vmul.f32 %v3238, %v3242
      %v3251 = vadd.f32 %v3223, %v3243
      %v3252 = vadd.f32 %v3224, %v3244
      %v3253 = vadd.f32 %v3225, %v3245
      %v3254 = vadd.f32 %v3226, %v3246
      %v3255 = vadd.f32 %v3227, %v3247
      %v3256 = vadd.f32 %v3228, %v3248
      %v3257 = vadd.f32 %v3229, %v3249
      %v3258 = vadd.f32 %v3230, %v3250
      %v3259 = vld [vmem:[%s669 + $0x4] sm:$0xff]
      %v3260 = vld [vmem:[%s669 + $0x14] sm:$0xff]
      %v3261 = vld [vmem:[%s669 + $0x24] sm:$0xff]
      %v3262 = vld [vmem:[%s669 + $0x34] sm:$0xff]
      %v3263 = vld [vmem:[%s669 + $0x44] sm:$0xff]
      %v3264 = vld [vmem:[%s669 + $0x54] sm:$0xff]
      %v3265 = vld [vmem:[%s669 + $0x64] sm:$0xff]
      %v3266 = vld [vmem:[%s669 + $0x74] sm:$0xff]
      %v3267 = vlaneseq
      %v3268 = vshrl.u32 %v3267, 7
      %v3269 = vsub.s32 6, %v3268
      %v3270 = vrot.slane %v640, %v3269
      %v3271 = vmul.f32 %v3259, %v3270
      %v3272 = vmul.f32 %v3260, %v3270
      %v3273 = vmul.f32 %v3261, %v3270
      %v3274 = vmul.f32 %v3262, %v3270
      %v3275 = vmul.f32 %v3263, %v3270
      %v3276 = vmul.f32 %v3264, %v3270
      %v3277 = vmul.f32 %v3265, %v3270
      %v3278 = vmul.f32 %v3266, %v3270
      %v3279 = vadd.f32 %v3251, %v3271
      %v3280 = vadd.f32 %v3252, %v3272
      %v3281 = vadd.f32 %v3253, %v3273
      %v3282 = vadd.f32 %v3254, %v3274
      %v3283 = vadd.f32 %v3255, %v3275
      %v3284 = vadd.f32 %v3256, %v3276
      %v3285 = vadd.f32 %v3257, %v3277
      %v3286 = vadd.f32 %v3258, %v3278
      %v3287 = vld [vmem:[%s1099] sm:$0xff]
      %v3288 = vld [vmem:[%s1099 + $0x10] sm:$0xff]
      %v3289 = vld [vmem:[%s1099 + $0x20] sm:$0xff]
      %v3290 = vld [vmem:[%s1099 + $0x30] sm:$0xff]
      %v3291 = vld [vmem:[%s1099 + $0x40] sm:$0xff]
      %v3292 = vld [vmem:[%s1099 + $0x50] sm:$0xff]
      %v3293 = vld [vmem:[%s1099 + $0x60] sm:$0xff]
      %v3294 = vld [vmem:[%s1099 + $0x70] sm:$0xff]
      %v3295 = vlaneseq
      %v3296 = vshrl.u32 %v3295, 7
      %v3297 = vsub.s32 7, %v3296
      %v3298 = vrot.slane %v640, %v3297
      %v3299 = vmul.f32 %v3287, %v3298
      %v3300 = vmul.f32 %v3288, %v3298
      %v3301 = vmul.f32 %v3289, %v3298
      %v3302 = vmul.f32 %v3290, %v3298
      %v3303 = vmul.f32 %v3291, %v3298
      %v3304 = vmul.f32 %v3292, %v3298
      %v3305 = vmul.f32 %v3293, %v3298
      %v3306 = vmul.f32 %v3294, %v3298
      %v3307 = vadd.f32 %v3279, %v3299
      %v3308 = vadd.f32 %v3280, %v3300
      %v3309 = vadd.f32 %v3281, %v3301
      %v3310 = vadd.f32 %v3282, %v3302
      %v3311 = vadd.f32 %v3283, %v3303
      %v3312 = vadd.f32 %v3284, %v3304
      %v3313 = vadd.f32 %v3285, %v3305
      %v3314 = vadd.f32 %v3286, %v3306
      %v3315 = vld [vmem:[%s1099 + $0x1] sm:$0xff]
      %v3316 = vld [vmem:[%s1099 + $0x11] sm:$0xff]
      %v3317 = vld [vmem:[%s1099 + $0x21] sm:$0xff]
      %v3318 = vld [vmem:[%s1099 + $0x31] sm:$0xff]
      %v3319 = vld [vmem:[%s1099 + $0x41] sm:$0xff]
      %v3320 = vld [vmem:[%s1099 + $0x51] sm:$0xff]
      %v3321 = vld [vmem:[%s1099 + $0x61] sm:$0xff]
      %v3322 = vld [vmem:[%s1099 + $0x71] sm:$0xff]
      %v3323 = vlaneseq
      %v3324 = vshrl.u32 %v3323, 7
      %v3325 = vsub.s32 0, %v3324
      %v3326 = vrot.slane %v641, %v3325
      %v3327 = vmul.f32 %v3315, %v3326
      %v3328 = vmul.f32 %v3316, %v3326
      %v3329 = vmul.f32 %v3317, %v3326
      %v3330 = vmul.f32 %v3318, %v3326
      %v3331 = vmul.f32 %v3319, %v3326
      %v3332 = vmul.f32 %v3320, %v3326
      %v3333 = vmul.f32 %v3321, %v3326
      %v3334 = vmul.f32 %v3322, %v3326
      %v3335 = vadd.f32 %v3307, %v3327
      %v3336 = vadd.f32 %v3308, %v3328
      %v3337 = vadd.f32 %v3309, %v3329
      %v3338 = vadd.f32 %v3310, %v3330
      %v3339 = vadd.f32 %v3311, %v3331
      %v3340 = vadd.f32 %v3312, %v3332
      %v3341 = vadd.f32 %v3313, %v3333
      %v3342 = vadd.f32 %v3314, %v3334
      %v3343 = vld [vmem:[%s1099 + $0x2] sm:$0xff]
      %v3344 = vld [vmem:[%s1099 + $0x12] sm:$0xff]
      %v3345 = vld [vmem:[%s1099 + $0x22] sm:$0xff]
      %v3346 = vld [vmem:[%s1099 + $0x32] sm:$0xff]
      %v3347 = vld [vmem:[%s1099 + $0x42] sm:$0xff]
      %v3348 = vld [vmem:[%s1099 + $0x52] sm:$0xff]
      %v3349 = vld [vmem:[%s1099 + $0x62] sm:$0xff]
      %v3350 = vld [vmem:[%s1099 + $0x72] sm:$0xff]
      %v3351 = vlaneseq
      %v3352 = vshrl.u32 %v3351, 7
      %v3353 = vsub.s32 1, %v3352
      %v3354 = vrot.slane %v641, %v3353
      %v3355 = vmul.f32 %v3343, %v3354
      %v3356 = vmul.f32 %v3344, %v3354
      %v3357 = vmul.f32 %v3345, %v3354
      %v3358 = vmul.f32 %v3346, %v3354
      %v3359 = vmul.f32 %v3347, %v3354
      %v3360 = vmul.f32 %v3348, %v3354
      %v3361 = vmul.f32 %v3349, %v3354
      %v3362 = vmul.f32 %v3350, %v3354
      %v3363 = vadd.f32 %v3335, %v3355
      %v3364 = vadd.f32 %v3336, %v3356
      %v3365 = vadd.f32 %v3337, %v3357
      %v3366 = vadd.f32 %v3338, %v3358
      %v3367 = vadd.f32 %v3339, %v3359
      %v3368 = vadd.f32 %v3340, %v3360
      %v3369 = vadd.f32 %v3341, %v3361
      %v3370 = vadd.f32 %v3342, %v3362
      %v3371 = vld [vmem:[%s1099 + $0x3] sm:$0xff]
      %v3372 = vld [vmem:[%s1099 + $0x13] sm:$0xff]
      %v3373 = vld [vmem:[%s1099 + $0x23] sm:$0xff]
      %v3374 = vld [vmem:[%s1099 + $0x33] sm:$0xff]
      %v3375 = vld [vmem:[%s1099 + $0x43] sm:$0xff]
      %v3376 = vld [vmem:[%s1099 + $0x53] sm:$0xff]
      %v3377 = vld [vmem:[%s1099 + $0x63] sm:$0xff]
      %v3378 = vld [vmem:[%s1099 + $0x73] sm:$0xff]
      %v3379 = vlaneseq
      %v3380 = vshrl.u32 %v3379, 7
      %v3381 = vsub.s32 2, %v3380
      %v3382 = vrot.slane %v641, %v3381
      %v3383 = vmul.f32 %v3371, %v3382
      %v3384 = vmul.f32 %v3372, %v3382
      %v3385 = vmul.f32 %v3373, %v3382
      %v3386 = vmul.f32 %v3374, %v3382
      %v3387 = vmul.f32 %v3375, %v3382
      %v3388 = vmul.f32 %v3376, %v3382
      %v3389 = vmul.f32 %v3377, %v3382
      %v3390 = vmul.f32 %v3378, %v3382
      %v3391 = vadd.f32 %v3363, %v3383
      %v3392 = vadd.f32 %v3364, %v3384
      %v3393 = vadd.f32 %v3365, %v3385
      %v3394 = vadd.f32 %v3366, %v3386
      %v3395 = vadd.f32 %v3367, %v3387
      %v3396 = vadd.f32 %v3368, %v3388
      %v3397 = vadd.f32 %v3369, %v3389
      %v3398 = vadd.f32 %v3370, %v3390
      %v3399 = vld [vmem:[%s1099 + $0x4] sm:$0xff]
      %v3400 = vld [vmem:[%s1099 + $0x14] sm:$0xff]
      %v3401 = vld [vmem:[%s1099 + $0x24] sm:$0xff]
      %v3402 = vld [vmem:[%s1099 + $0x34] sm:$0xff]
      %v3403 = vld [vmem:[%s1099 + $0x44] sm:$0xff]
      %v3404 = vld [vmem:[%s1099 + $0x54] sm:$0xff]
      %v3405 = vld [vmem:[%s1099 + $0x64] sm:$0xff]
      %v3406 = vld [vmem:[%s1099 + $0x74] sm:$0xff]
      %v3407 = vlaneseq
      %v3408 = vshrl.u32 %v3407, 7
      %v3409 = vsub.s32 3, %v3408
      %v3410 = vrot.slane %v641, %v3409
      %v3411 = vmul.f32 %v3399, %v3410
      %v3412 = vmul.f32 %v3400, %v3410
      %v3413 = vmul.f32 %v3401, %v3410
      %v3414 = vmul.f32 %v3402, %v3410
      %v3415 = vmul.f32 %v3403, %v3410
      %v3416 = vmul.f32 %v3404, %v3410
      %v3417 = vmul.f32 %v3405, %v3410
      %v3418 = vmul.f32 %v3406, %v3410
      %v3419 = vadd.f32 %v3391, %v3411
      %v3420 = vadd.f32 %v3392, %v3412
      %v3421 = vadd.f32 %v3393, %v3413
      %v3422 = vadd.f32 %v3394, %v3414
      %v3423 = vadd.f32 %v3395, %v3415
      %v3424 = vadd.f32 %v3396, %v3416
      %v3425 = vadd.f32 %v3397, %v3417
      %v3426 = vadd.f32 %v3398, %v3418
      %v3427 = vld [vmem:[%s1240] sm:$0xff]
      %v3428 = vld [vmem:[%s1240 + $0x10] sm:$0xff]
      %v3429 = vld [vmem:[%s1240 + $0x20] sm:$0xff]
      %v3430 = vld [vmem:[%s1240 + $0x30] sm:$0xff]
      %v3431 = vld [vmem:[%s1240 + $0x40] sm:$0xff]
      %v3432 = vld [vmem:[%s1240 + $0x50] sm:$0xff]
      %v3433 = vld [vmem:[%s1240 + $0x60] sm:$0xff]
      %v3434 = vld [vmem:[%s1240 + $0x70] sm:$0xff]
      %v3435 = vlaneseq
      %v3436 = vshrl.u32 %v3435, 7
      %v3437 = vsub.s32 4, %v3436
      %v3438 = vrot.slane %v641, %v3437
      %v3439 = vmul.f32 %v3427, %v3438
      %v3440 = vmul.f32 %v3428, %v3438
      %v3441 = vmul.f32 %v3429, %v3438
      %v3442 = vmul.f32 %v3430, %v3438
      %v3443 = vmul.f32 %v3431, %v3438
      %v3444 = vmul.f32 %v3432, %v3438
      %v3445 = vmul.f32 %v3433, %v3438
      %v3446 = vmul.f32 %v3434, %v3438
      %v3447 = vadd.f32 %v3419, %v3439
      %v3448 = vadd.f32 %v3420, %v3440
      %v3449 = vadd.f32 %v3421, %v3441
      %v3450 = vadd.f32 %v3422, %v3442
      %v3451 = vadd.f32 %v3423, %v3443
      %v3452 = vadd.f32 %v3424, %v3444
      %v3453 = vadd.f32 %v3425, %v3445
      %v3454 = vadd.f32 %v3426, %v3446
      %v3455 = vld [vmem:[%s1240 + $0x1] sm:$0xff]
      %v3456 = vld [vmem:[%s1240 + $0x11] sm:$0xff]
      %v3457 = vld [vmem:[%s1240 + $0x21] sm:$0xff]
      %v3458 = vld [vmem:[%s1240 + $0x31] sm:$0xff]
      %v3459 = vld [vmem:[%s1240 + $0x41] sm:$0xff]
      %v3460 = vld [vmem:[%s1240 + $0x51] sm:$0xff]
      %v3461 = vld [vmem:[%s1240 + $0x61] sm:$0xff]
      %v3462 = vld [vmem:[%s1240 + $0x71] sm:$0xff]
      %v3463 = vlaneseq
      %v3464 = vshrl.u32 %v3463, 7
      %v3465 = vsub.s32 5, %v3464
      %v3466 = vrot.slane %v641, %v3465
      %v3467 = vmul.f32 %v3455, %v3466
      %v3468 = vmul.f32 %v3456, %v3466
      %v3469 = vmul.f32 %v3457, %v3466
      %v3470 = vmul.f32 %v3458, %v3466
      %v3471 = vmul.f32 %v3459, %v3466
      %v3472 = vmul.f32 %v3460, %v3466
      %v3473 = vmul.f32 %v3461, %v3466
      %v3474 = vmul.f32 %v3462, %v3466
      %v3475 = vadd.f32 %v3447, %v3467
      %v3476 = vadd.f32 %v3448, %v3468
      %v3477 = vadd.f32 %v3449, %v3469
      %v3478 = vadd.f32 %v3450, %v3470
      %v3479 = vadd.f32 %v3451, %v3471
      %v3480 = vadd.f32 %v3452, %v3472
      %v3481 = vadd.f32 %v3453, %v3473
      %v3482 = vadd.f32 %v3454, %v3474
      %v3483 = vld [vmem:[%s1240 + $0x2] sm:$0xff]
      %v3484 = vld [vmem:[%s1240 + $0x12] sm:$0xff]
      %v3485 = vld [vmem:[%s1240 + $0x22] sm:$0xff]
      %v3486 = vld [vmem:[%s1240 + $0x32] sm:$0xff]
      %v3487 = vld [vmem:[%s1240 + $0x42] sm:$0xff]
      %v3488 = vld [vmem:[%s1240 + $0x52] sm:$0xff]
      %v3489 = vld [vmem:[%s1240 + $0x62] sm:$0xff]
      %v3490 = vld [vmem:[%s1240 + $0x72] sm:$0xff]
      %v3491 = vlaneseq
      %v3492 = vshrl.u32 %v3491, 7
      %v3493 = vsub.s32 6, %v3492
      %v3494 = vrot.slane %v641, %v3493
      %v3495 = vmul.f32 %v3483, %v3494
      %v3496 = vmul.f32 %v3484, %v3494
      %v3497 = vmul.f32 %v3485, %v3494
      %v3498 = vmul.f32 %v3486, %v3494
      %v3499 = vmul.f32 %v3487, %v3494
      %v3500 = vmul.f32 %v3488, %v3494
      %v3501 = vmul.f32 %v3489, %v3494
      %v3502 = vmul.f32 %v3490, %v3494
      %v3503 = vadd.f32 %v3475, %v3495
      %v3504 = vadd.f32 %v3476, %v3496
      %v3505 = vadd.f32 %v3477, %v3497
      %v3506 = vadd.f32 %v3478, %v3498
      %v3507 = vadd.f32 %v3479, %v3499
      %v3508 = vadd.f32 %v3480, %v3500
      %v3509 = vadd.f32 %v3481, %v3501
      %v3510 = vadd.f32 %v3482, %v3502
      %v3511 = vld [vmem:[%s1240 + $0x3] sm:$0xff]
      %v3512 = vld [vmem:[%s1240 + $0x13] sm:$0xff]
      %v3513 = vld [vmem:[%s1240 + $0x23] sm:$0xff]
      %v3514 = vld [vmem:[%s1240 + $0x33] sm:$0xff]
      %v3515 = vld [vmem:[%s1240 + $0x43] sm:$0xff]
      %v3516 = vld [vmem:[%s1240 + $0x53] sm:$0xff]
      %v3517 = vld [vmem:[%s1240 + $0x63] sm:$0xff]
      %v3518 = vld [vmem:[%s1240 + $0x73] sm:$0xff]
      %v3519 = vlaneseq
      %v3520 = vshrl.u32 %v3519, 7
      %v3521 = vsub.s32 7, %v3520
      %v3522 = vrot.slane %v641, %v3521
      %v3523 = vmul.f32 %v3511, %v3522
      %v3524 = vmul.f32 %v3512, %v3522
      %v3525 = vmul.f32 %v3513, %v3522
      %v3526 = vmul.f32 %v3514, %v3522
      %v3527 = vmul.f32 %v3515, %v3522
      %v3528 = vmul.f32 %v3516, %v3522
      %v3529 = vmul.f32 %v3517, %v3522
      %v3530 = vmul.f32 %v3518, %v3522
      %v3531 = vadd.f32 %v3503, %v3523
      %v3532 = vadd.f32 %v3504, %v3524
      %v3533 = vadd.f32 %v3505, %v3525
      %v3534 = vadd.f32 %v3506, %v3526
      %v3535 = vadd.f32 %v3507, %v3527
      %v3536 = vadd.f32 %v3508, %v3528
      %v3537 = vadd.f32 %v3509, %v3529
      %v3538 = vadd.f32 %v3510, %v3530
      %v3539 = vld [vmem:[%s1240 + $0x4] sm:$0xff]
      %v3540 = vld [vmem:[%s1240 + $0x14] sm:$0xff]
      %v3541 = vld [vmem:[%s1240 + $0x24] sm:$0xff]
      %v3542 = vld [vmem:[%s1240 + $0x34] sm:$0xff]
      %v3543 = vld [vmem:[%s1240 + $0x44] sm:$0xff]
      %v3544 = vld [vmem:[%s1240 + $0x54] sm:$0xff]
      %v3545 = vld [vmem:[%s1240 + $0x64] sm:$0xff]
      %v3546 = vld [vmem:[%s1240 + $0x74] sm:$0xff]
      %v3547 = vlaneseq
      %v3548 = vshrl.u32 %v3547, 7
      %v3549 = vsub.s32 0, %v3548
      %v3550 = vrot.slane %v642, %v3549
      %v3551 = vmul.f32 %v3539, %v3550
      %v3552 = vmul.f32 %v3540, %v3550
      %v3553 = vmul.f32 %v3541, %v3550
      %v3554 = vmul.f32 %v3542, %v3550
      %v3555 = vmul.f32 %v3543, %v3550
      %v3556 = vmul.f32 %v3544, %v3550
      %v3557 = vmul.f32 %v3545, %v3550
      %v3558 = vmul.f32 %v3546, %v3550
      %v3559 = vadd.f32 %v3531, %v3551
      %v3560 = vadd.f32 %v3532, %v3552
      %v3561 = vadd.f32 %v3533, %v3553
      %v3562 = vadd.f32 %v3534, %v3554
      %v3563 = vadd.f32 %v3535, %v3555
      %v3564 = vadd.f32 %v3536, %v3556
      %v3565 = vadd.f32 %v3537, %v3557
      %v3566 = vadd.f32 %v3538, %v3558
      %v3567 = vlaneseq
      %v3568 = vshrl.u32 %v3567, 7
      %v3569 = vsub.s32 3, %v3568
      %v3570 = vrot.slane %v643, %v3569
      %v3571 = vmul.f32 %v3570, %v3559
      %v3572 = vmul.f32 %v3570, %v3560
      %v3573 = vmul.f32 %v3570, %v3561
      %v3574 = vmul.f32 %v3570, %v3562
      %v3575 = vmul.f32 %v3570, %v3563
      %v3576 = vmul.f32 %v3570, %v3564
      %v3577 = vmul.f32 %v3570, %v3565
      %v3578 = vmul.f32 %v3570, %v3566
      %s3579 = scalar_lea.vmem [#allocation4], 192
      %3580 = vst.msk [vmem:[%s3579] sm:$0xff] %vm362, %v3571
      %3581 = vst.msk [vmem:[%s3579 + $0x8] sm:$0xff] %vm362, %v3572
      %3582 = vst.msk [vmem:[%s3579 + $0x10] sm:$0xff] %vm362, %v3573
      %3583 = vst.msk [vmem:[%s3579 + $0x18] sm:$0xff] %vm362, %v3574
      %3584 = vst.msk [vmem:[%s3579 + $0x20] sm:$0xff] %vm362, %v3575
      %3585 = vst.msk [vmem:[%s3579 + $0x28] sm:$0xff] %vm362, %v3576
      %3586 = vst.msk [vmem:[%s3579 + $0x30] sm:$0xff] %vm362, %v3577
      %3587 = vst.msk [vmem:[%s3579 + $0x38] sm:$0xff] %vm362, %v3578
      %v3588 = vld [vmem:[%s339] sm:$0xff]
      %v3589 = vld [vmem:[%s339 + $0x8] sm:$0xff]
      %v3590 = vld [vmem:[%s339 + $0x10] sm:$0xff]
      %v3591 = vld [vmem:[%s339 + $0x18] sm:$0x1]
      %v3592 = vld [vmem:[%s342] sm:$0x1]
      %v3593 = vld [vmem:[%s345] sm:$0x1]
      %v3594 = vld [vmem:[#allocation4] sm:$0xff]
      %v3595 = vld [vmem:[#allocation4 + $0x8] sm:$0xff]
      %v3596 = vld [vmem:[#allocation4 + $0x10] sm:$0xff]
      %v3597 = vld [vmem:[#allocation4 + $0x18] sm:$0xff]
      %v3598 = vld [vmem:[#allocation4 + $0x20] sm:$0xff]
      %v3599 = vld [vmem:[#allocation4 + $0x28] sm:$0xff]
      %v3600 = vld [vmem:[#allocation4 + $0x30] sm:$0xff]
      %v3601 = vld [vmem:[#allocation4 + $0x38] sm:$0xff]
      %v3602 = vld [vmem:[%s2121] sm:$0xff]
      %v3603 = vld [vmem:[%s2121 + $0x8] sm:$0xff]
      %v3604 = vld [vmem:[%s2121 + $0x10] sm:$0xff]
      %v3605 = vld [vmem:[%s2121 + $0x18] sm:$0xff]
      %v3606 = vld [vmem:[%s2121 + $0x20] sm:$0xff]
      %v3607 = vld [vmem:[%s2121 + $0x28] sm:$0xff]
      %v3608 = vld [vmem:[%s2121 + $0x30] sm:$0xff]
      %v3609 = vld [vmem:[%s2121 + $0x38] sm:$0xff]
      %v3610 = vld [vmem:[%s2850] sm:$0xff]
      %v3611 = vld [vmem:[%s2850 + $0x8] sm:$0xff]
      %v3612 = vld [vmem:[%s2850 + $0x10] sm:$0xff]
      %v3613 = vld [vmem:[%s2850 + $0x18] sm:$0xff]
      %v3614 = vld [vmem:[%s2850 + $0x20] sm:$0xff]
      %v3615 = vld [vmem:[%s2850 + $0x28] sm:$0xff]
      %v3616 = vld [vmem:[%s2850 + $0x30] sm:$0xff]
      %v3617 = vld [vmem:[%s2850 + $0x38] sm:$0xff]
      %v3618 = vld [vmem:[%s3579] sm:$0xff]
      %v3619 = vld [vmem:[%s3579 + $0x8] sm:$0xff]
      %v3620 = vld [vmem:[%s3579 + $0x10] sm:$0xff]
      %v3621 = vld [vmem:[%s3579 + $0x18] sm:$0xff]
      %v3622 = vld [vmem:[%s3579 + $0x20] sm:$0xff]
      %v3623 = vld [vmem:[%s3579 + $0x28] sm:$0xff]
      %v3624 = vld [vmem:[%s3579 + $0x30] sm:$0xff]
      %v3625 = vld [vmem:[%s3579 + $0x38] sm:$0xff]
      %v3626 = vadd.f32 %v3594, %v3602
      %v3627 = vadd.f32 %v3595, %v3603
      %v3628 = vadd.f32 %v3596, %v3604
      %v3629 = vadd.f32 %v3597, %v3605
      %v3630 = vadd.f32 %v3598, %v3606
      %v3631 = vadd.f32 %v3599, %v3607
      %v3632 = vadd.f32 %v3600, %v3608
      %v3633 = vadd.f32 %v3601, %v3609
      %v3634 = vadd.f32 %v3626, %v3610
      %v3635 = vadd.f32 %v3627, %v3611
      %v3636 = vadd.f32 %v3628, %v3612
      %v3637 = vadd.f32 %v3629, %v3613
      %v3638 = vadd.f32 %v3630, %v3614
      %v3639 = vadd.f32 %v3631, %v3615
      %v3640 = vadd.f32 %v3632, %v3616
      %v3641 = vadd.f32 %v3633, %v3617
      %v3642 = vadd.f32 %v3634, %v3618
      %v3643 = vadd.f32 %v3635, %v3619
      %v3644 = vadd.f32 %v3636, %v3620
      %v3645 = vadd.f32 %v3637, %v3621
      %v3646 = vadd.f32 %v3638, %v3622
      %v3647 = vadd.f32 %v3639, %v3623
      %v3648 = vadd.f32 %v3640, %v3624
      %v3649 = vadd.f32 %v3641, %v3625
      %v3650 = vmul.f32 %v3642, 0.5
      %v3651 = vmul.f32 %v3643, 0.5
      %v3652 = vmul.f32 %v3644, 0.5
      %v3653 = vmul.f32 %v3645, 0.5
      %v3654 = vmul.f32 %v3646, 0.5
      %v3655 = vmul.f32 %v3647, 0.5
      %v3656 = vmul.f32 %v3648, 0.5
      %v3657 = vmul.f32 %v3649, 0.5
      %v3658 = vld [vmem:[#allocation2] sm:$0xff]
      %v3659 = vld [vmem:[#allocation2 + $0x10] sm:$0xff]
      %v3660 = vld [vmem:[#allocation2 + $0x20] sm:$0xff]
      %v3661 = vld [vmem:[#allocation2 + $0x30] sm:$0xff]
      %v3662 = vld [vmem:[#allocation2 + $0x40] sm:$0xff]
      %v3663 = vld [vmem:[#allocation2 + $0x50] sm:$0xff]
      %v3664 = vld [vmem:[#allocation2 + $0x60] sm:$0xff]
      %v3665 = vld [vmem:[#allocation2 + $0x70] sm:$0xff]
      %v3666 = vlaneseq
      %v3667 = vshrl.u32 %v3666, 7
      %v3668 = vsub.s32 0, %v3667
      %v3669 = vrot.slane %v3588, %v3668
      %v3670 = vmul.f32 %v3658, %v3669
      %v3671 = vmul.f32 %v3659, %v3669
      %v3672 = vmul.f32 %v3660, %v3669
      %v3673 = vmul.f32 %v3661, %v3669
      %v3674 = vmul.f32 %v3662, %v3669
      %v3675 = vmul.f32 %v3663, %v3669
      %v3676 = vmul.f32 %v3664, %v3669
      %v3677 = vmul.f32 %v3665, %v3669
      %v3678 = vadd.f32 %v3670, 0.0
      %v3679 = vadd.f32 %v3671, 0.0
      %v3680 = vadd.f32 %v3672, 0.0
      %v3681 = vadd.f32 %v3673, 0.0
      %v3682 = vadd.f32 %v3674, 0.0
      %v3683 = vadd.f32 %v3675, 0.0
      %v3684 = vadd.f32 %v3676, 0.0
      %v3685 = vadd.f32 %v3677, 0.0
      %s3686 = scalar_lea.vmem [#allocation2], 160
      %v3687 = vld [vmem:[%s3686] sm:$0xff]
      %v3688 = vld [vmem:[%s3686 + $0x10] sm:$0xff]
      %v3689 = vld [vmem:[%s3686 + $0x20] sm:$0xff]
      %v3690 = vld [vmem:[%s3686 + $0x30] sm:$0xff]
      %v3691 = vld [vmem:[%s3686 + $0x40] sm:$0xff]
      %v3692 = vld [vmem:[%s3686 + $0x50] sm:$0xff]
      %v3693 = vld [vmem:[%s3686 + $0x60] sm:$0xff]
      %v3694 = vld [vmem:[%s3686 + $0x70] sm:$0xff]
      %v3695 = vlaneseq
      %v3696 = vshrl.u32 %v3695, 7
      %v3697 = vsub.s32 1, %v3696
      %v3698 = vrot.slane %v3588, %v3697
      %v3699 = vmul.f32 %v3687, %v3698
      %v3700 = vmul.f32 %v3688, %v3698
      %v3701 = vmul.f32 %v3689, %v3698
      %v3702 = vmul.f32 %v3690, %v3698
      %v3703 = vmul.f32 %v3691, %v3698
      %v3704 = vmul.f32 %v3692, %v3698
      %v3705 = vmul.f32 %v3693, %v3698
      %v3706 = vmul.f32 %v3694, %v3698
      %v3707 = vadd.f32 %v3678, %v3699
      %v3708 = vadd.f32 %v3679, %v3700
      %v3709 = vadd.f32 %v3680, %v3701
      %v3710 = vadd.f32 %v3681, %v3702
      %v3711 = vadd.f32 %v3682, %v3703
      %v3712 = vadd.f32 %v3683, %v3704
      %v3713 = vadd.f32 %v3684, %v3705
      %v3714 = vadd.f32 %v3685, %v3706
      %v3715 = vld [vmem:[#allocation2 + $0x1] sm:$0xff]
      %v3716 = vld [vmem:[#allocation2 + $0x11] sm:$0xff]
      %v3717 = vld [vmem:[#allocation2 + $0x21] sm:$0xff]
      %v3718 = vld [vmem:[#allocation2 + $0x31] sm:$0xff]
      %v3719 = vld [vmem:[#allocation2 + $0x41] sm:$0xff]
      %v3720 = vld [vmem:[#allocation2 + $0x51] sm:$0xff]
      %v3721 = vld [vmem:[#allocation2 + $0x61] sm:$0xff]
      %v3722 = vld [vmem:[#allocation2 + $0x71] sm:$0xff]
      %v3723 = vlaneseq
      %v3724 = vshrl.u32 %v3723, 7
      %v3725 = vsub.s32 2, %v3724
      %v3726 = vrot.slane %v3588, %v3725
      %v3727 = vmul.f32 %v3715, %v3726
      %v3728 = vmul.f32 %v3716, %v3726
      %v3729 = vmul.f32 %v3717, %v3726
      %v3730 = vmul.f32 %v3718, %v3726
      %v3731 = vmul.f32 %v3719, %v3726
      %v3732 = vmul.f32 %v3720, %v3726
      %v3733 = vmul.f32 %v3721, %v3726
      %v3734 = vmul.f32 %v3722, %v3726
      %v3735 = vadd.f32 %v3707, %v3727
      %v3736 = vadd.f32 %v3708, %v3728
      %v3737 = vadd.f32 %v3709, %v3729
      %v3738 = vadd.f32 %v3710, %v3730
      %v3739 = vadd.f32 %v3711, %v3731
      %v3740 = vadd.f32 %v3712, %v3732
      %v3741 = vadd.f32 %v3713, %v3733
      %v3742 = vadd.f32 %v3714, %v3734
      %v3743 = vld [vmem:[%s3686 + $0x1] sm:$0xff]
      %v3744 = vld [vmem:[%s3686 + $0x11] sm:$0xff]
      %v3745 = vld [vmem:[%s3686 + $0x21] sm:$0xff]
      %v3746 = vld [vmem:[%s3686 + $0x31] sm:$0xff]
      %v3747 = vld [vmem:[%s3686 + $0x41] sm:$0xff]
      %v3748 = vld [vmem:[%s3686 + $0x51] sm:$0xff]
      %v3749 = vld [vmem:[%s3686 + $0x61] sm:$0xff]
      %v3750 = vld [vmem:[%s3686 + $0x71] sm:$0xff]
      %v3751 = vlaneseq
      %v3752 = vshrl.u32 %v3751, 7
      %v3753 = vsub.s32 3, %v3752
      %v3754 = vrot.slane %v3588, %v3753
      %v3755 = vmul.f32 %v3743, %v3754
      %v3756 = vmul.f32 %v3744, %v3754
      %v3757 = vmul.f32 %v3745, %v3754
      %v3758 = vmul.f32 %v3746, %v3754
      %v3759 = vmul.f32 %v3747, %v3754
      %v3760 = vmul.f32 %v3748, %v3754
      %v3761 = vmul.f32 %v3749, %v3754
      %v3762 = vmul.f32 %v3750, %v3754
      %v3763 = vadd.f32 %v3735, %v3755
      %v3764 = vadd.f32 %v3736, %v3756
      %v3765 = vadd.f32 %v3737, %v3757
      %v3766 = vadd.f32 %v3738, %v3758
      %v3767 = vadd.f32 %v3739, %v3759
      %v3768 = vadd.f32 %v3740, %v3760
      %v3769 = vadd.f32 %v3741, %v3761
      %v3770 = vadd.f32 %v3742, %v3762
      %v3771 = vld [vmem:[#allocation2 + $0x2] sm:$0xff]
      %v3772 = vld [vmem:[#allocation2 + $0x12] sm:$0xff]
      %v3773 = vld [vmem:[#allocation2 + $0x22] sm:$0xff]
      %v3774 = vld [vmem:[#allocation2 + $0x32] sm:$0xff]
      %v3775 = vld [vmem:[#allocation2 + $0x42] sm:$0xff]
      %v3776 = vld [vmem:[#allocation2 + $0x52] sm:$0xff]
      %v3777 = vld [vmem:[#allocation2 + $0x62] sm:$0xff]
      %v3778 = vld [vmem:[#allocation2 + $0x72] sm:$0xff]
      %v3779 = vlaneseq
      %v3780 = vshrl.u32 %v3779, 7
      %v3781 = vsub.s32 4, %v3780
      %v3782 = vrot.slane %v3588, %v3781
      %v3783 = vmul.f32 %v3771, %v3782
      %v3784 = vmul.f32 %v3772, %v3782
      %v3785 = vmul.f32 %v3773, %v3782
      %v3786 = vmul.f32 %v3774, %v3782
      %v3787 = vmul.f32 %v3775, %v3782
      %v3788 = vmul.f32 %v3776, %v3782
      %v3789 = vmul.f32 %v3777, %v3782
      %v3790 = vmul.f32 %v3778, %v3782
      %v3791 = vadd.f32 %v3763, %v3783
      %v3792 = vadd.f32 %v3764, %v3784
      %v3793 = vadd.f32 %v3765, %v3785
      %v3794 = vadd.f32 %v3766, %v3786
      %v3795 = vadd.f32 %v3767, %v3787
      %v3796 = vadd.f32 %v3768, %v3788
      %v3797 = vadd.f32 %v3769, %v3789
      %v3798 = vadd.f32 %v3770, %v3790
      %s3799 = scalar_lea.vmem [#allocation2], 320
      %v3800 = vld [vmem:[%s3799] sm:$0xff]
      %v3801 = vld [vmem:[%s3799 + $0x10] sm:$0xff]
      %v3802 = vld [vmem:[%s3799 + $0x20] sm:$0xff]
      %v3803 = vld [vmem:[%s3799 + $0x30] sm:$0xff]
      %v3804 = vld [vmem:[%s3799 + $0x40] sm:$0xff]
      %v3805 = vld [vmem:[%s3799 + $0x50] sm:$0xff]
      %v3806 = vld [vmem:[%s3799 + $0x60] sm:$0xff]
      %v3807 = vld [vmem:[%s3799 + $0x70] sm:$0xff]
      %v3808 = vlaneseq
      %v3809 = vshrl.u32 %v3808, 7
      %v3810 = vsub.s32 5, %v3809
      %v3811 = vrot.slane %v3588, %v3810
      %v3812 = vmul.f32 %v3800, %v3811
      %v3813 = vmul.f32 %v3801, %v3811
      %v3814 = vmul.f32 %v3802, %v3811
      %v3815 = vmul.f32 %v3803, %v3811
      %v3816 = vmul.f32 %v3804, %v3811
      %v3817 = vmul.f32 %v3805, %v3811
      %v3818 = vmul.f32 %v3806, %v3811
      %v3819 = vmul.f32 %v3807, %v3811
      %v3820 = vadd.f32 %v3791, %v3812
      %v3821 = vadd.f32 %v3792, %v3813
      %v3822 = vadd.f32 %v3793, %v3814
      %v3823 = vadd.f32 %v3794, %v3815
      %v3824 = vadd.f32 %v3795, %v3816
      %v3825 = vadd.f32 %v3796, %v3817
      %v3826 = vadd.f32 %v3797, %v3818
      %v3827 = vadd.f32 %v3798, %v3819
      %s3828 = scalar_lea.vmem [#allocation2], 480
      %v3829 = vld [vmem:[%s3828] sm:$0xff]
      %v3830 = vld [vmem:[%s3828 + $0x10] sm:$0xff]
      %v3831 = vld [vmem:[%s3828 + $0x20] sm:$0xff]
      %v3832 = vld [vmem:[%s3828 + $0x30] sm:$0xff]
      %v3833 = vld [vmem:[%s3828 + $0x40] sm:$0xff]
      %v3834 = vld [vmem:[%s3828 + $0x50] sm:$0xff]
      %v3835 = vld [vmem:[%s3828 + $0x60] sm:$0xff]
      %v3836 = vld [vmem:[%s3828 + $0x70] sm:$0xff]
      %v3837 = vlaneseq
      %v3838 = vshrl.u32 %v3837, 7
      %v3839 = vsub.s32 6, %v3838
      %v3840 = vrot.slane %v3588, %v3839
      %v3841 = vmul.f32 %v3829, %v3840
      %v3842 = vmul.f32 %v3830, %v3840
      %v3843 = vmul.f32 %v3831, %v3840
      %v3844 = vmul.f32 %v3832, %v3840
      %v3845 = vmul.f32 %v3833, %v3840
      %v3846 = vmul.f32 %v3834, %v3840
      %v3847 = vmul.f32 %v3835, %v3840
      %v3848 = vmul.f32 %v3836, %v3840
      %v3849 = vadd.f32 %v3820, %v3841
      %v3850 = vadd.f32 %v3821, %v3842
      %v3851 = vadd.f32 %v3822, %v3843
      %v3852 = vadd.f32 %v3823, %v3844
      %v3853 = vadd.f32 %v3824, %v3845
      %v3854 = vadd.f32 %v3825, %v3846
      %v3855 = vadd.f32 %v3826, %v3847
      %v3856 = vadd.f32 %v3827, %v3848
      %v3857 = vld [vmem:[%s3799 + $0x1] sm:$0xff]
      %v3858 = vld [vmem:[%s3799 + $0x11] sm:$0xff]
      %v3859 = vld [vmem:[%s3799 + $0x21] sm:$0xff]
      %v3860 = vld [vmem:[%s3799 + $0x31] sm:$0xff]
      %v3861 = vld [vmem:[%s3799 + $0x41] sm:$0xff]
      %v3862 = vld [vmem:[%s3799 + $0x51] sm:$0xff]
      %v3863 = vld [vmem:[%s3799 + $0x61] sm:$0xff]
      %v3864 = vld [vmem:[%s3799 + $0x71] sm:$0xff]
      %v3865 = vlaneseq
      %v3866 = vshrl.u32 %v3865, 7
      %v3867 = vsub.s32 7, %v3866
      %v3868 = vrot.slane %v3588, %v3867
      %v3869 = vmul.f32 %v3857, %v3868
      %v3870 = vmul.f32 %v3858, %v3868
      %v3871 = vmul.f32 %v3859, %v3868
      %v3872 = vmul.f32 %v3860, %v3868
      %v3873 = vmul.f32 %v3861, %v3868
      %v3874 = vmul.f32 %v3862, %v3868
      %v3875 = vmul.f32 %v3863, %v3868
      %v3876 = vmul.f32 %v3864, %v3868
      %v3877 = vadd.f32 %v3849, %v3869
      %v3878 = vadd.f32 %v3850, %v3870
      %v3879 = vadd.f32 %v3851, %v3871
      %v3880 = vadd.f32 %v3852, %v3872
      %v3881 = vadd.f32 %v3853, %v3873
      %v3882 = vadd.f32 %v3854, %v3874
      %v3883 = vadd.f32 %v3855, %v3875
      %v3884 = vadd.f32 %v3856, %v3876
      %v3885 = vld [vmem:[%s3828 + $0x1] sm:$0xff]
      %v3886 = vld [vmem:[%s3828 + $0x11] sm:$0xff]
      %v3887 = vld [vmem:[%s3828 + $0x21] sm:$0xff]
      %v3888 = vld [vmem:[%s3828 + $0x31] sm:$0xff]
      %v3889 = vld [vmem:[%s3828 + $0x41] sm:$0xff]
      %v3890 = vld [vmem:[%s3828 + $0x51] sm:$0xff]
      %v3891 = vld [vmem:[%s3828 + $0x61] sm:$0xff]
      %v3892 = vld [vmem:[%s3828 + $0x71] sm:$0xff]
      %v3893 = vlaneseq
      %v3894 = vshrl.u32 %v3893, 7
      %v3895 = vsub.s32 0, %v3894
      %v3896 = vrot.slane %v3589, %v3895
      %v3897 = vmul.f32 %v3885, %v3896
      %v3898 = vmul.f32 %v3886, %v3896
      %v3899 = vmul.f32 %v3887, %v3896
      %v3900 = vmul.f32 %v3888, %v3896
      %v3901 = vmul.f32 %v3889, %v3896
      %v3902 = vmul.f32 %v3890, %v3896
      %v3903 = vmul.f32 %v3891, %v3896
      %v3904 = vmul.f32 %v3892, %v3896
      %v3905 = vadd.f32 %v3877, %v3897
      %v3906 = vadd.f32 %v3878, %v3898
      %v3907 = vadd.f32 %v3879, %v3899
      %v3908 = vadd.f32 %v3880, %v3900
      %v3909 = vadd.f32 %v3881, %v3901
      %v3910 = vadd.f32 %v3882, %v3902
      %v3911 = vadd.f32 %v3883, %v3903
      %v3912 = vadd.f32 %v3884, %v3904
      %v3913 = vld [vmem:[%s3799 + $0x2] sm:$0xff]
      %v3914 = vld [vmem:[%s3799 + $0x12] sm:$0xff]
      %v3915 = vld [vmem:[%s3799 + $0x22] sm:$0xff]
      %v3916 = vld [vmem:[%s3799 + $0x32] sm:$0xff]
      %v3917 = vld [vmem:[%s3799 + $0x42] sm:$0xff]
      %v3918 = vld [vmem:[%s3799 + $0x52] sm:$0xff]
      %v3919 = vld [vmem:[%s3799 + $0x62] sm:$0xff]
      %v3920 = vld [vmem:[%s3799 + $0x72] sm:$0xff]
      %v3921 = vlaneseq
      %v3922 = vshrl.u32 %v3921, 7
      %v3923 = vsub.s32 1, %v3922
      %v3924 = vrot.slane %v3589, %v3923
      %v3925 = vmul.f32 %v3913, %v3924
      %v3926 = vmul.f32 %v3914, %v3924
      %v3927 = vmul.f32 %v3915, %v3924
      %v3928 = vmul.f32 %v3916, %v3924
      %v3929 = vmul.f32 %v3917, %v3924
      %v3930 = vmul.f32 %v3918, %v3924
      %v3931 = vmul.f32 %v3919, %v3924
      %v3932 = vmul.f32 %v3920, %v3924
      %v3933 = vadd.f32 %v3905, %v3925
      %v3934 = vadd.f32 %v3906, %v3926
      %v3935 = vadd.f32 %v3907, %v3927
      %v3936 = vadd.f32 %v3908, %v3928
      %v3937 = vadd.f32 %v3909, %v3929
      %v3938 = vadd.f32 %v3910, %v3930
      %v3939 = vadd.f32 %v3911, %v3931
      %v3940 = vadd.f32 %v3912, %v3932
      %v3941 = vld [vmem:[%s452] sm:$0xff]
      %v3942 = vld [vmem:[%s452 + $0x10] sm:$0xff]
      %v3943 = vld [vmem:[%s452 + $0x20] sm:$0xff]
      %v3944 = vld [vmem:[%s452 + $0x30] sm:$0xff]
      %v3945 = vld [vmem:[%s452 + $0x40] sm:$0xff]
      %v3946 = vld [vmem:[%s452 + $0x50] sm:$0xff]
      %v3947 = vld [vmem:[%s452 + $0x60] sm:$0xff]
      %v3948 = vld [vmem:[%s452 + $0x70] sm:$0xff]
      %v3949 = vlaneseq
      %v3950 = vshrl.u32 %v3949, 7
      %v3951 = vsub.s32 2, %v3950
      %v3952 = vrot.slane %v3589, %v3951
      %v3953 = vmul.f32 %v3941, %v3952
      %v3954 = vmul.f32 %v3942, %v3952
      %v3955 = vmul.f32 %v3943, %v3952
      %v3956 = vmul.f32 %v3944, %v3952
      %v3957 = vmul.f32 %v3945, %v3952
      %v3958 = vmul.f32 %v3946, %v3952
      %v3959 = vmul.f32 %v3947, %v3952
      %v3960 = vmul.f32 %v3948, %v3952
      %v3961 = vadd.f32 %v3933, %v3953
      %v3962 = vadd.f32 %v3934, %v3954
      %v3963 = vadd.f32 %v3935, %v3955
      %v3964 = vadd.f32 %v3936, %v3956
      %v3965 = vadd.f32 %v3937, %v3957
      %v3966 = vadd.f32 %v3938, %v3958
      %v3967 = vadd.f32 %v3939, %v3959
      %v3968 = vadd.f32 %v3940, %v3960
      %v3969 = vld [vmem:[%s470] sm:$0xff]
      %v3970 = vld [vmem:[%s470 + $0x10] sm:$0xff]
      %v3971 = vld [vmem:[%s470 + $0x20] sm:$0xff]
      %v3972 = vld [vmem:[%s470 + $0x30] sm:$0xff]
      %v3973 = vld [vmem:[%s470 + $0x40] sm:$0xff]
      %v3974 = vld [vmem:[%s470 + $0x50] sm:$0xff]
      %v3975 = vld [vmem:[%s470 + $0x60] sm:$0xff]
      %v3976 = vld [vmem:[%s470 + $0x70] sm:$0xff]
      %v3977 = vlaneseq
      %v3978 = vshrl.u32 %v3977, 7
      %v3979 = vsub.s32 3, %v3978
      %v3980 = vrot.slane %v3589, %v3979
      %v3981 = vmul.f32 %v3969, %v3980
      %v3982 = vmul.f32 %v3970, %v3980
      %v3983 = vmul.f32 %v3971, %v3980
      %v3984 = vmul.f32 %v3972, %v3980
      %v3985 = vmul.f32 %v3973, %v3980
      %v3986 = vmul.f32 %v3974, %v3980
      %v3987 = vmul.f32 %v3975, %v3980
      %v3988 = vmul.f32 %v3976, %v3980
      %v3989 = vadd.f32 %v3961, %v3981
      %v3990 = vadd.f32 %v3962, %v3982
      %v3991 = vadd.f32 %v3963, %v3983
      %v3992 = vadd.f32 %v3964, %v3984
      %v3993 = vadd.f32 %v3965, %v3985
      %v3994 = vadd.f32 %v3966, %v3986
      %v3995 = vadd.f32 %v3967, %v3987
      %v3996 = vadd.f32 %v3968, %v3988
      %v3997 = vld [vmem:[%s452 + $0x1] sm:$0xff]
      %v3998 = vld [vmem:[%s452 + $0x11] sm:$0xff]
      %v3999 = vld [vmem:[%s452 + $0x21] sm:$0xff]
      %v4000 = vld [vmem:[%s452 + $0x31] sm:$0xff]
      %v4001 = vld [vmem:[%s452 + $0x41] sm:$0xff]
      %v4002 = vld [vmem:[%s452 + $0x51] sm:$0xff]
      %v4003 = vld [vmem:[%s452 + $0x61] sm:$0xff]
      %v4004 = vld [vmem:[%s452 + $0x71] sm:$0xff]
      %v4005 = vlaneseq
      %v4006 = vshrl.u32 %v4005, 7
      %v4007 = vsub.s32 4, %v4006
      %v4008 = vrot.slane %v3589, %v4007
      %v4009 = vmul.f32 %v3997, %v4008
      %v4010 = vmul.f32 %v3998, %v4008
      %v4011 = vmul.f32 %v3999, %v4008
      %v4012 = vmul.f32 %v4000, %v4008
      %v4013 = vmul.f32 %v4001, %v4008
      %v4014 = vmul.f32 %v4002, %v4008
      %v4015 = vmul.f32 %v4003, %v4008
      %v4016 = vmul.f32 %v4004, %v4008
      %v4017 = vadd.f32 %v3989, %v4009
      %v4018 = vadd.f32 %v3990, %v4010
      %v4019 = vadd.f32 %v3991, %v4011
      %v4020 = vadd.f32 %v3992, %v4012
      %v4021 = vadd.f32 %v3993, %v4013
      %v4022 = vadd.f32 %v3994, %v4014
      %v4023 = vadd.f32 %v3995, %v4015
      %v4024 = vadd.f32 %v3996, %v4016
      %v4025 = vld [vmem:[%s470 + $0x1] sm:$0xff]
      %v4026 = vld [vmem:[%s470 + $0x11] sm:$0xff]
      %v4027 = vld [vmem:[%s470 + $0x21] sm:$0xff]
      %v4028 = vld [vmem:[%s470 + $0x31] sm:$0xff]
      %v4029 = vld [vmem:[%s470 + $0x41] sm:$0xff]
      %v4030 = vld [vmem:[%s470 + $0x51] sm:$0xff]
      %v4031 = vld [vmem:[%s470 + $0x61] sm:$0xff]
      %v4032 = vld [vmem:[%s470 + $0x71] sm:$0xff]
      %v4033 = vlaneseq
      %v4034 = vshrl.u32 %v4033, 7
      %v4035 = vsub.s32 5, %v4034
      %v4036 = vrot.slane %v3589, %v4035
      %v4037 = vmul.f32 %v4025, %v4036
      %v4038 = vmul.f32 %v4026, %v4036
      %v4039 = vmul.f32 %v4027, %v4036
      %v4040 = vmul.f32 %v4028, %v4036
      %v4041 = vmul.f32 %v4029, %v4036
      %v4042 = vmul.f32 %v4030, %v4036
      %v4043 = vmul.f32 %v4031, %v4036
      %v4044 = vmul.f32 %v4032, %v4036
      %v4045 = vadd.f32 %v4017, %v4037
      %v4046 = vadd.f32 %v4018, %v4038
      %v4047 = vadd.f32 %v4019, %v4039
      %v4048 = vadd.f32 %v4020, %v4040
      %v4049 = vadd.f32 %v4021, %v4041
      %v4050 = vadd.f32 %v4022, %v4042
      %v4051 = vadd.f32 %v4023, %v4043
      %v4052 = vadd.f32 %v4024, %v4044
      %v4053 = vld [vmem:[%s452 + $0x2] sm:$0xff]
      %v4054 = vld [vmem:[%s452 + $0x12] sm:$0xff]
      %v4055 = vld [vmem:[%s452 + $0x22] sm:$0xff]
      %v4056 = vld [vmem:[%s452 + $0x32] sm:$0xff]
      %v4057 = vld [vmem:[%s452 + $0x42] sm:$0xff]
      %v4058 = vld [vmem:[%s452 + $0x52] sm:$0xff]
      %v4059 = vld [vmem:[%s452 + $0x62] sm:$0xff]
      %v4060 = vld [vmem:[%s452 + $0x72] sm:$0xff]
      %v4061 = vlaneseq
      %v4062 = vshrl.u32 %v4061, 7
      %v4063 = vsub.s32 6, %v4062
      %v4064 = vrot.slane %v3589, %v4063
      %v4065 = vmul.f32 %v4053, %v4064
      %v4066 = vmul.f32 %v4054, %v4064
      %v4067 = vmul.f32 %v4055, %v4064
      %v4068 = vmul.f32 %v4056, %v4064
      %v4069 = vmul.f32 %v4057, %v4064
      %v4070 = vmul.f32 %v4058, %v4064
      %v4071 = vmul.f32 %v4059, %v4064
      %v4072 = vmul.f32 %v4060, %v4064
      %v4073 = vadd.f32 %v4045, %v4065
      %v4074 = vadd.f32 %v4046, %v4066
      %v4075 = vadd.f32 %v4047, %v4067
      %v4076 = vadd.f32 %v4048, %v4068
      %v4077 = vadd.f32 %v4049, %v4069
      %v4078 = vadd.f32 %v4050, %v4070
      %v4079 = vadd.f32 %v4051, %v4071
      %v4080 = vadd.f32 %v4052, %v4072
      %v4081 = vld [vmem:[%s488] sm:$0xff]
      %v4082 = vld [vmem:[%s488 + $0x10] sm:$0xff]
      %v4083 = vld [vmem:[%s488 + $0x20] sm:$0xff]
      %v4084 = vld [vmem:[%s488 + $0x30] sm:$0xff]
      %v4085 = vld [vmem:[%s488 + $0x40] sm:$0xff]
      %v4086 = vld [vmem:[%s488 + $0x50] sm:$0xff]
      %v4087 = vld [vmem:[%s488 + $0x60] sm:$0xff]
      %v4088 = vld [vmem:[%s488 + $0x70] sm:$0xff]
      %v4089 = vlaneseq
      %v4090 = vshrl.u32 %v4089, 7
      %v4091 = vsub.s32 7, %v4090
      %v4092 = vrot.slane %v3589, %v4091
      %v4093 = vmul.f32 %v4081, %v4092
      %v4094 = vmul.f32 %v4082, %v4092
      %v4095 = vmul.f32 %v4083, %v4092
      %v4096 = vmul.f32 %v4084, %v4092
      %v4097 = vmul.f32 %v4085, %v4092
      %v4098 = vmul.f32 %v4086, %v4092
      %v4099 = vmul.f32 %v4087, %v4092
      %v4100 = vmul.f32 %v4088, %v4092
      %v4101 = vadd.f32 %v4073, %v4093
      %v4102 = vadd.f32 %v4074, %v4094
      %v4103 = vadd.f32 %v4075, %v4095
      %v4104 = vadd.f32 %v4076, %v4096
      %v4105 = vadd.f32 %v4077, %v4097
      %v4106 = vadd.f32 %v4078, %v4098
      %v4107 = vadd.f32 %v4079, %v4099
      %v4108 = vadd.f32 %v4080, %v4100
      %v4109 = vld [vmem:[%s506] sm:$0xff]
      %v4110 = vld [vmem:[%s506 + $0x10] sm:$0xff]
      %v4111 = vld [vmem:[%s506 + $0x20] sm:$0xff]
      %v4112 = vld [vmem:[%s506 + $0x30] sm:$0xff]
      %v4113 = vld [vmem:[%s506 + $0x40] sm:$0xff]
      %v4114 = vld [vmem:[%s506 + $0x50] sm:$0xff]
      %v4115 = vld [vmem:[%s506 + $0x60] sm:$0xff]
      %v4116 = vld [vmem:[%s506 + $0x70] sm:$0xff]
      %v4117 = vlaneseq
      %v4118 = vshrl.u32 %v4117, 7
      %v4119 = vsub.s32 0, %v4118
      %v4120 = vrot.slane %v3590, %v4119
      %v4121 = vmul.f32 %v4109, %v4120
      %v4122 = vmul.f32 %v4110, %v4120
      %v4123 = vmul.f32 %v4111, %v4120
      %v4124 = vmul.f32 %v4112, %v4120
      %v4125 = vmul.f32 %v4113, %v4120
      %v4126 = vmul.f32 %v4114, %v4120
      %v4127 = vmul.f32 %v4115, %v4120
      %v4128 = vmul.f32 %v4116, %v4120
      %v4129 = vadd.f32 %v4101, %v4121
      %v4130 = vadd.f32 %v4102, %v4122
      %v4131 = vadd.f32 %v4103, %v4123
      %v4132 = vadd.f32 %v4104, %v4124
      %v4133 = vadd.f32 %v4105, %v4125
      %v4134 = vadd.f32 %v4106, %v4126
      %v4135 = vadd.f32 %v4107, %v4127
      %v4136 = vadd.f32 %v4108, %v4128
      %v4137 = vld [vmem:[%s488 + $0x1] sm:$0xff]
      %v4138 = vld [vmem:[%s488 + $0x11] sm:$0xff]
      %v4139 = vld [vmem:[%s488 + $0x21] sm:$0xff]
      %v4140 = vld [vmem:[%s488 + $0x31] sm:$0xff]
      %v4141 = vld [vmem:[%s488 + $0x41] sm:$0xff]
      %v4142 = vld [vmem:[%s488 + $0x51] sm:$0xff]
      %v4143 = vld [vmem:[%s488 + $0x61] sm:$0xff]
      %v4144 = vld [vmem:[%s488 + $0x71] sm:$0xff]
      %v4145 = vlaneseq
      %v4146 = vshrl.u32 %v4145, 7
      %v4147 = vsub.s32 1, %v4146
      %v4148 = vrot.slane %v3590, %v4147
      %v4149 = vmul.f32 %v4137, %v4148
      %v4150 = vmul.f32 %v4138, %v4148
      %v4151 = vmul.f32 %v4139, %v4148
      %v4152 = vmul.f32 %v4140, %v4148
      %v4153 = vmul.f32 %v4141, %v4148
      %v4154 = vmul.f32 %v4142, %v4148
      %v4155 = vmul.f32 %v4143, %v4148
      %v4156 = vmul.f32 %v4144, %v4148
      %v4157 = vadd.f32 %v4129, %v4149
      %v4158 = vadd.f32 %v4130, %v4150
      %v4159 = vadd.f32 %v4131, %v4151
      %v4160 = vadd.f32 %v4132, %v4152
      %v4161 = vadd.f32 %v4133, %v4153
      %v4162 = vadd.f32 %v4134, %v4154
      %v4163 = vadd.f32 %v4135, %v4155
      %v4164 = vadd.f32 %v4136, %v4156
      %v4165 = vld [vmem:[%s506 + $0x1] sm:$0xff]
      %v4166 = vld [vmem:[%s506 + $0x11] sm:$0xff]
      %v4167 = vld [vmem:[%s506 + $0x21] sm:$0xff]
      %v4168 = vld [vmem:[%s506 + $0x31] sm:$0xff]
      %v4169 = vld [vmem:[%s506 + $0x41] sm:$0xff]
      %v4170 = vld [vmem:[%s506 + $0x51] sm:$0xff]
      %v4171 = vld [vmem:[%s506 + $0x61] sm:$0xff]
      %v4172 = vld [vmem:[%s506 + $0x71] sm:$0xff]
      %v4173 = vlaneseq
      %v4174 = vshrl.u32 %v4173, 7
      %v4175 = vsub.s32 2, %v4174
      %v4176 = vrot.slane %v3590, %v4175
      %v4177 = vmul.f32 %v4165, %v4176
      %v4178 = vmul.f32 %v4166, %v4176
      %v4179 = vmul.f32 %v4167, %v4176
      %v4180 = vmul.f32 %v4168, %v4176
      %v4181 = vmul.f32 %v4169, %v4176
      %v4182 = vmul.f32 %v4170, %v4176
      %v4183 = vmul.f32 %v4171, %v4176
      %v4184 = vmul.f32 %v4172, %v4176
      %v4185 = vadd.f32 %v4157, %v4177
      %v4186 = vadd.f32 %v4158, %v4178
      %v4187 = vadd.f32 %v4159, %v4179
      %v4188 = vadd.f32 %v4160, %v4180
      %v4189 = vadd.f32 %v4161, %v4181
      %v4190 = vadd.f32 %v4162, %v4182
      %v4191 = vadd.f32 %v4163, %v4183
      %v4192 = vadd.f32 %v4164, %v4184
      %v4193 = vld [vmem:[%s488 + $0x2] sm:$0xff]
      %v4194 = vld [vmem:[%s488 + $0x12] sm:$0xff]
      %v4195 = vld [vmem:[%s488 + $0x22] sm:$0xff]
      %v4196 = vld [vmem:[%s488 + $0x32] sm:$0xff]
      %v4197 = vld [vmem:[%s488 + $0x42] sm:$0xff]
      %v4198 = vld [vmem:[%s488 + $0x52] sm:$0xff]
      %v4199 = vld [vmem:[%s488 + $0x62] sm:$0xff]
      %v4200 = vld [vmem:[%s488 + $0x72] sm:$0xff]
      %v4201 = vlaneseq
      %v4202 = vshrl.u32 %v4201, 7
      %v4203 = vsub.s32 3, %v4202
      %v4204 = vrot.slane %v3590, %v4203
      %v4205 = vmul.f32 %v4193, %v4204
      %v4206 = vmul.f32 %v4194, %v4204
      %v4207 = vmul.f32 %v4195, %v4204
      %v4208 = vmul.f32 %v4196, %v4204
      %v4209 = vmul.f32 %v4197, %v4204
      %v4210 = vmul.f32 %v4198, %v4204
      %v4211 = vmul.f32 %v4199, %v4204
      %v4212 = vmul.f32 %v4200, %v4204
      %v4213 = vadd.f32 %v4185, %v4205
      %v4214 = vadd.f32 %v4186, %v4206
      %v4215 = vadd.f32 %v4187, %v4207
      %v4216 = vadd.f32 %v4188, %v4208
      %v4217 = vadd.f32 %v4189, %v4209
      %v4218 = vadd.f32 %v4190, %v4210
      %v4219 = vadd.f32 %v4191, %v4211
      %v4220 = vadd.f32 %v4192, %v4212
      %s4221 = scalar_lea.vmem [#allocation2], 32
      %v4222 = vld [vmem:[%s4221] sm:$0xff]
      %v4223 = vld [vmem:[%s4221 + $0x10] sm:$0xff]
      %v4224 = vld [vmem:[%s4221 + $0x20] sm:$0xff]
      %v4225 = vld [vmem:[%s4221 + $0x30] sm:$0xff]
      %v4226 = vld [vmem:[%s4221 + $0x40] sm:$0xff]
      %v4227 = vld [vmem:[%s4221 + $0x50] sm:$0xff]
      %v4228 = vld [vmem:[%s4221 + $0x60] sm:$0xff]
      %v4229 = vld [vmem:[%s4221 + $0x70] sm:$0xff]
      %v4230 = vlaneseq
      %v4231 = vshrl.u32 %v4230, 7
      %v4232 = vsub.s32 4, %v4231
      %v4233 = vrot.slane %v3590, %v4232
      %v4234 = vmul.f32 %v4222, %v4233
      %v4235 = vmul.f32 %v4223, %v4233
      %v4236 = vmul.f32 %v4224, %v4233
      %v4237 = vmul.f32 %v4225, %v4233
      %v4238 = vmul.f32 %v4226, %v4233
      %v4239 = vmul.f32 %v4227, %v4233
      %v4240 = vmul.f32 %v4228, %v4233
      %v4241 = vmul.f32 %v4229, %v4233
      %v4242 = vadd.f32 %v4213, %v4234
      %v4243 = vadd.f32 %v4214, %v4235
      %v4244 = vadd.f32 %v4215, %v4236
      %v4245 = vadd.f32 %v4216, %v4237
      %v4246 = vadd.f32 %v4217, %v4238
      %v4247 = vadd.f32 %v4218, %v4239
      %v4248 = vadd.f32 %v4219, %v4240
      %v4249 = vadd.f32 %v4220, %v4241
      %s4250 = scalar_lea.vmem [#allocation2], 192
      %v4251 = vld [vmem:[%s4250] sm:$0xff]
      %v4252 = vld [vmem:[%s4250 + $0x10] sm:$0xff]
      %v4253 = vld [vmem:[%s4250 + $0x20] sm:$0xff]
      %v4254 = vld [vmem:[%s4250 + $0x30] sm:$0xff]
      %v4255 = vld [vmem:[%s4250 + $0x40] sm:$0xff]
      %v4256 = vld [vmem:[%s4250 + $0x50] sm:$0xff]
      %v4257 = vld [vmem:[%s4250 + $0x60] sm:$0xff]
      %v4258 = vld [vmem:[%s4250 + $0x70] sm:$0xff]
      %v4259 = vlaneseq
      %v4260 = vshrl.u32 %v4259, 7
      %v4261 = vsub.s32 5, %v4260
      %v4262 = vrot.slane %v3590, %v4261
      %v4263 = vmul.f32 %v4251, %v4262
      %v4264 = vmul.f32 %v4252, %v4262
      %v4265 = vmul.f32 %v4253, %v4262
      %v4266 = vmul.f32 %v4254, %v4262
      %v4267 = vmul.f32 %v4255, %v4262
      %v4268 = vmul.f32 %v4256, %v4262
      %v4269 = vmul.f32 %v4257, %v4262
      %v4270 = vmul.f32 %v4258, %v4262
      %v4271 = vadd.f32 %v4242, %v4263
      %v4272 = vadd.f32 %v4243, %v4264
      %v4273 = vadd.f32 %v4244, %v4265
      %v4274 = vadd.f32 %v4245, %v4266
      %v4275 = vadd.f32 %v4246, %v4267
      %v4276 = vadd.f32 %v4247, %v4268
      %v4277 = vadd.f32 %v4248, %v4269
      %v4278 = vadd.f32 %v4249, %v4270
      %v4279 = vld [vmem:[%s4221 + $0x1] sm:$0xff]
      %v4280 = vld [vmem:[%s4221 + $0x11] sm:$0xff]
      %v4281 = vld [vmem:[%s4221 + $0x21] sm:$0xff]
      %v4282 = vld [vmem:[%s4221 + $0x31] sm:$0xff]
      %v4283 = vld [vmem:[%s4221 + $0x41] sm:$0xff]
      %v4284 = vld [vmem:[%s4221 + $0x51] sm:$0xff]
      %v4285 = vld [vmem:[%s4221 + $0x61] sm:$0xff]
      %v4286 = vld [vmem:[%s4221 + $0x71] sm:$0xff]
      %v4287 = vlaneseq
      %v4288 = vshrl.u32 %v4287, 7
      %v4289 = vsub.s32 6, %v4288
      %v4290 = vrot.slane %v3590, %v4289
      %v4291 = vmul.f32 %v4279, %v4290
      %v4292 = vmul.f32 %v4280, %v4290
      %v4293 = vmul.f32 %v4281, %v4290
      %v4294 = vmul.f32 %v4282, %v4290
      %v4295 = vmul.f32 %v4283, %v4290
      %v4296 = vmul.f32 %v4284, %v4290
      %v4297 = vmul.f32 %v4285, %v4290
      %v4298 = vmul.f32 %v4286, %v4290
      %v4299 = vadd.f32 %v4271, %v4291
      %v4300 = vadd.f32 %v4272, %v4292
      %v4301 = vadd.f32 %v4273, %v4293
      %v4302 = vadd.f32 %v4274, %v4294
      %v4303 = vadd.f32 %v4275, %v4295
      %v4304 = vadd.f32 %v4276, %v4296
      %v4305 = vadd.f32 %v4277, %v4297
      %v4306 = vadd.f32 %v4278, %v4298
      %v4307 = vld [vmem:[%s4250 + $0x1] sm:$0xff]
      %v4308 = vld [vmem:[%s4250 + $0x11] sm:$0xff]
      %v4309 = vld [vmem:[%s4250 + $0x21] sm:$0xff]
      %v4310 = vld [vmem:[%s4250 + $0x31] sm:$0xff]
      %v4311 = vld [vmem:[%s4250 + $0x41] sm:$0xff]
      %v4312 = vld [vmem:[%s4250 + $0x51] sm:$0xff]
      %v4313 = vld [vmem:[%s4250 + $0x61] sm:$0xff]
      %v4314 = vld [vmem:[%s4250 + $0x71] sm:$0xff]
      %v4315 = vlaneseq
      %v4316 = vshrl.u32 %v4315, 7
      %v4317 = vsub.s32 7, %v4316
      %v4318 = vrot.slane %v3590, %v4317
      %v4319 = vmul.f32 %v4307, %v4318
      %v4320 = vmul.f32 %v4308, %v4318
      %v4321 = vmul.f32 %v4309, %v4318
      %v4322 = vmul.f32 %v4310, %v4318
      %v4323 = vmul.f32 %v4311, %v4318
      %v4324 = vmul.f32 %v4312, %v4318
      %v4325 = vmul.f32 %v4313, %v4318
      %v4326 = vmul.f32 %v4314, %v4318
      %v4327 = vadd.f32 %v4299, %v4319
      %v4328 = vadd.f32 %v4300, %v4320
      %v4329 = vadd.f32 %v4301, %v4321
      %v4330 = vadd.f32 %v4302, %v4322
      %v4331 = vadd.f32 %v4303, %v4323
      %v4332 = vadd.f32 %v4304, %v4324
      %v4333 = vadd.f32 %v4305, %v4325
      %v4334 = vadd.f32 %v4306, %v4326
      %v4335 = vld [vmem:[%s4221 + $0x2] sm:$0xff]
      %v4336 = vld [vmem:[%s4221 + $0x12] sm:$0xff]
      %v4337 = vld [vmem:[%s4221 + $0x22] sm:$0xff]
      %v4338 = vld [vmem:[%s4221 + $0x32] sm:$0xff]
      %v4339 = vld [vmem:[%s4221 + $0x42] sm:$0xff]
      %v4340 = vld [vmem:[%s4221 + $0x52] sm:$0xff]
      %v4341 = vld [vmem:[%s4221 + $0x62] sm:$0xff]
      %v4342 = vld [vmem:[%s4221 + $0x72] sm:$0xff]
      %v4343 = vlaneseq
      %v4344 = vshrl.u32 %v4343, 7
      %v4345 = vsub.s32 0, %v4344
      %v4346 = vrot.slane %v3591, %v4345
      %v4347 = vmul.f32 %v4335, %v4346
      %v4348 = vmul.f32 %v4336, %v4346
      %v4349 = vmul.f32 %v4337, %v4346
      %v4350 = vmul.f32 %v4338, %v4346
      %v4351 = vmul.f32 %v4339, %v4346
      %v4352 = vmul.f32 %v4340, %v4346
      %v4353 = vmul.f32 %v4341, %v4346
      %v4354 = vmul.f32 %v4342, %v4346
      %v4355 = vadd.f32 %v4327, %v4347
      %v4356 = vadd.f32 %v4328, %v4348
      %v4357 = vadd.f32 %v4329, %v4349
      %v4358 = vadd.f32 %v4330, %v4350
      %v4359 = vadd.f32 %v4331, %v4351
      %v4360 = vadd.f32 %v4332, %v4352
      %v4361 = vadd.f32 %v4333, %v4353
      %v4362 = vadd.f32 %v4334, %v4354
      %v4364 = vlaneseq
      %v4365 = vshrl.u32 %v4364, 7
      %v4366 = vsub.s32 0, %v4365
      %v4367 = vrot.slane %v3592, %v4366
      %v4369 = vadd.f32 %v4355, %v4367
      %v4370 = vadd.f32 %v4356, %v4367
      %v4371 = vadd.f32 %v4357, %v4367
      %v4372 = vadd.f32 %v4358, %v4367
      %v4373 = vadd.f32 %v4359, %v4367
      %v4374 = vadd.f32 %v4360, %v4367
      %v4375 = vadd.f32 %v4361, %v4367
      %v4376 = vadd.f32 %v4362, %v4367
      %v4378 = vlaneseq
      %v4379 = vshrl.u32 %v4378, 7
      %v4380 = vsub.s32 0, %v4379
      %v4381 = vrot.slane %v3593, %v4380
      %v4383 = vmul.f32 %v4381, %v4369
      %v4384 = vmul.f32 %v4381, %v4370
      %v4385 = vmul.f32 %v4381, %v4371
      %v4386 = vmul.f32 %v4381, %v4372
      %v4387 = vmul.f32 %v4381, %v4373
      %v4388 = vmul.f32 %v4381, %v4374
      %v4389 = vmul.f32 %v4381, %v4375
      %v4390 = vmul.f32 %v4381, %v4376
      %v4391 = vadd.f32 %v4383, %v3650
      %v4392 = vadd.f32 %v4384, %v3651
      %v4393 = vadd.f32 %v4385, %v3652
      %v4394 = vadd.f32 %v4386, %v3653
      %v4395 = vadd.f32 %v4387, %v3654
      %v4396 = vadd.f32 %v4388, %v3655
      %v4397 = vadd.f32 %v4389, %v3656
      %v4398 = vadd.f32 %v4390, %v3657
      %4399 = vst.msk [vmem:[%s361] sm:$0xff] %vm362, %v4391
      %4400 = vst.msk [vmem:[%s361 + $0x20] sm:$0xff] %vm362, %v4392
      %4401 = vst.msk [vmem:[%s361 + $0x40] sm:$0xff] %vm362, %v4393
      %4402 = vst.msk [vmem:[%s361 + $0x60] sm:$0xff] %vm362, %v4394
      %4403 = vst.msk [vmem:[%s361 + $0x80] sm:$0xff] %vm362, %v4395
      %4404 = vst.msk [vmem:[%s361 + $0xa0] sm:$0xff] %vm362, %v4396
      %4405 = vst.msk [vmem:[%s361 + $0xc0] sm:$0xff] %vm362, %v4397
      %4406 = vst.msk [vmem:[%s361 + $0xe0] sm:$0xff] %vm362, %v4398
      %v4407 = vmul.f32 %v3610, -1.0
      %v4408 = vmul.f32 %v3611, -1.0
      %v4409 = vmul.f32 %v3612, -1.0
      %v4410 = vmul.f32 %v3613, -1.0
      %v4411 = vmul.f32 %v3614, -1.0
      %v4412 = vmul.f32 %v3615, -1.0
      %v4413 = vmul.f32 %v3616, -1.0
      %v4414 = vmul.f32 %v3617, -1.0
      %v4415 = vadd.f32 %v3626, %v4407
      %v4416 = vadd.f32 %v3627, %v4408
      %v4417 = vadd.f32 %v3628, %v4409
      %v4418 = vadd.f32 %v3629, %v4410
      %v4419 = vadd.f32 %v3630, %v4411
      %v4420 = vadd.f32 %v3631, %v4412
      %v4421 = vadd.f32 %v3632, %v4413
      %v4422 = vadd.f32 %v3633, %v4414
      %v4423 = vmul.f32 %v3618, -1.0
      %v4424 = vmul.f32 %v3619, -1.0
      %v4425 = vmul.f32 %v3620, -1.0
      %v4426 = vmul.f32 %v3621, -1.0
      %v4427 = vmul.f32 %v3622, -1.0
      %v4428 = vmul.f32 %v3623, -1.0
      %v4429 = vmul.f32 %v3624, -1.0
      %v4430 = vmul.f32 %v3625, -1.0
      %v4431 = vadd.f32 %v4415, %v4423
      %v4432 = vadd.f32 %v4416, %v4424
      %v4433 = vadd.f32 %v4417, %v4425
      %v4434 = vadd.f32 %v4418, %v4426
      %v4435 = vadd.f32 %v4419, %v4427
      %v4436 = vadd.f32 %v4420, %v4428
      %v4437 = vadd.f32 %v4421, %v4429
      %v4438 = vadd.f32 %v4422, %v4430
      %v4439 = vmul.f32 %v4431, 0.5
      %v4440 = vmul.f32 %v4432, 0.5
      %v4441 = vmul.f32 %v4433, 0.5
      %v4442 = vmul.f32 %v4434, 0.5
      %v4443 = vmul.f32 %v4435, 0.5
      %v4444 = vmul.f32 %v4436, 0.5
      %v4445 = vmul.f32 %v4437, 0.5
      %v4446 = vmul.f32 %v4438, 0.5
      %v4447 = vld [vmem:[%s3686] sm:$0xff]
      %v4448 = vld [vmem:[%s3686 + $0x10] sm:$0xff]
      %v4449 = vld [vmem:[%s3686 + $0x20] sm:$0xff]
      %v4450 = vld [vmem:[%s3686 + $0x30] sm:$0xff]
      %v4451 = vld [vmem:[%s3686 + $0x40] sm:$0xff]
      %v4452 = vld [vmem:[%s3686 + $0x50] sm:$0xff]
      %v4453 = vld [vmem:[%s3686 + $0x60] sm:$0xff]
      %v4454 = vld [vmem:[%s3686 + $0x70] sm:$0xff]
      %v4455 = vmul.f32 %v4447, %v3669
      %v4456 = vmul.f32 %v4448, %v3669
      %v4457 = vmul.f32 %v4449, %v3669
      %v4458 = vmul.f32 %v4450, %v3669
      %v4459 = vmul.f32 %v4451, %v3669
      %v4460 = vmul.f32 %v4452, %v3669
      %v4461 = vmul.f32 %v4453, %v3669
      %v4462 = vmul.f32 %v4454, %v3669
      %v4463 = vadd.f32 %v4455, 0.0
      %v4464 = vadd.f32 %v4456, 0.0
      %v4465 = vadd.f32 %v4457, 0.0
      %v4466 = vadd.f32 %v4458, 0.0
      %v4467 = vadd.f32 %v4459, 0.0
      %v4468 = vadd.f32 %v4460, 0.0
      %v4469 = vadd.f32 %v4461, 0.0
      %v4470 = vadd.f32 %v4462, 0.0
      %v4471 = vld [vmem:[#allocation2 + $0x1] sm:$0xff]
      %v4472 = vld [vmem:[#allocation2 + $0x11] sm:$0xff]
      %v4473 = vld [vmem:[#allocation2 + $0x21] sm:$0xff]
      %v4474 = vld [vmem:[#allocation2 + $0x31] sm:$0xff]
      %v4475 = vld [vmem:[#allocation2 + $0x41] sm:$0xff]
      %v4476 = vld [vmem:[#allocation2 + $0x51] sm:$0xff]
      %v4477 = vld [vmem:[#allocation2 + $0x61] sm:$0xff]
      %v4478 = vld [vmem:[#allocation2 + $0x71] sm:$0xff]
      %v4479 = vmul.f32 %v4471, %v3698
      %v4480 = vmul.f32 %v4472, %v3698
      %v4481 = vmul.f32 %v4473, %v3698
      %v4482 = vmul.f32 %v4474, %v3698
      %v4483 = vmul.f32 %v4475, %v3698
      %v4484 = vmul.f32 %v4476, %v3698
      %v4485 = vmul.f32 %v4477, %v3698
      %v4486 = vmul.f32 %v4478, %v3698
      %v4487 = vadd.f32 %v4463, %v4479
      %v4488 = vadd.f32 %v4464, %v4480
      %v4489 = vadd.f32 %v4465, %v4481
      %v4490 = vadd.f32 %v4466, %v4482
      %v4491 = vadd.f32 %v4467, %v4483
      %v4492 = vadd.f32 %v4468, %v4484
      %v4493 = vadd.f32 %v4469, %v4485
      %v4494 = vadd.f32 %v4470, %v4486
      %v4495 = vld [vmem:[%s3686 + $0x1] sm:$0xff]
      %v4496 = vld [vmem:[%s3686 + $0x11] sm:$0xff]
      %v4497 = vld [vmem:[%s3686 + $0x21] sm:$0xff]
      %v4498 = vld [vmem:[%s3686 + $0x31] sm:$0xff]
      %v4499 = vld [vmem:[%s3686 + $0x41] sm:$0xff]
      %v4500 = vld [vmem:[%s3686 + $0x51] sm:$0xff]
      %v4501 = vld [vmem:[%s3686 + $0x61] sm:$0xff]
      %v4502 = vld [vmem:[%s3686 + $0x71] sm:$0xff]
      %v4503 = vmul.f32 %v4495, %v3726
      %v4504 = vmul.f32 %v4496, %v3726
      %v4505 = vmul.f32 %v4497, %v3726
      %v4506 = vmul.f32 %v4498, %v3726
      %v4507 = vmul.f32 %v4499, %v3726
      %v4508 = vmul.f32 %v4500, %v3726
      %v4509 = vmul.f32 %v4501, %v3726
      %v4510 = vmul.f32 %v4502, %v3726
      %v4511 = vadd.f32 %v4487, %v4503
      %v4512 = vadd.f32 %v4488, %v4504
      %v4513 = vadd.f32 %v4489, %v4505
      %v4514 = vadd.f32 %v4490, %v4506
      %v4515 = vadd.f32 %v4491, %v4507
      %v4516 = vadd.f32 %v4492, %v4508
      %v4517 = vadd.f32 %v4493, %v4509
      %v4518 = vadd.f32 %v4494, %v4510
      %v4519 = vld [vmem:[#allocation2 + $0x2] sm:$0xff]
      %v4520 = vld [vmem:[#allocation2 + $0x12] sm:$0xff]
      %v4521 = vld [vmem:[#allocation2 + $0x22] sm:$0xff]
      %v4522 = vld [vmem:[#allocation2 + $0x32] sm:$0xff]
      %v4523 = vld [vmem:[#allocation2 + $0x42] sm:$0xff]
      %v4524 = vld [vmem:[#allocation2 + $0x52] sm:$0xff]
      %v4525 = vld [vmem:[#allocation2 + $0x62] sm:$0xff]
      %v4526 = vld [vmem:[#allocation2 + $0x72] sm:$0xff]
      %v4527 = vmul.f32 %v4519, %v3754
      %v4528 = vmul.f32 %v4520, %v3754
      %v4529 = vmul.f32 %v4521, %v3754
      %v4530 = vmul.f32 %v4522, %v3754
      %v4531 = vmul.f32 %v4523, %v3754
      %v4532 = vmul.f32 %v4524, %v3754
      %v4533 = vmul.f32 %v4525, %v3754
      %v4534 = vmul.f32 %v4526, %v3754
      %v4535 = vadd.f32 %v4511, %v4527
      %v4536 = vadd.f32 %v4512, %v4528
      %v4537 = vadd.f32 %v4513, %v4529
      %v4538 = vadd.f32 %v4514, %v4530
      %v4539 = vadd.f32 %v4515, %v4531
      %v4540 = vadd.f32 %v4516, %v4532
      %v4541 = vadd.f32 %v4517, %v4533
      %v4542 = vadd.f32 %v4518, %v4534
      %v4543 = vld [vmem:[%s3686 + $0x2] sm:$0xff]
      %v4544 = vld [vmem:[%s3686 + $0x12] sm:$0xff]
      %v4545 = vld [vmem:[%s3686 + $0x22] sm:$0xff]
      %v4546 = vld [vmem:[%s3686 + $0x32] sm:$0xff]
      %v4547 = vld [vmem:[%s3686 + $0x42] sm:$0xff]
      %v4548 = vld [vmem:[%s3686 + $0x52] sm:$0xff]
      %v4549 = vld [vmem:[%s3686 + $0x62] sm:$0xff]
      %v4550 = vld [vmem:[%s3686 + $0x72] sm:$0xff]
      %v4551 = vmul.f32 %v4543, %v3782
      %v4552 = vmul.f32 %v4544, %v3782
      %v4553 = vmul.f32 %v4545, %v3782
      %v4554 = vmul.f32 %v4546, %v3782
      %v4555 = vmul.f32 %v4547, %v3782
      %v4556 = vmul.f32 %v4548, %v3782
      %v4557 = vmul.f32 %v4549, %v3782
      %v4558 = vmul.f32 %v4550, %v3782
      %v4559 = vadd.f32 %v4535, %v4551
      %v4560 = vadd.f32 %v4536, %v4552
      %v4561 = vadd.f32 %v4537, %v4553
      %v4562 = vadd.f32 %v4538, %v4554
      %v4563 = vadd.f32 %v4539, %v4555
      %v4564 = vadd.f32 %v4540, %v4556
      %v4565 = vadd.f32 %v4541, %v4557
      %v4566 = vadd.f32 %v4542, %v4558
      %v4567 = vld [vmem:[%s3828] sm:$0xff]
      %v4568 = vld [vmem:[%s3828 + $0x10] sm:$0xff]
      %v4569 = vld [vmem:[%s3828 + $0x20] sm:$0xff]
      %v4570 = vld [vmem:[%s3828 + $0x30] sm:$0xff]
      %v4571 = vld [vmem:[%s3828 + $0x40] sm:$0xff]
      %v4572 = vld [vmem:[%s3828 + $0x50] sm:$0xff]
      %v4573 = vld [vmem:[%s3828 + $0x60] sm:$0xff]
      %v4574 = vld [vmem:[%s3828 + $0x70] sm:$0xff]
      %v4575 = vmul.f32 %v4567, %v3811
      %v4576 = vmul.f32 %v4568, %v3811
      %v4577 = vmul.f32 %v4569, %v3811
      %v4578 = vmul.f32 %v4570, %v3811
      %v4579 = vmul.f32 %v4571, %v3811
      %v4580 = vmul.f32 %v4572, %v3811
      %v4581 = vmul.f32 %v4573, %v3811
      %v4582 = vmul.f32 %v4574, %v3811
      %v4583 = vadd.f32 %v4559, %v4575
      %v4584 = vadd.f32 %v4560, %v4576
      %v4585 = vadd.f32 %v4561, %v4577
      %v4586 = vadd.f32 %v4562, %v4578
      %v4587 = vadd.f32 %v4563, %v4579
      %v4588 = vadd.f32 %v4564, %v4580
      %v4589 = vadd.f32 %v4565, %v4581
      %v4590 = vadd.f32 %v4566, %v4582
      %v4591 = vld [vmem:[%s3799 + $0x1] sm:$0xff]
      %v4592 = vld [vmem:[%s3799 + $0x11] sm:$0xff]
      %v4593 = vld [vmem:[%s3799 + $0x21] sm:$0xff]
      %v4594 = vld [vmem:[%s3799 + $0x31] sm:$0xff]
      %v4595 = vld [vmem:[%s3799 + $0x41] sm:$0xff]
      %v4596 = vld [vmem:[%s3799 + $0x51] sm:$0xff]
      %v4597 = vld [vmem:[%s3799 + $0x61] sm:$0xff]
      %v4598 = vld [vmem:[%s3799 + $0x71] sm:$0xff]
      %v4599 = vmul.f32 %v4591, %v3840
      %v4600 = vmul.f32 %v4592, %v3840
      %v4601 = vmul.f32 %v4593, %v3840
      %v4602 = vmul.f32 %v4594, %v3840
      %v4603 = vmul.f32 %v4595, %v3840
      %v4604 = vmul.f32 %v4596, %v3840
      %v4605 = vmul.f32 %v4597, %v3840
      %v4606 = vmul.f32 %v4598, %v3840
      %v4607 = vadd.f32 %v4583, %v4599
      %v4608 = vadd.f32 %v4584, %v4600
      %v4609 = vadd.f32 %v4585, %v4601
      %v4610 = vadd.f32 %v4586, %v4602
      %v4611 = vadd.f32 %v4587, %v4603
      %v4612 = vadd.f32 %v4588, %v4604
      %v4613 = vadd.f32 %v4589, %v4605
      %v4614 = vadd.f32 %v4590, %v4606
      %v4615 = vld [vmem:[%s3828 + $0x1] sm:$0xff]
      %v4616 = vld [vmem:[%s3828 + $0x11] sm:$0xff]
      %v4617 = vld [vmem:[%s3828 + $0x21] sm:$0xff]
      %v4618 = vld [vmem:[%s3828 + $0x31] sm:$0xff]
      %v4619 = vld [vmem:[%s3828 + $0x41] sm:$0xff]
      %v4620 = vld [vmem:[%s3828 + $0x51] sm:$0xff]
      %v4621 = vld [vmem:[%s3828 + $0x61] sm:$0xff]
      %v4622 = vld [vmem:[%s3828 + $0x71] sm:$0xff]
      %v4623 = vmul.f32 %v4615, %v3868
      %v4624 = vmul.f32 %v4616, %v3868
      %v4625 = vmul.f32 %v4617, %v3868
      %v4626 = vmul.f32 %v4618, %v3868
      %v4627 = vmul.f32 %v4619, %v3868
      %v4628 = vmul.f32 %v4620, %v3868
      %v4629 = vmul.f32 %v4621, %v3868
      %v4630 = vmul.f32 %v4622, %v3868
      %v4631 = vadd.f32 %v4607, %v4623
      %v4632 = vadd.f32 %v4608, %v4624
      %v4633 = vadd.f32 %v4609, %v4625
      %v4634 = vadd.f32 %v4610, %v4626
      %v4635 = vadd.f32 %v4611, %v4627
      %v4636 = vadd.f32 %v4612, %v4628
      %v4637 = vadd.f32 %v4613, %v4629
      %v4638 = vadd.f32 %v4614, %v4630
      %v4639 = vld [vmem:[%s3799 + $0x2] sm:$0xff]
      %v4640 = vld [vmem:[%s3799 + $0x12] sm:$0xff]
      %v4641 = vld [vmem:[%s3799 + $0x22] sm:$0xff]
      %v4642 = vld [vmem:[%s3799 + $0x32] sm:$0xff]
      %v4643 = vld [vmem:[%s3799 + $0x42] sm:$0xff]
      %v4644 = vld [vmem:[%s3799 + $0x52] sm:$0xff]
      %v4645 = vld [vmem:[%s3799 + $0x62] sm:$0xff]
      %v4646 = vld [vmem:[%s3799 + $0x72] sm:$0xff]
      %v4647 = vmul.f32 %v4639, %v3896
      %v4648 = vmul.f32 %v4640, %v3896
      %v4649 = vmul.f32 %v4641, %v3896
      %v4650 = vmul.f32 %v4642, %v3896
      %v4651 = vmul.f32 %v4643, %v3896
      %v4652 = vmul.f32 %v4644, %v3896
      %v4653 = vmul.f32 %v4645, %v3896
      %v4654 = vmul.f32 %v4646, %v3896
      %v4655 = vadd.f32 %v4631, %v4647
      %v4656 = vadd.f32 %v4632, %v4648
      %v4657 = vadd.f32 %v4633, %v4649
      %v4658 = vadd.f32 %v4634, %v4650
      %v4659 = vadd.f32 %v4635, %v4651
      %v4660 = vadd.f32 %v4636, %v4652
      %v4661 = vadd.f32 %v4637, %v4653
      %v4662 = vadd.f32 %v4638, %v4654
      %v4663 = vld [vmem:[%s3828 + $0x2] sm:$0xff]
      %v4664 = vld [vmem:[%s3828 + $0x12] sm:$0xff]
      %v4665 = vld [vmem:[%s3828 + $0x22] sm:$0xff]
      %v4666 = vld [vmem:[%s3828 + $0x32] sm:$0xff]
      %v4667 = vld [vmem:[%s3828 + $0x42] sm:$0xff]
      %v4668 = vld [vmem:[%s3828 + $0x52] sm:$0xff]
      %v4669 = vld [vmem:[%s3828 + $0x62] sm:$0xff]
      %v4670 = vld [vmem:[%s3828 + $0x72] sm:$0xff]
      %v4671 = vmul.f32 %v4663, %v3924
      %v4672 = vmul.f32 %v4664, %v3924
      %v4673 = vmul.f32 %v4665, %v3924
      %v4674 = vmul.f32 %v4666, %v3924
      %v4675 = vmul.f32 %v4667, %v3924
      %v4676 = vmul.f32 %v4668, %v3924
      %v4677 = vmul.f32 %v4669, %v3924
      %v4678 = vmul.f32 %v4670, %v3924
      %v4679 = vadd.f32 %v4655, %v4671
      %v4680 = vadd.f32 %v4656, %v4672
      %v4681 = vadd.f32 %v4657, %v4673
      %v4682 = vadd.f32 %v4658, %v4674
      %v4683 = vadd.f32 %v4659, %v4675
      %v4684 = vadd.f32 %v4660, %v4676
      %v4685 = vadd.f32 %v4661, %v4677
      %v4686 = vadd.f32 %v4662, %v4678
      %v4687 = vld [vmem:[%s470] sm:$0xff]
      %v4688 = vld [vmem:[%s470 + $0x10] sm:$0xff]
      %v4689 = vld [vmem:[%s470 + $0x20] sm:$0xff]
      %v4690 = vld [vmem:[%s470 + $0x30] sm:$0xff]
      %v4691 = vld [vmem:[%s470 + $0x40] sm:$0xff]
      %v4692 = vld [vmem:[%s470 + $0x50] sm:$0xff]
      %v4693 = vld [vmem:[%s470 + $0x60] sm:$0xff]
      %v4694 = vld [vmem:[%s470 + $0x70] sm:$0xff]
      %v4695 = vmul.f32 %v4687, %v3952
      %v4696 = vmul.f32 %v4688, %v3952
      %v4697 = vmul.f32 %v4689, %v3952
      %v4698 = vmul.f32 %v4690, %v3952
      %v4699 = vmul.f32 %v4691, %v3952
      %v4700 = vmul.f32 %v4692, %v3952
      %v4701 = vmul.f32 %v4693, %v3952
      %v4702 = vmul.f32 %v4694, %v3952
      %v4703 = vadd.f32 %v4679, %v4695
      %v4704 = vadd.f32 %v4680, %v4696
      %v4705 = vadd.f32 %v4681, %v4697
      %v4706 = vadd.f32 %v4682, %v4698
      %v4707 = vadd.f32 %v4683, %v4699
      %v4708 = vadd.f32 %v4684, %v4700
      %v4709 = vadd.f32 %v4685, %v4701
      %v4710 = vadd.f32 %v4686, %v4702
      %v4711 = vld [vmem:[%s452 + $0x1] sm:$0xff]
      %v4712 = vld [vmem:[%s452 + $0x11] sm:$0xff]
      %v4713 = vld [vmem:[%s452 + $0x21] sm:$0xff]
      %v4714 = vld [vmem:[%s452 + $0x31] sm:$0xff]
      %v4715 = vld [vmem:[%s452 + $0x41] sm:$0xff]
      %v4716 = vld [vmem:[%s452 + $0x51] sm:$0xff]
      %v4717 = vld [vmem:[%s452 + $0x61] sm:$0xff]
      %v4718 = vld [vmem:[%s452 + $0x71] sm:$0xff]
      %v4719 = vmul.f32 %v4711, %v3980
      %v4720 = vmul.f32 %v4712, %v3980
      %v4721 = vmul.f32 %v4713, %v3980
      %v4722 = vmul.f32 %v4714, %v3980
      %v4723 = vmul.f32 %v4715, %v3980
      %v4724 = vmul.f32 %v4716, %v3980
      %v4725 = vmul.f32 %v4717, %v3980
      %v4726 = vmul.f32 %v4718, %v3980
      %v4727 = vadd.f32 %v4703, %v4719
      %v4728 = vadd.f32 %v4704, %v4720
      %v4729 = vadd.f32 %v4705, %v4721
      %v4730 = vadd.f32 %v4706, %v4722
      %v4731 = vadd.f32 %v4707, %v4723
      %v4732 = vadd.f32 %v4708, %v4724
      %v4733 = vadd.f32 %v4709, %v4725
      %v4734 = vadd.f32 %v4710, %v4726
      %v4735 = vld [vmem:[%s470 + $0x1] sm:$0xff]
      %v4736 = vld [vmem:[%s470 + $0x11] sm:$0xff]
      %v4737 = vld [vmem:[%s470 + $0x21] sm:$0xff]
      %v4738 = vld [vmem:[%s470 + $0x31] sm:$0xff]
      %v4739 = vld [vmem:[%s470 + $0x41] sm:$0xff]
      %v4740 = vld [vmem:[%s470 + $0x51] sm:$0xff]
      %v4741 = vld [vmem:[%s470 + $0x61] sm:$0xff]
      %v4742 = vld [vmem:[%s470 + $0x71] sm:$0xff]
      %v4743 = vmul.f32 %v4735, %v4008
      %v4744 = vmul.f32 %v4736, %v4008
      %v4745 = vmul.f32 %v4737, %v4008
      %v4746 = vmul.f32 %v4738, %v4008
      %v4747 = vmul.f32 %v4739, %v4008
      %v4748 = vmul.f32 %v4740, %v4008
      %v4749 = vmul.f32 %v4741, %v4008
      %v4750 = vmul.f32 %v4742, %v4008
      %v4751 = vadd.f32 %v4727, %v4743
      %v4752 = vadd.f32 %v4728, %v4744
      %v4753 = vadd.f32 %v4729, %v4745
      %v4754 = vadd.f32 %v4730, %v4746
      %v4755 = vadd.f32 %v4731, %v4747
      %v4756 = vadd.f32 %v4732, %v4748
      %v4757 = vadd.f32 %v4733, %v4749
      %v4758 = vadd.f32 %v4734, %v4750
      %v4759 = vld [vmem:[%s452 + $0x2] sm:$0xff]
      %v4760 = vld [vmem:[%s452 + $0x12] sm:$0xff]
      %v4761 = vld [vmem:[%s452 + $0x22] sm:$0xff]
      %v4762 = vld [vmem:[%s452 + $0x32] sm:$0xff]
      %v4763 = vld [vmem:[%s452 + $0x42] sm:$0xff]
      %v4764 = vld [vmem:[%s452 + $0x52] sm:$0xff]
      %v4765 = vld [vmem:[%s452 + $0x62] sm:$0xff]
      %v4766 = vld [vmem:[%s452 + $0x72] sm:$0xff]
      %v4767 = vmul.f32 %v4759, %v4036
      %v4768 = vmul.f32 %v4760, %v4036
      %v4769 = vmul.f32 %v4761, %v4036
      %v4770 = vmul.f32 %v4762, %v4036
      %v4771 = vmul.f32 %v4763, %v4036
      %v4772 = vmul.f32 %v4764, %v4036
      %v4773 = vmul.f32 %v4765, %v4036
      %v4774 = vmul.f32 %v4766, %v4036
      %v4775 = vadd.f32 %v4751, %v4767
      %v4776 = vadd.f32 %v4752, %v4768
      %v4777 = vadd.f32 %v4753, %v4769
      %v4778 = vadd.f32 %v4754, %v4770
      %v4779 = vadd.f32 %v4755, %v4771
      %v4780 = vadd.f32 %v4756, %v4772
      %v4781 = vadd.f32 %v4757, %v4773
      %v4782 = vadd.f32 %v4758, %v4774
      %v4783 = vld [vmem:[%s470 + $0x2] sm:$0xff]
      %v4784 = vld [vmem:[%s470 + $0x12] sm:$0xff]
      %v4785 = vld [vmem:[%s470 + $0x22] sm:$0xff]
      %v4786 = vld [vmem:[%s470 + $0x32] sm:$0xff]
      %v4787 = vld [vmem:[%s470 + $0x42] sm:$0xff]
      %v4788 = vld [vmem:[%s470 + $0x52] sm:$0xff]
      %v4789 = vld [vmem:[%s470 + $0x62] sm:$0xff]
      %v4790 = vld [vmem:[%s470 + $0x72] sm:$0xff]
      %v4791 = vmul.f32 %v4783, %v4064
      %v4792 = vmul.f32 %v4784, %v4064
      %v4793 = vmul.f32 %v4785, %v4064
      %v4794 = vmul.f32 %v4786, %v4064
      %v4795 = vmul.f32 %v4787, %v4064
      %v4796 = vmul.f32 %v4788, %v4064
      %v4797 = vmul.f32 %v4789, %v4064
      %v4798 = vmul.f32 %v4790, %v4064
      %v4799 = vadd.f32 %v4775, %v4791
      %v4800 = vadd.f32 %v4776, %v4792
      %v4801 = vadd.f32 %v4777, %v4793
      %v4802 = vadd.f32 %v4778, %v4794
      %v4803 = vadd.f32 %v4779, %v4795
      %v4804 = vadd.f32 %v4780, %v4796
      %v4805 = vadd.f32 %v4781, %v4797
      %v4806 = vadd.f32 %v4782, %v4798
      %v4807 = vld [vmem:[%s506] sm:$0xff]
      %v4808 = vld [vmem:[%s506 + $0x10] sm:$0xff]
      %v4809 = vld [vmem:[%s506 + $0x20] sm:$0xff]
      %v4810 = vld [vmem:[%s506 + $0x30] sm:$0xff]
      %v4811 = vld [vmem:[%s506 + $0x40] sm:$0xff]
      %v4812 = vld [vmem:[%s506 + $0x50] sm:$0xff]
      %v4813 = vld [vmem:[%s506 + $0x60] sm:$0xff]
      %v4814 = vld [vmem:[%s506 + $0x70] sm:$0xff]
      %v4815 = vmul.f32 %v4807, %v4092
      %v4816 = vmul.f32 %v4808, %v4092
      %v4817 = vmul.f32 %v4809, %v4092
      %v4818 = vmul.f32 %v4810, %v4092
      %v4819 = vmul.f32 %v4811, %v4092
      %v4820 = vmul.f32 %v4812, %v4092
      %v4821 = vmul.f32 %v4813, %v4092
      %v4822 = vmul.f32 %v4814, %v4092
      %v4823 = vadd.f32 %v4799, %v4815
      %v4824 = vadd.f32 %v4800, %v4816
      %v4825 = vadd.f32 %v4801, %v4817
      %v4826 = vadd.f32 %v4802, %v4818
      %v4827 = vadd.f32 %v4803, %v4819
      %v4828 = vadd.f32 %v4804, %v4820
      %v4829 = vadd.f32 %v4805, %v4821
      %v4830 = vadd.f32 %v4806, %v4822
      %v4831 = vld [vmem:[%s488 + $0x1] sm:$0xff]
      %v4832 = vld [vmem:[%s488 + $0x11] sm:$0xff]
      %v4833 = vld [vmem:[%s488 + $0x21] sm:$0xff]
      %v4834 = vld [vmem:[%s488 + $0x31] sm:$0xff]
      %v4835 = vld [vmem:[%s488 + $0x41] sm:$0xff]
      %v4836 = vld [vmem:[%s488 + $0x51] sm:$0xff]
      %v4837 = vld [vmem:[%s488 + $0x61] sm:$0xff]
      %v4838 = vld [vmem:[%s488 + $0x71] sm:$0xff]
      %v4839 = vmul.f32 %v4831, %v4120
      %v4840 = vmul.f32 %v4832, %v4120
      %v4841 = vmul.f32 %v4833, %v4120
      %v4842 = vmul.f32 %v4834, %v4120
      %v4843 = vmul.f32 %v4835, %v4120
      %v4844 = vmul.f32 %v4836, %v4120
      %v4845 = vmul.f32 %v4837, %v4120
      %v4846 = vmul.f32 %v4838, %v4120
      %v4847 = vadd.f32 %v4823, %v4839
      %v4848 = vadd.f32 %v4824, %v4840
      %v4849 = vadd.f32 %v4825, %v4841
      %v4850 = vadd.f32 %v4826, %v4842
      %v4851 = vadd.f32 %v4827, %v4843
      %v4852 = vadd.f32 %v4828, %v4844
      %v4853 = vadd.f32 %v4829, %v4845
      %v4854 = vadd.f32 %v4830, %v4846
      %v4855 = vld [vmem:[%s506 + $0x1] sm:$0xff]
      %v4856 = vld [vmem:[%s506 + $0x11] sm:$0xff]
      %v4857 = vld [vmem:[%s506 + $0x21] sm:$0xff]
      %v4858 = vld [vmem:[%s506 + $0x31] sm:$0xff]
      %v4859 = vld [vmem:[%s506 + $0x41] sm:$0xff]
      %v4860 = vld [vmem:[%s506 + $0x51] sm:$0xff]
      %v4861 = vld [vmem:[%s506 + $0x61] sm:$0xff]
      %v4862 = vld [vmem:[%s506 + $0x71] sm:$0xff]
      %v4863 = vmul.f32 %v4855, %v4148
      %v4864 = vmul.f32 %v4856, %v4148
      %v4865 = vmul.f32 %v4857, %v4148
      %v4866 = vmul.f32 %v4858, %v4148
      %v4867 = vmul.f32 %v4859, %v4148
      %v4868 = vmul.f32 %v4860, %v4148
      %v4869 = vmul.f32 %v4861, %v4148
      %v4870 = vmul.f32 %v4862, %v4148
      %v4871 = vadd.f32 %v4847, %v4863
      %v4872 = vadd.f32 %v4848, %v4864
      %v4873 = vadd.f32 %v4849, %v4865
      %v4874 = vadd.f32 %v4850, %v4866
      %v4875 = vadd.f32 %v4851, %v4867
      %v4876 = vadd.f32 %v4852, %v4868
      %v4877 = vadd.f32 %v4853, %v4869
      %v4878 = vadd.f32 %v4854, %v4870
      %v4879 = vld [vmem:[%s488 + $0x2] sm:$0xff]
      %v4880 = vld [vmem:[%s488 + $0x12] sm:$0xff]
      %v4881 = vld [vmem:[%s488 + $0x22] sm:$0xff]
      %v4882 = vld [vmem:[%s488 + $0x32] sm:$0xff]
      %v4883 = vld [vmem:[%s488 + $0x42] sm:$0xff]
      %v4884 = vld [vmem:[%s488 + $0x52] sm:$0xff]
      %v4885 = vld [vmem:[%s488 + $0x62] sm:$0xff]
      %v4886 = vld [vmem:[%s488 + $0x72] sm:$0xff]
      %v4887 = vmul.f32 %v4879, %v4176
      %v4888 = vmul.f32 %v4880, %v4176
      %v4889 = vmul.f32 %v4881, %v4176
      %v4890 = vmul.f32 %v4882, %v4176
      %v4891 = vmul.f32 %v4883, %v4176
      %v4892 = vmul.f32 %v4884, %v4176
      %v4893 = vmul.f32 %v4885, %v4176
      %v4894 = vmul.f32 %v4886, %v4176
      %v4895 = vadd.f32 %v4871, %v4887
      %v4896 = vadd.f32 %v4872, %v4888
      %v4897 = vadd.f32 %v4873, %v4889
      %v4898 = vadd.f32 %v4874, %v4890
      %v4899 = vadd.f32 %v4875, %v4891
      %v4900 = vadd.f32 %v4876, %v4892
      %v4901 = vadd.f32 %v4877, %v4893
      %v4902 = vadd.f32 %v4878, %v4894
      %v4903 = vld [vmem:[%s506 + $0x2] sm:$0xff]
      %v4904 = vld [vmem:[%s506 + $0x12] sm:$0xff]
      %v4905 = vld [vmem:[%s506 + $0x22] sm:$0xff]
      %v4906 = vld [vmem:[%s506 + $0x32] sm:$0xff]
      %v4907 = vld [vmem:[%s506 + $0x42] sm:$0xff]
      %v4908 = vld [vmem:[%s506 + $0x52] sm:$0xff]
      %v4909 = vld [vmem:[%s506 + $0x62] sm:$0xff]
      %v4910 = vld [vmem:[%s506 + $0x72] sm:$0xff]
      %v4911 = vmul.f32 %v4903, %v4204
      %v4912 = vmul.f32 %v4904, %v4204
      %v4913 = vmul.f32 %v4905, %v4204
      %v4914 = vmul.f32 %v4906, %v4204
      %v4915 = vmul.f32 %v4907, %v4204
      %v4916 = vmul.f32 %v4908, %v4204
      %v4917 = vmul.f32 %v4909, %v4204
      %v4918 = vmul.f32 %v4910, %v4204
      %v4919 = vadd.f32 %v4895, %v4911
      %v4920 = vadd.f32 %v4896, %v4912
      %v4921 = vadd.f32 %v4897, %v4913
      %v4922 = vadd.f32 %v4898, %v4914
      %v4923 = vadd.f32 %v4899, %v4915
      %v4924 = vadd.f32 %v4900, %v4916
      %v4925 = vadd.f32 %v4901, %v4917
      %v4926 = vadd.f32 %v4902, %v4918
      %v4927 = vld [vmem:[%s4250] sm:$0xff]
      %v4928 = vld [vmem:[%s4250 + $0x10] sm:$0xff]
      %v4929 = vld [vmem:[%s4250 + $0x20] sm:$0xff]
      %v4930 = vld [vmem:[%s4250 + $0x30] sm:$0xff]
      %v4931 = vld [vmem:[%s4250 + $0x40] sm:$0xff]
      %v4932 = vld [vmem:[%s4250 + $0x50] sm:$0xff]
      %v4933 = vld [vmem:[%s4250 + $0x60] sm:$0xff]
      %v4934 = vld [vmem:[%s4250 + $0x70] sm:$0xff]
      %v4935 = vmul.f32 %v4927, %v4233
      %v4936 = vmul.f32 %v4928, %v4233
      %v4937 = vmul.f32 %v4929, %v4233
      %v4938 = vmul.f32 %v4930, %v4233
      %v4939 = vmul.f32 %v4931, %v4233
      %v4940 = vmul.f32 %v4932, %v4233
      %v4941 = vmul.f32 %v4933, %v4233
      %v4942 = vmul.f32 %v4934, %v4233
      %v4943 = vadd.f32 %v4919, %v4935
      %v4944 = vadd.f32 %v4920, %v4936
      %v4945 = vadd.f32 %v4921, %v4937
      %v4946 = vadd.f32 %v4922, %v4938
      %v4947 = vadd.f32 %v4923, %v4939
      %v4948 = vadd.f32 %v4924, %v4940
      %v4949 = vadd.f32 %v4925, %v4941
      %v4950 = vadd.f32 %v4926, %v4942
      %v4951 = vld [vmem:[%s4221 + $0x1] sm:$0xff]
      %v4952 = vld [vmem:[%s4221 + $0x11] sm:$0xff]
      %v4953 = vld [vmem:[%s4221 + $0x21] sm:$0xff]
      %v4954 = vld [vmem:[%s4221 + $0x31] sm:$0xff]
      %v4955 = vld [vmem:[%s4221 + $0x41] sm:$0xff]
      %v4956 = vld [vmem:[%s4221 + $0x51] sm:$0xff]
      %v4957 = vld [vmem:[%s4221 + $0x61] sm:$0xff]
      %v4958 = vld [vmem:[%s4221 + $0x71] sm:$0xff]
      %v4959 = vmul.f32 %v4951, %v4262
      %v4960 = vmul.f32 %v4952, %v4262
      %v4961 = vmul.f32 %v4953, %v4262
      %v4962 = vmul.f32 %v4954, %v4262
      %v4963 = vmul.f32 %v4955, %v4262
      %v4964 = vmul.f32 %v4956, %v4262
      %v4965 = vmul.f32 %v4957, %v4262
      %v4966 = vmul.f32 %v4958, %v4262
      %v4967 = vadd.f32 %v4943, %v4959
      %v4968 = vadd.f32 %v4944, %v4960
      %v4969 = vadd.f32 %v4945, %v4961
      %v4970 = vadd.f32 %v4946, %v4962
      %v4971 = vadd.f32 %v4947, %v4963
      %v4972 = vadd.f32 %v4948, %v4964
      %v4973 = vadd.f32 %v4949, %v4965
      %v4974 = vadd.f32 %v4950, %v4966
      %v4975 = vld [vmem:[%s4250 + $0x1] sm:$0xff]
      %v4976 = vld [vmem:[%s4250 + $0x11] sm:$0xff]
      %v4977 = vld [vmem:[%s4250 + $0x21] sm:$0xff]
      %v4978 = vld [vmem:[%s4250 + $0x31] sm:$0xff]
      %v4979 = vld [vmem:[%s4250 + $0x41] sm:$0xff]
      %v4980 = vld [vmem:[%s4250 + $0x51] sm:$0xff]
      %v4981 = vld [vmem:[%s4250 + $0x61] sm:$0xff]
      %v4982 = vld [vmem:[%s4250 + $0x71] sm:$0xff]
      %v4983 = vmul.f32 %v4975, %v4290
      %v4984 = vmul.f32 %v4976, %v4290
      %v4985 = vmul.f32 %v4977, %v4290
      %v4986 = vmul.f32 %v4978, %v4290
      %v4987 = vmul.f32 %v4979, %v4290
      %v4988 = vmul.f32 %v4980, %v4290
      %v4989 = vmul.f32 %v4981, %v4290
      %v4990 = vmul.f32 %v4982, %v4290
      %v4991 = vadd.f32 %v4967, %v4983
      %v4992 = vadd.f32 %v4968, %v4984
      %v4993 = vadd.f32 %v4969, %v4985
      %v4994 = vadd.f32 %v4970, %v4986
      %v4995 = vadd.f32 %v4971, %v4987
      %v4996 = vadd.f32 %v4972, %v4988
      %v4997 = vadd.f32 %v4973, %v4989
      %v4998 = vadd.f32 %v4974, %v4990
      %v4999 = vld [vmem:[%s4221 + $0x2] sm:$0xff]
      %v5000 = vld [vmem:[%s4221 + $0x12] sm:$0xff]
      %v5001 = vld [vmem:[%s4221 + $0x22] sm:$0xff]
      %v5002 = vld [vmem:[%s4221 + $0x32] sm:$0xff]
      %v5003 = vld [vmem:[%s4221 + $0x42] sm:$0xff]
      %v5004 = vld [vmem:[%s4221 + $0x52] sm:$0xff]
      %v5005 = vld [vmem:[%s4221 + $0x62] sm:$0xff]
      %v5006 = vld [vmem:[%s4221 + $0x72] sm:$0xff]
      %v5007 = vmul.f32 %v4999, %v4318
      %v5008 = vmul.f32 %v5000, %v4318
      %v5009 = vmul.f32 %v5001, %v4318
      %v5010 = vmul.f32 %v5002, %v4318
      %v5011 = vmul.f32 %v5003, %v4318
      %v5012 = vmul.f32 %v5004, %v4318
      %v5013 = vmul.f32 %v5005, %v4318
      %v5014 = vmul.f32 %v5006, %v4318
      %v5015 = vadd.f32 %v4991, %v5007
      %v5016 = vadd.f32 %v4992, %v5008
      %v5017 = vadd.f32 %v4993, %v5009
      %v5018 = vadd.f32 %v4994, %v5010
      %v5019 = vadd.f32 %v4995, %v5011
      %v5020 = vadd.f32 %v4996, %v5012
      %v5021 = vadd.f32 %v4997, %v5013
      %v5022 = vadd.f32 %v4998, %v5014
      %v5023 = vld [vmem:[%s4250 + $0x2] sm:$0xff]
      %v5024 = vld [vmem:[%s4250 + $0x12] sm:$0xff]
      %v5025 = vld [vmem:[%s4250 + $0x22] sm:$0xff]
      %v5026 = vld [vmem:[%s4250 + $0x32] sm:$0xff]
      %v5027 = vld [vmem:[%s4250 + $0x42] sm:$0xff]
      %v5028 = vld [vmem:[%s4250 + $0x52] sm:$0xff]
      %v5029 = vld [vmem:[%s4250 + $0x62] sm:$0xff]
      %v5030 = vld [vmem:[%s4250 + $0x72] sm:$0xff]
      %v5031 = vmul.f32 %v5023, %v4346
      %v5032 = vmul.f32 %v5024, %v4346
      %v5033 = vmul.f32 %v5025, %v4346
      %v5034 = vmul.f32 %v5026, %v4346
      %v5035 = vmul.f32 %v5027, %v4346
      %v5036 = vmul.f32 %v5028, %v4346
      %v5037 = vmul.f32 %v5029, %v4346
      %v5038 = vmul.f32 %v5030, %v4346
      %v5039 = vadd.f32 %v5015, %v5031
      %v5040 = vadd.f32 %v5016, %v5032
      %v5041 = vadd.f32 %v5017, %v5033
      %v5042 = vadd.f32 %v5018, %v5034
      %v5043 = vadd.f32 %v5019, %v5035
      %v5044 = vadd.f32 %v5020, %v5036
      %v5045 = vadd.f32 %v5021, %v5037
      %v5046 = vadd.f32 %v5022, %v5038
      %v5047 = vadd.f32 %v5039, %v4367
      %v5048 = vadd.f32 %v5040, %v4367
      %v5049 = vadd.f32 %v5041, %v4367
      %v5050 = vadd.f32 %v5042, %v4367
      %v5051 = vadd.f32 %v5043, %v4367
      %v5052 = vadd.f32 %v5044, %v4367
      %v5053 = vadd.f32 %v5045, %v4367
      %v5054 = vadd.f32 %v5046, %v4367
      %v5055 = vmul.f32 %v4381, %v5047
      %v5056 = vmul.f32 %v4381, %v5048
      %v5057 = vmul.f32 %v4381, %v5049
      %v5058 = vmul.f32 %v4381, %v5050
      %v5059 = vmul.f32 %v4381, %v5051
      %v5060 = vmul.f32 %v4381, %v5052
      %v5061 = vmul.f32 %v4381, %v5053
      %v5062 = vmul.f32 %v4381, %v5054
      %v5063 = vadd.f32 %v5055, %v4439
      %v5064 = vadd.f32 %v5056, %v4440
      %v5065 = vadd.f32 %v5057, %v4441
      %v5066 = vadd.f32 %v5058, %v4442
      %v5067 = vadd.f32 %v5059, %v4443
      %v5068 = vadd.f32 %v5060, %v4444
      %v5069 = vadd.f32 %v5061, %v4445
      %v5070 = vadd.f32 %v5062, %v4446
      %s5071 = scalar_lea.vmem %s361, 8
      %5072 = vst.msk [vmem:[%s5071] sm:$0xff] %vm362, %v5063
      %5073 = vst.msk [vmem:[%s5071 + $0x20] sm:$0xff] %vm362, %v5064
      %5074 = vst.msk [vmem:[%s5071 + $0x40] sm:$0xff] %vm362, %v5065
      %5075 = vst.msk [vmem:[%s5071 + $0x60] sm:$0xff] %vm362, %v5066
      %5076 = vst.msk [vmem:[%s5071 + $0x80] sm:$0xff] %vm362, %v5067
      %5077 = vst.msk [vmem:[%s5071 + $0xa0] sm:$0xff] %vm362, %v5068
      %5078 = vst.msk [vmem:[%s5071 + $0xc0] sm:$0xff] %vm362, %v5069
      %5079 = vst.msk [vmem:[%s5071 + $0xe0] sm:$0xff] %vm362, %v5070
      %v5080 = vmul.f32 %v3602, -1.0
      %v5081 = vmul.f32 %v3603, -1.0
      %v5082 = vmul.f32 %v3604, -1.0
      %v5083 = vmul.f32 %v3605, -1.0
      %v5084 = vmul.f32 %v3606, -1.0
      %v5085 = vmul.f32 %v3607, -1.0
      %v5086 = vmul.f32 %v3608, -1.0
      %v5087 = vmul.f32 %v3609, -1.0
      %v5088 = vadd.f32 %v3594, %v5080
      %v5089 = vadd.f32 %v3595, %v5081
      %v5090 = vadd.f32 %v3596, %v5082
      %v5091 = vadd.f32 %v3597, %v5083
      %v5092 = vadd.f32 %v3598, %v5084
      %v5093 = vadd.f32 %v3599, %v5085
      %v5094 = vadd.f32 %v3600, %v5086
      %v5095 = vadd.f32 %v3601, %v5087
      %v5096 = vadd.f32 %v5088, %v3610
      %v5097 = vadd.f32 %v5089, %v3611
      %v5098 = vadd.f32 %v5090, %v3612
      %v5099 = vadd.f32 %v5091, %v3613
      %v5100 = vadd.f32 %v5092, %v3614
      %v5101 = vadd.f32 %v5093, %v3615
      %v5102 = vadd.f32 %v5094, %v3616
      %v5103 = vadd.f32 %v5095, %v3617
      %v5104 = vadd.f32 %v5096, %v4423
      %v5105 = vadd.f32 %v5097, %v4424
      %v5106 = vadd.f32 %v5098, %v4425
      %v5107 = vadd.f32 %v5099, %v4426
      %v5108 = vadd.f32 %v5100, %v4427
      %v5109 = vadd.f32 %v5101, %v4428
      %v5110 = vadd.f32 %v5102, %v4429
      %v5111 = vadd.f32 %v5103, %v4430
      %v5112 = vmul.f32 %v5104, 0.5
      %v5113 = vmul.f32 %v5105, 0.5
      %v5114 = vmul.f32 %v5106, 0.5
      %v5115 = vmul.f32 %v5107, 0.5
      %v5116 = vmul.f32 %v5108, 0.5
      %v5117 = vmul.f32 %v5109, 0.5
      %v5118 = vmul.f32 %v5110, 0.5
      %v5119 = vmul.f32 %v5111, 0.5
      %v5120 = vld [vmem:[%s3799] sm:$0xff]
      %v5121 = vld [vmem:[%s3799 + $0x10] sm:$0xff]
      %v5122 = vld [vmem:[%s3799 + $0x20] sm:$0xff]
      %v5123 = vld [vmem:[%s3799 + $0x30] sm:$0xff]
      %v5124 = vld [vmem:[%s3799 + $0x40] sm:$0xff]
      %v5125 = vld [vmem:[%s3799 + $0x50] sm:$0xff]
      %v5126 = vld [vmem:[%s3799 + $0x60] sm:$0xff]
      %v5127 = vld [vmem:[%s3799 + $0x70] sm:$0xff]
      %v5128 = vmul.f32 %v5120, %v3669
      %v5129 = vmul.f32 %v5121, %v3669
      %v5130 = vmul.f32 %v5122, %v3669
      %v5131 = vmul.f32 %v5123, %v3669
      %v5132 = vmul.f32 %v5124, %v3669
      %v5133 = vmul.f32 %v5125, %v3669
      %v5134 = vmul.f32 %v5126, %v3669
      %v5135 = vmul.f32 %v5127, %v3669
      %v5136 = vadd.f32 %v5128, 0.0
      %v5137 = vadd.f32 %v5129, 0.0
      %v5138 = vadd.f32 %v5130, 0.0
      %v5139 = vadd.f32 %v5131, 0.0
      %v5140 = vadd.f32 %v5132, 0.0
      %v5141 = vadd.f32 %v5133, 0.0
      %v5142 = vadd.f32 %v5134, 0.0
      %v5143 = vadd.f32 %v5135, 0.0
      %v5144 = vld [vmem:[%s3828] sm:$0xff]
      %v5145 = vld [vmem:[%s3828 + $0x10] sm:$0xff]
      %v5146 = vld [vmem:[%s3828 + $0x20] sm:$0xff]
      %v5147 = vld [vmem:[%s3828 + $0x30] sm:$0xff]
      %v5148 = vld [vmem:[%s3828 + $0x40] sm:$0xff]
      %v5149 = vld [vmem:[%s3828 + $0x50] sm:$0xff]
      %v5150 = vld [vmem:[%s3828 + $0x60] sm:$0xff]
      %v5151 = vld [vmem:[%s3828 + $0x70] sm:$0xff]
      %v5152 = vmul.f32 %v5144, %v3698
      %v5153 = vmul.f32 %v5145, %v3698
      %v5154 = vmul.f32 %v5146, %v3698
      %v5155 = vmul.f32 %v5147, %v3698
      %v5156 = vmul.f32 %v5148, %v3698
      %v5157 = vmul.f32 %v5149, %v3698
      %v5158 = vmul.f32 %v5150, %v3698
      %v5159 = vmul.f32 %v5151, %v3698
      %v5160 = vadd.f32 %v5136, %v5152
      %v5161 = vadd.f32 %v5137, %v5153
      %v5162 = vadd.f32 %v5138, %v5154
      %v5163 = vadd.f32 %v5139, %v5155
      %v5164 = vadd.f32 %v5140, %v5156
      %v5165 = vadd.f32 %v5141, %v5157
      %v5166 = vadd.f32 %v5142, %v5158
      %v5167 = vadd.f32 %v5143, %v5159
      %v5168 = vld [vmem:[%s3799 + $0x1] sm:$0xff]
      %v5169 = vld [vmem:[%s3799 + $0x11] sm:$0xff]
      %v5170 = vld [vmem:[%s3799 + $0x21] sm:$0xff]
      %v5171 = vld [vmem:[%s3799 + $0x31] sm:$0xff]
      %v5172 = vld [vmem:[%s3799 + $0x41] sm:$0xff]
      %v5173 = vld [vmem:[%s3799 + $0x51] sm:$0xff]
      %v5174 = vld [vmem:[%s3799 + $0x61] sm:$0xff]
      %v5175 = vld [vmem:[%s3799 + $0x71] sm:$0xff]
      %v5176 = vmul.f32 %v5168, %v3726
      %v5177 = vmul.f32 %v5169, %v3726
      %v5178 = vmul.f32 %v5170, %v3726
      %v5179 = vmul.f32 %v5171, %v3726
      %v5180 = vmul.f32 %v5172, %v3726
      %v5181 = vmul.f32 %v5173, %v3726
      %v5182 = vmul.f32 %v5174, %v3726
      %v5183 = vmul.f32 %v5175, %v3726
      %v5184 = vadd.f32 %v5160, %v5176
      %v5185 = vadd.f32 %v5161, %v5177
      %v5186 = vadd.f32 %v5162, %v5178
      %v5187 = vadd.f32 %v5163, %v5179
      %v5188 = vadd.f32 %v5164, %v5180
      %v5189 = vadd.f32 %v5165, %v5181
      %v5190 = vadd.f32 %v5166, %v5182
      %v5191 = vadd.f32 %v5167, %v5183
      %v5192 = vld [vmem:[%s3828 + $0x1] sm:$0xff]
      %v5193 = vld [vmem:[%s3828 + $0x11] sm:$0xff]
      %v5194 = vld [vmem:[%s3828 + $0x21] sm:$0xff]
      %v5195 = vld [vmem:[%s3828 + $0x31] sm:$0xff]
      %v5196 = vld [vmem:[%s3828 + $0x41] sm:$0xff]
      %v5197 = vld [vmem:[%s3828 + $0x51] sm:$0xff]
      %v5198 = vld [vmem:[%s3828 + $0x61] sm:$0xff]
      %v5199 = vld [vmem:[%s3828 + $0x71] sm:$0xff]
      %v5200 = vmul.f32 %v5192, %v3754
      %v5201 = vmul.f32 %v5193, %v3754
      %v5202 = vmul.f32 %v5194, %v3754
      %v5203 = vmul.f32 %v5195, %v3754
      %v5204 = vmul.f32 %v5196, %v3754
      %v5205 = vmul.f32 %v5197, %v3754
      %v5206 = vmul.f32 %v5198, %v3754
      %v5207 = vmul.f32 %v5199, %v3754
      %v5208 = vadd.f32 %v5184, %v5200
      %v5209 = vadd.f32 %v5185, %v5201
      %v5210 = vadd.f32 %v5186, %v5202
      %v5211 = vadd.f32 %v5187, %v5203
      %v5212 = vadd.f32 %v5188, %v5204
      %v5213 = vadd.f32 %v5189, %v5205
      %v5214 = vadd.f32 %v5190, %v5206
      %v5215 = vadd.f32 %v5191, %v5207
      %v5216 = vld [vmem:[%s3799 + $0x2] sm:$0xff]
      %v5217 = vld [vmem:[%s3799 + $0x12] sm:$0xff]
      %v5218 = vld [vmem:[%s3799 + $0x22] sm:$0xff]
      %v5219 = vld [vmem:[%s3799 + $0x32] sm:$0xff]
      %v5220 = vld [vmem:[%s3799 + $0x42] sm:$0xff]
      %v5221 = vld [vmem:[%s3799 + $0x52] sm:$0xff]
      %v5222 = vld [vmem:[%s3799 + $0x62] sm:$0xff]
      %v5223 = vld [vmem:[%s3799 + $0x72] sm:$0xff]
      %v5224 = vmul.f32 %v5216, %v3782
      %v5225 = vmul.f32 %v5217, %v3782
      %v5226 = vmul.f32 %v5218, %v3782
      %v5227 = vmul.f32 %v5219, %v3782
      %v5228 = vmul.f32 %v5220, %v3782
      %v5229 = vmul.f32 %v5221, %v3782
      %v5230 = vmul.f32 %v5222, %v3782
      %v5231 = vmul.f32 %v5223, %v3782
      %v5232 = vadd.f32 %v5208, %v5224
      %v5233 = vadd.f32 %v5209, %v5225
      %v5234 = vadd.f32 %v5210, %v5226
      %v5235 = vadd.f32 %v5211, %v5227
      %v5236 = vadd.f32 %v5212, %v5228
      %v5237 = vadd.f32 %v5213, %v5229
      %v5238 = vadd.f32 %v5214, %v5230
      %v5239 = vadd.f32 %v5215, %v5231
      %v5240 = vld [vmem:[%s452] sm:$0xff]
      %v5241 = vld [vmem:[%s452 + $0x10] sm:$0xff]
      %v5242 = vld [vmem:[%s452 + $0x20] sm:$0xff]
      %v5243 = vld [vmem:[%s452 + $0x30] sm:$0xff]
      %v5244 = vld [vmem:[%s452 + $0x40] sm:$0xff]
      %v5245 = vld [vmem:[%s452 + $0x50] sm:$0xff]
      %v5246 = vld [vmem:[%s452 + $0x60] sm:$0xff]
      %v5247 = vld [vmem:[%s452 + $0x70] sm:$0xff]
      %v5248 = vmul.f32 %v5240, %v3811
      %v5249 = vmul.f32 %v5241, %v3811
      %v5250 = vmul.f32 %v5242, %v3811
      %v5251 = vmul.f32 %v5243, %v3811
      %v5252 = vmul.f32 %v5244, %v3811
      %v5253 = vmul.f32 %v5245, %v3811
      %v5254 = vmul.f32 %v5246, %v3811
      %v5255 = vmul.f32 %v5247, %v3811
      %v5256 = vadd.f32 %v5232, %v5248
      %v5257 = vadd.f32 %v5233, %v5249
      %v5258 = vadd.f32 %v5234, %v5250
      %v5259 = vadd.f32 %v5235, %v5251
      %v5260 = vadd.f32 %v5236, %v5252
      %v5261 = vadd.f32 %v5237, %v5253
      %v5262 = vadd.f32 %v5238, %v5254
      %v5263 = vadd.f32 %v5239, %v5255
      %v5264 = vld [vmem:[%s470] sm:$0xff]
      %v5265 = vld [vmem:[%s470 + $0x10] sm:$0xff]
      %v5266 = vld [vmem:[%s470 + $0x20] sm:$0xff]
      %v5267 = vld [vmem:[%s470 + $0x30] sm:$0xff]
      %v5268 = vld [vmem:[%s470 + $0x40] sm:$0xff]
      %v5269 = vld [vmem:[%s470 + $0x50] sm:$0xff]
      %v5270 = vld [vmem:[%s470 + $0x60] sm:$0xff]
      %v5271 = vld [vmem:[%s470 + $0x70] sm:$0xff]
      %v5272 = vmul.f32 %v5264, %v3840
      %v5273 = vmul.f32 %v5265, %v3840
      %v5274 = vmul.f32 %v5266, %v3840
      %v5275 = vmul.f32 %v5267, %v3840
      %v5276 = vmul.f32 %v5268, %v3840
      %v5277 = vmul.f32 %v5269, %v3840
      %v5278 = vmul.f32 %v5270, %v3840
      %v5279 = vmul.f32 %v5271, %v3840
      %v5280 = vadd.f32 %v5256, %v5272
      %v5281 = vadd.f32 %v5257, %v5273
      %v5282 = vadd.f32 %v5258, %v5274
      %v5283 = vadd.f32 %v5259, %v5275
      %v5284 = vadd.f32 %v5260, %v5276
      %v5285 = vadd.f32 %v5261, %v5277
      %v5286 = vadd.f32 %v5262, %v5278
      %v5287 = vadd.f32 %v5263, %v5279
      %v5288 = vld [vmem:[%s452 + $0x1] sm:$0xff]
      %v5289 = vld [vmem:[%s452 + $0x11] sm:$0xff]
      %v5290 = vld [vmem:[%s452 + $0x21] sm:$0xff]
      %v5291 = vld [vmem:[%s452 + $0x31] sm:$0xff]
      %v5292 = vld [vmem:[%s452 + $0x41] sm:$0xff]
      %v5293 = vld [vmem:[%s452 + $0x51] sm:$0xff]
      %v5294 = vld [vmem:[%s452 + $0x61] sm:$0xff]
      %v5295 = vld [vmem:[%s452 + $0x71] sm:$0xff]
      %v5296 = vmul.f32 %v5288, %v3868
      %v5297 = vmul.f32 %v5289, %v3868
      %v5298 = vmul.f32 %v5290, %v3868
      %v5299 = vmul.f32 %v5291, %v3868
      %v5300 = vmul.f32 %v5292, %v3868
      %v5301 = vmul.f32 %v5293, %v3868
      %v5302 = vmul.f32 %v5294, %v3868
      %v5303 = vmul.f32 %v5295, %v3868
      %v5304 = vadd.f32 %v5280, %v5296
      %v5305 = vadd.f32 %v5281, %v5297
      %v5306 = vadd.f32 %v5282, %v5298
      %v5307 = vadd.f32 %v5283, %v5299
      %v5308 = vadd.f32 %v5284, %v5300
      %v5309 = vadd.f32 %v5285, %v5301
      %v5310 = vadd.f32 %v5286, %v5302
      %v5311 = vadd.f32 %v5287, %v5303
      %v5312 = vld [vmem:[%s470 + $0x1] sm:$0xff]
      %v5313 = vld [vmem:[%s470 + $0x11] sm:$0xff]
      %v5314 = vld [vmem:[%s470 + $0x21] sm:$0xff]
      %v5315 = vld [vmem:[%s470 + $0x31] sm:$0xff]
      %v5316 = vld [vmem:[%s470 + $0x41] sm:$0xff]
      %v5317 = vld [vmem:[%s470 + $0x51] sm:$0xff]
      %v5318 = vld [vmem:[%s470 + $0x61] sm:$0xff]
      %v5319 = vld [vmem:[%s470 + $0x71] sm:$0xff]
      %v5320 = vmul.f32 %v5312, %v3896
      %v5321 = vmul.f32 %v5313, %v3896
      %v5322 = vmul.f32 %v5314, %v3896
      %v5323 = vmul.f32 %v5315, %v3896
      %v5324 = vmul.f32 %v5316, %v3896
      %v5325 = vmul.f32 %v5317, %v3896
      %v5326 = vmul.f32 %v5318, %v3896
      %v5327 = vmul.f32 %v5319, %v3896
      %v5328 = vadd.f32 %v5304, %v5320
      %v5329 = vadd.f32 %v5305, %v5321
      %v5330 = vadd.f32 %v5306, %v5322
      %v5331 = vadd.f32 %v5307, %v5323
      %v5332 = vadd.f32 %v5308, %v5324
      %v5333 = vadd.f32 %v5309, %v5325
      %v5334 = vadd.f32 %v5310, %v5326
      %v5335 = vadd.f32 %v5311, %v5327
      %v5336 = vld [vmem:[%s452 + $0x2] sm:$0xff]
      %v5337 = vld [vmem:[%s452 + $0x12] sm:$0xff]
      %v5338 = vld [vmem:[%s452 + $0x22] sm:$0xff]
      %v5339 = vld [vmem:[%s452 + $0x32] sm:$0xff]
      %v5340 = vld [vmem:[%s452 + $0x42] sm:$0xff]
      %v5341 = vld [vmem:[%s452 + $0x52] sm:$0xff]
      %v5342 = vld [vmem:[%s452 + $0x62] sm:$0xff]
      %v5343 = vld [vmem:[%s452 + $0x72] sm:$0xff]
      %v5344 = vmul.f32 %v5336, %v3924
      %v5345 = vmul.f32 %v5337, %v3924
      %v5346 = vmul.f32 %v5338, %v3924
      %v5347 = vmul.f32 %v5339, %v3924
      %v5348 = vmul.f32 %v5340, %v3924
      %v5349 = vmul.f32 %v5341, %v3924
      %v5350 = vmul.f32 %v5342, %v3924
      %v5351 = vmul.f32 %v5343, %v3924
      %v5352 = vadd.f32 %v5328, %v5344
      %v5353 = vadd.f32 %v5329, %v5345
      %v5354 = vadd.f32 %v5330, %v5346
      %v5355 = vadd.f32 %v5331, %v5347
      %v5356 = vadd.f32 %v5332, %v5348
      %v5357 = vadd.f32 %v5333, %v5349
      %v5358 = vadd.f32 %v5334, %v5350
      %v5359 = vadd.f32 %v5335, %v5351
      %v5360 = vld [vmem:[%s488] sm:$0xff]
      %v5361 = vld [vmem:[%s488 + $0x10] sm:$0xff]
      %v5362 = vld [vmem:[%s488 + $0x20] sm:$0xff]
      %v5363 = vld [vmem:[%s488 + $0x30] sm:$0xff]
      %v5364 = vld [vmem:[%s488 + $0x40] sm:$0xff]
      %v5365 = vld [vmem:[%s488 + $0x50] sm:$0xff]
      %v5366 = vld [vmem:[%s488 + $0x60] sm:$0xff]
      %v5367 = vld [vmem:[%s488 + $0x70] sm:$0xff]
      %v5368 = vmul.f32 %v5360, %v3952
      %v5369 = vmul.f32 %v5361, %v3952
      %v5370 = vmul.f32 %v5362, %v3952
      %v5371 = vmul.f32 %v5363, %v3952
      %v5372 = vmul.f32 %v5364, %v3952
      %v5373 = vmul.f32 %v5365, %v3952
      %v5374 = vmul.f32 %v5366, %v3952
      %v5375 = vmul.f32 %v5367, %v3952
      %v5376 = vadd.f32 %v5352, %v5368
      %v5377 = vadd.f32 %v5353, %v5369
      %v5378 = vadd.f32 %v5354, %v5370
      %v5379 = vadd.f32 %v5355, %v5371
      %v5380 = vadd.f32 %v5356, %v5372
      %v5381 = vadd.f32 %v5357, %v5373
      %v5382 = vadd.f32 %v5358, %v5374
      %v5383 = vadd.f32 %v5359, %v5375
      %v5384 = vld [vmem:[%s506] sm:$0xff]
      %v5385 = vld [vmem:[%s506 + $0x10] sm:$0xff]
      %v5386 = vld [vmem:[%s506 + $0x20] sm:$0xff]
      %v5387 = vld [vmem:[%s506 + $0x30] sm:$0xff]
      %v5388 = vld [vmem:[%s506 + $0x40] sm:$0xff]
      %v5389 = vld [vmem:[%s506 + $0x50] sm:$0xff]
      %v5390 = vld [vmem:[%s506 + $0x60] sm:$0xff]
      %v5391 = vld [vmem:[%s506 + $0x70] sm:$0xff]
      %v5392 = vmul.f32 %v5384, %v3980
      %v5393 = vmul.f32 %v5385, %v3980
      %v5394 = vmul.f32 %v5386, %v3980
      %v5395 = vmul.f32 %v5387, %v3980
      %v5396 = vmul.f32 %v5388, %v3980
      %v5397 = vmul.f32 %v5389, %v3980
      %v5398 = vmul.f32 %v5390, %v3980
      %v5399 = vmul.f32 %v5391, %v3980
      %v5400 = vadd.f32 %v5376, %v5392
      %v5401 = vadd.f32 %v5377, %v5393
      %v5402 = vadd.f32 %v5378, %v5394
      %v5403 = vadd.f32 %v5379, %v5395
      %v5404 = vadd.f32 %v5380, %v5396
      %v5405 = vadd.f32 %v5381, %v5397
      %v5406 = vadd.f32 %v5382, %v5398
      %v5407 = vadd.f32 %v5383, %v5399
      %v5408 = vld [vmem:[%s488 + $0x1] sm:$0xff]
      %v5409 = vld [vmem:[%s488 + $0x11] sm:$0xff]
      %v5410 = vld [vmem:[%s488 + $0x21] sm:$0xff]
      %v5411 = vld [vmem:[%s488 + $0x31] sm:$0xff]
      %v5412 = vld [vmem:[%s488 + $0x41] sm:$0xff]
      %v5413 = vld [vmem:[%s488 + $0x51] sm:$0xff]
      %v5414 = vld [vmem:[%s488 + $0x61] sm:$0xff]
      %v5415 = vld [vmem:[%s488 + $0x71] sm:$0xff]
      %v5416 = vmul.f32 %v5408, %v4008
      %v5417 = vmul.f32 %v5409, %v4008
      %v5418 = vmul.f32 %v5410, %v4008
      %v5419 = vmul.f32 %v5411, %v4008
      %v5420 = vmul.f32 %v5412, %v4008
      %v5421 = vmul.f32 %v5413, %v4008
      %v5422 = vmul.f32 %v5414, %v4008
      %v5423 = vmul.f32 %v5415, %v4008
      %v5424 = vadd.f32 %v5400, %v5416
      %v5425 = vadd.f32 %v5401, %v5417
      %v5426 = vadd.f32 %v5402, %v5418
      %v5427 = vadd.f32 %v5403, %v5419
      %v5428 = vadd.f32 %v5404, %v5420
      %v5429 = vadd.f32 %v5405, %v5421
      %v5430 = vadd.f32 %v5406, %v5422
      %v5431 = vadd.f32 %v5407, %v5423
      %v5432 = vld [vmem:[%s506 + $0x1] sm:$0xff]
      %v5433 = vld [vmem:[%s506 + $0x11] sm:$0xff]
      %v5434 = vld [vmem:[%s506 + $0x21] sm:$0xff]
      %v5435 = vld [vmem:[%s506 + $0x31] sm:$0xff]
      %v5436 = vld [vmem:[%s506 + $0x41] sm:$0xff]
      %v5437 = vld [vmem:[%s506 + $0x51] sm:$0xff]
      %v5438 = vld [vmem:[%s506 + $0x61] sm:$0xff]
      %v5439 = vld [vmem:[%s506 + $0x71] sm:$0xff]
      %v5440 = vmul.f32 %v5432, %v4036
      %v5441 = vmul.f32 %v5433, %v4036
      %v5442 = vmul.f32 %v5434, %v4036
      %v5443 = vmul.f32 %v5435, %v4036
      %v5444 = vmul.f32 %v5436, %v4036
      %v5445 = vmul.f32 %v5437, %v4036
      %v5446 = vmul.f32 %v5438, %v4036
      %v5447 = vmul.f32 %v5439, %v4036
      %v5448 = vadd.f32 %v5424, %v5440
      %v5449 = vadd.f32 %v5425, %v5441
      %v5450 = vadd.f32 %v5426, %v5442
      %v5451 = vadd.f32 %v5427, %v5443
      %v5452 = vadd.f32 %v5428, %v5444
      %v5453 = vadd.f32 %v5429, %v5445
      %v5454 = vadd.f32 %v5430, %v5446
      %v5455 = vadd.f32 %v5431, %v5447
      %v5456 = vld [vmem:[%s488 + $0x2] sm:$0xff]
      %v5457 = vld [vmem:[%s488 + $0x12] sm:$0xff]
      %v5458 = vld [vmem:[%s488 + $0x22] sm:$0xff]
      %v5459 = vld [vmem:[%s488 + $0x32] sm:$0xff]
      %v5460 = vld [vmem:[%s488 + $0x42] sm:$0xff]
      %v5461 = vld [vmem:[%s488 + $0x52] sm:$0xff]
      %v5462 = vld [vmem:[%s488 + $0x62] sm:$0xff]
      %v5463 = vld [vmem:[%s488 + $0x72] sm:$0xff]
      %v5464 = vmul.f32 %v5456, %v4064
      %v5465 = vmul.f32 %v5457, %v4064
      %v5466 = vmul.f32 %v5458, %v4064
      %v5467 = vmul.f32 %v5459, %v4064
      %v5468 = vmul.f32 %v5460, %v4064
      %v5469 = vmul.f32 %v5461, %v4064
      %v5470 = vmul.f32 %v5462, %v4064
      %v5471 = vmul.f32 %v5463, %v4064
      %v5472 = vadd.f32 %v5448, %v5464
      %v5473 = vadd.f32 %v5449, %v5465
      %v5474 = vadd.f32 %v5450, %v5466
      %v5475 = vadd.f32 %v5451, %v5467
      %v5476 = vadd.f32 %v5452, %v5468
      %v5477 = vadd.f32 %v5453, %v5469
      %v5478 = vadd.f32 %v5454, %v5470
      %v5479 = vadd.f32 %v5455, %v5471
      %v5480 = vld [vmem:[%s4221] sm:$0xff]
      %v5481 = vld [vmem:[%s4221 + $0x10] sm:$0xff]
      %v5482 = vld [vmem:[%s4221 + $0x20] sm:$0xff]
      %v5483 = vld [vmem:[%s4221 + $0x30] sm:$0xff]
      %v5484 = vld [vmem:[%s4221 + $0x40] sm:$0xff]
      %v5485 = vld [vmem:[%s4221 + $0x50] sm:$0xff]
      %v5486 = vld [vmem:[%s4221 + $0x60] sm:$0xff]
      %v5487 = vld [vmem:[%s4221 + $0x70] sm:$0xff]
      %v5488 = vmul.f32 %v5480, %v4092
      %v5489 = vmul.f32 %v5481, %v4092
      %v5490 = vmul.f32 %v5482, %v4092
      %v5491 = vmul.f32 %v5483, %v4092
      %v5492 = vmul.f32 %v5484, %v4092
      %v5493 = vmul.f32 %v5485, %v4092
      %v5494 = vmul.f32 %v5486, %v4092
      %v5495 = vmul.f32 %v5487, %v4092
      %v5496 = vadd.f32 %v5472, %v5488
      %v5497 = vadd.f32 %v5473, %v5489
      %v5498 = vadd.f32 %v5474, %v5490
      %v5499 = vadd.f32 %v5475, %v5491
      %v5500 = vadd.f32 %v5476, %v5492
      %v5501 = vadd.f32 %v5477, %v5493
      %v5502 = vadd.f32 %v5478, %v5494
      %v5503 = vadd.f32 %v5479, %v5495
      %v5504 = vld [vmem:[%s4250] sm:$0xff]
      %v5505 = vld [vmem:[%s4250 + $0x10] sm:$0xff]
      %v5506 = vld [vmem:[%s4250 + $0x20] sm:$0xff]
      %v5507 = vld [vmem:[%s4250 + $0x30] sm:$0xff]
      %v5508 = vld [vmem:[%s4250 + $0x40] sm:$0xff]
      %v5509 = vld [vmem:[%s4250 + $0x50] sm:$0xff]
      %v5510 = vld [vmem:[%s4250 + $0x60] sm:$0xff]
      %v5511 = vld [vmem:[%s4250 + $0x70] sm:$0xff]
      %v5512 = vmul.f32 %v5504, %v4120
      %v5513 = vmul.f32 %v5505, %v4120
      %v5514 = vmul.f32 %v5506, %v4120
      %v5515 = vmul.f32 %v5507, %v4120
      %v5516 = vmul.f32 %v5508, %v4120
      %v5517 = vmul.f32 %v5509, %v4120
      %v5518 = vmul.f32 %v5510, %v4120
      %v5519 = vmul.f32 %v5511, %v4120
      %v5520 = vadd.f32 %v5496, %v5512
      %v5521 = vadd.f32 %v5497, %v5513
      %v5522 = vadd.f32 %v5498, %v5514
      %v5523 = vadd.f32 %v5499, %v5515
      %v5524 = vadd.f32 %v5500, %v5516
      %v5525 = vadd.f32 %v5501, %v5517
      %v5526 = vadd.f32 %v5502, %v5518
      %v5527 = vadd.f32 %v5503, %v5519
      %v5528 = vld [vmem:[%s4221 + $0x1] sm:$0xff]
      %v5529 = vld [vmem:[%s4221 + $0x11] sm:$0xff]
      %v5530 = vld [vmem:[%s4221 + $0x21] sm:$0xff]
      %v5531 = vld [vmem:[%s4221 + $0x31] sm:$0xff]
      %v5532 = vld [vmem:[%s4221 + $0x41] sm:$0xff]
      %v5533 = vld [vmem:[%s4221 + $0x51] sm:$0xff]
      %v5534 = vld [vmem:[%s4221 + $0x61] sm:$0xff]
      %v5535 = vld [vmem:[%s4221 + $0x71] sm:$0xff]
      %v5536 = vmul.f32 %v5528, %v4148
      %v5537 = vmul.f32 %v5529, %v4148
      %v5538 = vmul.f32 %v5530, %v4148
      %v5539 = vmul.f32 %v5531, %v4148
      %v5540 = vmul.f32 %v5532, %v4148
      %v5541 = vmul.f32 %v5533, %v4148
      %v5542 = vmul.f32 %v5534, %v4148
      %v5543 = vmul.f32 %v5535, %v4148
      %v5544 = vadd.f32 %v5520, %v5536
      %v5545 = vadd.f32 %v5521, %v5537
      %v5546 = vadd.f32 %v5522, %v5538
      %v5547 = vadd.f32 %v5523, %v5539
      %v5548 = vadd.f32 %v5524, %v5540
      %v5549 = vadd.f32 %v5525, %v5541
      %v5550 = vadd.f32 %v5526, %v5542
      %v5551 = vadd.f32 %v5527, %v5543
      %v5552 = vld [vmem:[%s4250 + $0x1] sm:$0xff]
      %v5553 = vld [vmem:[%s4250 + $0x11] sm:$0xff]
      %v5554 = vld [vmem:[%s4250 + $0x21] sm:$0xff]
      %v5555 = vld [vmem:[%s4250 + $0x31] sm:$0xff]
      %v5556 = vld [vmem:[%s4250 + $0x41] sm:$0xff]
      %v5557 = vld [vmem:[%s4250 + $0x51] sm:$0xff]
      %v5558 = vld [vmem:[%s4250 + $0x61] sm:$0xff]
      %v5559 = vld [vmem:[%s4250 + $0x71] sm:$0xff]
      %v5560 = vmul.f32 %v5552, %v4176
      %v5561 = vmul.f32 %v5553, %v4176
      %v5562 = vmul.f32 %v5554, %v4176
      %v5563 = vmul.f32 %v5555, %v4176
      %v5564 = vmul.f32 %v5556, %v4176
      %v5565 = vmul.f32 %v5557, %v4176
      %v5566 = vmul.f32 %v5558, %v4176
      %v5567 = vmul.f32 %v5559, %v4176
      %v5568 = vadd.f32 %v5544, %v5560
      %v5569 = vadd.f32 %v5545, %v5561
      %v5570 = vadd.f32 %v5546, %v5562
      %v5571 = vadd.f32 %v5547, %v5563
      %v5572 = vadd.f32 %v5548, %v5564
      %v5573 = vadd.f32 %v5549, %v5565
      %v5574 = vadd.f32 %v5550, %v5566
      %v5575 = vadd.f32 %v5551, %v5567
      %v5576 = vld [vmem:[%s4221 + $0x2] sm:$0xff]
      %v5577 = vld [vmem:[%s4221 + $0x12] sm:$0xff]
      %v5578 = vld [vmem:[%s4221 + $0x22] sm:$0xff]
      %v5579 = vld [vmem:[%s4221 + $0x32] sm:$0xff]
      %v5580 = vld [vmem:[%s4221 + $0x42] sm:$0xff]
      %v5581 = vld [vmem:[%s4221 + $0x52] sm:$0xff]
      %v5582 = vld [vmem:[%s4221 + $0x62] sm:$0xff]
      %v5583 = vld [vmem:[%s4221 + $0x72] sm:$0xff]
      %v5584 = vmul.f32 %v5576, %v4204
      %v5585 = vmul.f32 %v5577, %v4204
      %v5586 = vmul.f32 %v5578, %v4204
      %v5587 = vmul.f32 %v5579, %v4204
      %v5588 = vmul.f32 %v5580, %v4204
      %v5589 = vmul.f32 %v5581, %v4204
      %v5590 = vmul.f32 %v5582, %v4204
      %v5591 = vmul.f32 %v5583, %v4204
      %v5592 = vadd.f32 %v5568, %v5584
      %v5593 = vadd.f32 %v5569, %v5585
      %v5594 = vadd.f32 %v5570, %v5586
      %v5595 = vadd.f32 %v5571, %v5587
      %v5596 = vadd.f32 %v5572, %v5588
      %v5597 = vadd.f32 %v5573, %v5589
      %v5598 = vadd.f32 %v5574, %v5590
      %v5599 = vadd.f32 %v5575, %v5591
      %s5600 = scalar_lea.vmem [#allocation2], 352
      %v5601 = vld [vmem:[%s5600] sm:$0xff]
      %v5602 = vld [vmem:[%s5600 + $0x10] sm:$0xff]
      %v5603 = vld [vmem:[%s5600 + $0x20] sm:$0xff]
      %v5604 = vld [vmem:[%s5600 + $0x30] sm:$0xff]
      %v5605 = vld [vmem:[%s5600 + $0x40] sm:$0xff]
      %v5606 = vld [vmem:[%s5600 + $0x50] sm:$0xff]
      %v5607 = vld [vmem:[%s5600 + $0x60] sm:$0xff]
      %v5608 = vld [vmem:[%s5600 + $0x70] sm:$0xff]
      %v5609 = vmul.f32 %v5601, %v4233
      %v5610 = vmul.f32 %v5602, %v4233
      %v5611 = vmul.f32 %v5603, %v4233
      %v5612 = vmul.f32 %v5604, %v4233
      %v5613 = vmul.f32 %v5605, %v4233
      %v5614 = vmul.f32 %v5606, %v4233
      %v5615 = vmul.f32 %v5607, %v4233
      %v5616 = vmul.f32 %v5608, %v4233
      %v5617 = vadd.f32 %v5592, %v5609
      %v5618 = vadd.f32 %v5593, %v5610
      %v5619 = vadd.f32 %v5594, %v5611
      %v5620 = vadd.f32 %v5595, %v5612
      %v5621 = vadd.f32 %v5596, %v5613
      %v5622 = vadd.f32 %v5597, %v5614
      %v5623 = vadd.f32 %v5598, %v5615
      %v5624 = vadd.f32 %v5599, %v5616
      %s5625 = scalar_lea.vmem [#allocation2], 512
      %v5626 = vld [vmem:[%s5625] sm:$0xff]
      %v5627 = vld [vmem:[%s5625 + $0x10] sm:$0xff]
      %v5628 = vld [vmem:[%s5625 + $0x20] sm:$0xff]
      %v5629 = vld [vmem:[%s5625 + $0x30] sm:$0xff]
      %v5630 = vld [vmem:[%s5625 + $0x40] sm:$0xff]
      %v5631 = vld [vmem:[%s5625 + $0x50] sm:$0xff]
      %v5632 = vld [vmem:[%s5625 + $0x60] sm:$0xff]
      %v5633 = vld [vmem:[%s5625 + $0x70] sm:$0xff]
      %v5634 = vmul.f32 %v5626, %v4262
      %v5635 = vmul.f32 %v5627, %v4262
      %v5636 = vmul.f32 %v5628, %v4262
      %v5637 = vmul.f32 %v5629, %v4262
      %v5638 = vmul.f32 %v5630, %v4262
      %v5639 = vmul.f32 %v5631, %v4262
      %v5640 = vmul.f32 %v5632, %v4262
      %v5641 = vmul.f32 %v5633, %v4262
      %v5642 = vadd.f32 %v5617, %v5634
      %v5643 = vadd.f32 %v5618, %v5635
      %v5644 = vadd.f32 %v5619, %v5636
      %v5645 = vadd.f32 %v5620, %v5637
      %v5646 = vadd.f32 %v5621, %v5638
      %v5647 = vadd.f32 %v5622, %v5639
      %v5648 = vadd.f32 %v5623, %v5640
      %v5649 = vadd.f32 %v5624, %v5641
      %v5650 = vld [vmem:[%s5600 + $0x1] sm:$0xff]
      %v5651 = vld [vmem:[%s5600 + $0x11] sm:$0xff]
      %v5652 = vld [vmem:[%s5600 + $0x21] sm:$0xff]
      %v5653 = vld [vmem:[%s5600 + $0x31] sm:$0xff]
      %v5654 = vld [vmem:[%s5600 + $0x41] sm:$0xff]
      %v5655 = vld [vmem:[%s5600 + $0x51] sm:$0xff]
      %v5656 = vld [vmem:[%s5600 + $0x61] sm:$0xff]
      %v5657 = vld [vmem:[%s5600 + $0x71] sm:$0xff]
      %v5658 = vmul.f32 %v5650, %v4290
      %v5659 = vmul.f32 %v5651, %v4290
      %v5660 = vmul.f32 %v5652, %v4290
      %v5661 = vmul.f32 %v5653, %v4290
      %v5662 = vmul.f32 %v5654, %v4290
      %v5663 = vmul.f32 %v5655, %v4290
      %v5664 = vmul.f32 %v5656, %v4290
      %v5665 = vmul.f32 %v5657, %v4290
      %v5666 = vadd.f32 %v5642, %v5658
      %v5667 = vadd.f32 %v5643, %v5659
      %v5668 = vadd.f32 %v5644, %v5660
      %v5669 = vadd.f32 %v5645, %v5661
      %v5670 = vadd.f32 %v5646, %v5662
      %v5671 = vadd.f32 %v5647, %v5663
      %v5672 = vadd.f32 %v5648, %v5664
      %v5673 = vadd.f32 %v5649, %v5665
      %v5674 = vld [vmem:[%s5625 + $0x1] sm:$0xff]
      %v5675 = vld [vmem:[%s5625 + $0x11] sm:$0xff]
      %v5676 = vld [vmem:[%s5625 + $0x21] sm:$0xff]
      %v5677 = vld [vmem:[%s5625 + $0x31] sm:$0xff]
      %v5678 = vld [vmem:[%s5625 + $0x41] sm:$0xff]
      %v5679 = vld [vmem:[%s5625 + $0x51] sm:$0xff]
      %v5680 = vld [vmem:[%s5625 + $0x61] sm:$0xff]
      %v5681 = vld [vmem:[%s5625 + $0x71] sm:$0xff]
      %v5682 = vmul.f32 %v5674, %v4318
      %v5683 = vmul.f32 %v5675, %v4318
      %v5684 = vmul.f32 %v5676, %v4318
      %v5685 = vmul.f32 %v5677, %v4318
      %v5686 = vmul.f32 %v5678, %v4318
      %v5687 = vmul.f32 %v5679, %v4318
      %v5688 = vmul.f32 %v5680, %v4318
      %v5689 = vmul.f32 %v5681, %v4318
      %v5690 = vadd.f32 %v5666, %v5682
      %v5691 = vadd.f32 %v5667, %v5683
      %v5692 = vadd.f32 %v5668, %v5684
      %v5693 = vadd.f32 %v5669, %v5685
      %v5694 = vadd.f32 %v5670, %v5686
      %v5695 = vadd.f32 %v5671, %v5687
      %v5696 = vadd.f32 %v5672, %v5688
      %v5697 = vadd.f32 %v5673, %v5689
      %v5698 = vld [vmem:[%s5600 + $0x2] sm:$0xff]
      %v5699 = vld [vmem:[%s5600 + $0x12] sm:$0xff]
      %v5700 = vld [vmem:[%s5600 + $0x22] sm:$0xff]
      %v5701 = vld [vmem:[%s5600 + $0x32] sm:$0xff]
      %v5702 = vld [vmem:[%s5600 + $0x42] sm:$0xff]
      %v5703 = vld [vmem:[%s5600 + $0x52] sm:$0xff]
      %v5704 = vld [vmem:[%s5600 + $0x62] sm:$0xff]
      %v5705 = vld [vmem:[%s5600 + $0x72] sm:$0xff]
      %v5706 = vmul.f32 %v5698, %v4346
      %v5707 = vmul.f32 %v5699, %v4346
      %v5708 = vmul.f32 %v5700, %v4346
      %v5709 = vmul.f32 %v5701, %v4346
      %v5710 = vmul.f32 %v5702, %v4346
      %v5711 = vmul.f32 %v5703, %v4346
      %v5712 = vmul.f32 %v5704, %v4346
      %v5713 = vmul.f32 %v5705, %v4346
      %v5714 = vadd.f32 %v5690, %v5706
      %v5715 = vadd.f32 %v5691, %v5707
      %v5716 = vadd.f32 %v5692, %v5708
      %v5717 = vadd.f32 %v5693, %v5709
      %v5718 = vadd.f32 %v5694, %v5710
      %v5719 = vadd.f32 %v5695, %v5711
      %v5720 = vadd.f32 %v5696, %v5712
      %v5721 = vadd.f32 %v5697, %v5713
      %v5722 = vadd.f32 %v5714, %v4367
      %v5723 = vadd.f32 %v5715, %v4367
      %v5724 = vadd.f32 %v5716, %v4367
      %v5725 = vadd.f32 %v5717, %v4367
      %v5726 = vadd.f32 %v5718, %v4367
      %v5727 = vadd.f32 %v5719, %v4367
      %v5728 = vadd.f32 %v5720, %v4367
      %v5729 = vadd.f32 %v5721, %v4367
      %v5730 = vmul.f32 %v4381, %v5722
      %v5731 = vmul.f32 %v4381, %v5723
      %v5732 = vmul.f32 %v4381, %v5724
      %v5733 = vmul.f32 %v4381, %v5725
      %v5734 = vmul.f32 %v4381, %v5726
      %v5735 = vmul.f32 %v4381, %v5727
      %v5736 = vmul.f32 %v4381, %v5728
      %v5737 = vmul.f32 %v4381, %v5729
      %v5738 = vadd.f32 %v5730, %v5112
      %v5739 = vadd.f32 %v5731, %v5113
      %v5740 = vadd.f32 %v5732, %v5114
      %v5741 = vadd.f32 %v5733, %v5115
      %v5742 = vadd.f32 %v5734, %v5116
      %v5743 = vadd.f32 %v5735, %v5117
      %v5744 = vadd.f32 %v5736, %v5118
      %v5745 = vadd.f32 %v5737, %v5119
      %s5746 = scalar_lea.vmem %s361, 16
      %5747 = vst.msk [vmem:[%s5746] sm:$0xff] %vm362, %v5738
      %5748 = vst.msk [vmem:[%s5746 + $0x20] sm:$0xff] %vm362, %v5739
      %5749 = vst.msk [vmem:[%s5746 + $0x40] sm:$0xff] %vm362, %v5740
      %5750 = vst.msk [vmem:[%s5746 + $0x60] sm:$0xff] %vm362, %v5741
      %5751 = vst.msk [vmem:[%s5746 + $0x80] sm:$0xff] %vm362, %v5742
      %5752 = vst.msk [vmem:[%s5746 + $0xa0] sm:$0xff] %vm362, %v5743
      %5753 = vst.msk [vmem:[%s5746 + $0xc0] sm:$0xff] %vm362, %v5744
      %5754 = vst.msk [vmem:[%s5746 + $0xe0] sm:$0xff] %vm362, %v5745
      %v5755 = vadd.f32 %v5088, %v4407
      %v5756 = vadd.f32 %v5089, %v4408
      %v5757 = vadd.f32 %v5090, %v4409
      %v5758 = vadd.f32 %v5091, %v4410
      %v5759 = vadd.f32 %v5092, %v4411
      %v5760 = vadd.f32 %v5093, %v4412
      %v5761 = vadd.f32 %v5094, %v4413
      %v5762 = vadd.f32 %v5095, %v4414
      %v5763 = vadd.f32 %v5755, %v3618
      %v5764 = vadd.f32 %v5756, %v3619
      %v5765 = vadd.f32 %v5757, %v3620
      %v5766 = vadd.f32 %v5758, %v3621
      %v5767 = vadd.f32 %v5759, %v3622
      %v5768 = vadd.f32 %v5760, %v3623
      %v5769 = vadd.f32 %v5761, %v3624
      %v5770 = vadd.f32 %v5762, %v3625
      %v5771 = vmul.f32 %v5763, 0.5
      %v5772 = vmul.f32 %v5764, 0.5
      %v5773 = vmul.f32 %v5765, 0.5
      %v5774 = vmul.f32 %v5766, 0.5
      %v5775 = vmul.f32 %v5767, 0.5
      %v5776 = vmul.f32 %v5768, 0.5
      %v5777 = vmul.f32 %v5769, 0.5
      %v5778 = vmul.f32 %v5770, 0.5
      %v5779 = vld [vmem:[%s3828] sm:$0xff]
      %v5780 = vld [vmem:[%s3828 + $0x10] sm:$0xff]
      %v5781 = vld [vmem:[%s3828 + $0x20] sm:$0xff]
      %v5782 = vld [vmem:[%s3828 + $0x30] sm:$0xff]
      %v5783 = vld [vmem:[%s3828 + $0x40] sm:$0xff]
      %v5784 = vld [vmem:[%s3828 + $0x50] sm:$0xff]
      %v5785 = vld [vmem:[%s3828 + $0x60] sm:$0xff]
      %v5786 = vld [vmem:[%s3828 + $0x70] sm:$0xff]
      %v5787 = vmul.f32 %v5779, %v3669
      %v5788 = vmul.f32 %v5780, %v3669
      %v5789 = vmul.f32 %v5781, %v3669
      %v5790 = vmul.f32 %v5782, %v3669
      %v5791 = vmul.f32 %v5783, %v3669
      %v5792 = vmul.f32 %v5784, %v3669
      %v5793 = vmul.f32 %v5785, %v3669
      %v5794 = vmul.f32 %v5786, %v3669
      %v5795 = vadd.f32 %v5787, 0.0
      %v5796 = vadd.f32 %v5788, 0.0
      %v5797 = vadd.f32 %v5789, 0.0
      %v5798 = vadd.f32 %v5790, 0.0
      %v5799 = vadd.f32 %v5791, 0.0
      %v5800 = vadd.f32 %v5792, 0.0
      %v5801 = vadd.f32 %v5793, 0.0
      %v5802 = vadd.f32 %v5794, 0.0
      %v5803 = vld [vmem:[%s3799 + $0x1] sm:$0xff]
      %v5804 = vld [vmem:[%s3799 + $0x11] sm:$0xff]
      %v5805 = vld [vmem:[%s3799 + $0x21] sm:$0xff]
      %v5806 = vld [vmem:[%s3799 + $0x31] sm:$0xff]
      %v5807 = vld [vmem:[%s3799 + $0x41] sm:$0xff]
      %v5808 = vld [vmem:[%s3799 + $0x51] sm:$0xff]
      %v5809 = vld [vmem:[%s3799 + $0x61] sm:$0xff]
      %v5810 = vld [vmem:[%s3799 + $0x71] sm:$0xff]
      %v5811 = vmul.f32 %v5803, %v3698
      %v5812 = vmul.f32 %v5804, %v3698
      %v5813 = vmul.f32 %v5805, %v3698
      %v5814 = vmul.f32 %v5806, %v3698
      %v5815 = vmul.f32 %v5807, %v3698
      %v5816 = vmul.f32 %v5808, %v3698
      %v5817 = vmul.f32 %v5809, %v3698
      %v5818 = vmul.f32 %v5810, %v3698
      %v5819 = vadd.f32 %v5795, %v5811
      %v5820 = vadd.f32 %v5796, %v5812
      %v5821 = vadd.f32 %v5797, %v5813
      %v5822 = vadd.f32 %v5798, %v5814
      %v5823 = vadd.f32 %v5799, %v5815
      %v5824 = vadd.f32 %v5800, %v5816
      %v5825 = vadd.f32 %v5801, %v5817
      %v5826 = vadd.f32 %v5802, %v5818
      %v5827 = vld [vmem:[%s3828 + $0x1] sm:$0xff]
      %v5828 = vld [vmem:[%s3828 + $0x11] sm:$0xff]
      %v5829 = vld [vmem:[%s3828 + $0x21] sm:$0xff]
      %v5830 = vld [vmem:[%s3828 + $0x31] sm:$0xff]
      %v5831 = vld [vmem:[%s3828 + $0x41] sm:$0xff]
      %v5832 = vld [vmem:[%s3828 + $0x51] sm:$0xff]
      %v5833 = vld [vmem:[%s3828 + $0x61] sm:$0xff]
      %v5834 = vld [vmem:[%s3828 + $0x71] sm:$0xff]
      %v5835 = vmul.f32 %v5827, %v3726
      %v5836 = vmul.f32 %v5828, %v3726
      %v5837 = vmul.f32 %v5829, %v3726
      %v5838 = vmul.f32 %v5830, %v3726
      %v5839 = vmul.f32 %v5831, %v3726
      %v5840 = vmul.f32 %v5832, %v3726
      %v5841 = vmul.f32 %v5833, %v3726
      %v5842 = vmul.f32 %v5834, %v3726
      %v5843 = vadd.f32 %v5819, %v5835
      %v5844 = vadd.f32 %v5820, %v5836
      %v5845 = vadd.f32 %v5821, %v5837
      %v5846 = vadd.f32 %v5822, %v5838
      %v5847 = vadd.f32 %v5823, %v5839
      %v5848 = vadd.f32 %v5824, %v5840
      %v5849 = vadd.f32 %v5825, %v5841
      %v5850 = vadd.f32 %v5826, %v5842
      %v5851 = vld [vmem:[%s3799 + $0x2] sm:$0xff]
      %v5852 = vld [vmem:[%s3799 + $0x12] sm:$0xff]
      %v5853 = vld [vmem:[%s3799 + $0x22] sm:$0xff]
      %v5854 = vld [vmem:[%s3799 + $0x32] sm:$0xff]
      %v5855 = vld [vmem:[%s3799 + $0x42] sm:$0xff]
      %v5856 = vld [vmem:[%s3799 + $0x52] sm:$0xff]
      %v5857 = vld [vmem:[%s3799 + $0x62] sm:$0xff]
      %v5858 = vld [vmem:[%s3799 + $0x72] sm:$0xff]
      %v5859 = vmul.f32 %v5851, %v3754
      %v5860 = vmul.f32 %v5852, %v3754
      %v5861 = vmul.f32 %v5853, %v3754
      %v5862 = vmul.f32 %v5854, %v3754
      %v5863 = vmul.f32 %v5855, %v3754
      %v5864 = vmul.f32 %v5856, %v3754
      %v5865 = vmul.f32 %v5857, %v3754
      %v5866 = vmul.f32 %v5858, %v3754
      %v5867 = vadd.f32 %v5843, %v5859
      %v5868 = vadd.f32 %v5844, %v5860
      %v5869 = vadd.f32 %v5845, %v5861
      %v5870 = vadd.f32 %v5846, %v5862
      %v5871 = vadd.f32 %v5847, %v5863
      %v5872 = vadd.f32 %v5848, %v5864
      %v5873 = vadd.f32 %v5849, %v5865
      %v5874 = vadd.f32 %v5850, %v5866
      %v5875 = vld [vmem:[%s3828 + $0x2] sm:$0xff]
      %v5876 = vld [vmem:[%s3828 + $0x12] sm:$0xff]
      %v5877 = vld [vmem:[%s3828 + $0x22] sm:$0xff]
      %v5878 = vld [vmem:[%s3828 + $0x32] sm:$0xff]
      %v5879 = vld [vmem:[%s3828 + $0x42] sm:$0xff]
      %v5880 = vld [vmem:[%s3828 + $0x52] sm:$0xff]
      %v5881 = vld [vmem:[%s3828 + $0x62] sm:$0xff]
      %v5882 = vld [vmem:[%s3828 + $0x72] sm:$0xff]
      %v5883 = vmul.f32 %v5875, %v3782
      %v5884 = vmul.f32 %v5876, %v3782
      %v5885 = vmul.f32 %v5877, %v3782
      %v5886 = vmul.f32 %v5878, %v3782
      %v5887 = vmul.f32 %v5879, %v3782
      %v5888 = vmul.f32 %v5880, %v3782
      %v5889 = vmul.f32 %v5881, %v3782
      %v5890 = vmul.f32 %v5882, %v3782
      %v5891 = vadd.f32 %v5867, %v5883
      %v5892 = vadd.f32 %v5868, %v5884
      %v5893 = vadd.f32 %v5869, %v5885
      %v5894 = vadd.f32 %v5870, %v5886
      %v5895 = vadd.f32 %v5871, %v5887
      %v5896 = vadd.f32 %v5872, %v5888
      %v5897 = vadd.f32 %v5873, %v5889
      %v5898 = vadd.f32 %v5874, %v5890
      %v5899 = vld [vmem:[%s470] sm:$0xff]
      %v5900 = vld [vmem:[%s470 + $0x10] sm:$0xff]
      %v5901 = vld [vmem:[%s470 + $0x20] sm:$0xff]
      %v5902 = vld [vmem:[%s470 + $0x30] sm:$0xff]
      %v5903 = vld [vmem:[%s470 + $0x40] sm:$0xff]
      %v5904 = vld [vmem:[%s470 + $0x50] sm:$0xff]
      %v5905 = vld [vmem:[%s470 + $0x60] sm:$0xff]
      %v5906 = vld [vmem:[%s470 + $0x70] sm:$0xff]
      %v5907 = vmul.f32 %v5899, %v3811
      %v5908 = vmul.f32 %v5900, %v3811
      %v5909 = vmul.f32 %v5901, %v3811
      %v5910 = vmul.f32 %v5902, %v3811
      %v5911 = vmul.f32 %v5903, %v3811
      %v5912 = vmul.f32 %v5904, %v3811
      %v5913 = vmul.f32 %v5905, %v3811
      %v5914 = vmul.f32 %v5906, %v3811
      %v5915 = vadd.f32 %v5891, %v5907
      %v5916 = vadd.f32 %v5892, %v5908
      %v5917 = vadd.f32 %v5893, %v5909
      %v5918 = vadd.f32 %v5894, %v5910
      %v5919 = vadd.f32 %v5895, %v5911
      %v5920 = vadd.f32 %v5896, %v5912
      %v5921 = vadd.f32 %v5897, %v5913
      %v5922 = vadd.f32 %v5898, %v5914
      %v5923 = vld [vmem:[%s452 + $0x1] sm:$0xff]
      %v5924 = vld [vmem:[%s452 + $0x11] sm:$0xff]
      %v5925 = vld [vmem:[%s452 + $0x21] sm:$0xff]
      %v5926 = vld [vmem:[%s452 + $0x31] sm:$0xff]
      %v5927 = vld [vmem:[%s452 + $0x41] sm:$0xff]
      %v5928 = vld [vmem:[%s452 + $0x51] sm:$0xff]
      %v5929 = vld [vmem:[%s452 + $0x61] sm:$0xff]
      %v5930 = vld [vmem:[%s452 + $0x71] sm:$0xff]
      %v5931 = vmul.f32 %v5923, %v3840
      %v5932 = vmul.f32 %v5924, %v3840
      %v5933 = vmul.f32 %v5925, %v3840
      %v5934 = vmul.f32 %v5926, %v3840
      %v5935 = vmul.f32 %v5927, %v3840
      %v5936 = vmul.f32 %v5928, %v3840
      %v5937 = vmul.f32 %v5929, %v3840
      %v5938 = vmul.f32 %v5930, %v3840
      %v5939 = vadd.f32 %v5915, %v5931
      %v5940 = vadd.f32 %v5916, %v5932
      %v5941 = vadd.f32 %v5917, %v5933
      %v5942 = vadd.f32 %v5918, %v5934
      %v5943 = vadd.f32 %v5919, %v5935
      %v5944 = vadd.f32 %v5920, %v5936
      %v5945 = vadd.f32 %v5921, %v5937
      %v5946 = vadd.f32 %v5922, %v5938
      %v5947 = vld [vmem:[%s470 + $0x1] sm:$0xff]
      %v5948 = vld [vmem:[%s470 + $0x11] sm:$0xff]
      %v5949 = vld [vmem:[%s470 + $0x21] sm:$0xff]
      %v5950 = vld [vmem:[%s470 + $0x31] sm:$0xff]
      %v5951 = vld [vmem:[%s470 + $0x41] sm:$0xff]
      %v5952 = vld [vmem:[%s470 + $0x51] sm:$0xff]
      %v5953 = vld [vmem:[%s470 + $0x61] sm:$0xff]
      %v5954 = vld [vmem:[%s470 + $0x71] sm:$0xff]
      %v5955 = vmul.f32 %v5947, %v3868
      %v5956 = vmul.f32 %v5948, %v3868
      %v5957 = vmul.f32 %v5949, %v3868
      %v5958 = vmul.f32 %v5950, %v3868
      %v5959 = vmul.f32 %v5951, %v3868
      %v5960 = vmul.f32 %v5952, %v3868
      %v5961 = vmul.f32 %v5953, %v3868
      %v5962 = vmul.f32 %v5954, %v3868
      %v5963 = vadd.f32 %v5939, %v5955
      %v5964 = vadd.f32 %v5940, %v5956
      %v5965 = vadd.f32 %v5941, %v5957
      %v5966 = vadd.f32 %v5942, %v5958
      %v5967 = vadd.f32 %v5943, %v5959
      %v5968 = vadd.f32 %v5944, %v5960
      %v5969 = vadd.f32 %v5945, %v5961
      %v5970 = vadd.f32 %v5946, %v5962
      %v5971 = vld [vmem:[%s452 + $0x2] sm:$0xff]
      %v5972 = vld [vmem:[%s452 + $0x12] sm:$0xff]
      %v5973 = vld [vmem:[%s452 + $0x22] sm:$0xff]
      %v5974 = vld [vmem:[%s452 + $0x32] sm:$0xff]
      %v5975 = vld [vmem:[%s452 + $0x42] sm:$0xff]
      %v5976 = vld [vmem:[%s452 + $0x52] sm:$0xff]
      %v5977 = vld [vmem:[%s452 + $0x62] sm:$0xff]
      %v5978 = vld [vmem:[%s452 + $0x72] sm:$0xff]
      %v5979 = vmul.f32 %v5971, %v3896
      %v5980 = vmul.f32 %v5972, %v3896
      %v5981 = vmul.f32 %v5973, %v3896
      %v5982 = vmul.f32 %v5974, %v3896
      %v5983 = vmul.f32 %v5975, %v3896
      %v5984 = vmul.f32 %v5976, %v3896
      %v5985 = vmul.f32 %v5977, %v3896
      %v5986 = vmul.f32 %v5978, %v3896
      %v5987 = vadd.f32 %v5963, %v5979
      %v5988 = vadd.f32 %v5964, %v5980
      %v5989 = vadd.f32 %v5965, %v5981
      %v5990 = vadd.f32 %v5966, %v5982
      %v5991 = vadd.f32 %v5967, %v5983
      %v5992 = vadd.f32 %v5968, %v5984
      %v5993 = vadd.f32 %v5969, %v5985
      %v5994 = vadd.f32 %v5970, %v5986
      %v5995 = vld [vmem:[%s470 + $0x2] sm:$0xff]
      %v5996 = vld [vmem:[%s470 + $0x12] sm:$0xff]
      %v5997 = vld [vmem:[%s470 + $0x22] sm:$0xff]
      %v5998 = vld [vmem:[%s470 + $0x32] sm:$0xff]
      %v5999 = vld [vmem:[%s470 + $0x42] sm:$0xff]
      %v6000 = vld [vmem:[%s470 + $0x52] sm:$0xff]
      %v6001 = vld [vmem:[%s470 + $0x62] sm:$0xff]
      %v6002 = vld [vmem:[%s470 + $0x72] sm:$0xff]
      %v6003 = vmul.f32 %v5995, %v3924
      %v6004 = vmul.f32 %v5996, %v3924
      %v6005 = vmul.f32 %v5997, %v3924
      %v6006 = vmul.f32 %v5998, %v3924
      %v6007 = vmul.f32 %v5999, %v3924
      %v6008 = vmul.f32 %v6000, %v3924
      %v6009 = vmul.f32 %v6001, %v3924
      %v6010 = vmul.f32 %v6002, %v3924
      %v6011 = vadd.f32 %v5987, %v6003
      %v6012 = vadd.f32 %v5988, %v6004
      %v6013 = vadd.f32 %v5989, %v6005
      %v6014 = vadd.f32 %v5990, %v6006
      %v6015 = vadd.f32 %v5991, %v6007
      %v6016 = vadd.f32 %v5992, %v6008
      %v6017 = vadd.f32 %v5993, %v6009
      %v6018 = vadd.f32 %v5994, %v6010
      %v6019 = vld [vmem:[%s506] sm:$0xff]
      %v6020 = vld [vmem:[%s506 + $0x10] sm:$0xff]
      %v6021 = vld [vmem:[%s506 + $0x20] sm:$0xff]
      %v6022 = vld [vmem:[%s506 + $0x30] sm:$0xff]
      %v6023 = vld [vmem:[%s506 + $0x40] sm:$0xff]
      %v6024 = vld [vmem:[%s506 + $0x50] sm:$0xff]
      %v6025 = vld [vmem:[%s506 + $0x60] sm:$0xff]
      %v6026 = vld [vmem:[%s506 + $0x70] sm:$0xff]
      %v6027 = vmul.f32 %v6019, %v3952
      %v6028 = vmul.f32 %v6020, %v3952
      %v6029 = vmul.f32 %v6021, %v3952
      %v6030 = vmul.f32 %v6022, %v3952
      %v6031 = vmul.f32 %v6023, %v3952
      %v6032 = vmul.f32 %v6024, %v3952
      %v6033 = vmul.f32 %v6025, %v3952
      %v6034 = vmul.f32 %v6026, %v3952
      %v6035 = vadd.f32 %v6011, %v6027
      %v6036 = vadd.f32 %v6012, %v6028
      %v6037 = vadd.f32 %v6013, %v6029
      %v6038 = vadd.f32 %v6014, %v6030
      %v6039 = vadd.f32 %v6015, %v6031
      %v6040 = vadd.f32 %v6016, %v6032
      %v6041 = vadd.f32 %v6017, %v6033
      %v6042 = vadd.f32 %v6018, %v6034
      %v6043 = vld [vmem:[%s488 + $0x1] sm:$0xff]
      %v6044 = vld [vmem:[%s488 + $0x11] sm:$0xff]
      %v6045 = vld [vmem:[%s488 + $0x21] sm:$0xff]
      %v6046 = vld [vmem:[%s488 + $0x31] sm:$0xff]
      %v6047 = vld [vmem:[%s488 + $0x41] sm:$0xff]
      %v6048 = vld [vmem:[%s488 + $0x51] sm:$0xff]
      %v6049 = vld [vmem:[%s488 + $0x61] sm:$0xff]
      %v6050 = vld [vmem:[%s488 + $0x71] sm:$0xff]
      %v6051 = vmul.f32 %v6043, %v3980
      %v6052 = vmul.f32 %v6044, %v3980
      %v6053 = vmul.f32 %v6045, %v3980
      %v6054 = vmul.f32 %v6046, %v3980
      %v6055 = vmul.f32 %v6047, %v3980
      %v6056 = vmul.f32 %v6048, %v3980
      %v6057 = vmul.f32 %v6049, %v3980
      %v6058 = vmul.f32 %v6050, %v3980
      %v6059 = vadd.f32 %v6035, %v6051
      %v6060 = vadd.f32 %v6036, %v6052
      %v6061 = vadd.f32 %v6037, %v6053
      %v6062 = vadd.f32 %v6038, %v6054
      %v6063 = vadd.f32 %v6039, %v6055
      %v6064 = vadd.f32 %v6040, %v6056
      %v6065 = vadd.f32 %v6041, %v6057
      %v6066 = vadd.f32 %v6042, %v6058
      %v6067 = vld [vmem:[%s506 + $0x1] sm:$0xff]
      %v6068 = vld [vmem:[%s506 + $0x11] sm:$0xff]
      %v6069 = vld [vmem:[%s506 + $0x21] sm:$0xff]
      %v6070 = vld [vmem:[%s506 + $0x31] sm:$0xff]
      %v6071 = vld [vmem:[%s506 + $0x41] sm:$0xff]
      %v6072 = vld [vmem:[%s506 + $0x51] sm:$0xff]
      %v6073 = vld [vmem:[%s506 + $0x61] sm:$0xff]
      %v6074 = vld [vmem:[%s506 + $0x71] sm:$0xff]
      %v6075 = vmul.f32 %v6067, %v4008
      %v6076 = vmul.f32 %v6068, %v4008
      %v6077 = vmul.f32 %v6069, %v4008
      %v6078 = vmul.f32 %v6070, %v4008
      %v6079 = vmul.f32 %v6071, %v4008
      %v6080 = vmul.f32 %v6072, %v4008
      %v6081 = vmul.f32 %v6073, %v4008
      %v6082 = vmul.f32 %v6074, %v4008
      %v6083 = vadd.f32 %v6059, %v6075
      %v6084 = vadd.f32 %v6060, %v6076
      %v6085 = vadd.f32 %v6061, %v6077
      %v6086 = vadd.f32 %v6062, %v6078
      %v6087 = vadd.f32 %v6063, %v6079
      %v6088 = vadd.f32 %v6064, %v6080
      %v6089 = vadd.f32 %v6065, %v6081
      %v6090 = vadd.f32 %v6066, %v6082
      %v6091 = vld [vmem:[%s488 + $0x2] sm:$0xff]
      %v6092 = vld [vmem:[%s488 + $0x12] sm:$0xff]
      %v6093 = vld [vmem:[%s488 + $0x22] sm:$0xff]
      %v6094 = vld [vmem:[%s488 + $0x32] sm:$0xff]
      %v6095 = vld [vmem:[%s488 + $0x42] sm:$0xff]
      %v6096 = vld [vmem:[%s488 + $0x52] sm:$0xff]
      %v6097 = vld [vmem:[%s488 + $0x62] sm:$0xff]
      %v6098 = vld [vmem:[%s488 + $0x72] sm:$0xff]
      %v6099 = vmul.f32 %v6091, %v4036
      %v6100 = vmul.f32 %v6092, %v4036
      %v6101 = vmul.f32 %v6093, %v4036
      %v6102 = vmul.f32 %v6094, %v4036
      %v6103 = vmul.f32 %v6095, %v4036
      %v6104 = vmul.f32 %v6096, %v4036
      %v6105 = vmul.f32 %v6097, %v4036
      %v6106 = vmul.f32 %v6098, %v4036
      %v6107 = vadd.f32 %v6083, %v6099
      %v6108 = vadd.f32 %v6084, %v6100
      %v6109 = vadd.f32 %v6085, %v6101
      %v6110 = vadd.f32 %v6086, %v6102
      %v6111 = vadd.f32 %v6087, %v6103
      %v6112 = vadd.f32 %v6088, %v6104
      %v6113 = vadd.f32 %v6089, %v6105
      %v6114 = vadd.f32 %v6090, %v6106
      %v6115 = vld [vmem:[%s506 + $0x2] sm:$0xff]
      %v6116 = vld [vmem:[%s506 + $0x12] sm:$0xff]
      %v6117 = vld [vmem:[%s506 + $0x22] sm:$0xff]
      %v6118 = vld [vmem:[%s506 + $0x32] sm:$0xff]
      %v6119 = vld [vmem:[%s506 + $0x42] sm:$0xff]
      %v6120 = vld [vmem:[%s506 + $0x52] sm:$0xff]
      %v6121 = vld [vmem:[%s506 + $0x62] sm:$0xff]
      %v6122 = vld [vmem:[%s506 + $0x72] sm:$0xff]
      %v6123 = vmul.f32 %v6115, %v4064
      %v6124 = vmul.f32 %v6116, %v4064
      %v6125 = vmul.f32 %v6117, %v4064
      %v6126 = vmul.f32 %v6118, %v4064
      %v6127 = vmul.f32 %v6119, %v4064
      %v6128 = vmul.f32 %v6120, %v4064
      %v6129 = vmul.f32 %v6121, %v4064
      %v6130 = vmul.f32 %v6122, %v4064
      %v6131 = vadd.f32 %v6107, %v6123
      %v6132 = vadd.f32 %v6108, %v6124
      %v6133 = vadd.f32 %v6109, %v6125
      %v6134 = vadd.f32 %v6110, %v6126
      %v6135 = vadd.f32 %v6111, %v6127
      %v6136 = vadd.f32 %v6112, %v6128
      %v6137 = vadd.f32 %v6113, %v6129
      %v6138 = vadd.f32 %v6114, %v6130
      %v6139 = vld [vmem:[%s4250] sm:$0xff]
      %v6140 = vld [vmem:[%s4250 + $0x10] sm:$0xff]
      %v6141 = vld [vmem:[%s4250 + $0x20] sm:$0xff]
      %v6142 = vld [vmem:[%s4250 + $0x30] sm:$0xff]
      %v6143 = vld [vmem:[%s4250 + $0x40] sm:$0xff]
      %v6144 = vld [vmem:[%s4250 + $0x50] sm:$0xff]
      %v6145 = vld [vmem:[%s4250 + $0x60] sm:$0xff]
      %v6146 = vld [vmem:[%s4250 + $0x70] sm:$0xff]
      %v6147 = vmul.f32 %v6139, %v4092
      %v6148 = vmul.f32 %v6140, %v4092
      %v6149 = vmul.f32 %v6141, %v4092
      %v6150 = vmul.f32 %v6142, %v4092
      %v6151 = vmul.f32 %v6143, %v4092
      %v6152 = vmul.f32 %v6144, %v4092
      %v6153 = vmul.f32 %v6145, %v4092
      %v6154 = vmul.f32 %v6146, %v4092
      %v6155 = vadd.f32 %v6131, %v6147
      %v6156 = vadd.f32 %v6132, %v6148
      %v6157 = vadd.f32 %v6133, %v6149
      %v6158 = vadd.f32 %v6134, %v6150
      %v6159 = vadd.f32 %v6135, %v6151
      %v6160 = vadd.f32 %v6136, %v6152
      %v6161 = vadd.f32 %v6137, %v6153
      %v6162 = vadd.f32 %v6138, %v6154
      %v6163 = vld [vmem:[%s4221 + $0x1] sm:$0xff]
      %v6164 = vld [vmem:[%s4221 + $0x11] sm:$0xff]
      %v6165 = vld [vmem:[%s4221 + $0x21] sm:$0xff]
      %v6166 = vld [vmem:[%s4221 + $0x31] sm:$0xff]
      %v6167 = vld [vmem:[%s4221 + $0x41] sm:$0xff]
      %v6168 = vld [vmem:[%s4221 + $0x51] sm:$0xff]
      %v6169 = vld [vmem:[%s4221 + $0x61] sm:$0xff]
      %v6170 = vld [vmem:[%s4221 + $0x71] sm:$0xff]
      %v6171 = vmul.f32 %v6163, %v4120
      %v6172 = vmul.f32 %v6164, %v4120
      %v6173 = vmul.f32 %v6165, %v4120
      %v6174 = vmul.f32 %v6166, %v4120
      %v6175 = vmul.f32 %v6167, %v4120
      %v6176 = vmul.f32 %v6168, %v4120
      %v6177 = vmul.f32 %v6169, %v4120
      %v6178 = vmul.f32 %v6170, %v4120
      %v6179 = vadd.f32 %v6155, %v6171
      %v6180 = vadd.f32 %v6156, %v6172
      %v6181 = vadd.f32 %v6157, %v6173
      %v6182 = vadd.f32 %v6158, %v6174
      %v6183 = vadd.f32 %v6159, %v6175
      %v6184 = vadd.f32 %v6160, %v6176
      %v6185 = vadd.f32 %v6161, %v6177
      %v6186 = vadd.f32 %v6162, %v6178
      %v6187 = vld [vmem:[%s4250 + $0x1] sm:$0xff]
      %v6188 = vld [vmem:[%s4250 + $0x11] sm:$0xff]
      %v6189 = vld [vmem:[%s4250 + $0x21] sm:$0xff]
      %v6190 = vld [vmem:[%s4250 + $0x31] sm:$0xff]
      %v6191 = vld [vmem:[%s4250 + $0x41] sm:$0xff]
      %v6192 = vld [vmem:[%s4250 + $0x51] sm:$0xff]
      %v6193 = vld [vmem:[%s4250 + $0x61] sm:$0xff]
      %v6194 = vld [vmem:[%s4250 + $0x71] sm:$0xff]
      %v6195 = vmul.f32 %v6187, %v4148
      %v6196 = vmul.f32 %v6188, %v4148
      %v6197 = vmul.f32 %v6189, %v4148
      %v6198 = vmul.f32 %v6190, %v4148
      %v6199 = vmul.f32 %v6191, %v4148
      %v6200 = vmul.f32 %v6192, %v4148
      %v6201 = vmul.f32 %v6193, %v4148
      %v6202 = vmul.f32 %v6194, %v4148
      %v6203 = vadd.f32 %v6179, %v6195
      %v6204 = vadd.f32 %v6180, %v6196
      %v6205 = vadd.f32 %v6181, %v6197
      %v6206 = vadd.f32 %v6182, %v6198
      %v6207 = vadd.f32 %v6183, %v6199
      %v6208 = vadd.f32 %v6184, %v6200
      %v6209 = vadd.f32 %v6185, %v6201
      %v6210 = vadd.f32 %v6186, %v6202
      %v6211 = vld [vmem:[%s4221 + $0x2] sm:$0xff]
      %v6212 = vld [vmem:[%s4221 + $0x12] sm:$0xff]
      %v6213 = vld [vmem:[%s4221 + $0x22] sm:$0xff]
      %v6214 = vld [vmem:[%s4221 + $0x32] sm:$0xff]
      %v6215 = vld [vmem:[%s4221 + $0x42] sm:$0xff]
      %v6216 = vld [vmem:[%s4221 + $0x52] sm:$0xff]
      %v6217 = vld [vmem:[%s4221 + $0x62] sm:$0xff]
      %v6218 = vld [vmem:[%s4221 + $0x72] sm:$0xff]
      %v6219 = vmul.f32 %v6211, %v4176
      %v6220 = vmul.f32 %v6212, %v4176
      %v6221 = vmul.f32 %v6213, %v4176
      %v6222 = vmul.f32 %v6214, %v4176
      %v6223 = vmul.f32 %v6215, %v4176
      %v6224 = vmul.f32 %v6216, %v4176
      %v6225 = vmul.f32 %v6217, %v4176
      %v6226 = vmul.f32 %v6218, %v4176
      %v6227 = vadd.f32 %v6203, %v6219
      %v6228 = vadd.f32 %v6204, %v6220
      %v6229 = vadd.f32 %v6205, %v6221
      %v6230 = vadd.f32 %v6206, %v6222
      %v6231 = vadd.f32 %v6207, %v6223
      %v6232 = vadd.f32 %v6208, %v6224
      %v6233 = vadd.f32 %v6209, %v6225
      %v6234 = vadd.f32 %v6210, %v6226
      %v6235 = vld [vmem:[%s4250 + $0x2] sm:$0xff]
      %v6236 = vld [vmem:[%s4250 + $0x12] sm:$0xff]
      %v6237 = vld [vmem:[%s4250 + $0x22] sm:$0xff]
      %v6238 = vld [vmem:[%s4250 + $0x32] sm:$0xff]
      %v6239 = vld [vmem:[%s4250 + $0x42] sm:$0xff]
      %v6240 = vld [vmem:[%s4250 + $0x52] sm:$0xff]
      %v6241 = vld [vmem:[%s4250 + $0x62] sm:$0xff]
      %v6242 = vld [vmem:[%s4250 + $0x72] sm:$0xff]
      %v6243 = vmul.f32 %v6235, %v4204
      %v6244 = vmul.f32 %v6236, %v4204
      %v6245 = vmul.f32 %v6237, %v4204
      %v6246 = vmul.f32 %v6238, %v4204
      %v6247 = vmul.f32 %v6239, %v4204
      %v6248 = vmul.f32 %v6240, %v4204
      %v6249 = vmul.f32 %v6241, %v4204
      %v6250 = vmul.f32 %v6242, %v4204
      %v6251 = vadd.f32 %v6227, %v6243
      %v6252 = vadd.f32 %v6228, %v6244
      %v6253 = vadd.f32 %v6229, %v6245
      %v6254 = vadd.f32 %v6230, %v6246
      %v6255 = vadd.f32 %v6231, %v6247
      %v6256 = vadd.f32 %v6232, %v6248
      %v6257 = vadd.f32 %v6233, %v6249
      %v6258 = vadd.f32 %v6234, %v6250
      %v6259 = vld [vmem:[%s5625] sm:$0xff]
      %v6260 = vld [vmem:[%s5625 + $0x10] sm:$0xff]
      %v6261 = vld [vmem:[%s5625 + $0x20] sm:$0xff]
      %v6262 = vld [vmem:[%s5625 + $0x30] sm:$0xff]
      %v6263 = vld [vmem:[%s5625 + $0x40] sm:$0xff]
      %v6264 = vld [vmem:[%s5625 + $0x50] sm:$0xff]
      %v6265 = vld [vmem:[%s5625 + $0x60] sm:$0xff]
      %v6266 = vld [vmem:[%s5625 + $0x70] sm:$0xff]
      %v6267 = vmul.f32 %v6259, %v4233
      %v6268 = vmul.f32 %v6260, %v4233
      %v6269 = vmul.f32 %v6261, %v4233
      %v6270 = vmul.f32 %v6262, %v4233
      %v6271 = vmul.f32 %v6263, %v4233
      %v6272 = vmul.f32 %v6264, %v4233
      %v6273 = vmul.f32 %v6265, %v4233
      %v6274 = vmul.f32 %v6266, %v4233
      %v6275 = vadd.f32 %v6251, %v6267
      %v6276 = vadd.f32 %v6252, %v6268
      %v6277 = vadd.f32 %v6253, %v6269
      %v6278 = vadd.f32 %v6254, %v6270
      %v6279 = vadd.f32 %v6255, %v6271
      %v6280 = vadd.f32 %v6256, %v6272
      %v6281 = vadd.f32 %v6257, %v6273
      %v6282 = vadd.f32 %v6258, %v6274
      %v6283 = vld [vmem:[%s5600 + $0x1] sm:$0xff]
      %v6284 = vld [vmem:[%s5600 + $0x11] sm:$0xff]
      %v6285 = vld [vmem:[%s5600 + $0x21] sm:$0xff]
      %v6286 = vld [vmem:[%s5600 + $0x31] sm:$0xff]
      %v6287 = vld [vmem:[%s5600 + $0x41] sm:$0xff]
      %v6288 = vld [vmem:[%s5600 + $0x51] sm:$0xff]
      %v6289 = vld [vmem:[%s5600 + $0x61] sm:$0xff]
      %v6290 = vld [vmem:[%s5600 + $0x71] sm:$0xff]
      %v6291 = vmul.f32 %v6283, %v4262
      %v6292 = vmul.f32 %v6284, %v4262
      %v6293 = vmul.f32 %v6285, %v4262
      %v6294 = vmul.f32 %v6286, %v4262
      %v6295 = vmul.f32 %v6287, %v4262
      %v6296 = vmul.f32 %v6288, %v4262
      %v6297 = vmul.f32 %v6289, %v4262
      %v6298 = vmul.f32 %v6290, %v4262
      %v6299 = vadd.f32 %v6275, %v6291
      %v6300 = vadd.f32 %v6276, %v6292
      %v6301 = vadd.f32 %v6277, %v6293
      %v6302 = vadd.f32 %v6278, %v6294
      %v6303 = vadd.f32 %v6279, %v6295
      %v6304 = vadd.f32 %v6280, %v6296
      %v6305 = vadd.f32 %v6281, %v6297
      %v6306 = vadd.f32 %v6282, %v6298
      %v6307 = vld [vmem:[%s5625 + $0x1] sm:$0xff]
      %v6308 = vld [vmem:[%s5625 + $0x11] sm:$0xff]
      %v6309 = vld [vmem:[%s5625 + $0x21] sm:$0xff]
      %v6310 = vld [vmem:[%s5625 + $0x31] sm:$0xff]
      %v6311 = vld [vmem:[%s5625 + $0x41] sm:$0xff]
      %v6312 = vld [vmem:[%s5625 + $0x51] sm:$0xff]
      %v6313 = vld [vmem:[%s5625 + $0x61] sm:$0xff]
      %v6314 = vld [vmem:[%s5625 + $0x71] sm:$0xff]
      %v6315 = vmul.f32 %v6307, %v4290
      %v6316 = vmul.f32 %v6308, %v4290
      %v6317 = vmul.f32 %v6309, %v4290
      %v6318 = vmul.f32 %v6310, %v4290
      %v6319 = vmul.f32 %v6311, %v4290
      %v6320 = vmul.f32 %v6312, %v4290
      %v6321 = vmul.f32 %v6313, %v4290
      %v6322 = vmul.f32 %v6314, %v4290
      %v6323 = vadd.f32 %v6299, %v6315
      %v6324 = vadd.f32 %v6300, %v6316
      %v6325 = vadd.f32 %v6301, %v6317
      %v6326 = vadd.f32 %v6302, %v6318
      %v6327 = vadd.f32 %v6303, %v6319
      %v6328 = vadd.f32 %v6304, %v6320
      %v6329 = vadd.f32 %v6305, %v6321
      %v6330 = vadd.f32 %v6306, %v6322
      %v6331 = vld [vmem:[%s5600 + $0x2] sm:$0xff]
      %v6332 = vld [vmem:[%s5600 + $0x12] sm:$0xff]
      %v6333 = vld [vmem:[%s5600 + $0x22] sm:$0xff]
      %v6334 = vld [vmem:[%s5600 + $0x32] sm:$0xff]
      %v6335 = vld [vmem:[%s5600 + $0x42] sm:$0xff]
      %v6336 = vld [vmem:[%s5600 + $0x52] sm:$0xff]
      %v6337 = vld [vmem:[%s5600 + $0x62] sm:$0xff]
      %v6338 = vld [vmem:[%s5600 + $0x72] sm:$0xff]
      %v6339 = vmul.f32 %v6331, %v4318
      %v6340 = vmul.f32 %v6332, %v4318
      %v6341 = vmul.f32 %v6333, %v4318
      %v6342 = vmul.f32 %v6334, %v4318
      %v6343 = vmul.f32 %v6335, %v4318
      %v6344 = vmul.f32 %v6336, %v4318
      %v6345 = vmul.f32 %v6337, %v4318
      %v6346 = vmul.f32 %v6338, %v4318
      %v6347 = vadd.f32 %v6323, %v6339
      %v6348 = vadd.f32 %v6324, %v6340
      %v6349 = vadd.f32 %v6325, %v6341
      %v6350 = vadd.f32 %v6326, %v6342
      %v6351 = vadd.f32 %v6327, %v6343
      %v6352 = vadd.f32 %v6328, %v6344
      %v6353 = vadd.f32 %v6329, %v6345
      %v6354 = vadd.f32 %v6330, %v6346
      %v6355 = vld [vmem:[%s5625 + $0x2] sm:$0xff]
      %v6356 = vld [vmem:[%s5625 + $0x12] sm:$0xff]
      %v6357 = vld [vmem:[%s5625 + $0x22] sm:$0xff]
      %v6358 = vld [vmem:[%s5625 + $0x32] sm:$0xff]
      %v6359 = vld [vmem:[%s5625 + $0x42] sm:$0xff]
      %v6360 = vld [vmem:[%s5625 + $0x52] sm:$0xff]
      %v6361 = vld [vmem:[%s5625 + $0x62] sm:$0xff]
      %v6362 = vld [vmem:[%s5625 + $0x72] sm:$0xff]
      %v6363 = vmul.f32 %v6355, %v4346
      %v6364 = vmul.f32 %v6356, %v4346
      %v6365 = vmul.f32 %v6357, %v4346
      %v6366 = vmul.f32 %v6358, %v4346
      %v6367 = vmul.f32 %v6359, %v4346
      %v6368 = vmul.f32 %v6360, %v4346
      %v6369 = vmul.f32 %v6361, %v4346
      %v6370 = vmul.f32 %v6362, %v4346
      %v6371 = vadd.f32 %v6347, %v6363
      %v6372 = vadd.f32 %v6348, %v6364
      %v6373 = vadd.f32 %v6349, %v6365
      %v6374 = vadd.f32 %v6350, %v6366
      %v6375 = vadd.f32 %v6351, %v6367
      %v6376 = vadd.f32 %v6352, %v6368
      %v6377 = vadd.f32 %v6353, %v6369
      %v6378 = vadd.f32 %v6354, %v6370
      %v6379 = vadd.f32 %v6371, %v4367
      %v6380 = vadd.f32 %v6372, %v4367
      %v6381 = vadd.f32 %v6373, %v4367
      %v6382 = vadd.f32 %v6374, %v4367
      %v6383 = vadd.f32 %v6375, %v4367
      %v6384 = vadd.f32 %v6376, %v4367
      %v6385 = vadd.f32 %v6377, %v4367
      %v6386 = vadd.f32 %v6378, %v4367
      %v6387 = vmul.f32 %v4381, %v6379
      %v6388 = vmul.f32 %v4381, %v6380
      %v6389 = vmul.f32 %v4381, %v6381
      %v6390 = vmul.f32 %v4381, %v6382
      %v6391 = vmul.f32 %v4381, %v6383
      %v6392 = vmul.f32 %v4381, %v6384
      %v6393 = vmul.f32 %v4381, %v6385
      %v6394 = vmul.f32 %v4381, %v6386
      %v6395 = vadd.f32 %v6387, %v5771
      %v6396 = vadd.f32 %v6388, %v5772
      %v6397 = vadd.f32 %v6389, %v5773
      %v6398 = vadd.f32 %v6390, %v5774
      %v6399 = vadd.f32 %v6391, %v5775
      %v6400 = vadd.f32 %v6392, %v5776
      %v6401 = vadd.f32 %v6393, %v5777
      %v6402 = vadd.f32 %v6394, %v5778
      %s6403 = scalar_lea.vmem %s361, 24
      %6404 = vst.msk [vmem:[%s6403] sm:$0xff] %vm362, %v6395
      %6405 = vst.msk [vmem:[%s6403 + $0x20] sm:$0xff] %vm362, %v6396
      %6406 = vst.msk [vmem:[%s6403 + $0x40] sm:$0xff] %vm362, %v6397
      %6407 = vst.msk [vmem:[%s6403 + $0x60] sm:$0xff] %vm362, %v6398
      %6408 = vst.msk [vmem:[%s6403 + $0x80] sm:$0xff] %vm362, %v6399
      %6409 = vst.msk [vmem:[%s6403 + $0xa0] sm:$0xff] %vm362, %v6400
      %6410 = vst.msk [vmem:[%s6403 + $0xc0] sm:$0xff] %vm362, %v6401
      %6411 = vst.msk [vmem:[%s6403 + $0xe0] sm:$0xff] %vm362, %v6402
      %p6412 = scmp.lt.s32.totalorder %s21, 1
      %s6413 = scalar_select %p6412, %s21, 1
      %p6414 = scmp.lt.s32.totalorder %s22, 0
      %s6415 = scalar_select %p6414, %s22, 0
      %s6416 = smul.addr %s6413, 32
      %s6417 = sadd.s32 %s6415, %s6416
      %s6418 = smul.addr %s6417, 8
      %s6419 = scalar_lea.vmem %s6, %s6418
      // Predicated region
      $region45: #{_lambda_.1} parent=43 // pred_check
        %p6420 = pneg %p207
      $region46: #{_lambda_.1} parent=43 // pred_check_branch
        %6422 = sbr.rel (%p6420) target = $region48
      $region47: #{_lambda_.1} parent=43 // pred_region
        _
      $region48: #{_lambda_.1} parent=43 // pred_fallthru
        _
    $region44: #{_lambda_.1} parent=5 // pred_fallthru
      _
    %p6423 = scmp.le.s32.totalorder 2, %s12
    // Predicated region
    $region49: #{_lambda_.1} parent=5 // pred_check
      %p6424 = pneg %p6423
    $region50: #{_lambda_.1} parent=5 // pred_check_branch
      %6426 = sbr.rel (%p6424) target = $region52
    $region51: #{_lambda_.1} parent=5 // pred_region
      %s6427 = ssub.s32 %s12, 2
      // Predicated region
      $region53: #{_lambda_.1} parent=51 // pred_check
        %p6428 = pneg %p213
      $region54: #{_lambda_.1} parent=51 // pred_check_branch
        %6430 = sbr.rel (%p6428) target = $region56
      $region55: #{_lambda_.1} parent=51 // pred_region
        %p6431 = scmp.lt.s32.totalorder %s23, 1
        %s6432 = scalar_select %p6431, %s23, 1
        %p6433 = scmp.lt.s32.totalorder %s24, 0
        %s6434 = scalar_select %p6433, %s24, 0
        %s6435 = smul.addr %s6432, 32
        %s6436 = sadd.s32 %s6434, %s6435
        %s6437 = smul.addr %s6436, 8
        %s6438 = scalar_lea.vmem %s6, %s6437
      $region56: #{_lambda_.1} parent=51 // pred_fallthru
        _
    $region52: #{_lambda_.1} parent=5 // pred_fallthru
      _
  $region6: #{_lambda_.1} parent=0 // loop_footer
    %s16 = sadd.s32 1, %s12
  $region7: #{_lambda_.1} parent=0 // loop_footer_branch
    %11 = sbr.rel target = $region3
  $region8: #{_lambda_.1} parent=0 // loop_exit
    _

</llo_original>
